<compile_context>
chip_gen: v5e
topology: v5e:2x2
jax: 0.10.0
libtpu: 0.0.40
codegen_flags: <defaults>
</compile_context>

<pallas_src>
import functools

import jax
import jax.numpy as jnp
from jax.experimental import pallas as pl
from jax.experimental.pallas import tpu as pltpu


def _round_up(x, m):
    return (x + m - 1) // m * m


def _choose_tm(M):
    # Big tiles amortize the ~0.35us/grid-step overhead; keep >=2 steps when the
    # work is big enough so v7x's 2 TensorCores can split the "parallel" grid.
    if M <= 256:
        return _round_up(M, 8)
    return min(2048, _round_up(-(-M // 2), 8))


_COMPILER_PARAMS = pltpu.CompilerParams(
    dimension_semantics=("parallel",),
    vmem_limit_bytes=32 * 1024 * 1024,  # explicit; safe on v5e/v6e (128MiB) and v7x (64MiB)
)


# ----------------------------------------------------------------------------
# Pallas kernels
# ----------------------------------------------------------------------------
def _make_mm_kernel(relu, has_residual):
    """relu?( A @ W + bias [+ residual] ) with f32 accumulation, bf16 store."""
    def kernel(a_ref, w_ref, b_ref, *rest):
        if has_residual:
            r_ref, o_ref = rest
        else:
            (o_ref,) = rest
        acc = jnp.dot(a_ref[...], w_ref[...], preferred_element_type=jnp.float32)
        acc = acc + b_ref[...]
        if has_residual:
            acc = acc + r_ref[...].astype(jnp.float32)
        if relu:
            acc = jnp.maximum(acc, 0.0)
        o_ref[...] = acc.astype(o_ref.dtype)
    return kernel


def _make_block1x1_kernel(has_sc):
    """Whole BasicBlock with k1=k2=1 in one kernel (shares the x read)."""
    if has_sc:
        def kernel(x_ref, w1_ref, b1_ref, w2_ref, b2_ref, wsc_ref, bsc_ref, o_ref):
            x = x_ref[...]
            h = jnp.dot(x, w1_ref[...], preferred_element_type=jnp.float32) + b1_ref[...]
            h = jnp.maximum(h, 0.0).astype(w2_ref.dtype)
            sc = jnp.dot(x, wsc_ref[...], preferred_element_type=jnp.float32) + bsc_ref[...]
            y = jnp.dot(h, w2_ref[...], preferred_element_type=jnp.float32) + b2_ref[...] + sc
            o_ref[...] = jnp.maximum(y, 0.0).astype(o_ref.dtype)
    else:
        def kernel(x_ref, w1_ref, b1_ref, w2_ref, b2_ref, o_ref):
            x = x_ref[...]
            h = jnp.dot(x, w1_ref[...], preferred_element_type=jnp.float32) + b1_ref[...]
            h = jnp.maximum(h, 0.0).astype(w2_ref.dtype)
            y = jnp.dot(h, w2_ref[...], preferred_element_type=jnp.float32) + b2_ref[...]
            y = y + x.astype(jnp.float32)          # identity shortcut (cin == cout)
            o_ref[...] = jnp.maximum(y, 0.0).astype(o_ref.dtype)
    return kernel


# ----------------------------------------------------------------------------
# Pallas wrappers
# ----------------------------------------------------------------------------
def _full_spec(arr):
    return pl.BlockSpec(arr.shape, lambda i: (0, 0))


def fused_matmul(a, w, b, relu, residual=None):
    """a: [M,K] bf16, w: [K,N] bf16, b: [1,N] f32, residual: optional [M,N] bf16."""
    M, K = a.shape
    Ncol = w.shape[1]
    TM = _choose_tm(M)
    args = [a, w, b]
    in_specs = [pl.BlockSpec((TM, K), lambda i: (i, 0)), _full_spec(w), _full_spec(b)]
    if residual is not None:
        args.append(residual)
        in_specs.append(pl.BlockSpec((TM, Ncol), lambda i: (i, 0)))
    return pl.pallas_call(
        _make_mm_kernel(relu, residual is not None),
        out_shape=jax.ShapeDtypeStruct((M, Ncol), jnp.bfloat16),
        grid=(pl.cdiv(M, TM),),
        in_specs=in_specs,
        out_specs=pl.BlockSpec((TM, Ncol), lambda i: (i, 0)),
        compiler_params=_COMPILER_PARAMS,
    )(*args)


def fused_block_1x1(x_flat, blk, has_sc):
    """Fused BasicBlock (both convs 1x1): out = relu(conv2(relu(conv1(x))) + sc(x))."""
    M, Cin = x_flat.shape
    Cout = blk["w1"].shape[1]
    TM = _choose_tm(M)
    args = [x_flat, blk["w1"], blk["b1"], blk["w2"], blk["b2"]]
    in_specs = [pl.BlockSpec((TM, Cin), lambda i: (i, 0)),
                _full_spec(blk["w1"]), _full_spec(blk["b1"]),
                _full_spec(blk["w2"]), _full_spec(blk["b2"])]
    if has_sc:
        args += [blk["wsc"], blk["bsc"]]
        in_specs += [_full_spec(blk["wsc"]), _full_spec(blk["bsc"])]
    return pl.pallas_call(
        _make_block1x1_kernel(has_sc),
        out_shape=jax.ShapeDtypeStruct((M, Cout), jnp.bfloat16),
        grid=(pl.cdiv(M, TM),),
        in_specs=in_specs,
        out_specs=pl.BlockSpec((TM, Cout), lambda i: (i, 0)),
        compiler_params=_COMPILER_PARAMS,
    )(*args)


# ----------------------------------------------------------------------------
# Conv / pool glue (im2col in XLA under jit; matmul + epilogue in Pallas)
# ----------------------------------------------------------------------------
def _im2col(x_nhwc, k, stride, pad):
    """PyTorch-semantics conv patches -> [N*Ho*Wo, k*k*Cin] (bf16), (i, j, c) ordering."""
    N, H, W, C = x_nhwc.shape
    xp = jnp.pad(x_nhwc, ((0, 0), (pad, pad), (pad, pad), (0, 0)))
    Ho = (H + 2 * pad - k) // stride + 1
    Wo = (W + 2 * pad - k) // stride + 1
    cols = []
    for i in range(k):
        for j in range(k):
            cols.append(
                xp[:, i:i + (Ho - 1) * stride + 1:stride,
                      j:j + (Wo - 1) * stride + 1:stride, :])
    patches = jnp.concatenate(cols, axis=-1)                 # [N,Ho,Wo,k*k*C]
    return patches.reshape(N * Ho * Wo, k * k * C), (N, Ho, Wo)


def maxpool2x2(x):
    """nn.MaxPool2d(2, 2), floor mode, NHWC."""
    N, H, W, C = x.shape
    Ho, Wo = H // 2, W // 2
    x = x[:, :Ho * 2, :Wo * 2, :].reshape(N, Ho, 2, Wo, 2, C)
    return jnp.max(x, axis=(2, 4))


# ----------------------------------------------------------------------------
# Parameters: synthetic conv + eval-mode BN, folded into (bf16 weight matrix, f32 bias)
# ----------------------------------------------------------------------------
def _init_conv(key, cout, cin, kh, kw):
    fan_in = cin * kh * kw
    std = (2.0 / fan_in) ** 0.5
    return jax.random.normal(key, (cout, cin, kh, kw), jnp.float32) * std


def _init_bn(key, c):
    k1, k2, k3, k4 = jax.random.split(key, 4)
    return dict(
        gamma=jax.random.uniform(k1, (c,), jnp.float32, 0.5, 1.5),
        beta=jax.random.normal(k2, (c,), jnp.float32) * 0.1,
        mean=jax.random.normal(k3, (c,), jnp.float32) * 0.1,
        var=jax.random.uniform(k4, (c,), jnp.float32, 0.5, 1.5),
    )


def _folded_conv_bn(key, cout, cin, kh, kw, eps=1e-5):
    kc, kb = jax.random.split(key)
    w = _init_conv(kc, cout, cin, kh, kw)
    bn = _init_bn(kb, cout)
    s = bn["gamma"] * jax.lax.rsqrt(bn["var"] + eps)
    t = bn["beta"] - bn["mean"] * s
    wmat = jnp.transpose(w, (2, 3, 1, 0)).reshape(kh * kw * cin, cout) * s[None, :]
    return wmat.astype(jnp.bfloat16), t.reshape(1, cout).astype(jnp.float32)


def _build_block(key, cin, cout, k1, k2):
    ks = jax.random.split(key, 3)
    w1, b1 = _folded_conv_bn(ks[0], cout, cin, k1, k1)
    w2, b2 = _folded_conv_bn(ks[1], cout, cout, k2, k2)
    blk = dict(w1=w1, b1=b1, w2=w2, b2=b2)
    if cin != cout:
        wsc, bsc = _folded_conv_bn(ks[2], cout, cin, 1, 1)
        blk["wsc"], blk["bsc"] = wsc, bsc
    return blk


# rf='normal' config from the PyTorch module
NORMAL_CFG = dict(
    n_blocks_per_stage=[4, 1, 2],
    stage1=dict(k1s=[3, 3, 3, 3], k2s=[1, 3, 3, 1], maxpool=[1, 2, 4]),
    stage2=dict(k1s=[1, 1, 1, 1], k2s=[1, 1, 1, 1], maxpool=[]),
    stage3=dict(k1s=[1, 1, 1, 1], k2s=[1, 1, 1, 1], maxpool=[]),
)


def build_params(key, in_channels, base_channels, num_outputs, cfg):
    n_channels = [base_channels, base_channels * 2, base_channels * 4]
    keys = jax.random.split(key, 16)
    prep = {}
    w, b = _folded_conv_bn(keys[0], n_channels[0], in_channels, 5, 5)
    prep["stem"] = dict(w=w, b=b)
    stage_io = [(n_channels[0], n_channels[0]),
                (n_channels[0], n_channels[1]),
                (n_channels[1], n_channels[2])]
    kidx = 1
    for s, name in enumerate(("stage1", "stage2", "stage3")):
        scfg = cfg[name]
        cin, cout = stage_io[s]
        blocks = []
        for bi in range(cfg["n_blocks_per_stage"][s]):
            blocks.append(_build_block(keys[kidx], cin, cout, scfg["k1s"][bi], scfg["k2s"][bi]))
            kidx += 1
            cin = cout
        prep[name] = blocks
    w, b = _folded_conv_bn(keys[kidx], num_outputs, n_channels[2], 1, 1)
    prep["ff"] = dict(w=w, b=b)
    return prep


# ----------------------------------------------------------------------------
# Forward pass
# ----------------------------------------------------------------------------
def _basic_block(x, blk, k1, k2):
    N, H, W, Cin = x.shape
    x_flat = x.reshape(-1, Cin)
    has_sc = "wsc" in blk

    if k1 == 1 and k2 == 1:
        # whole block in one fused Pallas call (all of stage2/stage3 in this config)
        out = fused_block_1x1(x_flat, blk, has_sc)
        return out.reshape(N, H, W, -1)

    # general path (stage1: 3x3 convs, identity shortcut)
    a1 = x_flat if k1 == 1 else _im2col(x, k1, 1, k1 // 2)[0]
    h = fused_matmul(a1, blk["w1"], blk["b1"], relu=True)
    Cout = h.shape[-1]
    if has_sc:
        sc = fused_matmul(x_flat, blk["wsc"], blk["bsc"], relu=False)
    else:
        sc = x_flat
    a2 = h if k2 == 1 else _im2col(h.reshape(N, H, W, Cout), k2, 1, k2 // 2)[0]
    out = fused_matmul(a2, blk["w2"], blk["b2"], relu=True, residual=sc)
    return out.reshape(N, H, W, -1)


def network_forward(prep, x_nchw, cfg):
    x = jnp.transpose(x_nchw, (0, 2, 3, 1)).astype(jnp.bfloat16)   # NCHW -> NHWC, bf16

    # in_c: Conv2d(k=5, s=2, p=1) + folded BN + ReLU
    a, (N, Ho, Wo) = _im2col(x, 5, 2, 1)
    x = fused_matmul(a, prep["stem"]["w"], prep["stem"]["b"], relu=True).reshape(N, Ho, Wo, -1)

    for name in ("stage1", "stage2", "stage3"):
        scfg = cfg[name]
        maxpool = scfg["maxpool"]
        if 0 in maxpool:
            x = maxpool2x2(x)
        for idx, blk in enumerate(prep[name]):
            x = _basic_block(x, blk, scfg["k1s"][idx], scfg["k2s"][idx])
            if (idx + 1) in maxpool:
                x = maxpool2x2(x)

    # feed_forward: 1x1 conv + folded BN (no ReLU) + global average pool
    N, H, W, C = x.shape
    y = fused_matmul(x.reshape(-1, C), prep["ff"]["w"], prep["ff"]["b"], relu=False)
    y = y.reshape(N, H, W, -1).astype(jnp.float32)
    return jnp.mean(y, axis=(1, 2))                                 # (N, n_classes)


class ResNetPallas:
    """Mirrors dcase2020_task2 ResNet: forward(batch) adds batch['scores'] = net(x).view(-1, 1)."""

    def __init__(self, input_shape, num_outputs=1, base_channels=8, rf="normal",
                 key=jax.random.PRNGKey(0)):
        assert rf == "normal"
        self.cfg = NORMAL_CFG
        in_channels = input_shape[0]
        self.prep = build_params(key, in_channels, base_channels, num_outputs, self.cfg)
        self._forward = jax.jit(functools.partial(network_forward, cfg=self.cfg))

    def forward(self, batch):
        x = batch["observations"]
        scores = self._forward(self.prep, x)
        batch["scores"] = scores.reshape(-1, 1)
        return batch


if __name__ == "__main__":
    key = jax.random.PRNGKey(0)
    k_param, k_data = jax.random.split(key)

    # input_shape = (channels, H, W) like the spectrogram inputs of the original module
    input_shape = (1, 64, 64)
    model = ResNetPallas(input_shape, num_outputs=1, base_channels=8, rf="normal", key=k_param)

    x = jax.random.normal(k_data, (2, *input_shape), jnp.float32)   # NCHW, batch=2
    batch = {"observations": x}
    out = model.forward(batch)
    scores = jax.block_until_ready(out["scores"])

    assert scores.shape == (2, 1)
    assert bool(jnp.all(jnp.isfinite(scores)))
    print("KERNEL_OK")
</pallas_src>

<mosaic_0001>
module attributes {stable_mosaic.version = 11 : i64} {
  func.func @kernel(%arg0: i32, %arg1: memref<968x25xbf16, #tpu.memory_space<vmem>>, %arg2: memref<25x8xbf16, #tpu.memory_space<vmem>>, %arg3: memref<1x8xf32, #tpu.memory_space<vmem>>, %arg4: memref<968x8xbf16, #tpu.memory_space<vmem>>) attributes {dimension_semantics = [#tpu.dimension_semantics<parallel>], iteration_bounds = array<i64: 2>, scalar_prefetch = 0 : i64, scratch_operands = 0 : i64, tpu.core_type = #tpu.core_type<tc>, window_params = [{transform_indices = @transform_0, window_bounds = array<i64: 968, 25>}, {pipeline_mode = #tpu.pipeline_mode<synchronous>, transform_indices = @transform_1, window_bounds = array<i64: 25, 8>}, {pipeline_mode = #tpu.pipeline_mode<synchronous>, transform_indices = @transform_2, window_bounds = array<i64: 1, 8>}, {transform_indices = @transform_3, window_bounds = array<i64: 968, 8>}]} {
    %c0 = arith.constant 0 : index
    %c0_0 = arith.constant 0 : index
    %0 = vector.load %arg1[%c0, %c0_0] : memref<968x25xbf16, #tpu.memory_space<vmem>>, vector<968x25xbf16>
    %c0_1 = arith.constant 0 : index
    %c0_2 = arith.constant 0 : index
    %1 = vector.load %arg2[%c0_1, %c0_2] : memref<25x8xbf16, #tpu.memory_space<vmem>>, vector<25x8xbf16>
    %cst = arith.constant dense<0.000000e+00> : vector<968x8xf32>
    %2 = tpu.matmul %0, %1, %cst {dimension_numbers = #tpu.dot_dimension_numbers<[1], [0], [0], [1], [0, 0, 1, 1], [], []>} : vector<968x25xbf16>, vector<25x8xbf16>, vector<968x8xf32> -> vector<968x8xf32>
    %c0_3 = arith.constant 0 : index
    %c0_4 = arith.constant 0 : index
    %3 = vector.load %arg3[%c0_3, %c0_4] : memref<1x8xf32, #tpu.memory_space<vmem>>, vector<1x8xf32>
    %4 = vector.broadcast %3 : vector<1x8xf32> to vector<968x8xf32>
    %5 = arith.addf %2, %4 : vector<968x8xf32>
    %cst_5 = arith.constant 0.000000e+00 : f32
    %6 = vector.broadcast %cst_5 : f32 to vector<968x8xf32>
    %7 = arith.maximumf %5, %6 : vector<968x8xf32>
    %8 = arith.truncf %7 : vector<968x8xf32> to vector<968x8xbf16>
    %c0_6 = arith.constant 0 : index
    %c0_7 = arith.constant 0 : index
    %9 = vector.load %arg4[%c0_6, %c0_7] : memref<968x8xbf16, #tpu.memory_space<vmem>>, vector<968x8xbf16>
    tpu.vector_store %arg4[%c0_6, %c0_7], %8 {strides = array<i32>} : memref<968x8xbf16, #tpu.memory_space<vmem>>, vector<968x8xbf16>,
    return
  }
  func.func @transform_0(%arg0: i32) -> (i32, i32) {
    %c0_i32 = arith.constant 0 : i32
    %c0_i32_0 = arith.constant 0 : i32
    return %arg0, %c0_i32 : i32, i32
  }
  func.func @transform_1(%arg0: i32) -> (i32, i32) {
    %c0_i32 = arith.constant 0 : i32
    %c0_i32_0 = arith.constant 0 : i32
    %c0_i32_1 = arith.constant 0 : i32
    return %c0_i32, %c0_i32_0 : i32, i32
  }
  func.func @transform_2(%arg0: i32) -> (i32, i32) {
    %c0_i32 = arith.constant 0 : i32
    %c0_i32_0 = arith.constant 0 : i32
    %c0_i32_1 = arith.constant 0 : i32
    return %c0_i32, %c0_i32_0 : i32, i32
  }
  func.func @transform_3(%arg0: i32) -> (i32, i32) {
    %c0_i32 = arith.constant 0 : i32
    %c0_i32_0 = arith.constant 0 : i32
    return %arg0, %c0_i32 : i32, i32
  }
}

module attributes {stable_mosaic.version = 11 : i64} {
  func.func @kernel(%arg0: i32, %arg1: memref<968x72xbf16, #tpu.memory_space<vmem>>, %arg2: memref<72x8xbf16, #tpu.memory_space<vmem>>, %arg3: memref<1x8xf32, #tpu.memory_space<vmem>>, %arg4: memref<968x8xbf16, #tpu.memory_space<vmem>>) attributes {dimension_semantics = [#tpu.dimension_semantics<parallel>], iteration_bounds = array<i64: 2>, scalar_prefetch = 0 : i64, scratch_operands = 0 : i64, tpu.core_type = #tpu.core_type<tc>, window_params = [{transform_indices = @transform_0, window_bounds = array<i64: 968, 72>}, {pipeline_mode = #tpu.pipeline_mode<synchronous>, transform_indices = @transform_1, window_bounds = array<i64: 72, 8>}, {pipeline_mode = #tpu.pipeline_mode<synchronous>, transform_indices = @transform_2, window_bounds = array<i64: 1, 8>}, {transform_indices = @transform_3, window_bounds = array<i64: 968, 8>}]} {
    %c0 = arith.constant 0 : index
    %c0_0 = arith.constant 0 : index
    %0 = vector.load %arg1[%c0, %c0_0] : memref<968x72xbf16, #tpu.memory_space<vmem>>, vector<968x72xbf16>
    %c0_1 = arith.constant 0 : index
    %c0_2 = arith.constant 0 : index
    %1 = vector.load %arg2[%c0_1, %c0_2] : memref<72x8xbf16, #tpu.memory_space<vmem>>, vector<72x8xbf16>
    %cst = arith.constant dense<0.000000e+00> : vector<968x8xf32>
    %2 = tpu.matmul %0, %1, %cst {dimension_numbers = #tpu.dot_dimension_numbers<[1], [0], [0], [1], [0, 0, 1, 1], [], []>} : vector<968x72xbf16>, vector<72x8xbf16>, vector<968x8xf32> -> vector<968x8xf32>
    %c0_3 = arith.constant 0 : index
    %c0_4 = arith.constant 0 : index
    %3 = vector.load %arg3[%c0_3, %c0_4] : memref<1x8xf32, #tpu.memory_space<vmem>>, vector<1x8xf32>
    %4 = vector.broadcast %3 : vector<1x8xf32> to vector<968x8xf32>
    %5 = arith.addf %2, %4 : vector<968x8xf32>
    %cst_5 = arith.constant 0.000000e+00 : f32
    %6 = vector.broadcast %cst_5 : f32 to vector<968x8xf32>
    %7 = arith.maximumf %5, %6 : vector<968x8xf32>
    %8 = arith.truncf %7 : vector<968x8xf32> to vector<968x8xbf16>
    %c0_6 = arith.constant 0 : index
    %c0_7 = arith.constant 0 : index
    %9 = vector.load %arg4[%c0_6, %c0_7] : memref<968x8xbf16, #tpu.memory_space<vmem>>, vector<968x8xbf16>
    tpu.vector_store %arg4[%c0_6, %c0_7], %8 {strides = array<i32>} : memref<968x8xbf16, #tpu.memory_space<vmem>>, vector<968x8xbf16>,
    return
  }
  func.func @transform_0(%arg0: i32) -> (i32, i32) {
    %c0_i32 = arith.constant 0 : i32
    %c0_i32_0 = arith.constant 0 : i32
    return %arg0, %c0_i32 : i32, i32
  }
  func.func @transform_1(%arg0: i32) -> (i32, i32) {
    %c0_i32 = arith.constant 0 : i32
    %c0_i32_0 = arith.constant 0 : i32
    %c0_i32_1 = arith.constant 0 : i32
    return %c0_i32, %c0_i32_0 : i32, i32
  }
  func.func @transform_2(%arg0: i32) -> (i32, i32) {
    %c0_i32 = arith.constant 0 : i32
    %c0_i32_0 = arith.constant 0 : i32
    %c0_i32_1 = arith.constant 0 : i32
    return %c0_i32, %c0_i32_0 : i32, i32
  }
  func.func @transform_3(%arg0: i32) -> (i32, i32) {
    %c0_i32 = arith.constant 0 : i32
    %c0_i32_0 = arith.constant 0 : i32
    return %arg0, %c0_i32 : i32, i32
  }
}

module attributes {stable_mosaic.version = 11 : i64} {
  func.func @kernel(%arg0: i32, %arg1: memref<968x8xbf16, #tpu.memory_space<vmem>>, %arg2: memref<8x8xbf16, #tpu.memory_space<vmem>>, %arg3: memref<1x8xf32, #tpu.memory_space<vmem>>, %arg4: memref<968x8xbf16, #tpu.memory_space<vmem>>, %arg5: memref<968x8xbf16, #tpu.memory_space<vmem>>) attributes {dimension_semantics = [#tpu.dimension_semantics<parallel>], iteration_bounds = array<i64: 2>, scalar_prefetch = 0 : i64, scratch_operands = 0 : i64, tpu.core_type = #tpu.core_type<tc>, window_params = [{transform_indices = @transform_0, window_bounds = array<i64: 968, 8>}, {pipeline_mode = #tpu.pipeline_mode<synchronous>, transform_indices = @transform_1, window_bounds = array<i64: 8, 8>}, {pipeline_mode = #tpu.pipeline_mode<synchronous>, transform_indices = @transform_2, window_bounds = array<i64: 1, 8>}, {transform_indices = @transform_3, window_bounds = array<i64: 968, 8>}, {transform_indices = @transform_4, window_bounds = array<i64: 968, 8>}]} {
    %c0 = arith.constant 0 : index
    %c0_0 = arith.constant 0 : index
    %0 = vector.load %arg1[%c0, %c0_0] : memref<968x8xbf16, #tpu.memory_space<vmem>>, vector<968x8xbf16>
    %c0_1 = arith.constant 0 : index
    %c0_2 = arith.constant 0 : index
    %1 = vector.load %arg2[%c0_1, %c0_2] : memref<8x8xbf16, #tpu.memory_space<vmem>>, vector<8x8xbf16>
    %cst = arith.constant dense<0.000000e+00> : vector<968x8xf32>
    %2 = tpu.matmul %0, %1, %cst {dimension_numbers = #tpu.dot_dimension_numbers<[1], [0], [0], [1], [0, 0, 1, 1], [], []>} : vector<968x8xbf16>, vector<8x8xbf16>, vector<968x8xf32> -> vector<968x8xf32>
    %c0_3 = arith.constant 0 : index
    %c0_4 = arith.constant 0 : index
    %3 = vector.load %arg3[%c0_3, %c0_4] : memref<1x8xf32, #tpu.memory_space<vmem>>, vector<1x8xf32>
    %4 = vector.broadcast %3 : vector<1x8xf32> to vector<968x8xf32>
    %5 = arith.addf %2, %4 : vector<968x8xf32>
    %c0_5 = arith.constant 0 : index
    %c0_6 = arith.constant 0 : index
    %6 = vector.load %arg4[%c0_5, %c0_6] : memref<968x8xbf16, #tpu.memory_space<vmem>>, vector<968x8xbf16>
    %7 = arith.extf %6 : vector<968x8xbf16> to vector<968x8xf32>
    %8 = arith.addf %5, %7 : vector<968x8xf32>
    %cst_7 = arith.constant 0.000000e+00 : f32
    %9 = vector.broadcast %cst_7 : f32 to vector<968x8xf32>
    %10 = arith.maximumf %8, %9 : vector<968x8xf32>
    %11 = arith.truncf %10 : vector<968x8xf32> to vector<968x8xbf16>
    %c0_8 = arith.constant 0 : index
    %c0_9 = arith.constant 0 : index
    %12 = vector.load %arg5[%c0_8, %c0_9] : memref<968x8xbf16, #tpu.memory_space<vmem>>, vector<968x8xbf16>
    tpu.vector_store %arg5[%c0_8, %c0_9], %11 {strides = array<i32>} : memref<968x8xbf16, #tpu.memory_space<vmem>>, vector<968x8xbf16>,
    return
  }
  func.func @transform_0(%arg0: i32) -> (i32, i32) {
    %c0_i32 = arith.constant 0 : i32
    %c0_i32_0 = arith.constant 0 : i32
    return %arg0, %c0_i32 : i32, i32
  }
  func.func @transform_1(%arg0: i32) -> (i32, i32) {
    %c0_i32 = arith.constant 0 : i32
    %c0_i32_0 = arith.constant 0 : i32
    %c0_i32_1 = arith.constant 0 : i32
    return %c0_i32, %c0_i32_0 : i32, i32
  }
  func.func @transform_2(%arg0: i32) -> (i32, i32) {
    %c0_i32 = arith.constant 0 : i32
    %c0_i32_0 = arith.constant 0 : i32
    %c0_i32_1 = arith.constant 0 : i32
    return %c0_i32, %c0_i32_0 : i32, i32
  }
  func.func @transform_3(%arg0: i32) -> (i32, i32) {
    %c0_i32 = arith.constant 0 : i32
    %c0_i32_0 = arith.constant 0 : i32
    return %arg0, %c0_i32 : i32, i32
  }
  func.func @transform_4(%arg0: i32) -> (i32, i32) {
    %c0_i32 = arith.constant 0 : i32
    %c0_i32_0 = arith.constant 0 : i32
    return %arg0, %c0_i32 : i32, i32
  }
}

module attributes {stable_mosaic.version = 11 : i64} {
  func.func @kernel(%arg0: i32, %arg1: memref<232x72xbf16, #tpu.memory_space<vmem>>, %arg2: memref<72x8xbf16, #tpu.memory_space<vmem>>, %arg3: memref<1x8xf32, #tpu.memory_space<vmem>>, %arg4: memref<232x8xbf16, #tpu.memory_space<vmem>>) attributes {dimension_semantics = [#tpu.dimension_semantics<parallel>], iteration_bounds = array<i64: 2>, scalar_prefetch = 0 : i64, scratch_operands = 0 : i64, tpu.core_type = #tpu.core_type<tc>, window_params = [{transform_indices = @transform_0, window_bounds = array<i64: 232, 72>}, {pipeline_mode = #tpu.pipeline_mode<synchronous>, transform_indices = @transform_1, window_bounds = array<i64: 72, 8>}, {pipeline_mode = #tpu.pipeline_mode<synchronous>, transform_indices = @transform_2, window_bounds = array<i64: 1, 8>}, {transform_indices = @transform_3, window_bounds = array<i64: 232, 8>}]} {
    %c0 = arith.constant 0 : index
    %c0_0 = arith.constant 0 : index
    %0 = vector.load %arg1[%c0, %c0_0] : memref<232x72xbf16, #tpu.memory_space<vmem>>, vector<232x72xbf16>
    %c0_1 = arith.constant 0 : index
    %c0_2 = arith.constant 0 : index
    %1 = vector.load %arg2[%c0_1, %c0_2] : memref<72x8xbf16, #tpu.memory_space<vmem>>, vector<72x8xbf16>
    %cst = arith.constant dense<0.000000e+00> : vector<232x8xf32>
    %2 = tpu.matmul %0, %1, %cst {dimension_numbers = #tpu.dot_dimension_numbers<[1], [0], [0], [1], [0, 0, 1, 1], [], []>} : vector<232x72xbf16>, vector<72x8xbf16>, vector<232x8xf32> -> vector<232x8xf32>
    %c0_3 = arith.constant 0 : index
    %c0_4 = arith.constant 0 : index
    %3 = vector.load %arg3[%c0_3, %c0_4] : memref<1x8xf32, #tpu.memory_space<vmem>>, vector<1x8xf32>
    %4 = vector.broadcast %3 : vector<1x8xf32> to vector<232x8xf32>
    %5 = arith.addf %2, %4 : vector<232x8xf32>
    %cst_5 = arith.constant 0.000000e+00 : f32
    %6 = vector.broadcast %cst_5 : f32 to vector<232x8xf32>
    %7 = arith.maximumf %5, %6 : vector<232x8xf32>
    %8 = arith.truncf %7 : vector<232x8xf32> to vector<232x8xbf16>
    %c0_6 = arith.constant 0 : index
    %c0_7 = arith.constant 0 : index
    %9 = vector.load %arg4[%c0_6, %c0_7] : memref<232x8xbf16, #tpu.memory_space<vmem>>, vector<232x8xbf16>
    tpu.vector_store %arg4[%c0_6, %c0_7], %8 {strides = array<i32>} : memref<232x8xbf16, #tpu.memory_space<vmem>>, vector<232x8xbf16>,
    return
  }
  func.func @transform_0(%arg0: i32) -> (i32, i32) {
    %c0_i32 = arith.constant 0 : i32
    %c0_i32_0 = arith.constant 0 : i32
    return %arg0, %c0_i32 : i32, i32
  }
  func.func @transform_1(%arg0: i32) -> (i32, i32) {
    %c0_i32 = arith.constant 0 : i32
    %c0_i32_0 = arith.constant 0 : i32
    %c0_i32_1 = arith.constant 0 : i32
    return %c0_i32, %c0_i32_0 : i32, i32
  }
  func.func @transform_2(%arg0: i32) -> (i32, i32) {
    %c0_i32 = arith.constant 0 : i32
    %c0_i32_0 = arith.constant 0 : i32
    %c0_i32_1 = arith.constant 0 : i32
    return %c0_i32, %c0_i32_0 : i32, i32
  }
  func.func @transform_3(%arg0: i32) -> (i32, i32) {
    %c0_i32 = arith.constant 0 : i32
    %c0_i32_0 = arith.constant 0 : i32
    return %arg0, %c0_i32 : i32, i32
  }
}

module attributes {stable_mosaic.version = 11 : i64} {
  func.func @kernel(%arg0: i32, %arg1: memref<232x72xbf16, #tpu.memory_space<vmem>>, %arg2: memref<72x8xbf16, #tpu.memory_space<vmem>>, %arg3: memref<1x8xf32, #tpu.memory_space<vmem>>, %arg4: memref<232x8xbf16, #tpu.memory_space<vmem>>, %arg5: memref<232x8xbf16, #tpu.memory_space<vmem>>) attributes {dimension_semantics = [#tpu.dimension_semantics<parallel>], iteration_bounds = array<i64: 2>, scalar_prefetch = 0 : i64, scratch_operands = 0 : i64, tpu.core_type = #tpu.core_type<tc>, window_params = [{transform_indices = @transform_0, window_bounds = array<i64: 232, 72>}, {pipeline_mode = #tpu.pipeline_mode<synchronous>, transform_indices = @transform_1, window_bounds = array<i64: 72, 8>}, {pipeline_mode = #tpu.pipeline_mode<synchronous>, transform_indices = @transform_2, window_bounds = array<i64: 1, 8>}, {transform_indices = @transform_3, window_bounds = array<i64: 232, 8>}, {transform_indices = @transform_4, window_bounds = array<i64: 232, 8>}]} {
    %c0 = arith.constant 0 : index
    %c0_0 = arith.constant 0 : index
    %0 = vector.load %arg1[%c0, %c0_0] : memref<232x72xbf16, #tpu.memory_space<vmem>>, vector<232x72xbf16>
    %c0_1 = arith.constant 0 : index
    %c0_2 = arith.constant 0 : index
    %1 = vector.load %arg2[%c0_1, %c0_2] : memref<72x8xbf16, #tpu.memory_space<vmem>>, vector<72x8xbf16>
    %cst = arith.constant dense<0.000000e+00> : vector<232x8xf32>
    %2 = tpu.matmul %0, %1, %cst {dimension_numbers = #tpu.dot_dimension_numbers<[1], [0], [0], [1], [0, 0, 1, 1], [], []>} : vector<232x72xbf16>, vector<72x8xbf16>, vector<232x8xf32> -> vector<232x8xf32>
    %c0_3 = arith.constant 0 : index
    %c0_4 = arith.constant 0 : index
    %3 = vector.load %arg3[%c0_3, %c0_4] : memref<1x8xf32, #tpu.memory_space<vmem>>, vector<1x8xf32>
    %4 = vector.broadcast %3 : vector<1x8xf32> to vector<232x8xf32>
    %5 = arith.addf %2, %4 : vector<232x8xf32>
    %c0_5 = arith.constant 0 : index
    %c0_6 = arith.constant 0 : index
    %6 = vector.load %arg4[%c0_5, %c0_6] : memref<232x8xbf16, #tpu.memory_space<vmem>>, vector<232x8xbf16>
    %7 = arith.extf %6 : vector<232x8xbf16> to vector<232x8xf32>
    %8 = arith.addf %5, %7 : vector<232x8xf32>
    %cst_7 = arith.constant 0.000000e+00 : f32
    %9 = vector.broadcast %cst_7 : f32 to vector<232x8xf32>
    %10 = arith.maximumf %8, %9 : vector<232x8xf32>
    %11 = arith.truncf %10 : vector<232x8xf32> to vector<232x8xbf16>
    %c0_8 = arith.constant 0 : index
    %c0_9 = arith.constant 0 : index
    %12 = vector.load %arg5[%c0_8, %c0_9] : memref<232x8xbf16, #tpu.memory_space<vmem>>, vector<232x8xbf16>
    tpu.vector_store %arg5[%c0_8, %c0_9], %11 {strides = array<i32>} : memref<232x8xbf16, #tpu.memory_space<vmem>>, vector<232x8xbf16>,
    return
  }
  func.func @transform_0(%arg0: i32) -> (i32, i32) {
    %c0_i32 = arith.constant 0 : i32
    %c0_i32_0 = arith.constant 0 : i32
    return %arg0, %c0_i32 : i32, i32
  }
  func.func @transform_1(%arg0: i32) -> (i32, i32) {
    %c0_i32 = arith.constant 0 : i32
    %c0_i32_0 = arith.constant 0 : i32
    %c0_i32_1 = arith.constant 0 : i32
    return %c0_i32, %c0_i32_0 : i32, i32
  }
  func.func @transform_2(%arg0: i32) -> (i32, i32) {
    %c0_i32 = arith.constant 0 : i32
    %c0_i32_0 = arith.constant 0 : i32
    %c0_i32_1 = arith.constant 0 : i32
    return %c0_i32, %c0_i32_0 : i32, i32
  }
  func.func @transform_3(%arg0: i32) -> (i32, i32) {
    %c0_i32 = arith.constant 0 : i32
    %c0_i32_0 = arith.constant 0 : i32
    return %arg0, %c0_i32 : i32, i32
  }
  func.func @transform_4(%arg0: i32) -> (i32, i32) {
    %c0_i32 = arith.constant 0 : i32
    %c0_i32_0 = arith.constant 0 : i32
    return %arg0, %c0_i32 : i32, i32
  }
}

module attributes {stable_mosaic.version = 11 : i64} {
  func.func @kernel(%arg0: i32, %arg1: memref<104x72xbf16, #tpu.memory_space<vmem>>, %arg2: memref<72x8xbf16, #tpu.memory_space<vmem>>, %arg3: memref<1x8xf32, #tpu.memory_space<vmem>>, %arg4: memref<104x8xbf16, #tpu.memory_space<vmem>>) attributes {dimension_semantics = [#tpu.dimension_semantics<parallel>], iteration_bounds = array<i64: 1>, scalar_prefetch = 0 : i64, scratch_operands = 0 : i64, tpu.core_type = #tpu.core_type<tc>, window_params = [{transform_indices = @transform_0, window_bounds = array<i64: 104, 72>}, {pipeline_mode = #tpu.pipeline_mode<synchronous>, transform_indices = @transform_1, window_bounds = array<i64: 72, 8>}, {pipeline_mode = #tpu.pipeline_mode<synchronous>, transform_indices = @transform_2, window_bounds = array<i64: 1, 8>}, {transform_indices = @transform_3, window_bounds = array<i64: 104, 8>}]} {
    %c0 = arith.constant 0 : index
    %c0_0 = arith.constant 0 : index
    %0 = vector.load %arg1[%c0, %c0_0] : memref<104x72xbf16, #tpu.memory_space<vmem>>, vector<104x72xbf16>
    %c0_1 = arith.constant 0 : index
    %c0_2 = arith.constant 0 : index
    %1 = vector.load %arg2[%c0_1, %c0_2] : memref<72x8xbf16, #tpu.memory_space<vmem>>, vector<72x8xbf16>
    %cst = arith.constant dense<0.000000e+00> : vector<104x8xf32>
    %2 = tpu.matmul %0, %1, %cst {dimension_numbers = #tpu.dot_dimension_numbers<[1], [0], [0], [1], [0, 0, 1, 1], [], []>} : vector<104x72xbf16>, vector<72x8xbf16>, vector<104x8xf32> -> vector<104x8xf32>
    %c0_3 = arith.constant 0 : index
    %c0_4 = arith.constant 0 : index
    %3 = vector.load %arg3[%c0_3, %c0_4] : memref<1x8xf32, #tpu.memory_space<vmem>>, vector<1x8xf32>
    %4 = vector.broadcast %3 : vector<1x8xf32> to vector<104x8xf32>
    %5 = arith.addf %2, %4 : vector<104x8xf32>
    %cst_5 = arith.constant 0.000000e+00 : f32
    %6 = vector.broadcast %cst_5 : f32 to vector<104x8xf32>
    %7 = arith.maximumf %5, %6 : vector<104x8xf32>
    %8 = arith.truncf %7 : vector<104x8xf32> to vector<104x8xbf16>
    %c0_6 = arith.constant 0 : index
    %c0_7 = arith.constant 0 : index
    %9 = vector.load %arg4[%c0_6, %c0_7] : memref<104x8xbf16, #tpu.memory_space<vmem>>, vector<104x8xbf16>
    tpu.vector_store %arg4[%c0_6, %c0_7], %8 {strides = array<i32>} : memref<104x8xbf16, #tpu.memory_space<vmem>>, vector<104x8xbf16>,
    return
  }
  func.func @transform_0(%arg0: i32) -> (i32, i32) {
    %c0_i32 = arith.constant 0 : i32
    %c0_i32_0 = arith.constant 0 : i32
    return %arg0, %c0_i32 : i32, i32
  }
  func.func @transform_1(%arg0: i32) -> (i32, i32) {
    %c0_i32 = arith.constant 0 : i32
    %c0_i32_0 = arith.constant 0 : i32
    %c0_i32_1 = arith.constant 0 : i32
    return %c0_i32, %c0_i32_0 : i32, i32
  }
  func.func @transform_2(%arg0: i32) -> (i32, i32) {
    %c0_i32 = arith.constant 0 : i32
    %c0_i32_0 = arith.constant 0 : i32
    %c0_i32_1 = arith.constant 0 : i32
    return %c0_i32, %c0_i32_0 : i32, i32
  }
  func.func @transform_3(%arg0: i32) -> (i32, i32) {
    %c0_i32 = arith.constant 0 : i32
    %c0_i32_0 = arith.constant 0 : i32
    return %arg0, %c0_i32 : i32, i32
  }
}

module attributes {stable_mosaic.version = 11 : i64} {
  func.func @kernel(%arg0: i32, %arg1: memref<104x72xbf16, #tpu.memory_space<vmem>>, %arg2: memref<72x8xbf16, #tpu.memory_space<vmem>>, %arg3: memref<1x8xf32, #tpu.memory_space<vmem>>, %arg4: memref<104x8xbf16, #tpu.memory_space<vmem>>, %arg5: memref<104x8xbf16, #tpu.memory_space<vmem>>) attributes {dimension_semantics = [#tpu.dimension_semantics<parallel>], iteration_bounds = array<i64: 1>, scalar_prefetch = 0 : i64, scratch_operands = 0 : i64, tpu.core_type = #tpu.core_type<tc>, window_params = [{transform_indices = @transform_0, window_bounds = array<i64: 104, 72>}, {pipeline_mode = #tpu.pipeline_mode<synchronous>, transform_indices = @transform_1, window_bounds = array<i64: 72, 8>}, {pipeline_mode = #tpu.pipeline_mode<synchronous>, transform_indices = @transform_2, window_bounds = array<i64: 1, 8>}, {transform_indices = @transform_3, window_bounds = array<i64: 104, 8>}, {transform_indices = @transform_4, window_bounds = array<i64: 104, 8>}]} {
    %c0 = arith.constant 0 : index
    %c0_0 = arith.constant 0 : index
    %0 = vector.load %arg1[%c0, %c0_0] : memref<104x72xbf16, #tpu.memory_space<vmem>>, vector<104x72xbf16>
    %c0_1 = arith.constant 0 : index
    %c0_2 = arith.constant 0 : index
    %1 = vector.load %arg2[%c0_1, %c0_2] : memref<72x8xbf16, #tpu.memory_space<vmem>>, vector<72x8xbf16>
    %cst = arith.constant dense<0.000000e+00> : vector<104x8xf32>
    %2 = tpu.matmul %0, %1, %cst {dimension_numbers = #tpu.dot_dimension_numbers<[1], [0], [0], [1], [0, 0, 1, 1], [], []>} : vector<104x72xbf16>, vector<72x8xbf16>, vector<104x8xf32> -> vector<104x8xf32>
    %c0_3 = arith.constant 0 : index
    %c0_4 = arith.constant 0 : index
    %3 = vector.load %arg3[%c0_3, %c0_4] : memref<1x8xf32, #tpu.memory_space<vmem>>, vector<1x8xf32>
    %4 = vector.broadcast %3 : vector<1x8xf32> to vector<104x8xf32>
    %5 = arith.addf %2, %4 : vector<104x8xf32>
    %c0_5 = arith.constant 0 : index
    %c0_6 = arith.constant 0 : index
    %6 = vector.load %arg4[%c0_5, %c0_6] : memref<104x8xbf16, #tpu.memory_space<vmem>>, vector<104x8xbf16>
    %7 = arith.extf %6 : vector<104x8xbf16> to vector<104x8xf32>
    %8 = arith.addf %5, %7 : vector<104x8xf32>
    %cst_7 = arith.constant 0.000000e+00 : f32
    %9 = vector.broadcast %cst_7 : f32 to vector<104x8xf32>
    %10 = arith.maximumf %8, %9 : vector<104x8xf32>
    %11 = arith.truncf %10 : vector<104x8xf32> to vector<104x8xbf16>
    %c0_8 = arith.constant 0 : index
    %c0_9 = arith.constant 0 : index
    %12 = vector.load %arg5[%c0_8, %c0_9] : memref<104x8xbf16, #tpu.memory_space<vmem>>, vector<104x8xbf16>
    tpu.vector_store %arg5[%c0_8, %c0_9], %11 {strides = array<i32>} : memref<104x8xbf16, #tpu.memory_space<vmem>>, vector<104x8xbf16>,
    return
  }
  func.func @transform_0(%arg0: i32) -> (i32, i32) {
    %c0_i32 = arith.constant 0 : i32
    %c0_i32_0 = arith.constant 0 : i32
    return %arg0, %c0_i32 : i32, i32
  }
  func.func @transform_1(%arg0: i32) -> (i32, i32) {
    %c0_i32 = arith.constant 0 : i32
    %c0_i32_0 = arith.constant 0 : i32
    %c0_i32_1 = arith.constant 0 : i32
    return %c0_i32, %c0_i32_0 : i32, i32
  }
  func.func @transform_2(%arg0: i32) -> (i32, i32) {
    %c0_i32 = arith.constant 0 : i32
    %c0_i32_0 = arith.constant 0 : i32
    %c0_i32_1 = arith.constant 0 : i32
    return %c0_i32, %c0_i32_0 : i32, i32
  }
  func.func @transform_3(%arg0: i32) -> (i32, i32) {
    %c0_i32 = arith.constant 0 : i32
    %c0_i32_0 = arith.constant 0 : i32
    return %arg0, %c0_i32 : i32, i32
  }
  func.func @transform_4(%arg0: i32) -> (i32, i32) {
    %c0_i32 = arith.constant 0 : i32
    %c0_i32_0 = arith.constant 0 : i32
    return %arg0, %c0_i32 : i32, i32
  }
}

module attributes {stable_mosaic.version = 11 : i64} {
  func.func @kernel(%arg0: i32, %arg1: memref<104x8xbf16, #tpu.memory_space<vmem>>, %arg2: memref<8x8xbf16, #tpu.memory_space<vmem>>, %arg3: memref<1x8xf32, #tpu.memory_space<vmem>>, %arg4: memref<104x8xbf16, #tpu.memory_space<vmem>>, %arg5: memref<104x8xbf16, #tpu.memory_space<vmem>>) attributes {dimension_semantics = [#tpu.dimension_semantics<parallel>], iteration_bounds = array<i64: 1>, scalar_prefetch = 0 : i64, scratch_operands = 0 : i64, tpu.core_type = #tpu.core_type<tc>, window_params = [{transform_indices = @transform_0, window_bounds = array<i64: 104, 8>}, {pipeline_mode = #tpu.pipeline_mode<synchronous>, transform_indices = @transform_1, window_bounds = array<i64: 8, 8>}, {pipeline_mode = #tpu.pipeline_mode<synchronous>, transform_indices = @transform_2, window_bounds = array<i64: 1, 8>}, {transform_indices = @transform_3, window_bounds = array<i64: 104, 8>}, {transform_indices = @transform_4, window_bounds = array<i64: 104, 8>}]} {
    %c0 = arith.constant 0 : index
    %c0_0 = arith.constant 0 : index
    %0 = vector.load %arg1[%c0, %c0_0] : memref<104x8xbf16, #tpu.memory_space<vmem>>, vector<104x8xbf16>
    %c0_1 = arith.constant 0 : index
    %c0_2 = arith.constant 0 : index
    %1 = vector.load %arg2[%c0_1, %c0_2] : memref<8x8xbf16, #tpu.memory_space<vmem>>, vector<8x8xbf16>
    %cst = arith.constant dense<0.000000e+00> : vector<104x8xf32>
    %2 = tpu.matmul %0, %1, %cst {dimension_numbers = #tpu.dot_dimension_numbers<[1], [0], [0], [1], [0, 0, 1, 1], [], []>} : vector<104x8xbf16>, vector<8x8xbf16>, vector<104x8xf32> -> vector<104x8xf32>
    %c0_3 = arith.constant 0 : index
    %c0_4 = arith.constant 0 : index
    %3 = vector.load %arg3[%c0_3, %c0_4] : memref<1x8xf32, #tpu.memory_space<vmem>>, vector<1x8xf32>
    %4 = vector.broadcast %3 : vector<1x8xf32> to vector<104x8xf32>
    %5 = arith.addf %2, %4 : vector<104x8xf32>
    %c0_5 = arith.constant 0 : index
    %c0_6 = arith.constant 0 : index
    %6 = vector.load %arg4[%c0_5, %c0_6] : memref<104x8xbf16, #tpu.memory_space<vmem>>, vector<104x8xbf16>
    %7 = arith.extf %6 : vector<104x8xbf16> to vector<104x8xf32>
    %8 = arith.addf %5, %7 : vector<104x8xf32>
    %cst_7 = arith.constant 0.000000e+00 : f32
    %9 = vector.broadcast %cst_7 : f32 to vector<104x8xf32>
    %10 = arith.maximumf %8, %9 : vector<104x8xf32>
    %11 = arith.truncf %10 : vector<104x8xf32> to vector<104x8xbf16>
    %c0_8 = arith.constant 0 : index
    %c0_9 = arith.constant 0 : index
    %12 = vector.load %arg5[%c0_8, %c0_9] : memref<104x8xbf16, #tpu.memory_space<vmem>>, vector<104x8xbf16>
    tpu.vector_store %arg5[%c0_8, %c0_9], %11 {strides = array<i32>} : memref<104x8xbf16, #tpu.memory_space<vmem>>, vector<104x8xbf16>,
    return
  }
  func.func @transform_0(%arg0: i32) -> (i32, i32) {
    %c0_i32 = arith.constant 0 : i32
    %c0_i32_0 = arith.constant 0 : i32
    return %arg0, %c0_i32 : i32, i32
  }
  func.func @transform_1(%arg0: i32) -> (i32, i32) {
    %c0_i32 = arith.constant 0 : i32
    %c0_i32_0 = arith.constant 0 : i32
    %c0_i32_1 = arith.constant 0 : i32
    return %c0_i32, %c0_i32_0 : i32, i32
  }
  func.func @transform_2(%arg0: i32) -> (i32, i32) {
    %c0_i32 = arith.constant 0 : i32
    %c0_i32_0 = arith.constant 0 : i32
    %c0_i32_1 = arith.constant 0 : i32
    return %c0_i32, %c0_i32_0 : i32, i32
  }
  func.func @transform_3(%arg0: i32) -> (i32, i32) {
    %c0_i32 = arith.constant 0 : i32
    %c0_i32_0 = arith.constant 0 : i32
    return %arg0, %c0_i32 : i32, i32
  }
  func.func @transform_4(%arg0: i32) -> (i32, i32) {
    %c0_i32 = arith.constant 0 : i32
    %c0_i32_0 = arith.constant 0 : i32
    return %arg0, %c0_i32 : i32, i32
  }
}

module attributes {stable_mosaic.version = 11 : i64} {
  func.func @kernel(%arg0: i32, %arg1: memref<24x8xbf16, #tpu.memory_space<vmem>>, %arg2: memref<8x16xbf16, #tpu.memory_space<vmem>>, %arg3: memref<1x16xf32, #tpu.memory_space<vmem>>, %arg4: memref<16x16xbf16, #tpu.memory_space<vmem>>, %arg5: memref<1x16xf32, #tpu.memory_space<vmem>>, %arg6: memref<8x16xbf16, #tpu.memory_space<vmem>>, %arg7: memref<1x16xf32, #tpu.memory_space<vmem>>, %arg8: memref<24x16xbf16, #tpu.memory_space<vmem>>) attributes {dimension_semantics = [#tpu.dimension_semantics<parallel>], iteration_bounds = array<i64: 1>, scalar_prefetch = 0 : i64, scratch_operands = 0 : i64, tpu.core_type = #tpu.core_type<tc>, window_params = [{transform_indices = @transform_0, window_bounds = array<i64: 24, 8>}, {pipeline_mode = #tpu.pipeline_mode<synchronous>, transform_indices = @transform_1, window_bounds = array<i64: 8, 16>}, {pipeline_mode = #tpu.pipeline_mode<synchronous>, transform_indices = @transform_2, window_bounds = array<i64: 1, 16>}, {pipeline_mode = #tpu.pipeline_mode<synchronous>, transform_indices = @transform_3, window_bounds = array<i64: 16, 16>}, {pipeline_mode = #tpu.pipeline_mode<synchronous>, transform_indices = @transform_4, window_bounds = array<i64: 1, 16>}, {pipeline_mode = #tpu.pipeline_mode<synchronous>, transform_indices = @transform_5, window_bounds = array<i64: 8, 16>}, {pipeline_mode = #tpu.pipeline_mode<synchronous>, transform_indices = @transform_6, window_bounds = array<i64: 1, 16>}, {transform_indices = @transform_7, window_bounds = array<i64: 24, 16>}]} {
    %c0 = arith.constant 0 : index
    %c0_0 = arith.constant 0 : index
    %0 = vector.load %arg1[%c0, %c0_0] : memref<24x8xbf16, #tpu.memory_space<vmem>>, vector<24x8xbf16>
    %c0_1 = arith.constant 0 : index
    %c0_2 = arith.constant 0 : index
    %1 = vector.load %arg2[%c0_1, %c0_2] : memref<8x16xbf16, #tpu.memory_space<vmem>>, vector<8x16xbf16>
    %cst = arith.constant dense<0.000000e+00> : vector<24x16xf32>
    %2 = tpu.matmul %0, %1, %cst {dimension_numbers = #tpu.dot_dimension_numbers<[1], [0], [0], [1], [0, 0, 1, 1], [], []>} : vector<24x8xbf16>, vector<8x16xbf16>, vector<24x16xf32> -> vector<24x16xf32>
    %c0_3 = arith.constant 0 : index
    %c0_4 = arith.constant 0 : index
    %3 = vector.load %arg3[%c0_3, %c0_4] : memref<1x16xf32, #tpu.memory_space<vmem>>, vector<1x16xf32>
    %4 = vector.broadcast %3 : vector<1x16xf32> to vector<24x16xf32>
    %5 = arith.addf %2, %4 : vector<24x16xf32>
    %cst_5 = arith.constant 0.000000e+00 : f32
    %6 = vector.broadcast %cst_5 : f32 to vector<24x16xf32>
    %7 = arith.maximumf %5, %6 : vector<24x16xf32>
    %8 = arith.truncf %7 : vector<24x16xf32> to vector<24x16xbf16>
    %c0_6 = arith.constant 0 : index
    %c0_7 = arith.constant 0 : index
    %9 = vector.load %arg6[%c0_6, %c0_7] : memref<8x16xbf16, #tpu.memory_space<vmem>>, vector<8x16xbf16>
    %cst_8 = arith.constant dense<0.000000e+00> : vector<24x16xf32>
    %10 = tpu.matmul %0, %9, %cst_8 {dimension_numbers = #tpu.dot_dimension_numbers<[1], [0], [0], [1], [0, 0, 1, 1], [], []>} : vector<24x8xbf16>, vector<8x16xbf16>, vector<24x16xf32> -> vector<24x16xf32>
    %c0_9 = arith.constant 0 : index
    %c0_10 = arith.constant 0 : index
    %11 = vector.load %arg7[%c0_9, %c0_10] : memref<1x16xf32, #tpu.memory_space<vmem>>, vector<1x16xf32>
    %12 = vector.broadcast %11 : vector<1x16xf32> to vector<24x16xf32>
    %13 = arith.addf %10, %12 : vector<24x16xf32>
    %c0_11 = arith.constant 0 : index
    %c0_12 = arith.constant 0 : index
    %14 = vector.load %arg4[%c0_11, %c0_12] : memref<16x16xbf16, #tpu.memory_space<vmem>>, vector<16x16xbf16>
    %cst_13 = arith.constant dense<0.000000e+00> : vector<24x16xf32>
    %15 = tpu.matmul %8, %14, %cst_13 {dimension_numbers = #tpu.dot_dimension_numbers<[1], [0], [0], [1], [0, 0, 1, 1], [], []>} : vector<24x16xbf16>, vector<16x16xbf16>, vector<24x16xf32> -> vector<24x16xf32>
    %c0_14 = arith.constant 0 : index
    %c0_15 = arith.constant 0 : index
    %16 = vector.load %arg5[%c0_14, %c0_15] : memref<1x16xf32, #tpu.memory_space<vmem>>, vector<1x16xf32>
    %17 = vector.broadcast %16 : vector<1x16xf32> to vector<24x16xf32>
    %18 = arith.addf %15, %17 : vector<24x16xf32>
    %19 = arith.addf %18, %13 : vector<24x16xf32>
    %cst_16 = arith.constant 0.000000e+00 : f32
    %20 = vector.broadcast %cst_16 : f32 to vector<24x16xf32>
    %21 = arith.maximumf %19, %20 : vector<24x16xf32>
    %22 = arith.truncf %21 : vector<24x16xf32> to vector<24x16xbf16>
    %c0_17 = arith.constant 0 : index
    %c0_18 = arith.constant 0 : index
    %23 = vector.load %arg8[%c0_17, %c0_18] : memref<24x16xbf16, #tpu.memory_space<vmem>>, vector<24x16xbf16>
    tpu.vector_store %arg8[%c0_17, %c0_18], %22 {strides = array<i32>} : memref<24x16xbf16, #tpu.memory_space<vmem>>, vector<24x16xbf16>,
    return
  }
  func.func @transform_0(%arg0: i32) -> (i32, i32) {
    %c0_i32 = arith.constant 0 : i32
    %c0_i32_0 = arith.constant 0 : i32
    return %arg0, %c0_i32 : i32, i32
  }
  func.func @transform_1(%arg0: i32) -> (i32, i32) {
    %c0_i32 = arith.constant 0 : i32
    %c0_i32_0 = arith.constant 0 : i32
    %c0_i32_1 = arith.constant 0 : i32
    return %c0_i32, %c0_i32_0 : i32, i32
  }
  func.func @transform_2(%arg0: i32) -> (i32, i32) {
    %c0_i32 = arith.constant 0 : i32
    %c0_i32_0 = arith.constant 0 : i32
    %c0_i32_1 = arith.constant 0 : i32
    return %c0_i32, %c0_i32_0 : i32, i32
  }
  func.func @transform_3(%arg0: i32) -> (i32, i32) {
    %c0_i32 = arith.constant 0 : i32
    %c0_i32_0 = arith.constant 0 : i32
    %c0_i32_1 = arith.constant 0 : i32
    return %c0_i32, %c0_i32_0 : i32, i32
  }
  func.func @transform_4(%arg0: i32) -> (i32, i32) {
    %c0_i32 = arith.constant 0 : i32
    %c0_i32_0 = arith.constant 0 : i32
    %c0_i32_1 = arith.constant 0 : i32
    return %c0_i32, %c0_i32_0 : i32, i32
  }
  func.func @transform_5(%arg0: i32) -> (i32, i32) {
    %c0_i32 = arith.constant 0 : i32
    %c0_i32_0 = arith.constant 0 : i32
    %c0_i32_1 = arith.constant 0 : i32
    return %c0_i32, %c0_i32_0 : i32, i32
  }
  func.func @transform_6(%arg0: i32) -> (i32, i32) {
    %c0_i32 = arith.constant 0 : i32
    %c0_i32_0 = arith.constant 0 : i32
    %c0_i32_1 = arith.constant 0 : i32
    return %c0_i32, %c0_i32_0 : i32, i32
  }
  func.func @transform_7(%arg0: i32) -> (i32, i32) {
    %c0_i32 = arith.constant 0 : i32
    %c0_i32_0 = arith.constant 0 : i32
    return %arg0, %c0_i32 : i32, i32
  }
}

module attributes {stable_mosaic.version = 11 : i64} {
  func.func @kernel(%arg0: i32, %arg1: memref<24x32xbf16, #tpu.memory_space<vmem>>, %arg2: memref<32x32xbf16, #tpu.memory_space<vmem>>, %arg3: memref<1x32xf32, #tpu.memory_space<vmem>>, %arg4: memref<32x32xbf16, #tpu.memory_space<vmem>>, %arg5: memref<1x32xf32, #tpu.memory_space<vmem>>, %arg6: memref<24x32xbf16, #tpu.memory_space<vmem>>) attributes {dimension_semantics = [#tpu.dimension_semantics<parallel>], iteration_bounds = array<i64: 1>, scalar_prefetch = 0 : i64, scratch_operands = 0 : i64, tpu.core_type = #tpu.core_type<tc>, window_params = [{transform_indices = @transform_0, window_bounds = array<i64: 24, 32>}, {pipeline_mode = #tpu.pipeline_mode<synchronous>, transform_indices = @transform_1, window_bounds = array<i64: 32, 32>}, {pipeline_mode = #tpu.pipeline_mode<synchronous>, transform_indices = @transform_2, window_bounds = array<i64: 1, 32>}, {pipeline_mode = #tpu.pipeline_mode<synchronous>, transform_indices = @transform_3, window_bounds = array<i64: 32, 32>}, {pipeline_mode = #tpu.pipeline_mode<synchronous>, transform_indices = @transform_4, window_bounds = array<i64: 1, 32>}, {transform_indices = @transform_5, window_bounds = array<i64: 24, 32>}]} {
    %c0 = arith.constant 0 : index
    %c0_0 = arith.constant 0 : index
    %0 = vector.load %arg1[%c0, %c0_0] : memref<24x32xbf16, #tpu.memory_space<vmem>>, vector<24x32xbf16>
    %c0_1 = arith.constant 0 : index
    %c0_2 = arith.constant 0 : index
    %1 = vector.load %arg2[%c0_1, %c0_2] : memref<32x32xbf16, #tpu.memory_space<vmem>>, vector<32x32xbf16>
    %cst = arith.constant dense<0.000000e+00> : vector<24x32xf32>
    %2 = tpu.matmul %0, %1, %cst {dimension_numbers = #tpu.dot_dimension_numbers<[1], [0], [0], [1], [0, 0, 1, 1], [], []>} : vector<24x32xbf16>, vector<32x32xbf16>, vector<24x32xf32> -> vector<24x32xf32>
    %c0_3 = arith.constant 0 : index
    %c0_4 = arith.constant 0 : index
    %3 = vector.load %arg3[%c0_3, %c0_4] : memref<1x32xf32, #tpu.memory_space<vmem>>, vector<1x32xf32>
    %4 = vector.broadcast %3 : vector<1x32xf32> to vector<24x32xf32>
    %5 = arith.addf %2, %4 : vector<24x32xf32>
    %cst_5 = arith.constant 0.000000e+00 : f32
    %6 = vector.broadcast %cst_5 : f32 to vector<24x32xf32>
    %7 = arith.maximumf %5, %6 : vector<24x32xf32>
    %8 = arith.truncf %7 : vector<24x32xf32> to vector<24x32xbf16>
    %c0_6 = arith.constant 0 : index
    %c0_7 = arith.constant 0 : index
    %9 = vector.load %arg4[%c0_6, %c0_7] : memref<32x32xbf16, #tpu.memory_space<vmem>>, vector<32x32xbf16>
    %cst_8 = arith.constant dense<0.000000e+00> : vector<24x32xf32>
    %10 = tpu.matmul %8, %9, %cst_8 {dimension_numbers = #tpu.dot_dimension_numbers<[1], [0], [0], [1], [0, 0, 1, 1], [], []>} : vector<24x32xbf16>, vector<32x32xbf16>, vector<24x32xf32> -> vector<24x32xf32>
    %c0_9 = arith.constant 0 : index
    %c0_10 = arith.constant 0 : index
    %11 = vector.load %arg5[%c0_9, %c0_10] : memref<1x32xf32, #tpu.memory_space<vmem>>, vector<1x32xf32>
    %12 = vector.broadcast %11 : vector<1x32xf32> to vector<24x32xf32>
    %13 = arith.addf %10, %12 : vector<24x32xf32>
    %14 = arith.extf %0 : vector<24x32xbf16> to vector<24x32xf32>
    %15 = arith.addf %13, %14 : vector<24x32xf32>
    %cst_11 = arith.constant 0.000000e+00 : f32
    %16 = vector.broadcast %cst_11 : f32 to vector<24x32xf32>
    %17 = arith.maximumf %15, %16 : vector<24x32xf32>
    %18 = arith.truncf %17 : vector<24x32xf32> to vector<24x32xbf16>
    %c0_12 = arith.constant 0 : index
    %c0_13 = arith.constant 0 : index
    %19 = vector.load %arg6[%c0_12, %c0_13] : memref<24x32xbf16, #tpu.memory_space<vmem>>, vector<24x32xbf16>
    tpu.vector_store %arg6[%c0_12, %c0_13], %18 {strides = array<i32>} : memref<24x32xbf16, #tpu.memory_space<vmem>>, vector<24x32xbf16>,
    return
  }
  func.func @transform_0(%arg0: i32) -> (i32, i32) {
    %c0_i32 = arith.constant 0 : i32
    %c0_i32_0 = arith.constant 0 : i32
    return %arg0, %c0_i32 : i32, i32
  }
  func.func @transform_1(%arg0: i32) -> (i32, i32) {
    %c0_i32 = arith.constant 0 : i32
    %c0_i32_0 = arith.constant 0 : i32
    %c0_i32_1 = arith.constant 0 : i32
    return %c0_i32, %c0_i32_0 : i32, i32
  }
  func.func @transform_2(%arg0: i32) -> (i32, i32) {
    %c0_i32 = arith.constant 0 : i32
    %c0_i32_0 = arith.constant 0 : i32
    %c0_i32_1 = arith.constant 0 : i32
    return %c0_i32, %c0_i32_0 : i32, i32
  }
  func.func @transform_3(%arg0: i32) -> (i32, i32) {
    %c0_i32 = arith.constant 0 : i32
    %c0_i32_0 = arith.constant 0 : i32
    %c0_i32_1 = arith.constant 0 : i32
    return %c0_i32, %c0_i32_0 : i32, i32
  }
  func.func @transform_4(%arg0: i32) -> (i32, i32) {
    %c0_i32 = arith.constant 0 : i32
    %c0_i32_0 = arith.constant 0 : i32
    %c0_i32_1 = arith.constant 0 : i32
    return %c0_i32, %c0_i32_0 : i32, i32
  }
  func.func @transform_5(%arg0: i32) -> (i32, i32) {
    %c0_i32 = arith.constant 0 : i32
    %c0_i32_0 = arith.constant 0 : i32
    return %arg0, %c0_i32 : i32, i32
  }
}

module attributes {stable_mosaic.version = 11 : i64} {
  func.func @kernel(%arg0: i32, %arg1: memref<24x16xbf16, #tpu.memory_space<vmem>>, %arg2: memref<16x32xbf16, #tpu.memory_space<vmem>>, %arg3: memref<1x32xf32, #tpu.memory_space<vmem>>, %arg4: memref<32x32xbf16, #tpu.memory_space<vmem>>, %arg5: memref<1x32xf32, #tpu.memory_space<vmem>>, %arg6: memref<16x32xbf16, #tpu.memory_space<vmem>>, %arg7: memref<1x32xf32, #tpu.memory_space<vmem>>, %arg8: memref<24x32xbf16, #tpu.memory_space<vmem>>) attributes {dimension_semantics = [#tpu.dimension_semantics<parallel>], iteration_bounds = array<i64: 1>, scalar_prefetch = 0 : i64, scratch_operands = 0 : i64, tpu.core_type = #tpu.core_type<tc>, window_params = [{transform_indices = @transform_0, window_bounds = array<i64: 24, 16>}, {pipeline_mode = #tpu.pipeline_mode<synchronous>, transform_indices = @transform_1, window_bounds = array<i64: 16, 32>}, {pipeline_mode = #tpu.pipeline_mode<synchronous>, transform_indices = @transform_2, window_bounds = array<i64: 1, 32>}, {pipeline_mode = #tpu.pipeline_mode<synchronous>, transform_indices = @transform_3, window_bounds = array<i64: 32, 32>}, {pipeline_mode = #tpu.pipeline_mode<synchronous>, transform_indices = @transform_4, window_bounds = array<i64: 1, 32>}, {pipeline_mode = #tpu.pipeline_mode<synchronous>, transform_indices = @transform_5, window_bounds = array<i64: 16, 32>}, {pipeline_mode = #tpu.pipeline_mode<synchronous>, transform_indices = @transform_6, window_bounds = array<i64: 1, 32>}, {transform_indices = @transform_7, window_bounds = array<i64: 24, 32>}]} {
    %c0 = arith.constant 0 : index
    %c0_0 = arith.constant 0 : index
    %0 = vector.load %arg1[%c0, %c0_0] : memref<24x16xbf16, #tpu.memory_space<vmem>>, vector<24x16xbf16>
    %c0_1 = arith.constant 0 : index
    %c0_2 = arith.constant 0 : index
    %1 = vector.load %arg2[%c0_1, %c0_2] : memref<16x32xbf16, #tpu.memory_space<vmem>>, vector<16x32xbf16>
    %cst = arith.constant dense<0.000000e+00> : vector<24x32xf32>
    %2 = tpu.matmul %0, %1, %cst {dimension_numbers = #tpu.dot_dimension_numbers<[1], [0], [0], [1], [0, 0, 1, 1], [], []>} : vector<24x16xbf16>, vector<16x32xbf16>, vector<24x32xf32> -> vector<24x32xf32>
    %c0_3 = arith.constant 0 : index
    %c0_4 = arith.constant 0 : index
    %3 = vector.load %arg3[%c0_3, %c0_4] : memref<1x32xf32, #tpu.memory_space<vmem>>, vector<1x32xf32>
    %4 = vector.broadcast %3 : vector<1x32xf32> to vector<24x32xf32>
    %5 = arith.addf %2, %4 : vector<24x32xf32>
    %cst_5 = arith.constant 0.000000e+00 : f32
    %6 = vector.broadcast %cst_5 : f32 to vector<24x32xf32>
    %7 = arith.maximumf %5, %6 : vector<24x32xf32>
    %8 = arith.truncf %7 : vector<24x32xf32> to vector<24x32xbf16>
    %c0_6 = arith.constant 0 : index
    %c0_7 = arith.constant 0 : index
    %9 = vector.load %arg6[%c0_6, %c0_7] : memref<16x32xbf16, #tpu.memory_space<vmem>>, vector<16x32xbf16>
    %cst_8 = arith.constant dense<0.000000e+00> : vector<24x32xf32>
    %10 = tpu.matmul %0, %9, %cst_8 {dimension_numbers = #tpu.dot_dimension_numbers<[1], [0], [0], [1], [0, 0, 1, 1], [], []>} : vector<24x16xbf16>, vector<16x32xbf16>, vector<24x32xf32> -> vector<24x32xf32>
    %c0_9 = arith.constant 0 : index
    %c0_10 = arith.constant 0 : index
    %11 = vector.load %arg7[%c0_9, %c0_10] : memref<1x32xf32, #tpu.memory_space<vmem>>, vector<1x32xf32>
    %12 = vector.broadcast %11 : vector<1x32xf32> to vector<24x32xf32>
    %13 = arith.addf %10, %12 : vector<24x32xf32>
    %c0_11 = arith.constant 0 : index
    %c0_12 = arith.constant 0 : index
    %14 = vector.load %arg4[%c0_11, %c0_12] : memref<32x32xbf16, #tpu.memory_space<vmem>>, vector<32x32xbf16>
    %cst_13 = arith.constant dense<0.000000e+00> : vector<24x32xf32>
    %15 = tpu.matmul %8, %14, %cst_13 {dimension_numbers = #tpu.dot_dimension_numbers<[1], [0], [0], [1], [0, 0, 1, 1], [], []>} : vector<24x32xbf16>, vector<32x32xbf16>, vector<24x32xf32> -> vector<24x32xf32>
    %c0_14 = arith.constant 0 : index
    %c0_15 = arith.constant 0 : index
    %16 = vector.load %arg5[%c0_14, %c0_15] : memref<1x32xf32, #tpu.memory_space<vmem>>, vector<1x32xf32>
    %17 = vector.broadcast %16 : vector<1x32xf32> to vector<24x32xf32>
    %18 = arith.addf %15, %17 : vector<24x32xf32>
    %19 = arith.addf %18, %13 : vector<24x32xf32>
    %cst_16 = arith.constant 0.000000e+00 : f32
    %20 = vector.broadcast %cst_16 : f32 to vector<24x32xf32>
    %21 = arith.maximumf %19, %20 : vector<24x32xf32>
    %22 = arith.truncf %21 : vector<24x32xf32> to vector<24x32xbf16>
    %c0_17 = arith.constant 0 : index
    %c0_18 = arith.constant 0 : index
    %23 = vector.load %arg8[%c0_17, %c0_18] : memref<24x32xbf16, #tpu.memory_space<vmem>>, vector<24x32xbf16>
    tpu.vector_store %arg8[%c0_17, %c0_18], %22 {strides = array<i32>} : memref<24x32xbf16, #tpu.memory_space<vmem>>, vector<24x32xbf16>,
    return
  }
  func.func @transform_0(%arg0: i32) -> (i32, i32) {
    %c0_i32 = arith.constant 0 : i32
    %c0_i32_0 = arith.constant 0 : i32
    return %arg0, %c0_i32 : i32, i32
  }
  func.func @transform_1(%arg0: i32) -> (i32, i32) {
    %c0_i32 = arith.constant 0 : i32
    %c0_i32_0 = arith.constant 0 : i32
    %c0_i32_1 = arith.constant 0 : i32
    return %c0_i32, %c0_i32_0 : i32, i32
  }
  func.func @transform_2(%arg0: i32) -> (i32, i32) {
    %c0_i32 = arith.constant 0 : i32
    %c0_i32_0 = arith.constant 0 : i32
    %c0_i32_1 = arith.constant 0 : i32
    return %c0_i32, %c0_i32_0 : i32, i32
  }
  func.func @transform_3(%arg0: i32) -> (i32, i32) {
    %c0_i32 = arith.constant 0 : i32
    %c0_i32_0 = arith.constant 0 : i32
    %c0_i32_1 = arith.constant 0 : i32
    return %c0_i32, %c0_i32_0 : i32, i32
  }
  func.func @transform_4(%arg0: i32) -> (i32, i32) {
    %c0_i32 = arith.constant 0 : i32
    %c0_i32_0 = arith.constant 0 : i32
    %c0_i32_1 = arith.constant 0 : i32
    return %c0_i32, %c0_i32_0 : i32, i32
  }
  func.func @transform_5(%arg0: i32) -> (i32, i32) {
    %c0_i32 = arith.constant 0 : i32
    %c0_i32_0 = arith.constant 0 : i32
    %c0_i32_1 = arith.constant 0 : i32
    return %c0_i32, %c0_i32_0 : i32, i32
  }
  func.func @transform_6(%arg0: i32) -> (i32, i32) {
    %c0_i32 = arith.constant 0 : i32
    %c0_i32_0 = arith.constant 0 : i32
    %c0_i32_1 = arith.constant 0 : i32
    return %c0_i32, %c0_i32_0 : i32, i32
  }
  func.func @transform_7(%arg0: i32) -> (i32, i32) {
    %c0_i32 = arith.constant 0 : i32
    %c0_i32_0 = arith.constant 0 : i32
    return %arg0, %c0_i32 : i32, i32
  }
}

module attributes {stable_mosaic.version = 11 : i64} {
  func.func @kernel(%arg0: i32, %arg1: memref<24x32xbf16, #tpu.memory_space<vmem>>, %arg2: memref<32x1xbf16, #tpu.memory_space<vmem>>, %arg3: memref<1x1xf32, #tpu.memory_space<vmem>>, %arg4: memref<24x1xbf16, #tpu.memory_space<vmem>>) attributes {dimension_semantics = [#tpu.dimension_semantics<parallel>], iteration_bounds = array<i64: 1>, scalar_prefetch = 0 : i64, scratch_operands = 0 : i64, tpu.core_type = #tpu.core_type<tc>, window_params = [{transform_indices = @transform_0, window_bounds = array<i64: 24, 32>}, {pipeline_mode = #tpu.pipeline_mode<synchronous>, transform_indices = @transform_1, window_bounds = array<i64: 32, 1>}, {pipeline_mode = #tpu.pipeline_mode<synchronous>, transform_indices = @transform_2, window_bounds = array<i64: 1, 1>}, {transform_indices = @transform_3, window_bounds = array<i64: 24, 1>}]} {
    %c0 = arith.constant 0 : index
    %c0_0 = arith.constant 0 : index
    %0 = vector.load %arg1[%c0, %c0_0] : memref<24x32xbf16, #tpu.memory_space<vmem>>, vector<24x32xbf16>
    %c0_1 = arith.constant 0 : index
    %c0_2 = arith.constant 0 : index
    %1 = vector.load %arg2[%c0_1, %c0_2] : memref<32x1xbf16, #tpu.memory_space<vmem>>, vector<32x1xbf16>
    %cst = arith.constant dense<0.000000e+00> : vector<24x1xf32>
    %2 = tpu.matmul %0, %1, %cst {dimension_numbers = #tpu.dot_dimension_numbers<[1], [0], [0], [1], [0, 0, 1, 1], [], []>} : vector<24x32xbf16>, vector<32x1xbf16>, vector<24x1xf32> -> vector<24x1xf32>
    %c0_3 = arith.constant 0 : index
    %c0_4 = arith.constant 0 : index
    %3 = vector.load %arg3[%c0_3, %c0_4] : memref<1x1xf32, #tpu.memory_space<vmem>>, vector<1x1xf32>
    %4 = vector.broadcast %3 : vector<1x1xf32> to vector<24x1xf32>
    %5 = arith.addf %2, %4 : vector<24x1xf32>
    %6 = arith.truncf %5 : vector<24x1xf32> to vector<24x1xbf16>
    %c0_5 = arith.constant 0 : index
    %c0_6 = arith.constant 0 : index
    %7 = vector.load %arg4[%c0_5, %c0_6] : memref<24x1xbf16, #tpu.memory_space<vmem>>, vector<24x1xbf16>
    tpu.vector_store %arg4[%c0_5, %c0_6], %6 {strides = array<i32>} : memref<24x1xbf16, #tpu.memory_space<vmem>>, vector<24x1xbf16>,
    return
  }
  func.func @transform_0(%arg0: i32) -> (i32, i32) {
    %c0_i32 = arith.constant 0 : i32
    %c0_i32_0 = arith.constant 0 : i32
    return %arg0, %c0_i32 : i32, i32
  }
  func.func @transform_1(%arg0: i32) -> (i32, i32) {
    %c0_i32 = arith.constant 0 : i32
    %c0_i32_0 = arith.constant 0 : i32
    %c0_i32_1 = arith.constant 0 : i32
    return %c0_i32, %c0_i32_0 : i32, i32
  }
  func.func @transform_2(%arg0: i32) -> (i32, i32) {
    %c0_i32 = arith.constant 0 : i32
    %c0_i32_0 = arith.constant 0 : i32
    %c0_i32_1 = arith.constant 0 : i32
    return %c0_i32, %c0_i32_0 : i32, i32
  }
  func.func @transform_3(%arg0: i32) -> (i32, i32) {
    %c0_i32 = arith.constant 0 : i32
    %c0_i32_0 = arith.constant 0 : i32
    return %arg0, %c0_i32 : i32, i32
  }
}

</mosaic_0001>

<llo_original>
// kernel: network_forward.13
$region0: #{network_forward.13}
  #allocation0 [shape = 'u32[]', space=smem, size = 0x4, offset = 0x4, fixed_abs, tag = 'smem constant byte address 0x4 - core index']
  #allocation1 [shape = 'u32[72,128]{1,0:T(1,128)}', space=vmem, size = 0x9000, scoped, tag = 'internal scratch']
  %s0 = inlined_call_operand.vmem [shape: bf16[1922,25], index: 0, kind: input, shape index: {}]
  %s1 = inlined_call_operand.vmem [shape: bf16[25,8], index: 1, kind: input, shape index: {}]
  %s2 = inlined_call_operand.vmem [shape: f32[1,8], index: 2, kind: input, shape index: {}]
  %s3 = inlined_call_operand.vmem [shape: bf16[1922,8], index: 3, kind: output, shape index: {}]
  %s4 = sld [smem:[#allocation0]]
  $region89: #{network_forward.13} parent=0
    _
  %s6 = ssub.s32 1, %s4
  %s7 = scalar_select 0, %s6, %s4
  $region1: #{network_forward.13} parent=0
    #allocation2 [shape = 'u8[495616]{0}', space=vmem, size = 0x79000, scoped, tag = 'output window, operand 0']
    loop: start=0, step=1, limit=4
    $region2: #{network_forward.13} parent=1 // loop_pre_header
      _
    $region3: #{network_forward.13} parent=1 // loop_header
      %s9 = sphi 0, %s13
      %p10 = scmp.ge.s32.totalorder %s9, 4
      %s19 = sphi 0, %s21
      %s22 = sphi 0, %s19
      %s23 = sphi 0, %s22
      %s39 = sphi 0, %s23
      %s43 = sphi 0, %s43
      %s45 = sphi 0, %s43
      %s46 = sphi 0, %s45
      %s60 = sphi 0, %s46
      %s64 = sphi 0, %s64
      %s66 = sphi 0, %s64
      %s67 = sphi 0, %s66
      %s81 = sphi 0, %s67
      %s87 = sphi 0, %s89
      %s90 = sphi 0, %s87
      %s91 = sphi 0, %s90
      %s107 = sphi 0, %s91
    $region4: #{network_forward.13} parent=1 // loop_header_branch
      %12 = sbr.rel (%p10) target = $region8
    $region5: #{network_forward.13} parent=1 // loop_body
      %s14 = ssub.s32 %s9, 1
      %s15 = ssub.s32 %s9, 2
      %s16 = sadd.s32 %s9, 1
      %s17 = ssub.s32 %s9, %s16
      %p18 = scmp.eq.s32.totalorder %s17, 0
      %s20 = sadd.s32 %s19, 1
      %s21 = scalar_select %p18, %s19, %s20
      %p24 = pneg %p18
      %p25 = scmp.eq.s32.totalorder %s9, 1
      %p26 = por %p24, %p25
      %p27 = scmp.ne.s32.totalorder %s19, %s22
      %p28 = scmp.eq.s32.totalorder %s9, 0
      %p29 = por %p27, %p28
      %p30 = scmp.ne.s32.totalorder %s19, %s22
      %p31 = scmp.eq.s32.totalorder %s14, 1
      %p32 = por %p30, %p31
      %p33 = scmp.ne.s32.totalorder %s22, %s23
      %p34 = scmp.eq.s32.totalorder %s14, 0
      %p35 = por %p33, %p34
      %p36 = scmp.ne.s32.totalorder %s22, %s23
      %p37 = scmp.eq.s32.totalorder %s15, 1
      %p38 = por %p36, %p37
      %p40 = scmp.ne.s32.totalorder %s23, %s39
      %p41 = scmp.eq.s32.totalorder %s15, 0
      %p42 = por %p40, %p41
      %s44 = sadd.s32 %s43, 1
      %p47 = scmp.eq.s32.totalorder %s9, 1
      %p48 = scmp.ne.s32.totalorder %s43, %s45
      %p49 = scmp.eq.s32.totalorder %s9, 0
      %p50 = por %p48, %p49
      %p51 = scmp.ne.s32.totalorder %s43, %s45
      %p52 = scmp.eq.s32.totalorder %s14, 1
      %p53 = por %p51, %p52
      %p54 = scmp.ne.s32.totalorder %s45, %s46
      %p55 = scmp.eq.s32.totalorder %s14, 0
      %p56 = por %p54, %p55
      %p57 = scmp.ne.s32.totalorder %s45, %s46
      %p58 = scmp.eq.s32.totalorder %s15, 1
      %p59 = por %p57, %p58
      %p61 = scmp.ne.s32.totalorder %s46, %s60
      %p62 = scmp.eq.s32.totalorder %s15, 0
      %p63 = por %p61, %p62
      %s65 = sadd.s32 %s64, 1
      %p68 = scmp.eq.s32.totalorder %s9, 1
      %p69 = scmp.ne.s32.totalorder %s64, %s66
      %p70 = scmp.eq.s32.totalorder %s9, 0
      %p71 = por %p69, %p70
      %p72 = scmp.ne.s32.totalorder %s64, %s66
      %p73 = scmp.eq.s32.totalorder %s14, 1
      %p74 = por %p72, %p73
      %p75 = scmp.ne.s32.totalorder %s66, %s67
      %p76 = scmp.eq.s32.totalorder %s14, 0
      %p77 = por %p75, %p76
      %p78 = scmp.ne.s32.totalorder %s66, %s67
      %p79 = scmp.eq.s32.totalorder %s15, 1
      %p80 = por %p78, %p79
      %p82 = scmp.ne.s32.totalorder %s67, %s81
      %p83 = scmp.eq.s32.totalorder %s15, 0
      %p84 = por %p82, %p83
      %s85 = ssub.s32 %s9, %s16
      %p86 = scmp.eq.s32.totalorder %s85, 0
      %s88 = sadd.s32 %s87, 1
      %s89 = scalar_select %p86, %s87, %s88
      %p92 = pneg %p86
      %p93 = scmp.eq.s32.totalorder %s9, 1
      %p94 = por %p92, %p93
      %p95 = scmp.ne.s32.totalorder %s87, %s90
      %p96 = scmp.eq.s32.totalorder %s9, 0
      %p97 = por %p95, %p96
      %p98 = scmp.ne.s32.totalorder %s87, %s90
      %p99 = scmp.eq.s32.totalorder %s14, 1
      %p100 = por %p98, %p99
      %p101 = scmp.ne.s32.totalorder %s90, %s91
      %p102 = scmp.eq.s32.totalorder %s14, 0
      %p103 = por %p101, %p102
      %p104 = scmp.ne.s32.totalorder %s90, %s91
      %p105 = scmp.eq.s32.totalorder %s15, 1
      %p106 = por %p104, %p105
      %p108 = scmp.ne.s32.totalorder %s91, %s107
      %p109 = scmp.eq.s32.totalorder %s15, 0
      %p110 = por %p108, %p109
      %p111 = scmp.le.s32.totalorder 1, %s9
      %p112 = scmp.lt.s32.totalorder %s9, 3
      %p113 = pnand %p111, %p112
      %p114 = pneg %p113
      // Predicated region
      $region9: #{network_forward.13} parent=5 // pred_check
        _
      $region10: #{network_forward.13} parent=5 // pred_check_branch
        %116 = sbr.rel (%p113) target = $region12
      $region11: #{network_forward.13} parent=5 // pred_region
        %s117 = ssub.s32 %s9, 1
        // Predicated region
        $region13: #{network_forward.13} parent=11 // pred_check
          %p118 = pneg %p56
        $region14: #{network_forward.13} parent=11 // pred_check_branch
          %120 = sbr.rel (%p118) target = $region16
        $region15: #{network_forward.13} parent=11 // pred_region
          _
        $region16: #{network_forward.13} parent=11 // pred_fallthru
          _
        // Predicated region
        $region17: #{network_forward.13} parent=11 // pred_check
          %p121 = pneg %p77
        $region18: #{network_forward.13} parent=11 // pred_check_branch
          %123 = sbr.rel (%p121) target = $region20
        $region19: #{network_forward.13} parent=11 // pred_region
          _
        $region20: #{network_forward.13} parent=11 // pred_fallthru
          _
      $region12: #{network_forward.13} parent=5 // pred_fallthru
        _
      %p124 = scmp.lt.s32.totalorder %s9, 2
      // Predicated region
      $region21: #{network_forward.13} parent=5 // pred_check
        %p125 = pneg %p124
      $region22: #{network_forward.13} parent=5 // pred_check_branch
        %127 = sbr.rel (%p125) target = $region24
      $region23: #{network_forward.13} parent=5 // pred_region
        // Predicated region
        $region25: #{network_forward.13} parent=23 // pred_check
          %p128 = pneg %p29
        $region26: #{network_forward.13} parent=23 // pred_check_branch
          %130 = sbr.rel (%p128) target = $region28
        $region27: #{network_forward.13} parent=23 // pred_region
          %s131 = smul.u32 121, %s9
          %s132 = ssub.s32 241, %s131
          %p133 = scmp.lt.s32.totalorder %s132, 121
          %s134 = scalar_select %p133, %s132, 121
          %s135 = smul.u32 4, %s134
          %p136 = scmp.lt.s32.totalorder %s131, 240
          %s137 = scalar_select %p136, %s131, 240
          %s138 = smul.addr %s137, 4
          %s139 = scalar_lea.vmem %s0, %s138
          %s140 = smul.u32 121, %s9
          %s141 = ssub.s32 241, %s140
          %p142 = scmp.lt.s32.totalorder %s141, 121
          %s143 = scalar_select %p142, %s141, 121
          %s144 = smul.u32 4, %s143
        $region28: #{network_forward.13} parent=23 // pred_fallthru
          _
      $region24: #{network_forward.13} parent=5 // pred_fallthru
        _
      %p145 = scmp.le.s32.totalorder 1, %s9
      %p146 = scmp.lt.s32.totalorder %s9, 3
      %p147 = pnand %p145, %p146
      %p148 = pneg %p147
      // Predicated region
      $region29: #{network_forward.13} parent=5 // pred_check
        _
      $region30: #{network_forward.13} parent=5 // pred_check_branch
        %150 = sbr.rel (%p147) target = $region32
      $region31: #{network_forward.13} parent=5 // pred_region
        %s151 = ssub.s32 %s9, 1
        %s152 = smul.u32 121, %s14
        %s153 = ssub.s32 241, %s152
        %p154 = scmp.lt.s32.totalorder %s153, 121
        %s155 = scalar_select %p154, %s153, 121
        %s156 = smul.u32 4, %s155
        %p157 = scmp.lt.s32.totalorder %s152, 240
        %s158 = scalar_select %p157, %s152, 240
        %s159 = smul.addr %s158, 4
        %s160 = scalar_lea.vmem %s0, %s159
        %p161 = pneg %p35
        %p162 = pneg %p32
        %p163 = pneg %p56
        %p164 = pneg %p53
        %p165 = pneg %p77
        %p166 = pneg %p74
        %p167 = pneg %p103
        %p168 = pneg %p100
        %s169 = sand.u32 %s90, 1
        %s170 = sand.u32 %s90, 1
        %s171 = smul.addr %s170, 484
        %s172 = scalar_lea.vmem [#allocation2], %s171
        %s173 = smul.u32 121, %s14
        %s174 = ssub.s32 241, %s173
        %p175 = scmp.lt.s32.totalorder %s174, 121
        %s176 = scalar_select %p175, %s174, 121
        %s177 = smul.u32 4, %s176
        %p178 = scmp.lt.s32.totalorder %s173, 240
        %s179 = scalar_select %p178, %s173, 240
        %s180 = smul.addr %s179, 4
        %s181 = scalar_lea.vmem %s0, %s180
        %s182 = smul.u32 121, %s14
        %s183 = ssub.s32 241, %s182
        %p184 = scmp.lt.s32.totalorder %s183, 121
        %s185 = scalar_select %p184, %s183, 121
        %s186 = smul.u32 4, %s185
        %s187 = smul.u32 121, %s14
        %s188 = ssub.s32 241, %s187
        %p189 = scmp.lt.s32.totalorder %s188, 121
        %s190 = scalar_select %p189, %s188, 121
        %s191 = smul.u32 4, %s190
        %v193 = vld [vmem:[%s181] sm:$0xf]
        %v194 = vld [vmem:[%s181 + $0x4] sm:$0xf]
        %v195 = vld [vmem:[%s181 + $0x8] sm:$0xf]
        %v196 = vld [vmem:[%s181 + $0xc] sm:$0xf]
        %v197 = vld [vmem:[%s181 + $0x10] sm:$0xf]
        %v198 = vld [vmem:[%s181 + $0x14] sm:$0xf]
        %v199 = vld [vmem:[%s181 + $0x18] sm:$0xf]
        %v200 = vld [vmem:[%s181 + $0x1c] sm:$0xf]
        %v201 = vld [vmem:[%s181 + $0x20] sm:$0xf]
        %v202 = vld [vmem:[%s181 + $0x24] sm:$0xf]
        %v203 = vld [vmem:[%s181 + $0x28] sm:$0xf]
        %v204 = vld [vmem:[%s181 + $0x2c] sm:$0xf]
        %v205 = vld [vmem:[%s181 + $0x30] sm:$0xf]
        %v206 = vld [vmem:[%s181 + $0x34] sm:$0xf]
        %v207 = vld [vmem:[%s181 + $0x38] sm:$0xf]
        %v208 = vld [vmem:[%s181 + $0x3c] sm:$0xf]
        %v209 = vld [vmem:[%s181 + $0x40] sm:$0xf]
        %v210 = vld [vmem:[%s181 + $0x44] sm:$0xf]
        %v211 = vld [vmem:[%s181 + $0x48] sm:$0xf]
        %v212 = vld [vmem:[%s181 + $0x4c] sm:$0xf]
        %v213 = vld [vmem:[%s181 + $0x50] sm:$0xf]
        %v214 = vld [vmem:[%s181 + $0x54] sm:$0xf]
        %v215 = vld [vmem:[%s181 + $0x58] sm:$0xf]
        %v216 = vld [vmem:[%s181 + $0x5c] sm:$0xf]
        %v217 = vld [vmem:[%s181 + $0x60] sm:$0xf]
        %v218 = vld [vmem:[%s181 + $0x64] sm:$0xf]
        %v219 = vld [vmem:[%s181 + $0x68] sm:$0xf]
        %v220 = vld [vmem:[%s181 + $0x6c] sm:$0xf]
        %v221 = vld [vmem:[%s181 + $0x70] sm:$0xf]
        %v222 = vld [vmem:[%s181 + $0x74] sm:$0xf]
        %v223 = vld [vmem:[%s181 + $0x78] sm:$0xf]
        %v224 = vld [vmem:[%s181 + $0x7c] sm:$0xf]
        %v225 = vld [vmem:[%s181 + $0x80] sm:$0xf]
        %v226 = vld [vmem:[%s181 + $0x84] sm:$0xf]
        %v227 = vld [vmem:[%s181 + $0x88] sm:$0xf]
        %v228 = vld [vmem:[%s181 + $0x8c] sm:$0xf]
        %v229 = vld [vmem:[%s181 + $0x90] sm:$0xf]
        %v230 = vld [vmem:[%s181 + $0x94] sm:$0xf]
        %v231 = vld [vmem:[%s181 + $0x98] sm:$0xf]
        %v232 = vld [vmem:[%s181 + $0x9c] sm:$0xf]
        %v233 = vld [vmem:[%s181 + $0xa0] sm:$0xf]
        %v234 = vld [vmem:[%s181 + $0xa4] sm:$0xf]
        %v235 = vld [vmem:[%s181 + $0xa8] sm:$0xf]
        %v236 = vld [vmem:[%s181 + $0xac] sm:$0xf]
        %v237 = vld [vmem:[%s181 + $0xb0] sm:$0xf]
        %v238 = vld [vmem:[%s181 + $0xb4] sm:$0xf]
        %v239 = vld [vmem:[%s181 + $0xb8] sm:$0xf]
        %v240 = vld [vmem:[%s181 + $0xbc] sm:$0xf]
        %v241 = vld [vmem:[%s181 + $0xc0] sm:$0xf]
        %v242 = vld [vmem:[%s181 + $0xc4] sm:$0xf]
        %v243 = vld [vmem:[%s181 + $0xc8] sm:$0xf]
        %v244 = vld [vmem:[%s181 + $0xcc] sm:$0xf]
        %v245 = vld [vmem:[%s181 + $0xd0] sm:$0xf]
        %v246 = vld [vmem:[%s181 + $0xd4] sm:$0xf]
        %v247 = vld [vmem:[%s181 + $0xd8] sm:$0xf]
        %v248 = vld [vmem:[%s181 + $0xdc] sm:$0xf]
        %v249 = vld [vmem:[%s181 + $0xe0] sm:$0xf]
        %v250 = vld [vmem:[%s181 + $0xe4] sm:$0xf]
        %v251 = vld [vmem:[%s181 + $0xe8] sm:$0xf]
        %v252 = vld [vmem:[%s181 + $0xec] sm:$0xf]
        %v253 = vld [vmem:[%s181 + $0xf0] sm:$0xf]
        %v254 = vld [vmem:[%s181 + $0xf4] sm:$0xf]
        %v255 = vld [vmem:[%s181 + $0xf8] sm:$0xf]
        %v256 = vld [vmem:[%s181 + $0xfc] sm:$0xf]
        %v257 = vld [vmem:[%s181 + $0x100] sm:$0xf]
        %v258 = vld [vmem:[%s181 + $0x104] sm:$0xf]
        %v259 = vld [vmem:[%s181 + $0x108] sm:$0xf]
        %v260 = vld [vmem:[%s181 + $0x10c] sm:$0xf]
        %v261 = vld [vmem:[%s181 + $0x110] sm:$0xf]
        %v262 = vld [vmem:[%s181 + $0x114] sm:$0xf]
        %v263 = vld [vmem:[%s181 + $0x118] sm:$0xf]
        %v264 = vld [vmem:[%s181 + $0x11c] sm:$0xf]
        %v265 = vld [vmem:[%s181 + $0x120] sm:$0xf]
        %v266 = vld [vmem:[%s181 + $0x124] sm:$0xf]
        %v267 = vld [vmem:[%s181 + $0x128] sm:$0xf]
        %v268 = vld [vmem:[%s181 + $0x12c] sm:$0xf]
        %v269 = vld [vmem:[%s181 + $0x130] sm:$0xf]
        %v270 = vld [vmem:[%s181 + $0x134] sm:$0xf]
        %v271 = vld [vmem:[%s181 + $0x138] sm:$0xf]
        %v272 = vld [vmem:[%s181 + $0x13c] sm:$0xf]
        %v273 = vld [vmem:[%s181 + $0x140] sm:$0xf]
        %v274 = vld [vmem:[%s181 + $0x144] sm:$0xf]
        %v275 = vld [vmem:[%s181 + $0x148] sm:$0xf]
        %v276 = vld [vmem:[%s181 + $0x14c] sm:$0xf]
        %v277 = vld [vmem:[%s181 + $0x150] sm:$0xf]
        %v278 = vld [vmem:[%s181 + $0x154] sm:$0xf]
        %v279 = vld [vmem:[%s181 + $0x158] sm:$0xf]
        %v280 = vld [vmem:[%s181 + $0x15c] sm:$0xf]
        %v281 = vld [vmem:[%s181 + $0x160] sm:$0xf]
        %v282 = vld [vmem:[%s181 + $0x164] sm:$0xf]
        %v283 = vld [vmem:[%s181 + $0x168] sm:$0xf]
        %v284 = vld [vmem:[%s181 + $0x16c] sm:$0xf]
        %v285 = vld [vmem:[%s181 + $0x170] sm:$0xf]
        %v286 = vld [vmem:[%s181 + $0x174] sm:$0xf]
        %v287 = vld [vmem:[%s181 + $0x178] sm:$0xf]
        %v288 = vld [vmem:[%s181 + $0x17c] sm:$0xf]
        %v289 = vld [vmem:[%s181 + $0x180] sm:$0xf]
        %v290 = vld [vmem:[%s181 + $0x184] sm:$0xf]
        %v291 = vld [vmem:[%s181 + $0x188] sm:$0xf]
        %v292 = vld [vmem:[%s181 + $0x18c] sm:$0xf]
        %v293 = vld [vmem:[%s181 + $0x190] sm:$0xf]
        %v294 = vld [vmem:[%s181 + $0x194] sm:$0xf]
        %v295 = vld [vmem:[%s181 + $0x198] sm:$0xf]
        %v296 = vld [vmem:[%s181 + $0x19c] sm:$0xf]
        %v297 = vld [vmem:[%s181 + $0x1a0] sm:$0xf]
        %v298 = vld [vmem:[%s181 + $0x1a4] sm:$0xf]
        %v299 = vld [vmem:[%s181 + $0x1a8] sm:$0xf]
        %v300 = vld [vmem:[%s181 + $0x1ac] sm:$0xf]
        %v301 = vld [vmem:[%s181 + $0x1b0] sm:$0xf]
        %v302 = vld [vmem:[%s181 + $0x1b4] sm:$0xf]
        %v303 = vld [vmem:[%s181 + $0x1b8] sm:$0xf]
        %v304 = vld [vmem:[%s181 + $0x1bc] sm:$0xf]
        %v305 = vld [vmem:[%s181 + $0x1c0] sm:$0xf]
        %v306 = vld [vmem:[%s181 + $0x1c4] sm:$0xf]
        %v307 = vld [vmem:[%s181 + $0x1c8] sm:$0xf]
        %v308 = vld [vmem:[%s181 + $0x1cc] sm:$0xf]
        %v309 = vld [vmem:[%s181 + $0x1d0] sm:$0xf]
        %v310 = vld [vmem:[%s181 + $0x1d4] sm:$0xf]
        %v311 = vld [vmem:[%s181 + $0x1d8] sm:$0xf]
        %v312 = vld [vmem:[%s181 + $0x1dc] sm:$0xf]
        %v313 = vld [vmem:[%s181 + $0x1e0] sm:$0xf]
        %v314 = vld [vmem:[%s1] sm:$0xf]
        %v315 = vld [vmem:[%s1 + $0x4] sm:$0xf]
        %v316 = vld [vmem:[%s1 + $0x8] sm:$0xf]
        %v317 = vld [vmem:[%s1 + $0xc] sm:$0x1]
        %v318 = vld [vmem:[%s2] sm:$0x1]
        %v320 = vperm.slane %v318, 0
        %v443 = vunpack.c.l.b16 %v193
        %v444 = vunpack.c.l.b16 %v194
        %v445 = vunpack.c.l.b16 %v195
        %v446 = vunpack.c.l.b16 %v196
        %v447 = vunpack.c.l.b16 %v197
        %v448 = vunpack.c.l.b16 %v198
        %v449 = vunpack.c.l.b16 %v199
        %v450 = vunpack.c.l.b16 %v200
        %v451 = vunpack.c.l.b16 %v201
        %v452 = vunpack.c.l.b16 %v202
        %v453 = vunpack.c.l.b16 %v203
        %v454 = vunpack.c.l.b16 %v204
        %v455 = vunpack.c.l.b16 %v205
        %v456 = vunpack.c.l.b16 %v206
        %v457 = vunpack.c.l.b16 %v207
        %v458 = vunpack.c.l.b16 %v208
        %v459 = vunpack.c.l.b16 %v209
        %v460 = vunpack.c.l.b16 %v210
        %v461 = vunpack.c.l.b16 %v211
        %v462 = vunpack.c.l.b16 %v212
        %v463 = vunpack.c.l.b16 %v213
        %v464 = vunpack.c.l.b16 %v214
        %v465 = vunpack.c.l.b16 %v215
        %v466 = vunpack.c.l.b16 %v216
        %v467 = vunpack.c.l.b16 %v217
        %v468 = vunpack.c.l.b16 %v218
        %v469 = vunpack.c.l.b16 %v219
        %v470 = vunpack.c.l.b16 %v220
        %v471 = vunpack.c.l.b16 %v221
        %v472 = vunpack.c.l.b16 %v222
        %v473 = vunpack.c.l.b16 %v223
        %v474 = vunpack.c.l.b16 %v224
        %v475 = vunpack.c.l.b16 %v225
        %v476 = vunpack.c.l.b16 %v226
        %v477 = vunpack.c.l.b16 %v227
        %v478 = vunpack.c.l.b16 %v228
        %v479 = vunpack.c.l.b16 %v229
        %v480 = vunpack.c.l.b16 %v230
        %v481 = vunpack.c.l.b16 %v231
        %v482 = vunpack.c.l.b16 %v232
        %v483 = vunpack.c.l.b16 %v233
        %v484 = vunpack.c.l.b16 %v234
        %v485 = vunpack.c.l.b16 %v235
        %v486 = vunpack.c.l.b16 %v236
        %v487 = vunpack.c.l.b16 %v237
        %v488 = vunpack.c.l.b16 %v238
        %v489 = vunpack.c.l.b16 %v239
        %v490 = vunpack.c.l.b16 %v240
        %v491 = vunpack.c.l.b16 %v241
        %v492 = vunpack.c.l.b16 %v242
        %v493 = vunpack.c.l.b16 %v243
        %v494 = vunpack.c.l.b16 %v244
        %v495 = vunpack.c.l.b16 %v245
        %v496 = vunpack.c.l.b16 %v246
        %v497 = vunpack.c.l.b16 %v247
        %v498 = vunpack.c.l.b16 %v248
        %v499 = vunpack.c.l.b16 %v249
        %v500 = vunpack.c.l.b16 %v250
        %v501 = vunpack.c.l.b16 %v251
        %v502 = vunpack.c.l.b16 %v252
        %v503 = vunpack.c.l.b16 %v253
        %v504 = vunpack.c.l.b16 %v254
        %v505 = vunpack.c.l.b16 %v255
        %v506 = vunpack.c.l.b16 %v256
        %v507 = vunpack.c.l.b16 %v257
        %v508 = vunpack.c.l.b16 %v258
        %v509 = vunpack.c.l.b16 %v259
        %v510 = vunpack.c.l.b16 %v260
        %v511 = vunpack.c.l.b16 %v261
        %v512 = vunpack.c.l.b16 %v262
        %v513 = vunpack.c.l.b16 %v263
        %v514 = vunpack.c.l.b16 %v264
        %v515 = vunpack.c.l.b16 %v265
        %v516 = vunpack.c.l.b16 %v266
        %v517 = vunpack.c.l.b16 %v267
        %v518 = vunpack.c.l.b16 %v268
        %v519 = vunpack.c.l.b16 %v269
        %v520 = vunpack.c.l.b16 %v270
        %v521 = vunpack.c.l.b16 %v271
        %v522 = vunpack.c.l.b16 %v272
        %v523 = vunpack.c.l.b16 %v273
        %v524 = vunpack.c.l.b16 %v274
        %v525 = vunpack.c.l.b16 %v275
        %v526 = vunpack.c.l.b16 %v276
        %v527 = vunpack.c.l.b16 %v277
        %v528 = vunpack.c.l.b16 %v278
        %v529 = vunpack.c.l.b16 %v279
        %v530 = vunpack.c.l.b16 %v280
        %v531 = vunpack.c.l.b16 %v281
        %v532 = vunpack.c.l.b16 %v282
        %v533 = vunpack.c.l.b16 %v283
        %v534 = vunpack.c.l.b16 %v284
        %v535 = vunpack.c.l.b16 %v285
        %v536 = vunpack.c.l.b16 %v286
        %v537 = vunpack.c.l.b16 %v287
        %v538 = vunpack.c.l.b16 %v288
        %v539 = vunpack.c.l.b16 %v289
        %v540 = vunpack.c.l.b16 %v290
        %v541 = vunpack.c.l.b16 %v291
        %v542 = vunpack.c.l.b16 %v292
        %v543 = vunpack.c.l.b16 %v293
        %v544 = vunpack.c.l.b16 %v294
        %v545 = vunpack.c.l.b16 %v295
        %v546 = vunpack.c.l.b16 %v296
        %v547 = vunpack.c.l.b16 %v297
        %v548 = vunpack.c.l.b16 %v298
        %v549 = vunpack.c.l.b16 %v299
        %v550 = vunpack.c.l.b16 %v300
        %v551 = vunpack.c.l.b16 %v301
        %v552 = vunpack.c.l.b16 %v302
        %v553 = vunpack.c.l.b16 %v303
        %v554 = vunpack.c.l.b16 %v304
        %v555 = vunpack.c.l.b16 %v305
        %v556 = vunpack.c.l.b16 %v306
        %v557 = vunpack.c.l.b16 %v307
        %v558 = vunpack.c.l.b16 %v308
        %v559 = vunpack.c.l.b16 %v309
        %v560 = vunpack.c.l.b16 %v310
        %v561 = vunpack.c.l.b16 %v311
        %v562 = vunpack.c.l.b16 %v312
        %v563 = vunpack.c.l.b16 %v313
        %v564 = vpack.c.b16 %v444, %v443
        %v565 = vpack.c.b16 %v446, %v445
        %v566 = vpack.c.b16 %v448, %v447
        %v567 = vpack.c.b16 %v450, %v449
        %v568 = vpack.c.b16 %v452, %v451
        %v569 = vpack.c.b16 %v454, %v453
        %v570 = vpack.c.b16 %v456, %v455
        %v571 = vpack.c.b16 %v458, %v457
        %v572 = vpack.c.b16 %v460, %v459
        %v573 = vpack.c.b16 %v462, %v461
        %v574 = vpack.c.b16 %v464, %v463
        %v575 = vpack.c.b16 %v466, %v465
        %v576 = vpack.c.b16 %v468, %v467
        %v577 = vpack.c.b16 %v470, %v469
        %v578 = vpack.c.b16 %v472, %v471
        %v579 = vpack.c.b16 %v474, %v473
        %v580 = vpack.c.b16 %v476, %v475
        %v581 = vpack.c.b16 %v478, %v477
        %v582 = vpack.c.b16 %v480, %v479
        %v583 = vpack.c.b16 %v482, %v481
        %v584 = vpack.c.b16 %v484, %v483
        %v585 = vpack.c.b16 %v486, %v485
        %v586 = vpack.c.b16 %v488, %v487
        %v587 = vpack.c.b16 %v490, %v489
        %v588 = vpack.c.b16 %v492, %v491
        %v589 = vpack.c.b16 %v494, %v493
        %v590 = vpack.c.b16 %v496, %v495
        %v591 = vpack.c.b16 %v498, %v497
        %v592 = vpack.c.b16 %v500, %v499
        %v593 = vpack.c.b16 %v502, %v501
        %v594 = vpack.c.b16 %v504, %v503
        %v595 = vpack.c.b16 %v506, %v505
        %v596 = vpack.c.b16 %v508, %v507
        %v597 = vpack.c.b16 %v510, %v509
        %v598 = vpack.c.b16 %v512, %v511
        %v599 = vpack.c.b16 %v514, %v513
        %v600 = vpack.c.b16 %v516, %v515
        %v601 = vpack.c.b16 %v518, %v517
        %v602 = vpack.c.b16 %v520, %v519
        %v603 = vpack.c.b16 %v522, %v521
        %v604 = vpack.c.b16 %v524, %v523
        %v605 = vpack.c.b16 %v526, %v525
        %v606 = vpack.c.b16 %v528, %v527
        %v607 = vpack.c.b16 %v530, %v529
        %v608 = vpack.c.b16 %v532, %v531
        %v609 = vpack.c.b16 %v534, %v533
        %v610 = vpack.c.b16 %v536, %v535
        %v611 = vpack.c.b16 %v538, %v537
        %v612 = vpack.c.b16 %v540, %v539
        %v613 = vpack.c.b16 %v542, %v541
        %v614 = vpack.c.b16 %v544, %v543
        %v615 = vpack.c.b16 %v546, %v545
        %v616 = vpack.c.b16 %v548, %v547
        %v617 = vpack.c.b16 %v550, %v549
        %v618 = vpack.c.b16 %v552, %v551
        %v619 = vpack.c.b16 %v554, %v553
        %v620 = vpack.c.b16 %v556, %v555
        %v621 = vpack.c.b16 %v558, %v557
        %v622 = vpack.c.b16 %v560, %v559
        %v623 = vpack.c.b16 %v562, %v561
        %v624 = vpack.c.b16 %v563, %v563
        %v629 = vunpack.c.l.b16 %v314
        %v630 = vunpack.c.l.b16 %v315
        %v631 = vunpack.c.l.b16 %v316
        %v632 = vunpack.c.l.b16 %v317
        %v633 = vpack.c.b16 %v630, %v629
        %v634 = vpack.c.b16 %v632, %v631
        %vm636 = vcmask 203776
        %v638 = vsel %vm636, %v564, 0
        %v641 = vsel %vm636, %v565, 0
        %v644 = vsel %vm636, %v566, 0
        %v647 = vsel %vm636, %v567, 0
        %v650 = vsel %vm636, %v568, 0
        %v653 = vsel %vm636, %v569, 0
        %v656 = vsel %vm636, %v570, 0
        %v659 = vsel %vm636, %v571, 0
        %v662 = vsel %vm636, %v572, 0
        %v665 = vsel %vm636, %v573, 0
        %v668 = vsel %vm636, %v574, 0
        %v671 = vsel %vm636, %v575, 0
        %v674 = vsel %vm636, %v576, 0
        %v677 = vsel %vm636, %v577, 0
        %v680 = vsel %vm636, %v578, 0
        %v683 = vsel %vm636, %v579, 0
        %v686 = vsel %vm636, %v580, 0
        %v689 = vsel %vm636, %v581, 0
        %v692 = vsel %vm636, %v582, 0
        %v695 = vsel %vm636, %v583, 0
        %v698 = vsel %vm636, %v584, 0
        %v701 = vsel %vm636, %v585, 0
        %v704 = vsel %vm636, %v586, 0
        %v707 = vsel %vm636, %v587, 0
        %v710 = vsel %vm636, %v588, 0
        %v713 = vsel %vm636, %v589, 0
        %v716 = vsel %vm636, %v590, 0
        %v719 = vsel %vm636, %v591, 0
        %v722 = vsel %vm636, %v592, 0
        %v725 = vsel %vm636, %v593, 0
        %v728 = vsel %vm636, %v594, 0
        %v731 = vsel %vm636, %v595, 0
        %v734 = vsel %vm636, %v596, 0
        %v737 = vsel %vm636, %v597, 0
        %v740 = vsel %vm636, %v598, 0
        %v743 = vsel %vm636, %v599, 0
        %v746 = vsel %vm636, %v600, 0
        %v749 = vsel %vm636, %v601, 0
        %v752 = vsel %vm636, %v602, 0
        %v755 = vsel %vm636, %v603, 0
        %v758 = vsel %vm636, %v604, 0
        %v761 = vsel %vm636, %v605, 0
        %v764 = vsel %vm636, %v606, 0
        %v767 = vsel %vm636, %v607, 0
        %v770 = vsel %vm636, %v608, 0
        %v773 = vsel %vm636, %v609, 0
        %v776 = vsel %vm636, %v610, 0
        %v779 = vsel %vm636, %v611, 0
        %v782 = vsel %vm636, %v612, 0
        %v785 = vsel %vm636, %v613, 0
        %v788 = vsel %vm636, %v614, 0
        %v791 = vsel %vm636, %v615, 0
        %v794 = vsel %vm636, %v616, 0
        %v797 = vsel %vm636, %v617, 0
        %v800 = vsel %vm636, %v618, 0
        %v803 = vsel %vm636, %v619, 0
        %v806 = vsel %vm636, %v620, 0
        %v809 = vsel %vm636, %v621, 0
        %v812 = vsel %vm636, %v622, 0
        %v815 = vsel %vm636, %v623, 0
        %v818 = vsel %vm636, %v624, 0
        %vm820 = vcmask 1043456
        %vm821 = vcmask 1044480
        %v822 = vsel %vm820, 4294967295, 65535
        %v823 = vsel %vm821, %v822, 0
        %v825 = vand.u32 %v634, %v823
        %827 = vmatpush.bf16.msra.mxu0 0
        %828 = vmatpush.bf16.msra.mxu0 0
        %829 = vmatpush.bf16.msra.mxu0 0
        %830 = vmatpush.bf16.msra.mxu0 0
        %831 = vmatpush.bf16.msra.mxu0 0
        %832 = vmatpush.bf16.msra.mxu0 0
        %833 = vmatpush.bf16.msra.mxu0 %v825
        %834 = vmatpush.bf16.msra.mxu0 %v633
        %835 = vmatmul.bf16.gmra.mxu0 %v638
        %v836 = vpop.f32.mrf.mxu0
        %v837 = vadd.f32 %v320, %v836
        %v838 = vpop.f32.mrf.mxu0
        %v839 = vadd.f32 %v320, %v838
        %840 = vmatmul.bf16.gmra.mxu0 %v641
        %v841 = vpop.f32.mrf.mxu0
        %v842 = vadd.f32 %v320, %v841
        %v843 = vpop.f32.mrf.mxu0
        %v844 = vadd.f32 %v320, %v843
        %845 = vmatmul.bf16.gmra.mxu0 %v644
        %v846 = vpop.f32.mrf.mxu0
        %v847 = vadd.f32 %v320, %v846
        %v848 = vpop.f32.mrf.mxu0
        %v849 = vadd.f32 %v320, %v848
        %850 = vmatmul.bf16.gmra.mxu0 %v647
        %v851 = vpop.f32.mrf.mxu0
        %v852 = vadd.f32 %v320, %v851
        %v853 = vpop.f32.mrf.mxu0
        %v854 = vadd.f32 %v320, %v853
        %855 = vmatmul.bf16.gmra.mxu0 %v650
        %v856 = vpop.f32.mrf.mxu0
        %v857 = vadd.f32 %v320, %v856
        %v858 = vpop.f32.mrf.mxu0
        %v859 = vadd.f32 %v320, %v858
        %860 = vmatmul.bf16.gmra.mxu0 %v653
        %v861 = vpop.f32.mrf.mxu0
        %v862 = vadd.f32 %v320, %v861
        %v863 = vpop.f32.mrf.mxu0
        %v864 = vadd.f32 %v320, %v863
        %865 = vmatmul.bf16.gmra.mxu0 %v656
        %v866 = vpop.f32.mrf.mxu0
        %v867 = vadd.f32 %v320, %v866
        %v868 = vpop.f32.mrf.mxu0
        %v869 = vadd.f32 %v320, %v868
        %870 = vmatmul.bf16.gmra.mxu0 %v659
        %v871 = vpop.f32.mrf.mxu0
        %v872 = vadd.f32 %v320, %v871
        %v873 = vpop.f32.mrf.mxu0
        %v874 = vadd.f32 %v320, %v873
        %875 = vmatmul.bf16.gmra.mxu0 %v662
        %v876 = vpop.f32.mrf.mxu0
        %v877 = vadd.f32 %v320, %v876
        %v878 = vpop.f32.mrf.mxu0
        %v879 = vadd.f32 %v320, %v878
        %880 = vmatmul.bf16.gmra.mxu0 %v665
        %v881 = vpop.f32.mrf.mxu0
        %v882 = vadd.f32 %v320, %v881
        %v883 = vpop.f32.mrf.mxu0
        %v884 = vadd.f32 %v320, %v883
        %885 = vmatmul.bf16.gmra.mxu0 %v668
        %v886 = vpop.f32.mrf.mxu0
        %v887 = vadd.f32 %v320, %v886
        %v888 = vpop.f32.mrf.mxu0
        %v889 = vadd.f32 %v320, %v888
        %890 = vmatmul.bf16.gmra.mxu0 %v671
        %v891 = vpop.f32.mrf.mxu0
        %v892 = vadd.f32 %v320, %v891
        %v893 = vpop.f32.mrf.mxu0
        %v894 = vadd.f32 %v320, %v893
        %895 = vmatmul.bf16.gmra.mxu0 %v674
        %v896 = vpop.f32.mrf.mxu0
        %v897 = vadd.f32 %v320, %v896
        %v898 = vpop.f32.mrf.mxu0
        %v899 = vadd.f32 %v320, %v898
        %900 = vmatmul.bf16.gmra.mxu0 %v677
        %v901 = vpop.f32.mrf.mxu0
        %v902 = vadd.f32 %v320, %v901
        %v903 = vpop.f32.mrf.mxu0
        %v904 = vadd.f32 %v320, %v903
        %905 = vmatmul.bf16.gmra.mxu0 %v680
        %v906 = vpop.f32.mrf.mxu0
        %v907 = vadd.f32 %v320, %v906
        %v908 = vpop.f32.mrf.mxu0
        %v909 = vadd.f32 %v320, %v908
        %910 = vmatmul.bf16.gmra.mxu0 %v683
        %v911 = vpop.f32.mrf.mxu0
        %v912 = vadd.f32 %v320, %v911
        %v913 = vpop.f32.mrf.mxu0
        %v914 = vadd.f32 %v320, %v913
        %915 = vmatmul.bf16.gmra.mxu0 %v686
        %v916 = vpop.f32.mrf.mxu0
        %v917 = vadd.f32 %v320, %v916
        %v918 = vpop.f32.mrf.mxu0
        %v919 = vadd.f32 %v320, %v918
        %920 = vmatmul.bf16.gmra.mxu0 %v689
        %v921 = vpop.f32.mrf.mxu0
        %v922 = vadd.f32 %v320, %v921
        %v923 = vpop.f32.mrf.mxu0
        %v924 = vadd.f32 %v320, %v923
        %925 = vmatmul.bf16.gmra.mxu0 %v692
        %v926 = vpop.f32.mrf.mxu0
        %v927 = vadd.f32 %v320, %v926
        %v928 = vpop.f32.mrf.mxu0
        %v929 = vadd.f32 %v320, %v928
        %930 = vmatmul.bf16.gmra.mxu0 %v695
        %v931 = vpop.f32.mrf.mxu0
        %v932 = vadd.f32 %v320, %v931
        %v933 = vpop.f32.mrf.mxu0
        %v934 = vadd.f32 %v320, %v933
        %935 = vmatmul.bf16.gmra.mxu0 %v698
        %v936 = vpop.f32.mrf.mxu0
        %v937 = vadd.f32 %v320, %v936
        %v938 = vpop.f32.mrf.mxu0
        %v939 = vadd.f32 %v320, %v938
        %940 = vmatmul.bf16.gmra.mxu0 %v701
        %v941 = vpop.f32.mrf.mxu0
        %v942 = vadd.f32 %v320, %v941
        %v943 = vpop.f32.mrf.mxu0
        %v944 = vadd.f32 %v320, %v943
        %945 = vmatmul.bf16.gmra.mxu0 %v704
        %v946 = vpop.f32.mrf.mxu0
        %v947 = vadd.f32 %v320, %v946
        %v948 = vpop.f32.mrf.mxu0
        %v949 = vadd.f32 %v320, %v948
        %950 = vmatmul.bf16.gmra.mxu0 %v707
        %v951 = vpop.f32.mrf.mxu0
        %v952 = vadd.f32 %v320, %v951
        %v953 = vpop.f32.mrf.mxu0
        %v954 = vadd.f32 %v320, %v953
        %955 = vmatmul.bf16.gmra.mxu0 %v710
        %v956 = vpop.f32.mrf.mxu0
        %v957 = vadd.f32 %v320, %v956
        %v958 = vpop.f32.mrf.mxu0
        %v959 = vadd.f32 %v320, %v958
        %960 = vmatmul.bf16.gmra.mxu0 %v713
        %v961 = vpop.f32.mrf.mxu0
        %v962 = vadd.f32 %v320, %v961
        %v963 = vpop.f32.mrf.mxu0
        %v964 = vadd.f32 %v320, %v963
        %965 = vmatmul.bf16.gmra.mxu0 %v716
        %v966 = vpop.f32.mrf.mxu0
        %v967 = vadd.f32 %v320, %v966
        %v968 = vpop.f32.mrf.mxu0
        %v969 = vadd.f32 %v320, %v968
        %970 = vmatmul.bf16.gmra.mxu0 %v719
        %v971 = vpop.f32.mrf.mxu0
        %v972 = vadd.f32 %v320, %v971
        %v973 = vpop.f32.mrf.mxu0
        %v974 = vadd.f32 %v320, %v973
        %975 = vmatmul.bf16.gmra.mxu0 %v722
        %v976 = vpop.f32.mrf.mxu0
        %v977 = vadd.f32 %v320, %v976
        %v978 = vpop.f32.mrf.mxu0
        %v979 = vadd.f32 %v320, %v978
        %980 = vmatmul.bf16.gmra.mxu0 %v725
        %v981 = vpop.f32.mrf.mxu0
        %v982 = vadd.f32 %v320, %v981
        %v983 = vpop.f32.mrf.mxu0
        %v984 = vadd.f32 %v320, %v983
        %985 = vmatmul.bf16.gmra.mxu0 %v728
        %v986 = vpop.f32.mrf.mxu0
        %v987 = vadd.f32 %v320, %v986
        %v988 = vpop.f32.mrf.mxu0
        %v989 = vadd.f32 %v320, %v988
        %990 = vmatmul.bf16.gmra.mxu0 %v731
        %v991 = vpop.f32.mrf.mxu0
        %v992 = vadd.f32 %v320, %v991
        %v993 = vpop.f32.mrf.mxu0
        %v994 = vadd.f32 %v320, %v993
        %995 = vmatmul.bf16.gmra.mxu0 %v734
        %v996 = vpop.f32.mrf.mxu0
        %v997 = vadd.f32 %v320, %v996
        %v998 = vpop.f32.mrf.mxu0
        %v999 = vadd.f32 %v320, %v998
        %1000 = vmatmul.bf16.gmra.mxu0 %v737
        %v1001 = vpop.f32.mrf.mxu0
        %v1002 = vadd.f32 %v320, %v1001
        %v1003 = vpop.f32.mrf.mxu0
        %v1004 = vadd.f32 %v320, %v1003
        %1005 = vmatmul.bf16.gmra.mxu0 %v740
        %v1006 = vpop.f32.mrf.mxu0
        %v1007 = vadd.f32 %v320, %v1006
        %v1008 = vpop.f32.mrf.mxu0
        %v1009 = vadd.f32 %v320, %v1008
        %1010 = vmatmul.bf16.gmra.mxu0 %v743
        %v1011 = vpop.f32.mrf.mxu0
        %v1012 = vadd.f32 %v320, %v1011
        %v1013 = vpop.f32.mrf.mxu0
        %v1014 = vadd.f32 %v320, %v1013
        %1015 = vmatmul.bf16.gmra.mxu0 %v746
        %v1016 = vpop.f32.mrf.mxu0
        %v1017 = vadd.f32 %v320, %v1016
        %v1018 = vpop.f32.mrf.mxu0
        %v1019 = vadd.f32 %v320, %v1018
        %1020 = vmatmul.bf16.gmra.mxu0 %v749
        %v1021 = vpop.f32.mrf.mxu0
        %v1022 = vadd.f32 %v320, %v1021
        %v1023 = vpop.f32.mrf.mxu0
        %v1024 = vadd.f32 %v320, %v1023
        %1025 = vmatmul.bf16.gmra.mxu0 %v752
        %v1026 = vpop.f32.mrf.mxu0
        %v1027 = vadd.f32 %v320, %v1026
        %v1028 = vpop.f32.mrf.mxu0
        %v1029 = vadd.f32 %v320, %v1028
        %1030 = vmatmul.bf16.gmra.mxu0 %v755
        %v1031 = vpop.f32.mrf.mxu0
        %v1032 = vadd.f32 %v320, %v1031
        %v1033 = vpop.f32.mrf.mxu0
        %v1034 = vadd.f32 %v320, %v1033
        %1035 = vmatmul.bf16.gmra.mxu0 %v758
        %v1036 = vpop.f32.mrf.mxu0
        %v1037 = vadd.f32 %v320, %v1036
        %v1038 = vpop.f32.mrf.mxu0
        %v1039 = vadd.f32 %v320, %v1038
        %1040 = vmatmul.bf16.gmra.mxu0 %v761
        %v1041 = vpop.f32.mrf.mxu0
        %v1042 = vadd.f32 %v320, %v1041
        %v1043 = vpop.f32.mrf.mxu0
        %v1044 = vadd.f32 %v320, %v1043
        %1045 = vmatmul.bf16.gmra.mxu0 %v764
        %v1046 = vpop.f32.mrf.mxu0
        %v1047 = vadd.f32 %v320, %v1046
        %v1048 = vpop.f32.mrf.mxu0
        %v1049 = vadd.f32 %v320, %v1048
        %1050 = vmatmul.bf16.gmra.mxu0 %v767
        %v1051 = vpop.f32.mrf.mxu0
        %v1052 = vadd.f32 %v320, %v1051
        %v1053 = vpop.f32.mrf.mxu0
        %v1054 = vadd.f32 %v320, %v1053
        %1055 = vmatmul.bf16.gmra.mxu0 %v770
        %v1056 = vpop.f32.mrf.mxu0
        %v1057 = vadd.f32 %v320, %v1056
        %v1058 = vpop.f32.mrf.mxu0
        %v1059 = vadd.f32 %v320, %v1058
        %1060 = vmatmul.bf16.gmra.mxu0 %v773
        %v1061 = vpop.f32.mrf.mxu0
        %v1062 = vadd.f32 %v320, %v1061
        %v1063 = vpop.f32.mrf.mxu0
        %v1064 = vadd.f32 %v320, %v1063
        %1065 = vmatmul.bf16.gmra.mxu0 %v776
        %v1066 = vpop.f32.mrf.mxu0
        %v1067 = vadd.f32 %v320, %v1066
        %v1068 = vpop.f32.mrf.mxu0
        %v1069 = vadd.f32 %v320, %v1068
        %1070 = vmatmul.bf16.gmra.mxu0 %v779
        %v1071 = vpop.f32.mrf.mxu0
        %v1072 = vadd.f32 %v320, %v1071
        %v1073 = vpop.f32.mrf.mxu0
        %v1074 = vadd.f32 %v320, %v1073
        %1075 = vmatmul.bf16.gmra.mxu0 %v782
        %v1076 = vpop.f32.mrf.mxu0
        %v1077 = vadd.f32 %v320, %v1076
        %v1078 = vpop.f32.mrf.mxu0
        %v1079 = vadd.f32 %v320, %v1078
        %1080 = vmatmul.bf16.gmra.mxu0 %v785
        %v1081 = vpop.f32.mrf.mxu0
        %v1082 = vadd.f32 %v320, %v1081
        %v1083 = vpop.f32.mrf.mxu0
        %v1084 = vadd.f32 %v320, %v1083
        %1085 = vmatmul.bf16.gmra.mxu0 %v788
        %v1086 = vpop.f32.mrf.mxu0
        %v1087 = vadd.f32 %v320, %v1086
        %v1088 = vpop.f32.mrf.mxu0
        %v1089 = vadd.f32 %v320, %v1088
        %1090 = vmatmul.bf16.gmra.mxu0 %v791
        %v1091 = vpop.f32.mrf.mxu0
        %v1092 = vadd.f32 %v320, %v1091
        %v1093 = vpop.f32.mrf.mxu0
        %v1094 = vadd.f32 %v320, %v1093
        %1095 = vmatmul.bf16.gmra.mxu0 %v794
        %v1096 = vpop.f32.mrf.mxu0
        %v1097 = vadd.f32 %v320, %v1096
        %v1098 = vpop.f32.mrf.mxu0
        %v1099 = vadd.f32 %v320, %v1098
        %1100 = vmatmul.bf16.gmra.mxu0 %v797
        %v1101 = vpop.f32.mrf.mxu0
        %v1102 = vadd.f32 %v320, %v1101
        %v1103 = vpop.f32.mrf.mxu0
        %v1104 = vadd.f32 %v320, %v1103
        %1105 = vmatmul.bf16.gmra.mxu0 %v800
        %v1106 = vpop.f32.mrf.mxu0
        %v1107 = vadd.f32 %v320, %v1106
        %v1108 = vpop.f32.mrf.mxu0
        %v1109 = vadd.f32 %v320, %v1108
        %1110 = vmatmul.bf16.gmra.mxu0 %v803
        %v1111 = vpop.f32.mrf.mxu0
        %v1112 = vadd.f32 %v320, %v1111
        %v1113 = vpop.f32.mrf.mxu0
        %v1114 = vadd.f32 %v320, %v1113
        %1115 = vmatmul.bf16.gmra.mxu0 %v806
        %v1116 = vpop.f32.mrf.mxu0
        %v1117 = vadd.f32 %v320, %v1116
        %v1118 = vpop.f32.mrf.mxu0
        %v1119 = vadd.f32 %v320, %v1118
        %1120 = vmatmul.bf16.gmra.mxu0 %v809
        %v1121 = vpop.f32.mrf.mxu0
        %v1122 = vadd.f32 %v320, %v1121
        %v1123 = vpop.f32.mrf.mxu0
        %v1124 = vadd.f32 %v320, %v1123
        %1125 = vmatmul.bf16.gmra.mxu0 %v812
        %v1126 = vpop.f32.mrf.mxu0
        %v1127 = vadd.f32 %v320, %v1126
        %v1128 = vpop.f32.mrf.mxu0
        %v1129 = vadd.f32 %v320, %v1128
        %1130 = vmatmul.bf16.gmra.mxu0 %v815
        %v1131 = vpop.f32.mrf.mxu0
        %v1132 = vadd.f32 %v320, %v1131
        %v1133 = vpop.f32.mrf.mxu0
        %v1134 = vadd.f32 %v320, %v1133
        %1135 = vmatmul.bf16.gmra.mxu0 %v818
        %v1136 = vpop.f32.mrf.mxu0
        %v1137 = vadd.f32 %v320, %v1136
        %v1138 = vpop.f32.mrf.mxu0
        %1139 = vdwg.mxu0
        %v1140 = vmax.f32 %v837, 0.0
        %v1141 = vmax.f32 %v839, 0.0
        %v1142 = vmax.f32 %v842, 0.0
        %v1143 = vmax.f32 %v844, 0.0
        %v1144 = vmax.f32 %v847, 0.0
        %v1145 = vmax.f32 %v849, 0.0
        %v1146 = vmax.f32 %v852, 0.0
        %v1147 = vmax.f32 %v854, 0.0
        %v1148 = vmax.f32 %v857, 0.0
        %v1149 = vmax.f32 %v859, 0.0
        %v1150 = vmax.f32 %v862, 0.0
        %v1151 = vmax.f32 %v864, 0.0
        %v1152 = vmax.f32 %v867, 0.0
        %v1153 = vmax.f32 %v869, 0.0
        %v1154 = vmax.f32 %v872, 0.0
        %v1155 = vmax.f32 %v874, 0.0
        %v1156 = vmax.f32 %v877, 0.0
        %v1157 = vmax.f32 %v879, 0.0
        %v1158 = vmax.f32 %v882, 0.0
        %v1159 = vmax.f32 %v884, 0.0
        %v1160 = vmax.f32 %v887, 0.0
        %v1161 = vmax.f32 %v889, 0.0
        %v1162 = vmax.f32 %v892, 0.0
        %v1163 = vmax.f32 %v894, 0.0
        %v1164 = vmax.f32 %v897, 0.0
        %v1165 = vmax.f32 %v899, 0.0
        %v1166 = vmax.f32 %v902, 0.0
        %v1167 = vmax.f32 %v904, 0.0
        %v1168 = vmax.f32 %v907, 0.0
        %v1169 = vmax.f32 %v909, 0.0
        %v1170 = vmax.f32 %v912, 0.0
        %v1171 = vmax.f32 %v914, 0.0
        %v1172 = vmax.f32 %v917, 0.0
        %v1173 = vmax.f32 %v919, 0.0
        %v1174 = vmax.f32 %v922, 0.0
        %v1175 = vmax.f32 %v924, 0.0
        %v1176 = vmax.f32 %v927, 0.0
        %v1177 = vmax.f32 %v929, 0.0
        %v1178 = vmax.f32 %v932, 0.0
        %v1179 = vmax.f32 %v934, 0.0
        %v1180 = vmax.f32 %v937, 0.0
        %v1181 = vmax.f32 %v939, 0.0
        %v1182 = vmax.f32 %v942, 0.0
        %v1183 = vmax.f32 %v944, 0.0
        %v1184 = vmax.f32 %v947, 0.0
        %v1185 = vmax.f32 %v949, 0.0
        %v1186 = vmax.f32 %v952, 0.0
        %v1187 = vmax.f32 %v954, 0.0
        %v1188 = vmax.f32 %v957, 0.0
        %v1189 = vmax.f32 %v959, 0.0
        %v1190 = vmax.f32 %v962, 0.0
        %v1191 = vmax.f32 %v964, 0.0
        %v1192 = vmax.f32 %v967, 0.0
        %v1193 = vmax.f32 %v969, 0.0
        %v1194 = vmax.f32 %v972, 0.0
        %v1195 = vmax.f32 %v974, 0.0
        %v1196 = vmax.f32 %v977, 0.0
        %v1197 = vmax.f32 %v979, 0.0
        %v1198 = vmax.f32 %v982, 0.0
        %v1199 = vmax.f32 %v984, 0.0
        %v1200 = vmax.f32 %v987, 0.0
        %v1201 = vmax.f32 %v989, 0.0
        %v1202 = vmax.f32 %v992, 0.0
        %v1203 = vmax.f32 %v994, 0.0
        %v1204 = vmax.f32 %v997, 0.0
        %v1205 = vmax.f32 %v999, 0.0
        %v1206 = vmax.f32 %v1002, 0.0
        %v1207 = vmax.f32 %v1004, 0.0
        %v1208 = vmax.f32 %v1007, 0.0
        %v1209 = vmax.f32 %v1009, 0.0
        %v1210 = vmax.f32 %v1012, 0.0
        %v1211 = vmax.f32 %v1014, 0.0
        %v1212 = vmax.f32 %v1017, 0.0
        %v1213 = vmax.f32 %v1019, 0.0
        %v1214 = vmax.f32 %v1022, 0.0
        %v1215 = vmax.f32 %v1024, 0.0
        %v1216 = vmax.f32 %v1027, 0.0
        %v1217 = vmax.f32 %v1029, 0.0
        %v1218 = vmax.f32 %v1032, 0.0
        %v1219 = vmax.f32 %v1034, 0.0
        %v1220 = vmax.f32 %v1037, 0.0
        %v1221 = vmax.f32 %v1039, 0.0
        %v1222 = vmax.f32 %v1042, 0.0
        %v1223 = vmax.f32 %v1044, 0.0
        %v1224 = vmax.f32 %v1047, 0.0
        %v1225 = vmax.f32 %v1049, 0.0
        %v1226 = vmax.f32 %v1052, 0.0
        %v1227 = vmax.f32 %v1054, 0.0
        %v1228 = vmax.f32 %v1057, 0.0
        %v1229 = vmax.f32 %v1059, 0.0
        %v1230 = vmax.f32 %v1062, 0.0
        %v1231 = vmax.f32 %v1064, 0.0
        %v1232 = vmax.f32 %v1067, 0.0
        %v1233 = vmax.f32 %v1069, 0.0
        %v1234 = vmax.f32 %v1072, 0.0
        %v1235 = vmax.f32 %v1074, 0.0
        %v1236 = vmax.f32 %v1077, 0.0
        %v1237 = vmax.f32 %v1079, 0.0
        %v1238 = vmax.f32 %v1082, 0.0
        %v1239 = vmax.f32 %v1084, 0.0
        %v1240 = vmax.f32 %v1087, 0.0
        %v1241 = vmax.f32 %v1089, 0.0
        %v1242 = vmax.f32 %v1092, 0.0
        %v1243 = vmax.f32 %v1094, 0.0
        %v1244 = vmax.f32 %v1097, 0.0
        %v1245 = vmax.f32 %v1099, 0.0
        %v1246 = vmax.f32 %v1102, 0.0
        %v1247 = vmax.f32 %v1104, 0.0
        %v1248 = vmax.f32 %v1107, 0.0
        %v1249 = vmax.f32 %v1109, 0.0
        %v1250 = vmax.f32 %v1112, 0.0
        %v1251 = vmax.f32 %v1114, 0.0
        %v1252 = vmax.f32 %v1117, 0.0
        %v1253 = vmax.f32 %v1119, 0.0
        %v1254 = vmax.f32 %v1122, 0.0
        %v1255 = vmax.f32 %v1124, 0.0
        %v1256 = vmax.f32 %v1127, 0.0
        %v1257 = vmax.f32 %v1129, 0.0
        %v1258 = vmax.f32 %v1132, 0.0
        %v1259 = vmax.f32 %v1134, 0.0
        %v1260 = vmax.f32 %v1137, 0.0
        %v1261 = vpack.c.bf16 %v1140, %v1140
        %v1262 = vpack.c.bf16 %v1141, %v1141
        %v1263 = vpack.c.bf16 %v1142, %v1142
        %v1264 = vpack.c.bf16 %v1143, %v1143
        %v1265 = vpack.c.bf16 %v1144, %v1144
        %v1266 = vpack.c.bf16 %v1145, %v1145
        %v1267 = vpack.c.bf16 %v1146, %v1146
        %v1268 = vpack.c.bf16 %v1147, %v1147
        %v1269 = vpack.c.bf16 %v1148, %v1148
        %v1270 = vpack.c.bf16 %v1149, %v1149
        %v1271 = vpack.c.bf16 %v1150, %v1150
        %v1272 = vpack.c.bf16 %v1151, %v1151
        %v1273 = vpack.c.bf16 %v1152, %v1152
        %v1274 = vpack.c.bf16 %v1153, %v1153
        %v1275 = vpack.c.bf16 %v1154, %v1154
        %v1276 = vpack.c.bf16 %v1155, %v1155
        %v1277 = vpack.c.bf16 %v1156, %v1156
        %v1278 = vpack.c.bf16 %v1157, %v1157
        %v1279 = vpack.c.bf16 %v1158, %v1158
        %v1280 = vpack.c.bf16 %v1159, %v1159
        %v1281 = vpack.c.bf16 %v1160, %v1160
        %v1282 = vpack.c.bf16 %v1161, %v1161
        %v1283 = vpack.c.bf16 %v1162, %v1162
        %v1284 = vpack.c.bf16 %v1163, %v1163
        %v1285 = vpack.c.bf16 %v1164, %v1164
        %v1286 = vpack.c.bf16 %v1165, %v1165
        %v1287 = vpack.c.bf16 %v1166, %v1166
        %v1288 = vpack.c.bf16 %v1167, %v1167
        %v1289 = vpack.c.bf16 %v1168, %v1168
        %v1290 = vpack.c.bf16 %v1169, %v1169
        %v1291 = vpack.c.bf16 %v1170, %v1170
        %v1292 = vpack.c.bf16 %v1171, %v1171
        %v1293 = vpack.c.bf16 %v1172, %v1172
        %v1294 = vpack.c.bf16 %v1173, %v1173
        %v1295 = vpack.c.bf16 %v1174, %v1174
        %v1296 = vpack.c.bf16 %v1175, %v1175
        %v1297 = vpack.c.bf16 %v1176, %v1176
        %v1298 = vpack.c.bf16 %v1177, %v1177
        %v1299 = vpack.c.bf16 %v1178, %v1178
        %v1300 = vpack.c.bf16 %v1179, %v1179
        %v1301 = vpack.c.bf16 %v1180, %v1180
        %v1302 = vpack.c.bf16 %v1181, %v1181
        %v1303 = vpack.c.bf16 %v1182, %v1182
        %v1304 = vpack.c.bf16 %v1183, %v1183
        %v1305 = vpack.c.bf16 %v1184, %v1184
        %v1306 = vpack.c.bf16 %v1185, %v1185
        %v1307 = vpack.c.bf16 %v1186, %v1186
        %v1308 = vpack.c.bf16 %v1187, %v1187
        %v1309 = vpack.c.bf16 %v1188, %v1188
        %v1310 = vpack.c.bf16 %v1189, %v1189
        %v1311 = vpack.c.bf16 %v1190, %v1190
        %v1312 = vpack.c.bf16 %v1191, %v1191
        %v1313 = vpack.c.bf16 %v1192, %v1192
        %v1314 = vpack.c.bf16 %v1193, %v1193
        %v1315 = vpack.c.bf16 %v1194, %v1194
        %v1316 = vpack.c.bf16 %v1195, %v1195
        %v1317 = vpack.c.bf16 %v1196, %v1196
        %v1318 = vpack.c.bf16 %v1197, %v1197
        %v1319 = vpack.c.bf16 %v1198, %v1198
        %v1320 = vpack.c.bf16 %v1199, %v1199
        %v1321 = vpack.c.bf16 %v1200, %v1200
        %v1322 = vpack.c.bf16 %v1201, %v1201
        %v1323 = vpack.c.bf16 %v1202, %v1202
        %v1324 = vpack.c.bf16 %v1203, %v1203
        %v1325 = vpack.c.bf16 %v1204, %v1204
        %v1326 = vpack.c.bf16 %v1205, %v1205
        %v1327 = vpack.c.bf16 %v1206, %v1206
        %v1328 = vpack.c.bf16 %v1207, %v1207
        %v1329 = vpack.c.bf16 %v1208, %v1208
        %v1330 = vpack.c.bf16 %v1209, %v1209
        %v1331 = vpack.c.bf16 %v1210, %v1210
        %v1332 = vpack.c.bf16 %v1211, %v1211
        %v1333 = vpack.c.bf16 %v1212, %v1212
        %v1334 = vpack.c.bf16 %v1213, %v1213
        %v1335 = vpack.c.bf16 %v1214, %v1214
        %v1336 = vpack.c.bf16 %v1215, %v1215
        %v1337 = vpack.c.bf16 %v1216, %v1216
        %v1338 = vpack.c.bf16 %v1217, %v1217
        %v1339 = vpack.c.bf16 %v1218, %v1218
        %v1340 = vpack.c.bf16 %v1219, %v1219
        %v1341 = vpack.c.bf16 %v1220, %v1220
        %v1342 = vpack.c.bf16 %v1221, %v1221
        %v1343 = vpack.c.bf16 %v1222, %v1222
        %v1344 = vpack.c.bf16 %v1223, %v1223
        %v1345 = vpack.c.bf16 %v1224, %v1224
        %v1346 = vpack.c.bf16 %v1225, %v1225
        %v1347 = vpack.c.bf16 %v1226, %v1226
        %v1348 = vpack.c.bf16 %v1227, %v1227
        %v1349 = vpack.c.bf16 %v1228, %v1228
        %v1350 = vpack.c.bf16 %v1229, %v1229
        %v1351 = vpack.c.bf16 %v1230, %v1230
        %v1352 = vpack.c.bf16 %v1231, %v1231
        %v1353 = vpack.c.bf16 %v1232, %v1232
        %v1354 = vpack.c.bf16 %v1233, %v1233
        %v1355 = vpack.c.bf16 %v1234, %v1234
        %v1356 = vpack.c.bf16 %v1235, %v1235
        %v1357 = vpack.c.bf16 %v1236, %v1236
        %v1358 = vpack.c.bf16 %v1237, %v1237
        %v1359 = vpack.c.bf16 %v1238, %v1238
        %v1360 = vpack.c.bf16 %v1239, %v1239
        %v1361 = vpack.c.bf16 %v1240, %v1240
        %v1362 = vpack.c.bf16 %v1241, %v1241
        %v1363 = vpack.c.bf16 %v1242, %v1242
        %v1364 = vpack.c.bf16 %v1243, %v1243
        %v1365 = vpack.c.bf16 %v1244, %v1244
        %v1366 = vpack.c.bf16 %v1245, %v1245
        %v1367 = vpack.c.bf16 %v1246, %v1246
        %v1368 = vpack.c.bf16 %v1247, %v1247
        %v1369 = vpack.c.bf16 %v1248, %v1248
        %v1370 = vpack.c.bf16 %v1249, %v1249
        %v1371 = vpack.c.bf16 %v1250, %v1250
        %v1372 = vpack.c.bf16 %v1251, %v1251
        %v1373 = vpack.c.bf16 %v1252, %v1252
        %v1374 = vpack.c.bf16 %v1253, %v1253
        %v1375 = vpack.c.bf16 %v1254, %v1254
        %v1376 = vpack.c.bf16 %v1255, %v1255
        %v1377 = vpack.c.bf16 %v1256, %v1256
        %v1378 = vpack.c.bf16 %v1257, %v1257
        %v1379 = vpack.c.bf16 %v1258, %v1258
        %v1380 = vpack.c.bf16 %v1259, %v1259
        %v1381 = vpack.c.bf16 %v1260, %v1260
        %vm1382 = vcmask 60416
        %1383 = vst.msk [vmem:[%s172] sm:$0xf] %vm1382, %v1261
        %1384 = vst.msk [vmem:[%s172 + $0x4] sm:$0xf] %vm1382, %v1262
        %1385 = vst.msk [vmem:[%s172 + $0x8] sm:$0xf] %vm1382, %v1263
        %1386 = vst.msk [vmem:[%s172 + $0xc] sm:$0xf] %vm1382, %v1264
        %1387 = vst.msk [vmem:[%s172 + $0x10] sm:$0xf] %vm1382, %v1265
        %1388 = vst.msk [vmem:[%s172 + $0x14] sm:$0xf] %vm1382, %v1266
        %1389 = vst.msk [vmem:[%s172 + $0x18] sm:$0xf] %vm1382, %v1267
        %1390 = vst.msk [vmem:[%s172 + $0x1c] sm:$0xf] %vm1382, %v1268
        %1391 = vst.msk [vmem:[%s172 + $0x20] sm:$0xf] %vm1382, %v1269
        %1392 = vst.msk [vmem:[%s172 + $0x24] sm:$0xf] %vm1382, %v1270
        %1393 = vst.msk [vmem:[%s172 + $0x28] sm:$0xf] %vm1382, %v1271
        %1394 = vst.msk [vmem:[%s172 + $0x2c] sm:$0xf] %vm1382, %v1272
        %1395 = vst.msk [vmem:[%s172 + $0x30] sm:$0xf] %vm1382, %v1273
        %1396 = vst.msk [vmem:[%s172 + $0x34] sm:$0xf] %vm1382, %v1274
        %1397 = vst.msk [vmem:[%s172 + $0x38] sm:$0xf] %vm1382, %v1275
        %1398 = vst.msk [vmem:[%s172 + $0x3c] sm:$0xf] %vm1382, %v1276
        %1399 = vst.msk [vmem:[%s172 + $0x40] sm:$0xf] %vm1382, %v1277
        %1400 = vst.msk [vmem:[%s172 + $0x44] sm:$0xf] %vm1382, %v1278
        %1401 = vst.msk [vmem:[%s172 + $0x48] sm:$0xf] %vm1382, %v1279
        %1402 = vst.msk [vmem:[%s172 + $0x4c] sm:$0xf] %vm1382, %v1280
        %1403 = vst.msk [vmem:[%s172 + $0x50] sm:$0xf] %vm1382, %v1281
        %1404 = vst.msk [vmem:[%s172 + $0x54] sm:$0xf] %vm1382, %v1282
        %1405 = vst.msk [vmem:[%s172 + $0x58] sm:$0xf] %vm1382, %v1283
        %1406 = vst.msk [vmem:[%s172 + $0x5c] sm:$0xf] %vm1382, %v1284
        %1407 = vst.msk [vmem:[%s172 + $0x60] sm:$0xf] %vm1382, %v1285
        %1408 = vst.msk [vmem:[%s172 + $0x64] sm:$0xf] %vm1382, %v1286
        %1409 = vst.msk [vmem:[%s172 + $0x68] sm:$0xf] %vm1382, %v1287
        %1410 = vst.msk [vmem:[%s172 + $0x6c] sm:$0xf] %vm1382, %v1288
        %1411 = vst.msk [vmem:[%s172 + $0x70] sm:$0xf] %vm1382, %v1289
        %1412 = vst.msk [vmem:[%s172 + $0x74] sm:$0xf] %vm1382, %v1290
        %1413 = vst.msk [vmem:[%s172 + $0x78] sm:$0xf] %vm1382, %v1291
        %1414 = vst.msk [vmem:[%s172 + $0x7c] sm:$0xf] %vm1382, %v1292
        %1415 = vst.msk [vmem:[%s172 + $0x80] sm:$0xf] %vm1382, %v1293
        %1416 = vst.msk [vmem:[%s172 + $0x84] sm:$0xf] %vm1382, %v1294
        %1417 = vst.msk [vmem:[%s172 + $0x88] sm:$0xf] %vm1382, %v1295
        %1418 = vst.msk [vmem:[%s172 + $0x8c] sm:$0xf] %vm1382, %v1296
        %1419 = vst.msk [vmem:[%s172 + $0x90] sm:$0xf] %vm1382, %v1297
        %1420 = vst.msk [vmem:[%s172 + $0x94] sm:$0xf] %vm1382, %v1298
        %1421 = vst.msk [vmem:[%s172 + $0x98] sm:$0xf] %vm1382, %v1299
        %1422 = vst.msk [vmem:[%s172 + $0x9c] sm:$0xf] %vm1382, %v1300
        %1423 = vst.msk [vmem:[%s172 + $0xa0] sm:$0xf] %vm1382, %v1301
        %1424 = vst.msk [vmem:[%s172 + $0xa4] sm:$0xf] %vm1382, %v1302
        %1425 = vst.msk [vmem:[%s172 + $0xa8] sm:$0xf] %vm1382, %v1303
        %1426 = vst.msk [vmem:[%s172 + $0xac] sm:$0xf] %vm1382, %v1304
        %1427 = vst.msk [vmem:[%s172 + $0xb0] sm:$0xf] %vm1382, %v1305
        %1428 = vst.msk [vmem:[%s172 + $0xb4] sm:$0xf] %vm1382, %v1306
        %1429 = vst.msk [vmem:[%s172 + $0xb8] sm:$0xf] %vm1382, %v1307
        %1430 = vst.msk [vmem:[%s172 + $0xbc] sm:$0xf] %vm1382, %v1308
        %1431 = vst.msk [vmem:[%s172 + $0xc0] sm:$0xf] %vm1382, %v1309
        %1432 = vst.msk [vmem:[%s172 + $0xc4] sm:$0xf] %vm1382, %v1310
        %1433 = vst.msk [vmem:[%s172 + $0xc8] sm:$0xf] %vm1382, %v1311
        %1434 = vst.msk [vmem:[%s172 + $0xcc] sm:$0xf] %vm1382, %v1312
        %1435 = vst.msk [vmem:[%s172 + $0xd0] sm:$0xf] %vm1382, %v1313
        %1436 = vst.msk [vmem:[%s172 + $0xd4] sm:$0xf] %vm1382, %v1314
        %1437 = vst.msk [vmem:[%s172 + $0xd8] sm:$0xf] %vm1382, %v1315
        %1438 = vst.msk [vmem:[%s172 + $0xdc] sm:$0xf] %vm1382, %v1316
        %1439 = vst.msk [vmem:[%s172 + $0xe0] sm:$0xf] %vm1382, %v1317
        %1440 = vst.msk [vmem:[%s172 + $0xe4] sm:$0xf] %vm1382, %v1318
        %1441 = vst.msk [vmem:[%s172 + $0xe8] sm:$0xf] %vm1382, %v1319
        %1442 = vst.msk [vmem:[%s172 + $0xec] sm:$0xf] %vm1382, %v1320
        %1443 = vst.msk [vmem:[%s172 + $0xf0] sm:$0xf] %vm1382, %v1321
        %1444 = vst.msk [vmem:[%s172 + $0xf4] sm:$0xf] %vm1382, %v1322
        %1445 = vst.msk [vmem:[%s172 + $0xf8] sm:$0xf] %vm1382, %v1323
        %1446 = vst.msk [vmem:[%s172 + $0xfc] sm:$0xf] %vm1382, %v1324
        %1447 = vst.msk [vmem:[%s172 + $0x100] sm:$0xf] %vm1382, %v1325
        %1448 = vst.msk [vmem:[%s172 + $0x104] sm:$0xf] %vm1382, %v1326
        %1449 = vst.msk [vmem:[%s172 + $0x108] sm:$0xf] %vm1382, %v1327
        %1450 = vst.msk [vmem:[%s172 + $0x10c] sm:$0xf] %vm1382, %v1328
        %1451 = vst.msk [vmem:[%s172 + $0x110] sm:$0xf] %vm1382, %v1329
        %1452 = vst.msk [vmem:[%s172 + $0x114] sm:$0xf] %vm1382, %v1330
        %1453 = vst.msk [vmem:[%s172 + $0x118] sm:$0xf] %vm1382, %v1331
        %1454 = vst.msk [vmem:[%s172 + $0x11c] sm:$0xf] %vm1382, %v1332
        %1455 = vst.msk [vmem:[%s172 + $0x120] sm:$0xf] %vm1382, %v1333
        %1456 = vst.msk [vmem:[%s172 + $0x124] sm:$0xf] %vm1382, %v1334
        %1457 = vst.msk [vmem:[%s172 + $0x128] sm:$0xf] %vm1382, %v1335
        %1458 = vst.msk [vmem:[%s172 + $0x12c] sm:$0xf] %vm1382, %v1336
        %1459 = vst.msk [vmem:[%s172 + $0x130] sm:$0xf] %vm1382, %v1337
        %1460 = vst.msk [vmem:[%s172 + $0x134] sm:$0xf] %vm1382, %v1338
        %1461 = vst.msk [vmem:[%s172 + $0x138] sm:$0xf] %vm1382, %v1339
        %1462 = vst.msk [vmem:[%s172 + $0x13c] sm:$0xf] %vm1382, %v1340
        %1463 = vst.msk [vmem:[%s172 + $0x140] sm:$0xf] %vm1382, %v1341
        %1464 = vst.msk [vmem:[%s172 + $0x144] sm:$0xf] %vm1382, %v1342
        %1465 = vst.msk [vmem:[%s172 + $0x148] sm:$0xf] %vm1382, %v1343
        %1466 = vst.msk [vmem:[%s172 + $0x14c] sm:$0xf] %vm1382, %v1344
        %1467 = vst.msk [vmem:[%s172 + $0x150] sm:$0xf] %vm1382, %v1345
        %1468 = vst.msk [vmem:[%s172 + $0x154] sm:$0xf] %vm1382, %v1346
        %1469 = vst.msk [vmem:[%s172 + $0x158] sm:$0xf] %vm1382, %v1347
        %1470 = vst.msk [vmem:[%s172 + $0x15c] sm:$0xf] %vm1382, %v1348
        %1471 = vst.msk [vmem:[%s172 + $0x160] sm:$0xf] %vm1382, %v1349
        %1472 = vst.msk [vmem:[%s172 + $0x164] sm:$0xf] %vm1382, %v1350
        %1473 = vst.msk [vmem:[%s172 + $0x168] sm:$0xf] %vm1382, %v1351
        %1474 = vst.msk [vmem:[%s172 + $0x16c] sm:$0xf] %vm1382, %v1352
        %1475 = vst.msk [vmem:[%s172 + $0x170] sm:$0xf] %vm1382, %v1353
        %1476 = vst.msk [vmem:[%s172 + $0x174] sm:$0xf] %vm1382, %v1354
        %1477 = vst.msk [vmem:[%s172 + $0x178] sm:$0xf] %vm1382, %v1355
        %1478 = vst.msk [vmem:[%s172 + $0x17c] sm:$0xf] %vm1382, %v1356
        %1479 = vst.msk [vmem:[%s172 + $0x180] sm:$0xf] %vm1382, %v1357
        %1480 = vst.msk [vmem:[%s172 + $0x184] sm:$0xf] %vm1382, %v1358
        %1481 = vst.msk [vmem:[%s172 + $0x188] sm:$0xf] %vm1382, %v1359
        %1482 = vst.msk [vmem:[%s172 + $0x18c] sm:$0xf] %vm1382, %v1360
        %1483 = vst.msk [vmem:[%s172 + $0x190] sm:$0xf] %vm1382, %v1361
        %1484 = vst.msk [vmem:[%s172 + $0x194] sm:$0xf] %vm1382, %v1362
        %1485 = vst.msk [vmem:[%s172 + $0x198] sm:$0xf] %vm1382, %v1363
        %1486 = vst.msk [vmem:[%s172 + $0x19c] sm:$0xf] %vm1382, %v1364
        %1487 = vst.msk [vmem:[%s172 + $0x1a0] sm:$0xf] %vm1382, %v1365
        %1488 = vst.msk [vmem:[%s172 + $0x1a4] sm:$0xf] %vm1382, %v1366
        %1489 = vst.msk [vmem:[%s172 + $0x1a8] sm:$0xf] %vm1382, %v1367
        %1490 = vst.msk [vmem:[%s172 + $0x1ac] sm:$0xf] %vm1382, %v1368
        %1491 = vst.msk [vmem:[%s172 + $0x1b0] sm:$0xf] %vm1382, %v1369
        %1492 = vst.msk [vmem:[%s172 + $0x1b4] sm:$0xf] %vm1382, %v1370
        %1493 = vst.msk [vmem:[%s172 + $0x1b8] sm:$0xf] %vm1382, %v1371
        %1494 = vst.msk [vmem:[%s172 + $0x1bc] sm:$0xf] %vm1382, %v1372
        %1495 = vst.msk [vmem:[%s172 + $0x1c0] sm:$0xf] %vm1382, %v1373
        %1496 = vst.msk [vmem:[%s172 + $0x1c4] sm:$0xf] %vm1382, %v1374
        %1497 = vst.msk [vmem:[%s172 + $0x1c8] sm:$0xf] %vm1382, %v1375
        %1498 = vst.msk [vmem:[%s172 + $0x1cc] sm:$0xf] %vm1382, %v1376
        %1499 = vst.msk [vmem:[%s172 + $0x1d0] sm:$0xf] %vm1382, %v1377
        %1500 = vst.msk [vmem:[%s172 + $0x1d4] sm:$0xf] %vm1382, %v1378
        %1501 = vst.msk [vmem:[%s172 + $0x1d8] sm:$0xf] %vm1382, %v1379
        %1502 = vst.msk [vmem:[%s172 + $0x1dc] sm:$0xf] %vm1382, %v1380
        %1503 = vst.msk [vmem:[%s172 + $0x1e0] sm:$0xf] %vm1382, %v1381
        %s1504 = sand.u32 %s90, 1
        %s1505 = sand.u32 %s90, 1
        %s1506 = smul.addr %s1505, 484
        %s1507 = scalar_lea.vmem [#allocation2], %s1506
        // Predicated region
        $region33: #{network_forward.13} parent=31 // pred_check
          %p1508 = pneg %p100
        $region34: #{network_forward.13} parent=31 // pred_check_branch
          %1510 = sbr.rel (%p1508) target = $region36
        $region35: #{network_forward.13} parent=31 // pred_region
          %s1511 = smul.u32 121, %s14
          %s1512 = ssub.s32 241, %s1511
          %p1513 = scmp.lt.s32.totalorder %s1512, 121
          %s1514 = scalar_select %p1513, %s1512, 121
          %s1515 = smul.u32 4, %s1514
          %p1516 = scmp.ne.s32.totalorder 0, %s1515
          %s1517 = smul.addr %s1511, 4
          %s1518 = scalar_lea.vmem %s3, %s1517
          // Predicated region
          $region37: #{network_forward.13} parent=35 // pred_check
            %p1519 = pneg %p1516
          $region38: #{network_forward.13} parent=35 // pred_check_branch
            %1521 = sbr.rel (%p1519) target = $region40
          $region39: #{network_forward.13} parent=35 // pred_region
            // Predicated region
            $region41: #{network_forward.13} parent=39 // pred_check
              _
            $region42: #{network_forward.13} parent=39 // pred_check_branch
              %1523 = sbr.rel target = $region44
            $region43: #{network_forward.13} parent=39 // pred_region
              // Predicated region
              $region63: #{network_forward.13} parent=43 // pred_check
                _
              $region64: #{network_forward.13} parent=43 // pred_check_branch
                %1635 = sbr.rel (0) target = $region66
              $region65: #{network_forward.13} parent=43 // pred_region
                %s1637 = ssub.s32 16, 1
                %s1638 = sshrl.u32 %s1514, 5
                // While loop
                $region67: #{network_forward.13} parent=65 // loop_pre_header
                  _
                $region68: #{network_forward.13} parent=65 // loop_header
                  %s1640 = sphi 0, %s1642
                  %p1641 = scmp.ge.s32.totalorder %s1640, %s1638
                  %s1645 = sphi 0, %s1714
                  %s1646 = sphi %s1507, %s1717
                  %s1647 = sphi %s1518, %s1718
                $region69: #{network_forward.13} parent=65 // loop_header_branch
                  %1644 = sbr.rel (%p1641) target = $region73
                $region70: #{network_forward.13} parent=65 // loop_body
                  %v1648 = vld [vmem:[%s1646] sm:%s1637]
                  %1649 = vst [vmem:[%s1647] sm:%s1637] %v1648
                  %v1650 = vld [vmem:[%s1646 + $0x4] sm:%s1637]
                  %1651 = vst [vmem:[%s1647 + $0x4] sm:%s1637] %v1650
                  %v1652 = vld [vmem:[%s1646 + $0x8] sm:%s1637]
                  %1653 = vst [vmem:[%s1647 + $0x8] sm:%s1637] %v1652
                  %v1654 = vld [vmem:[%s1646 + $0xc] sm:%s1637]
                  %1655 = vst [vmem:[%s1647 + $0xc] sm:%s1637] %v1654
                  %v1656 = vld [vmem:[%s1646 + $0x10] sm:%s1637]
                  %1657 = vst [vmem:[%s1647 + $0x10] sm:%s1637] %v1656
                  %v1658 = vld [vmem:[%s1646 + $0x14] sm:%s1637]
                  %1659 = vst [vmem:[%s1647 + $0x14] sm:%s1637] %v1658
                  %v1660 = vld [vmem:[%s1646 + $0x18] sm:%s1637]
                  %1661 = vst [vmem:[%s1647 + $0x18] sm:%s1637] %v1660
                  %v1662 = vld [vmem:[%s1646 + $0x1c] sm:%s1637]
                  %1663 = vst [vmem:[%s1647 + $0x1c] sm:%s1637] %v1662
                  %v1664 = vld [vmem:[%s1646 + $0x20] sm:%s1637]
                  %1665 = vst [vmem:[%s1647 + $0x20] sm:%s1637] %v1664
                  %v1666 = vld [vmem:[%s1646 + $0x24] sm:%s1637]
                  %1667 = vst [vmem:[%s1647 + $0x24] sm:%s1637] %v1666
                  %v1668 = vld [vmem:[%s1646 + $0x28] sm:%s1637]
                  %1669 = vst [vmem:[%s1647 + $0x28] sm:%s1637] %v1668
                  %v1670 = vld [vmem:[%s1646 + $0x2c] sm:%s1637]
                  %1671 = vst [vmem:[%s1647 + $0x2c] sm:%s1637] %v1670
                  %v1672 = vld [vmem:[%s1646 + $0x30] sm:%s1637]
                  %1673 = vst [vmem:[%s1647 + $0x30] sm:%s1637] %v1672
                  %v1674 = vld [vmem:[%s1646 + $0x34] sm:%s1637]
                  %1675 = vst [vmem:[%s1647 + $0x34] sm:%s1637] %v1674
                  %v1676 = vld [vmem:[%s1646 + $0x38] sm:%s1637]
                  %1677 = vst [vmem:[%s1647 + $0x38] sm:%s1637] %v1676
                  %v1678 = vld [vmem:[%s1646 + $0x3c] sm:%s1637]
                  %1679 = vst [vmem:[%s1647 + $0x3c] sm:%s1637] %v1678
                  %v1680 = vld [vmem:[%s1646 + $0x40] sm:%s1637]
                  %1681 = vst [vmem:[%s1647 + $0x40] sm:%s1637] %v1680
                  %v1682 = vld [vmem:[%s1646 + $0x44] sm:%s1637]
                  %1683 = vst [vmem:[%s1647 + $0x44] sm:%s1637] %v1682
                  %v1684 = vld [vmem:[%s1646 + $0x48] sm:%s1637]
                  %1685 = vst [vmem:[%s1647 + $0x48] sm:%s1637] %v1684
                  %v1686 = vld [vmem:[%s1646 + $0x4c] sm:%s1637]
                  %1687 = vst [vmem:[%s1647 + $0x4c] sm:%s1637] %v1686
                  %v1688 = vld [vmem:[%s1646 + $0x50] sm:%s1637]
                  %1689 = vst [vmem:[%s1647 + $0x50] sm:%s1637] %v1688
                  %v1690 = vld [vmem:[%s1646 + $0x54] sm:%s1637]
                  %1691 = vst [vmem:[%s1647 + $0x54] sm:%s1637] %v1690
                  %v1692 = vld [vmem:[%s1646 + $0x58] sm:%s1637]
                  %1693 = vst [vmem:[%s1647 + $0x58] sm:%s1637] %v1692
                  %v1694 = vld [vmem:[%s1646 + $0x5c] sm:%s1637]
                  %1695 = vst [vmem:[%s1647 + $0x5c] sm:%s1637] %v1694
                  %v1696 = vld [vmem:[%s1646 + $0x60] sm:%s1637]
                  %1697 = vst [vmem:[%s1647 + $0x60] sm:%s1637] %v1696
                  %v1698 = vld [vmem:[%s1646 + $0x64] sm:%s1637]
                  %1699 = vst [vmem:[%s1647 + $0x64] sm:%s1637] %v1698
                  %v1700 = vld [vmem:[%s1646 + $0x68] sm:%s1637]
                  %1701 = vst [vmem:[%s1647 + $0x68] sm:%s1637] %v1700
                  %v1702 = vld [vmem:[%s1646 + $0x6c] sm:%s1637]
                  %1703 = vst [vmem:[%s1647 + $0x6c] sm:%s1637] %v1702
                  %v1704 = vld [vmem:[%s1646 + $0x70] sm:%s1637]
                  %1705 = vst [vmem:[%s1647 + $0x70] sm:%s1637] %v1704
                  %v1706 = vld [vmem:[%s1646 + $0x74] sm:%s1637]
                  %1707 = vst [vmem:[%s1647 + $0x74] sm:%s1637] %v1706
                  %v1708 = vld [vmem:[%s1646 + $0x78] sm:%s1637]
                  %1709 = vst [vmem:[%s1647 + $0x78] sm:%s1637] %v1708
                  %v1710 = vld [vmem:[%s1646 + $0x7c] sm:%s1637]
                  %1711 = vst [vmem:[%s1647 + $0x7c] sm:%s1637] %v1710
                  %s1712 = sadd.s32 1, %s1645
                  %p1713 = scmp.ge.s32.totalorder %s1712, %s1638
                  %s1714 = scalar_select %p1713, 0, %s1712
                  %s1715 = smul.u32 %s1714, 128
                  %s1716 = smul.u32 %s1714, 128
                  %s1717 = scalar_lea.vmem %s1507, %s1715 [#allocation2]
                  %s1718 = scalar_lea.vmem %s1518, %s1716
                $region71: #{network_forward.13} parent=65 // loop_footer
                  %s1642 = sadd.s32 %s1640, 1
                $region72: #{network_forward.13} parent=65 // loop_footer_branch
                  %1639 = sbr.rel target = $region68
                $region73: #{network_forward.13} parent=65 // loop_exit
                  _
                %s1719 = sshrl.u32 %s1514, 5
                %s1720 = sand.u32 %s1514, 31
                %s1721 = smul.u32 %s1719, 32
                %s1722 = smul.u32 4, %s1721
                %s1723 = scalar_lea.vmem %s1507, %s1722 [#allocation2]
                %s1724 = smul.u32 4, %s1721
                %s1725 = scalar_lea.vmem %s1518, %s1724
                // While loop
                $region74: #{network_forward.13} parent=65 // loop_pre_header
                  _
                $region75: #{network_forward.13} parent=65 // loop_header
                  %s1727 = sphi 0, %s1729
                  %p1728 = scmp.ge.s32.totalorder %s1727, %s1720
                  %s1732 = sphi 0, %s1739
                  %s1733 = sphi %s1723, %s1742
                  %s1734 = sphi %s1725, %s1743
                $region76: #{network_forward.13} parent=65 // loop_header_branch
                  %1731 = sbr.rel (%p1728) target = $region80
                $region77: #{network_forward.13} parent=65 // loop_body
                  %v1735 = vld [vmem:[%s1733] sm:%s1637]
                  %1736 = vst [vmem:[%s1734] sm:%s1637] %v1735
                  %s1737 = sadd.s32 1, %s1732
                  %p1738 = scmp.ge.s32.totalorder %s1737, %s1720
                  %s1739 = scalar_select %p1738, 0, %s1737
                  %s1740 = smul.u32 %s1739, 4
                  %s1741 = smul.u32 %s1739, 4
                  %s1742 = scalar_lea.vmem %s1723, %s1740 [#allocation2]
                  %s1743 = scalar_lea.vmem %s1725, %s1741
                $region78: #{network_forward.13} parent=65 // loop_footer
                  %s1729 = sadd.s32 %s1727, 1
                $region79: #{network_forward.13} parent=65 // loop_footer_branch
                  %1726 = sbr.rel target = $region75
                $region80: #{network_forward.13} parent=65 // loop_exit
                  _
              $region66: #{network_forward.13} parent=43 // pred_fallthru
                _
            $region44: #{network_forward.13} parent=39 // pred_fallthru
              _
            // Predicated region
            $region45: #{network_forward.13} parent=39 // pred_check
              _
            $region46: #{network_forward.13} parent=39 // pred_check_branch
              %1525 = sbr.rel (0) target = $region48
            $region47: #{network_forward.13} parent=39 // pred_region
              %s1527 = ssub.s32 16, 1
              %s1528 = sshrl.u32 %s1514, 5
              // While loop
              $region49: #{network_forward.13} parent=47 // loop_pre_header
                _
              $region50: #{network_forward.13} parent=47 // loop_header
                %s1530 = sphi 0, %s1532
                %p1531 = scmp.ge.s32.totalorder %s1530, %s1528
                %s1535 = sphi 0, %s1604
                %s1536 = sphi %s1507, %s1607
                %s1537 = sphi %s1518, %s1608
              $region51: #{network_forward.13} parent=47 // loop_header_branch
                %1534 = sbr.rel (%p1531) target = $region55
              $region52: #{network_forward.13} parent=47 // loop_body
                %v1538 = vld [vmem:[%s1536] sm:%s1527]
                %1539 = vst [vmem:[%s1537] sm:%s1527] %v1538
                %v1540 = vld [vmem:[%s1536 + $0x4] sm:%s1527]
                %1541 = vst [vmem:[%s1537 + $0x4] sm:%s1527] %v1540
                %v1542 = vld [vmem:[%s1536 + $0x8] sm:%s1527]
                %1543 = vst [vmem:[%s1537 + $0x8] sm:%s1527] %v1542
                %v1544 = vld [vmem:[%s1536 + $0xc] sm:%s1527]
                %1545 = vst [vmem:[%s1537 + $0xc] sm:%s1527] %v1544
                %v1546 = vld [vmem:[%s1536 + $0x10] sm:%s1527]
                %1547 = vst [vmem:[%s1537 + $0x10] sm:%s1527] %v1546
                %v1548 = vld [vmem:[%s1536 + $0x14] sm:%s1527]
                %1549 = vst [vmem:[%s1537 + $0x14] sm:%s1527] %v1548
                %v1550 = vld [vmem:[%s1536 + $0x18] sm:%s1527]
                %1551 = vst [vmem:[%s1537 + $0x18] sm:%s1527] %v1550
                %v1552 = vld [vmem:[%s1536 + $0x1c] sm:%s1527]
                %1553 = vst [vmem:[%s1537 + $0x1c] sm:%s1527] %v1552
                %v1554 = vld [vmem:[%s1536 + $0x20] sm:%s1527]
                %1555 = vst [vmem:[%s1537 + $0x20] sm:%s1527] %v1554
                %v1556 = vld [vmem:[%s1536 + $0x24] sm:%s1527]
                %1557 = vst [vmem:[%s1537 + $0x24] sm:%s1527] %v1556
                %v1558 = vld [vmem:[%s1536 + $0x28] sm:%s1527]
                %1559 = vst [vmem:[%s1537 + $0x28] sm:%s1527] %v1558
                %v1560 = vld [vmem:[%s1536 + $0x2c] sm:%s1527]
                %1561 = vst [vmem:[%s1537 + $0x2c] sm:%s1527] %v1560
                %v1562 = vld [vmem:[%s1536 + $0x30] sm:%s1527]
                %1563 = vst [vmem:[%s1537 + $0x30] sm:%s1527] %v1562
                %v1564 = vld [vmem:[%s1536 + $0x34] sm:%s1527]
                %1565 = vst [vmem:[%s1537 + $0x34] sm:%s1527] %v1564
                %v1566 = vld [vmem:[%s1536 + $0x38] sm:%s1527]
                %1567 = vst [vmem:[%s1537 + $0x38] sm:%s1527] %v1566
                %v1568 = vld [vmem:[%s1536 + $0x3c] sm:%s1527]
                %1569 = vst [vmem:[%s1537 + $0x3c] sm:%s1527] %v1568
                %v1570 = vld [vmem:[%s1536 + $0x40] sm:%s1527]
                %1571 = vst [vmem:[%s1537 + $0x40] sm:%s1527] %v1570
                %v1572 = vld [vmem:[%s1536 + $0x44] sm:%s1527]
                %1573 = vst [vmem:[%s1537 + $0x44] sm:%s1527] %v1572
                %v1574 = vld [vmem:[%s1536 + $0x48] sm:%s1527]
                %1575 = vst [vmem:[%s1537 + $0x48] sm:%s1527] %v1574
                %v1576 = vld [vmem:[%s1536 + $0x4c] sm:%s1527]
                %1577 = vst [vmem:[%s1537 + $0x4c] sm:%s1527] %v1576
                %v1578 = vld [vmem:[%s1536 + $0x50] sm:%s1527]
                %1579 = vst [vmem:[%s1537 + $0x50] sm:%s1527] %v1578
                %v1580 = vld [vmem:[%s1536 + $0x54] sm:%s1527]
                %1581 = vst [vmem:[%s1537 + $0x54] sm:%s1527] %v1580
                %v1582 = vld [vmem:[%s1536 + $0x58] sm:%s1527]
                %1583 = vst [vmem:[%s1537 + $0x58] sm:%s1527] %v1582
                %v1584 = vld [vmem:[%s1536 + $0x5c] sm:%s1527]
                %1585 = vst [vmem:[%s1537 + $0x5c] sm:%s1527] %v1584
                %v1586 = vld [vmem:[%s1536 + $0x60] sm:%s1527]
                %1587 = vst [vmem:[%s1537 + $0x60] sm:%s1527] %v1586
                %v1588 = vld [vmem:[%s1536 + $0x64] sm:%s1527]
                %1589 = vst [vmem:[%s1537 + $0x64] sm:%s1527] %v1588
                %v1590 = vld [vmem:[%s1536 + $0x68] sm:%s1527]
                %1591 = vst [vmem:[%s1537 + $0x68] sm:%s1527] %v1590
                %v1592 = vld [vmem:[%s1536 + $0x6c] sm:%s1527]
                %1593 = vst [vmem:[%s1537 + $0x6c] sm:%s1527] %v1592
                %v1594 = vld [vmem:[%s1536 + $0x70] sm:%s1527]
                %1595 = vst [vmem:[%s1537 + $0x70] sm:%s1527] %v1594
                %v1596 = vld [vmem:[%s1536 + $0x74] sm:%s1527]
                %1597 = vst [vmem:[%s1537 + $0x74] sm:%s1527] %v1596
                %v1598 = vld [vmem:[%s1536 + $0x78] sm:%s1527]
                %1599 = vst [vmem:[%s1537 + $0x78] sm:%s1527] %v1598
                %v1600 = vld [vmem:[%s1536 + $0x7c] sm:%s1527]
                %1601 = vst [vmem:[%s1537 + $0x7c] sm:%s1527] %v1600
                %s1602 = sadd.s32 1, %s1535
                %p1603 = scmp.ge.s32.totalorder %s1602, %s1528
                %s1604 = scalar_select %p1603, 0, %s1602
                %s1605 = smul.u32 %s1604, 128
                %s1606 = smul.u32 %s1604, 128
                %s1607 = scalar_lea.vmem %s1507, %s1605 [#allocation2]
                %s1608 = scalar_lea.vmem %s1518, %s1606
              $region53: #{network_forward.13} parent=47 // loop_footer
                %s1532 = sadd.s32 %s1530, 1
              $region54: #{network_forward.13} parent=47 // loop_footer_branch
                %1529 = sbr.rel target = $region50
              $region55: #{network_forward.13} parent=47 // loop_exit
                _
              %s1609 = sshrl.u32 %s1514, 5
              %s1610 = sand.u32 %s1514, 31
              %s1611 = smul.u32 %s1609, 32
              %s1612 = smul.u32 4, %s1611
              %s1613 = scalar_lea.vmem %s1507, %s1612 [#allocation2]
              %s1614 = smul.u32 4, %s1611
              %s1615 = scalar_lea.vmem %s1518, %s1614
              // While loop
              $region56: #{network_forward.13} parent=47 // loop_pre_header
                _
              $region57: #{network_forward.13} parent=47 // loop_header
                %s1617 = sphi 0, %s1619
                %p1618 = scmp.ge.s32.totalorder %s1617, %s1610
                %s1622 = sphi 0, %s1629
                %s1623 = sphi %s1613, %s1632
                %s1624 = sphi %s1615, %s1633
              $region58: #{network_forward.13} parent=47 // loop_header_branch
                %1621 = sbr.rel (%p1618) target = $region62
              $region59: #{network_forward.13} parent=47 // loop_body
                %v1625 = vld [vmem:[%s1623] sm:%s1527]
                %1626 = vst [vmem:[%s1624] sm:%s1527] %v1625
                %s1627 = sadd.s32 1, %s1622
                %p1628 = scmp.ge.s32.totalorder %s1627, %s1610
                %s1629 = scalar_select %p1628, 0, %s1627
                %s1630 = smul.u32 %s1629, 4
                %s1631 = smul.u32 %s1629, 4
                %s1632 = scalar_lea.vmem %s1613, %s1630 [#allocation2]
                %s1633 = scalar_lea.vmem %s1615, %s1631
              $region60: #{network_forward.13} parent=47 // loop_footer
                %s1619 = sadd.s32 %s1617, 1
              $region61: #{network_forward.13} parent=47 // loop_footer_branch
                %1616 = sbr.rel target = $region57
              $region62: #{network_forward.13} parent=47 // loop_exit
                _
            $region48: #{network_forward.13} parent=39 // pred_fallthru
              _
          $region40: #{network_forward.13} parent=35 // pred_fallthru
            _
          %1744 = vnop
        $region36: #{network_forward.13} parent=31 // pred_fallthru
          _
      $region32: #{network_forward.13} parent=5 // pred_fallthru
        _
      %p1745 = scmp.le.s32.totalorder 2, %s9
      // Predicated region
      $region81: #{network_forward.13} parent=5 // pred_check
        %p1746 = pneg %p1745
      $region82: #{network_forward.13} parent=5 // pred_check_branch
        %1748 = sbr.rel (%p1746) target = $region84
      $region83: #{network_forward.13} parent=5 // pred_region
        %s1749 = ssub.s32 %s9, 2
        // Predicated region
        $region85: #{network_forward.13} parent=83 // pred_check
          %p1750 = pneg %p106
        $region86: #{network_forward.13} parent=83 // pred_check_branch
          %1752 = sbr.rel (%p1750) target = $region88
        $region87: #{network_forward.13} parent=83 // pred_region
          %s1753 = sand.u32 %s91, 1
          %s1754 = sand.u32 %s91, 1
          %s1755 = smul.addr %s1754, 484
          %s1756 = scalar_lea.vmem [#allocation2], %s1755
        $region88: #{network_forward.13} parent=83 // pred_fallthru
          _
      $region84: #{network_forward.13} parent=5 // pred_fallthru
        _
    $region6: #{network_forward.13} parent=1 // loop_footer
      %s13 = sadd.s32 1, %s9
    $region7: #{network_forward.13} parent=1 // loop_footer_branch
      %8 = sbr.rel target = $region3
    $region8: #{network_forward.13} parent=1 // loop_exit
      _

// kernel: network_forward.14
$region0: #{network_forward.14}
  #allocation0 [shape = 'u32[]', space=smem, size = 0x4, offset = 0x4, fixed_abs, tag = 'smem constant byte address 0x4 - core index']
  #allocation1 [shape = 'u32[72,128]{1,0:T(1,128)}', space=vmem, size = 0x9000, scoped, tag = 'internal scratch']
  %s0 = inlined_call_operand.vmem [shape: bf16[1922,72], index: 0, kind: input, shape index: {}]
  %s1 = inlined_call_operand.vmem [shape: bf16[72,8], index: 1, kind: input, shape index: {}]
  %s2 = inlined_call_operand.vmem [shape: f32[1,8], index: 2, kind: input, shape index: {}]
  %s3 = inlined_call_operand.vmem [shape: bf16[1922,8], index: 3, kind: output, shape index: {}]
  %s4 = sld [smem:[#allocation0]]
  $region89: #{network_forward.14} parent=0
    _
  %s6 = ssub.s32 1, %s4
  %s7 = scalar_select 0, %s6, %s4
  $region1: #{network_forward.14} parent=0
    #allocation2 [shape = 'u8[495616]{0}', space=vmem, size = 0x79000, scoped, tag = 'output window, operand 0']
    loop: start=0, step=1, limit=4
    $region2: #{network_forward.14} parent=1 // loop_pre_header
      _
    $region3: #{network_forward.14} parent=1 // loop_header
      %s9 = sphi 0, %s13
      %p10 = scmp.ge.s32.totalorder %s9, 4
      %s19 = sphi 0, %s21
      %s22 = sphi 0, %s19
      %s23 = sphi 0, %s22
      %s39 = sphi 0, %s23
      %s43 = sphi 0, %s43
      %s45 = sphi 0, %s43
      %s46 = sphi 0, %s45
      %s60 = sphi 0, %s46
      %s64 = sphi 0, %s64
      %s66 = sphi 0, %s64
      %s67 = sphi 0, %s66
      %s81 = sphi 0, %s67
      %s87 = sphi 0, %s89
      %s90 = sphi 0, %s87
      %s91 = sphi 0, %s90
      %s107 = sphi 0, %s91
    $region4: #{network_forward.14} parent=1 // loop_header_branch
      %12 = sbr.rel (%p10) target = $region8
    $region5: #{network_forward.14} parent=1 // loop_body
      %s14 = ssub.s32 %s9, 1
      %s15 = ssub.s32 %s9, 2
      %s16 = sadd.s32 %s9, 1
      %s17 = ssub.s32 %s9, %s16
      %p18 = scmp.eq.s32.totalorder %s17, 0
      %s20 = sadd.s32 %s19, 1
      %s21 = scalar_select %p18, %s19, %s20
      %p24 = pneg %p18
      %p25 = scmp.eq.s32.totalorder %s9, 1
      %p26 = por %p24, %p25
      %p27 = scmp.ne.s32.totalorder %s19, %s22
      %p28 = scmp.eq.s32.totalorder %s9, 0
      %p29 = por %p27, %p28
      %p30 = scmp.ne.s32.totalorder %s19, %s22
      %p31 = scmp.eq.s32.totalorder %s14, 1
      %p32 = por %p30, %p31
      %p33 = scmp.ne.s32.totalorder %s22, %s23
      %p34 = scmp.eq.s32.totalorder %s14, 0
      %p35 = por %p33, %p34
      %p36 = scmp.ne.s32.totalorder %s22, %s23
      %p37 = scmp.eq.s32.totalorder %s15, 1
      %p38 = por %p36, %p37
      %p40 = scmp.ne.s32.totalorder %s23, %s39
      %p41 = scmp.eq.s32.totalorder %s15, 0
      %p42 = por %p40, %p41
      %s44 = sadd.s32 %s43, 1
      %p47 = scmp.eq.s32.totalorder %s9, 1
      %p48 = scmp.ne.s32.totalorder %s43, %s45
      %p49 = scmp.eq.s32.totalorder %s9, 0
      %p50 = por %p48, %p49
      %p51 = scmp.ne.s32.totalorder %s43, %s45
      %p52 = scmp.eq.s32.totalorder %s14, 1
      %p53 = por %p51, %p52
      %p54 = scmp.ne.s32.totalorder %s45, %s46
      %p55 = scmp.eq.s32.totalorder %s14, 0
      %p56 = por %p54, %p55
      %p57 = scmp.ne.s32.totalorder %s45, %s46
      %p58 = scmp.eq.s32.totalorder %s15, 1
      %p59 = por %p57, %p58
      %p61 = scmp.ne.s32.totalorder %s46, %s60
      %p62 = scmp.eq.s32.totalorder %s15, 0
      %p63 = por %p61, %p62
      %s65 = sadd.s32 %s64, 1
      %p68 = scmp.eq.s32.totalorder %s9, 1
      %p69 = scmp.ne.s32.totalorder %s64, %s66
      %p70 = scmp.eq.s32.totalorder %s9, 0
      %p71 = por %p69, %p70
      %p72 = scmp.ne.s32.totalorder %s64, %s66
      %p73 = scmp.eq.s32.totalorder %s14, 1
      %p74 = por %p72, %p73
      %p75 = scmp.ne.s32.totalorder %s66, %s67
      %p76 = scmp.eq.s32.totalorder %s14, 0
      %p77 = por %p75, %p76
      %p78 = scmp.ne.s32.totalorder %s66, %s67
      %p79 = scmp.eq.s32.totalorder %s15, 1
      %p80 = por %p78, %p79
      %p82 = scmp.ne.s32.totalorder %s67, %s81
      %p83 = scmp.eq.s32.totalorder %s15, 0
      %p84 = por %p82, %p83
      %s85 = ssub.s32 %s9, %s16
      %p86 = scmp.eq.s32.totalorder %s85, 0
      %s88 = sadd.s32 %s87, 1
      %s89 = scalar_select %p86, %s87, %s88
      %p92 = pneg %p86
      %p93 = scmp.eq.s32.totalorder %s9, 1
      %p94 = por %p92, %p93
      %p95 = scmp.ne.s32.totalorder %s87, %s90
      %p96 = scmp.eq.s32.totalorder %s9, 0
      %p97 = por %p95, %p96
      %p98 = scmp.ne.s32.totalorder %s87, %s90
      %p99 = scmp.eq.s32.totalorder %s14, 1
      %p100 = por %p98, %p99
      %p101 = scmp.ne.s32.totalorder %s90, %s91
      %p102 = scmp.eq.s32.totalorder %s14, 0
      %p103 = por %p101, %p102
      %p104 = scmp.ne.s32.totalorder %s90, %s91
      %p105 = scmp.eq.s32.totalorder %s15, 1
      %p106 = por %p104, %p105
      %p108 = scmp.ne.s32.totalorder %s91, %s107
      %p109 = scmp.eq.s32.totalorder %s15, 0
      %p110 = por %p108, %p109
      %p111 = scmp.le.s32.totalorder 1, %s9
      %p112 = scmp.lt.s32.totalorder %s9, 3
      %p113 = pnand %p111, %p112
      %p114 = pneg %p113
      // Predicated region
      $region9: #{network_forward.14} parent=5 // pred_check
        _
      $region10: #{network_forward.14} parent=5 // pred_check_branch
        %116 = sbr.rel (%p113) target = $region12
      $region11: #{network_forward.14} parent=5 // pred_region
        %s117 = ssub.s32 %s9, 1
        // Predicated region
        $region13: #{network_forward.14} parent=11 // pred_check
          %p118 = pneg %p56
        $region14: #{network_forward.14} parent=11 // pred_check_branch
          %120 = sbr.rel (%p118) target = $region16
        $region15: #{network_forward.14} parent=11 // pred_region
          _
        $region16: #{network_forward.14} parent=11 // pred_fallthru
          _
        // Predicated region
        $region17: #{network_forward.14} parent=11 // pred_check
          %p121 = pneg %p77
        $region18: #{network_forward.14} parent=11 // pred_check_branch
          %123 = sbr.rel (%p121) target = $region20
        $region19: #{network_forward.14} parent=11 // pred_region
          _
        $region20: #{network_forward.14} parent=11 // pred_fallthru
          _
      $region12: #{network_forward.14} parent=5 // pred_fallthru
        _
      %p124 = scmp.lt.s32.totalorder %s9, 2
      // Predicated region
      $region21: #{network_forward.14} parent=5 // pred_check
        %p125 = pneg %p124
      $region22: #{network_forward.14} parent=5 // pred_check_branch
        %127 = sbr.rel (%p125) target = $region24
      $region23: #{network_forward.14} parent=5 // pred_region
        // Predicated region
        $region25: #{network_forward.14} parent=23 // pred_check
          %p128 = pneg %p29
        $region26: #{network_forward.14} parent=23 // pred_check_branch
          %130 = sbr.rel (%p128) target = $region28
        $region27: #{network_forward.14} parent=23 // pred_region
          %s131 = smul.u32 121, %s9
          %s132 = ssub.s32 241, %s131
          %p133 = scmp.lt.s32.totalorder %s132, 121
          %s134 = scalar_select %p133, %s132, 121
          %s135 = smul.u32 4, %s134
          %p136 = scmp.lt.s32.totalorder %s131, 240
          %s137 = scalar_select %p136, %s131, 240
          %s138 = smul.addr %s137, 4
          %s139 = scalar_lea.vmem %s0, %s138
          %s140 = smul.u32 121, %s9
          %s141 = ssub.s32 241, %s140
          %p142 = scmp.lt.s32.totalorder %s141, 121
          %s143 = scalar_select %p142, %s141, 121
          %s144 = smul.u32 4, %s143
        $region28: #{network_forward.14} parent=23 // pred_fallthru
          _
      $region24: #{network_forward.14} parent=5 // pred_fallthru
        _
      %p145 = scmp.le.s32.totalorder 1, %s9
      %p146 = scmp.lt.s32.totalorder %s9, 3
      %p147 = pnand %p145, %p146
      %p148 = pneg %p147
      // Predicated region
      $region29: #{network_forward.14} parent=5 // pred_check
        _
      $region30: #{network_forward.14} parent=5 // pred_check_branch
        %150 = sbr.rel (%p147) target = $region32
      $region31: #{network_forward.14} parent=5 // pred_region
        %s151 = ssub.s32 %s9, 1
        %s152 = smul.u32 121, %s14
        %s153 = ssub.s32 241, %s152
        %p154 = scmp.lt.s32.totalorder %s153, 121
        %s155 = scalar_select %p154, %s153, 121
        %s156 = smul.u32 4, %s155
        %p157 = scmp.lt.s32.totalorder %s152, 240
        %s158 = scalar_select %p157, %s152, 240
        %s159 = smul.addr %s158, 4
        %s160 = scalar_lea.vmem %s0, %s159
        %p161 = pneg %p35
        %p162 = pneg %p32
        %p163 = pneg %p56
        %p164 = pneg %p53
        %p165 = pneg %p77
        %p166 = pneg %p74
        %p167 = pneg %p103
        %p168 = pneg %p100
        %s169 = sand.u32 %s90, 1
        %s170 = sand.u32 %s90, 1
        %s171 = smul.addr %s170, 484
        %s172 = scalar_lea.vmem [#allocation2], %s171
        %s173 = smul.u32 121, %s14
        %s174 = ssub.s32 241, %s173
        %p175 = scmp.lt.s32.totalorder %s174, 121
        %s176 = scalar_select %p175, %s174, 121
        %s177 = smul.u32 4, %s176
        %p178 = scmp.lt.s32.totalorder %s173, 240
        %s179 = scalar_select %p178, %s173, 240
        %s180 = smul.addr %s179, 4
        %s181 = scalar_lea.vmem %s0, %s180
        %s182 = smul.u32 121, %s14
        %s183 = ssub.s32 241, %s182
        %p184 = scmp.lt.s32.totalorder %s183, 121
        %s185 = scalar_select %p184, %s183, 121
        %s186 = smul.u32 4, %s185
        %s187 = smul.u32 121, %s14
        %s188 = ssub.s32 241, %s187
        %p189 = scmp.lt.s32.totalorder %s188, 121
        %s190 = scalar_select %p189, %s188, 121
        %s191 = smul.u32 4, %s190
        %v193 = vld [vmem:[%s181] sm:$0xf]
        %v194 = vld [vmem:[%s181 + $0x4] sm:$0xf]
        %v195 = vld [vmem:[%s181 + $0x8] sm:$0xf]
        %v196 = vld [vmem:[%s181 + $0xc] sm:$0xf]
        %v197 = vld [vmem:[%s181 + $0x10] sm:$0xf]
        %v198 = vld [vmem:[%s181 + $0x14] sm:$0xf]
        %v199 = vld [vmem:[%s181 + $0x18] sm:$0xf]
        %v200 = vld [vmem:[%s181 + $0x1c] sm:$0xf]
        %v201 = vld [vmem:[%s181 + $0x20] sm:$0xf]
        %v202 = vld [vmem:[%s181 + $0x24] sm:$0xf]
        %v203 = vld [vmem:[%s181 + $0x28] sm:$0xf]
        %v204 = vld [vmem:[%s181 + $0x2c] sm:$0xf]
        %v205 = vld [vmem:[%s181 + $0x30] sm:$0xf]
        %v206 = vld [vmem:[%s181 + $0x34] sm:$0xf]
        %v207 = vld [vmem:[%s181 + $0x38] sm:$0xf]
        %v208 = vld [vmem:[%s181 + $0x3c] sm:$0xf]
        %v209 = vld [vmem:[%s181 + $0x40] sm:$0xf]
        %v210 = vld [vmem:[%s181 + $0x44] sm:$0xf]
        %v211 = vld [vmem:[%s181 + $0x48] sm:$0xf]
        %v212 = vld [vmem:[%s181 + $0x4c] sm:$0xf]
        %v213 = vld [vmem:[%s181 + $0x50] sm:$0xf]
        %v214 = vld [vmem:[%s181 + $0x54] sm:$0xf]
        %v215 = vld [vmem:[%s181 + $0x58] sm:$0xf]
        %v216 = vld [vmem:[%s181 + $0x5c] sm:$0xf]
        %v217 = vld [vmem:[%s181 + $0x60] sm:$0xf]
        %v218 = vld [vmem:[%s181 + $0x64] sm:$0xf]
        %v219 = vld [vmem:[%s181 + $0x68] sm:$0xf]
        %v220 = vld [vmem:[%s181 + $0x6c] sm:$0xf]
        %v221 = vld [vmem:[%s181 + $0x70] sm:$0xf]
        %v222 = vld [vmem:[%s181 + $0x74] sm:$0xf]
        %v223 = vld [vmem:[%s181 + $0x78] sm:$0xf]
        %v224 = vld [vmem:[%s181 + $0x7c] sm:$0xf]
        %v225 = vld [vmem:[%s181 + $0x80] sm:$0xf]
        %v226 = vld [vmem:[%s181 + $0x84] sm:$0xf]
        %v227 = vld [vmem:[%s181 + $0x88] sm:$0xf]
        %v228 = vld [vmem:[%s181 + $0x8c] sm:$0xf]
        %v229 = vld [vmem:[%s181 + $0x90] sm:$0xf]
        %v230 = vld [vmem:[%s181 + $0x94] sm:$0xf]
        %v231 = vld [vmem:[%s181 + $0x98] sm:$0xf]
        %v232 = vld [vmem:[%s181 + $0x9c] sm:$0xf]
        %v233 = vld [vmem:[%s181 + $0xa0] sm:$0xf]
        %v234 = vld [vmem:[%s181 + $0xa4] sm:$0xf]
        %v235 = vld [vmem:[%s181 + $0xa8] sm:$0xf]
        %v236 = vld [vmem:[%s181 + $0xac] sm:$0xf]
        %v237 = vld [vmem:[%s181 + $0xb0] sm:$0xf]
        %v238 = vld [vmem:[%s181 + $0xb4] sm:$0xf]
        %v239 = vld [vmem:[%s181 + $0xb8] sm:$0xf]
        %v240 = vld [vmem:[%s181 + $0xbc] sm:$0xf]
        %v241 = vld [vmem:[%s181 + $0xc0] sm:$0xf]
        %v242 = vld [vmem:[%s181 + $0xc4] sm:$0xf]
        %v243 = vld [vmem:[%s181 + $0xc8] sm:$0xf]
        %v244 = vld [vmem:[%s181 + $0xcc] sm:$0xf]
        %v245 = vld [vmem:[%s181 + $0xd0] sm:$0xf]
        %v246 = vld [vmem:[%s181 + $0xd4] sm:$0xf]
        %v247 = vld [vmem:[%s181 + $0xd8] sm:$0xf]
        %v248 = vld [vmem:[%s181 + $0xdc] sm:$0xf]
        %v249 = vld [vmem:[%s181 + $0xe0] sm:$0xf]
        %v250 = vld [vmem:[%s181 + $0xe4] sm:$0xf]
        %v251 = vld [vmem:[%s181 + $0xe8] sm:$0xf]
        %v252 = vld [vmem:[%s181 + $0xec] sm:$0xf]
        %v253 = vld [vmem:[%s181 + $0xf0] sm:$0xf]
        %v254 = vld [vmem:[%s181 + $0xf4] sm:$0xf]
        %v255 = vld [vmem:[%s181 + $0xf8] sm:$0xf]
        %v256 = vld [vmem:[%s181 + $0xfc] sm:$0xf]
        %v257 = vld [vmem:[%s181 + $0x100] sm:$0xf]
        %v258 = vld [vmem:[%s181 + $0x104] sm:$0xf]
        %v259 = vld [vmem:[%s181 + $0x108] sm:$0xf]
        %v260 = vld [vmem:[%s181 + $0x10c] sm:$0xf]
        %v261 = vld [vmem:[%s181 + $0x110] sm:$0xf]
        %v262 = vld [vmem:[%s181 + $0x114] sm:$0xf]
        %v263 = vld [vmem:[%s181 + $0x118] sm:$0xf]
        %v264 = vld [vmem:[%s181 + $0x11c] sm:$0xf]
        %v265 = vld [vmem:[%s181 + $0x120] sm:$0xf]
        %v266 = vld [vmem:[%s181 + $0x124] sm:$0xf]
        %v267 = vld [vmem:[%s181 + $0x128] sm:$0xf]
        %v268 = vld [vmem:[%s181 + $0x12c] sm:$0xf]
        %v269 = vld [vmem:[%s181 + $0x130] sm:$0xf]
        %v270 = vld [vmem:[%s181 + $0x134] sm:$0xf]
        %v271 = vld [vmem:[%s181 + $0x138] sm:$0xf]
        %v272 = vld [vmem:[%s181 + $0x13c] sm:$0xf]
        %v273 = vld [vmem:[%s181 + $0x140] sm:$0xf]
        %v274 = vld [vmem:[%s181 + $0x144] sm:$0xf]
        %v275 = vld [vmem:[%s181 + $0x148] sm:$0xf]
        %v276 = vld [vmem:[%s181 + $0x14c] sm:$0xf]
        %v277 = vld [vmem:[%s181 + $0x150] sm:$0xf]
        %v278 = vld [vmem:[%s181 + $0x154] sm:$0xf]
        %v279 = vld [vmem:[%s181 + $0x158] sm:$0xf]
        %v280 = vld [vmem:[%s181 + $0x15c] sm:$0xf]
        %v281 = vld [vmem:[%s181 + $0x160] sm:$0xf]
        %v282 = vld [vmem:[%s181 + $0x164] sm:$0xf]
        %v283 = vld [vmem:[%s181 + $0x168] sm:$0xf]
        %v284 = vld [vmem:[%s181 + $0x16c] sm:$0xf]
        %v285 = vld [vmem:[%s181 + $0x170] sm:$0xf]
        %v286 = vld [vmem:[%s181 + $0x174] sm:$0xf]
        %v287 = vld [vmem:[%s181 + $0x178] sm:$0xf]
        %v288 = vld [vmem:[%s181 + $0x17c] sm:$0xf]
        %v289 = vld [vmem:[%s181 + $0x180] sm:$0xf]
        %v290 = vld [vmem:[%s181 + $0x184] sm:$0xf]
        %v291 = vld [vmem:[%s181 + $0x188] sm:$0xf]
        %v292 = vld [vmem:[%s181 + $0x18c] sm:$0xf]
        %v293 = vld [vmem:[%s181 + $0x190] sm:$0xf]
        %v294 = vld [vmem:[%s181 + $0x194] sm:$0xf]
        %v295 = vld [vmem:[%s181 + $0x198] sm:$0xf]
        %v296 = vld [vmem:[%s181 + $0x19c] sm:$0xf]
        %v297 = vld [vmem:[%s181 + $0x1a0] sm:$0xf]
        %v298 = vld [vmem:[%s181 + $0x1a4] sm:$0xf]
        %v299 = vld [vmem:[%s181 + $0x1a8] sm:$0xf]
        %v300 = vld [vmem:[%s181 + $0x1ac] sm:$0xf]
        %v301 = vld [vmem:[%s181 + $0x1b0] sm:$0xf]
        %v302 = vld [vmem:[%s181 + $0x1b4] sm:$0xf]
        %v303 = vld [vmem:[%s181 + $0x1b8] sm:$0xf]
        %v304 = vld [vmem:[%s181 + $0x1bc] sm:$0xf]
        %v305 = vld [vmem:[%s181 + $0x1c0] sm:$0xf]
        %v306 = vld [vmem:[%s181 + $0x1c4] sm:$0xf]
        %v307 = vld [vmem:[%s181 + $0x1c8] sm:$0xf]
        %v308 = vld [vmem:[%s181 + $0x1cc] sm:$0xf]
        %v309 = vld [vmem:[%s181 + $0x1d0] sm:$0xf]
        %v310 = vld [vmem:[%s181 + $0x1d4] sm:$0xf]
        %v311 = vld [vmem:[%s181 + $0x1d8] sm:$0xf]
        %v312 = vld [vmem:[%s181 + $0x1dc] sm:$0xf]
        %v313 = vld [vmem:[%s181 + $0x1e0] sm:$0xf]
        %v314 = vld [vmem:[%s1] sm:$0xf]
        %v315 = vld [vmem:[%s1 + $0x4] sm:$0xf]
        %v316 = vld [vmem:[%s1 + $0x8] sm:$0xf]
        %v317 = vld [vmem:[%s1 + $0xc] sm:$0xf]
        %v318 = vld [vmem:[%s1 + $0x10] sm:$0xf]
        %v319 = vld [vmem:[%s1 + $0x14] sm:$0xf]
        %v320 = vld [vmem:[%s1 + $0x18] sm:$0xf]
        %v321 = vld [vmem:[%s1 + $0x1c] sm:$0xf]
        %v322 = vld [vmem:[%s1 + $0x20] sm:$0xf]
        %v323 = vld [vmem:[%s2] sm:$0x1]
        %v325 = vperm.slane %v323, 0
        %v448 = vunpack.c.l.b16 %v193
        %v449 = vunpack.c.l.b16 %v194
        %v450 = vunpack.c.l.b16 %v195
        %v451 = vunpack.c.l.b16 %v196
        %v452 = vunpack.c.l.b16 %v197
        %v453 = vunpack.c.l.b16 %v198
        %v454 = vunpack.c.l.b16 %v199
        %v455 = vunpack.c.l.b16 %v200
        %v456 = vunpack.c.l.b16 %v201
        %v457 = vunpack.c.l.b16 %v202
        %v458 = vunpack.c.l.b16 %v203
        %v459 = vunpack.c.l.b16 %v204
        %v460 = vunpack.c.l.b16 %v205
        %v461 = vunpack.c.l.b16 %v206
        %v462 = vunpack.c.l.b16 %v207
        %v463 = vunpack.c.l.b16 %v208
        %v464 = vunpack.c.l.b16 %v209
        %v465 = vunpack.c.l.b16 %v210
        %v466 = vunpack.c.l.b16 %v211
        %v467 = vunpack.c.l.b16 %v212
        %v468 = vunpack.c.l.b16 %v213
        %v469 = vunpack.c.l.b16 %v214
        %v470 = vunpack.c.l.b16 %v215
        %v471 = vunpack.c.l.b16 %v216
        %v472 = vunpack.c.l.b16 %v217
        %v473 = vunpack.c.l.b16 %v218
        %v474 = vunpack.c.l.b16 %v219
        %v475 = vunpack.c.l.b16 %v220
        %v476 = vunpack.c.l.b16 %v221
        %v477 = vunpack.c.l.b16 %v222
        %v478 = vunpack.c.l.b16 %v223
        %v479 = vunpack.c.l.b16 %v224
        %v480 = vunpack.c.l.b16 %v225
        %v481 = vunpack.c.l.b16 %v226
        %v482 = vunpack.c.l.b16 %v227
        %v483 = vunpack.c.l.b16 %v228
        %v484 = vunpack.c.l.b16 %v229
        %v485 = vunpack.c.l.b16 %v230
        %v486 = vunpack.c.l.b16 %v231
        %v487 = vunpack.c.l.b16 %v232
        %v488 = vunpack.c.l.b16 %v233
        %v489 = vunpack.c.l.b16 %v234
        %v490 = vunpack.c.l.b16 %v235
        %v491 = vunpack.c.l.b16 %v236
        %v492 = vunpack.c.l.b16 %v237
        %v493 = vunpack.c.l.b16 %v238
        %v494 = vunpack.c.l.b16 %v239
        %v495 = vunpack.c.l.b16 %v240
        %v496 = vunpack.c.l.b16 %v241
        %v497 = vunpack.c.l.b16 %v242
        %v498 = vunpack.c.l.b16 %v243
        %v499 = vunpack.c.l.b16 %v244
        %v500 = vunpack.c.l.b16 %v245
        %v501 = vunpack.c.l.b16 %v246
        %v502 = vunpack.c.l.b16 %v247
        %v503 = vunpack.c.l.b16 %v248
        %v504 = vunpack.c.l.b16 %v249
        %v505 = vunpack.c.l.b16 %v250
        %v506 = vunpack.c.l.b16 %v251
        %v507 = vunpack.c.l.b16 %v252
        %v508 = vunpack.c.l.b16 %v253
        %v509 = vunpack.c.l.b16 %v254
        %v510 = vunpack.c.l.b16 %v255
        %v511 = vunpack.c.l.b16 %v256
        %v512 = vunpack.c.l.b16 %v257
        %v513 = vunpack.c.l.b16 %v258
        %v514 = vunpack.c.l.b16 %v259
        %v515 = vunpack.c.l.b16 %v260
        %v516 = vunpack.c.l.b16 %v261
        %v517 = vunpack.c.l.b16 %v262
        %v518 = vunpack.c.l.b16 %v263
        %v519 = vunpack.c.l.b16 %v264
        %v520 = vunpack.c.l.b16 %v265
        %v521 = vunpack.c.l.b16 %v266
        %v522 = vunpack.c.l.b16 %v267
        %v523 = vunpack.c.l.b16 %v268
        %v524 = vunpack.c.l.b16 %v269
        %v525 = vunpack.c.l.b16 %v270
        %v526 = vunpack.c.l.b16 %v271
        %v527 = vunpack.c.l.b16 %v272
        %v528 = vunpack.c.l.b16 %v273
        %v529 = vunpack.c.l.b16 %v274
        %v530 = vunpack.c.l.b16 %v275
        %v531 = vunpack.c.l.b16 %v276
        %v532 = vunpack.c.l.b16 %v277
        %v533 = vunpack.c.l.b16 %v278
        %v534 = vunpack.c.l.b16 %v279
        %v535 = vunpack.c.l.b16 %v280
        %v536 = vunpack.c.l.b16 %v281
        %v537 = vunpack.c.l.b16 %v282
        %v538 = vunpack.c.l.b16 %v283
        %v539 = vunpack.c.l.b16 %v284
        %v540 = vunpack.c.l.b16 %v285
        %v541 = vunpack.c.l.b16 %v286
        %v542 = vunpack.c.l.b16 %v287
        %v543 = vunpack.c.l.b16 %v288
        %v544 = vunpack.c.l.b16 %v289
        %v545 = vunpack.c.l.b16 %v290
        %v546 = vunpack.c.l.b16 %v291
        %v547 = vunpack.c.l.b16 %v292
        %v548 = vunpack.c.l.b16 %v293
        %v549 = vunpack.c.l.b16 %v294
        %v550 = vunpack.c.l.b16 %v295
        %v551 = vunpack.c.l.b16 %v296
        %v552 = vunpack.c.l.b16 %v297
        %v553 = vunpack.c.l.b16 %v298
        %v554 = vunpack.c.l.b16 %v299
        %v555 = vunpack.c.l.b16 %v300
        %v556 = vunpack.c.l.b16 %v301
        %v557 = vunpack.c.l.b16 %v302
        %v558 = vunpack.c.l.b16 %v303
        %v559 = vunpack.c.l.b16 %v304
        %v560 = vunpack.c.l.b16 %v305
        %v561 = vunpack.c.l.b16 %v306
        %v562 = vunpack.c.l.b16 %v307
        %v563 = vunpack.c.l.b16 %v308
        %v564 = vunpack.c.l.b16 %v309
        %v565 = vunpack.c.l.b16 %v310
        %v566 = vunpack.c.l.b16 %v311
        %v567 = vunpack.c.l.b16 %v312
        %v568 = vunpack.c.l.b16 %v313
        %v569 = vpack.c.b16 %v449, %v448
        %v570 = vpack.c.b16 %v451, %v450
        %v571 = vpack.c.b16 %v453, %v452
        %v572 = vpack.c.b16 %v455, %v454
        %v573 = vpack.c.b16 %v457, %v456
        %v574 = vpack.c.b16 %v459, %v458
        %v575 = vpack.c.b16 %v461, %v460
        %v576 = vpack.c.b16 %v463, %v462
        %v577 = vpack.c.b16 %v465, %v464
        %v578 = vpack.c.b16 %v467, %v466
        %v579 = vpack.c.b16 %v469, %v468
        %v580 = vpack.c.b16 %v471, %v470
        %v581 = vpack.c.b16 %v473, %v472
        %v582 = vpack.c.b16 %v475, %v474
        %v583 = vpack.c.b16 %v477, %v476
        %v584 = vpack.c.b16 %v479, %v478
        %v585 = vpack.c.b16 %v481, %v480
        %v586 = vpack.c.b16 %v483, %v482
        %v587 = vpack.c.b16 %v485, %v484
        %v588 = vpack.c.b16 %v487, %v486
        %v589 = vpack.c.b16 %v489, %v488
        %v590 = vpack.c.b16 %v491, %v490
        %v591 = vpack.c.b16 %v493, %v492
        %v592 = vpack.c.b16 %v495, %v494
        %v593 = vpack.c.b16 %v497, %v496
        %v594 = vpack.c.b16 %v499, %v498
        %v595 = vpack.c.b16 %v501, %v500
        %v596 = vpack.c.b16 %v503, %v502
        %v597 = vpack.c.b16 %v505, %v504
        %v598 = vpack.c.b16 %v507, %v506
        %v599 = vpack.c.b16 %v509, %v508
        %v600 = vpack.c.b16 %v511, %v510
        %v601 = vpack.c.b16 %v513, %v512
        %v602 = vpack.c.b16 %v515, %v514
        %v603 = vpack.c.b16 %v517, %v516
        %v604 = vpack.c.b16 %v519, %v518
        %v605 = vpack.c.b16 %v521, %v520
        %v606 = vpack.c.b16 %v523, %v522
        %v607 = vpack.c.b16 %v525, %v524
        %v608 = vpack.c.b16 %v527, %v526
        %v609 = vpack.c.b16 %v529, %v528
        %v610 = vpack.c.b16 %v531, %v530
        %v611 = vpack.c.b16 %v533, %v532
        %v612 = vpack.c.b16 %v535, %v534
        %v613 = vpack.c.b16 %v537, %v536
        %v614 = vpack.c.b16 %v539, %v538
        %v615 = vpack.c.b16 %v541, %v540
        %v616 = vpack.c.b16 %v543, %v542
        %v617 = vpack.c.b16 %v545, %v544
        %v618 = vpack.c.b16 %v547, %v546
        %v619 = vpack.c.b16 %v549, %v548
        %v620 = vpack.c.b16 %v551, %v550
        %v621 = vpack.c.b16 %v553, %v552
        %v622 = vpack.c.b16 %v555, %v554
        %v623 = vpack.c.b16 %v557, %v556
        %v624 = vpack.c.b16 %v559, %v558
        %v625 = vpack.c.b16 %v561, %v560
        %v626 = vpack.c.b16 %v563, %v562
        %v627 = vpack.c.b16 %v565, %v564
        %v628 = vpack.c.b16 %v567, %v566
        %v629 = vpack.c.b16 %v568, %v568
        %v639 = vunpack.c.l.b16 %v314
        %v640 = vunpack.c.l.b16 %v315
        %v641 = vunpack.c.l.b16 %v316
        %v642 = vunpack.c.l.b16 %v317
        %v643 = vunpack.c.l.b16 %v318
        %v644 = vunpack.c.l.b16 %v319
        %v645 = vunpack.c.l.b16 %v320
        %v646 = vunpack.c.l.b16 %v321
        %v647 = vunpack.c.l.b16 %v322
        %v648 = vpack.c.b16 %v640, %v639
        %v649 = vpack.c.b16 %v642, %v641
        %v650 = vpack.c.b16 %v644, %v643
        %v651 = vpack.c.b16 %v646, %v645
        %v652 = vpack.c.b16 %v647, %v647
        %vm657 = vcmask 588800
        %v659 = vsel %vm657, %v569, 0
        %v662 = vsel %vm657, %v570, 0
        %v665 = vsel %vm657, %v571, 0
        %v668 = vsel %vm657, %v572, 0
        %v671 = vsel %vm657, %v573, 0
        %v674 = vsel %vm657, %v574, 0
        %v677 = vsel %vm657, %v575, 0
        %v680 = vsel %vm657, %v576, 0
        %v683 = vsel %vm657, %v577, 0
        %v686 = vsel %vm657, %v578, 0
        %v689 = vsel %vm657, %v579, 0
        %v692 = vsel %vm657, %v580, 0
        %v695 = vsel %vm657, %v581, 0
        %v698 = vsel %vm657, %v582, 0
        %v701 = vsel %vm657, %v583, 0
        %v704 = vsel %vm657, %v584, 0
        %v707 = vsel %vm657, %v585, 0
        %v710 = vsel %vm657, %v586, 0
        %v713 = vsel %vm657, %v587, 0
        %v716 = vsel %vm657, %v588, 0
        %v719 = vsel %vm657, %v589, 0
        %v722 = vsel %vm657, %v590, 0
        %v725 = vsel %vm657, %v591, 0
        %v728 = vsel %vm657, %v592, 0
        %v731 = vsel %vm657, %v593, 0
        %v734 = vsel %vm657, %v594, 0
        %v737 = vsel %vm657, %v595, 0
        %v740 = vsel %vm657, %v596, 0
        %v743 = vsel %vm657, %v597, 0
        %v746 = vsel %vm657, %v598, 0
        %v749 = vsel %vm657, %v599, 0
        %v752 = vsel %vm657, %v600, 0
        %v755 = vsel %vm657, %v601, 0
        %v758 = vsel %vm657, %v602, 0
        %v761 = vsel %vm657, %v603, 0
        %v764 = vsel %vm657, %v604, 0
        %v767 = vsel %vm657, %v605, 0
        %v770 = vsel %vm657, %v606, 0
        %v773 = vsel %vm657, %v607, 0
        %v776 = vsel %vm657, %v608, 0
        %v779 = vsel %vm657, %v609, 0
        %v782 = vsel %vm657, %v610, 0
        %v785 = vsel %vm657, %v611, 0
        %v788 = vsel %vm657, %v612, 0
        %v791 = vsel %vm657, %v613, 0
        %v794 = vsel %vm657, %v614, 0
        %v797 = vsel %vm657, %v615, 0
        %v800 = vsel %vm657, %v616, 0
        %v803 = vsel %vm657, %v617, 0
        %v806 = vsel %vm657, %v618, 0
        %v809 = vsel %vm657, %v619, 0
        %v812 = vsel %vm657, %v620, 0
        %v815 = vsel %vm657, %v621, 0
        %v818 = vsel %vm657, %v622, 0
        %v821 = vsel %vm657, %v623, 0
        %v824 = vsel %vm657, %v624, 0
        %v827 = vsel %vm657, %v625, 0
        %v830 = vsel %vm657, %v626, 0
        %v833 = vsel %vm657, %v627, 0
        %v836 = vsel %vm657, %v628, 0
        %v839 = vsel %vm657, %v629, 0
        %vm841 = vcmask 1043456
        %v843 = vsel %vm841, %v652, 0
        %845 = vmatpush.bf16.msra.mxu0 0
        %846 = vmatpush.bf16.msra.mxu0 0
        %847 = vmatpush.bf16.msra.mxu0 0
        %848 = vmatpush.bf16.msra.mxu0 %v843
        %849 = vmatpush.bf16.msra.mxu0 %v651
        %850 = vmatpush.bf16.msra.mxu0 %v650
        %851 = vmatpush.bf16.msra.mxu0 %v649
        %852 = vmatpush.bf16.msra.mxu0 %v648
        %853 = vmatmul.bf16.gmra.mxu0 %v659
        %v854 = vpop.f32.mrf.mxu0
        %v855 = vadd.f32 %v325, %v854
        %v856 = vpop.f32.mrf.mxu0
        %v857 = vadd.f32 %v325, %v856
        %858 = vmatmul.bf16.gmra.mxu0 %v662
        %v859 = vpop.f32.mrf.mxu0
        %v860 = vadd.f32 %v325, %v859
        %v861 = vpop.f32.mrf.mxu0
        %v862 = vadd.f32 %v325, %v861
        %863 = vmatmul.bf16.gmra.mxu0 %v665
        %v864 = vpop.f32.mrf.mxu0
        %v865 = vadd.f32 %v325, %v864
        %v866 = vpop.f32.mrf.mxu0
        %v867 = vadd.f32 %v325, %v866
        %868 = vmatmul.bf16.gmra.mxu0 %v668
        %v869 = vpop.f32.mrf.mxu0
        %v870 = vadd.f32 %v325, %v869
        %v871 = vpop.f32.mrf.mxu0
        %v872 = vadd.f32 %v325, %v871
        %873 = vmatmul.bf16.gmra.mxu0 %v671
        %v874 = vpop.f32.mrf.mxu0
        %v875 = vadd.f32 %v325, %v874
        %v876 = vpop.f32.mrf.mxu0
        %v877 = vadd.f32 %v325, %v876
        %878 = vmatmul.bf16.gmra.mxu0 %v674
        %v879 = vpop.f32.mrf.mxu0
        %v880 = vadd.f32 %v325, %v879
        %v881 = vpop.f32.mrf.mxu0
        %v882 = vadd.f32 %v325, %v881
        %883 = vmatmul.bf16.gmra.mxu0 %v677
        %v884 = vpop.f32.mrf.mxu0
        %v885 = vadd.f32 %v325, %v884
        %v886 = vpop.f32.mrf.mxu0
        %v887 = vadd.f32 %v325, %v886
        %888 = vmatmul.bf16.gmra.mxu0 %v680
        %v889 = vpop.f32.mrf.mxu0
        %v890 = vadd.f32 %v325, %v889
        %v891 = vpop.f32.mrf.mxu0
        %v892 = vadd.f32 %v325, %v891
        %893 = vmatmul.bf16.gmra.mxu0 %v683
        %v894 = vpop.f32.mrf.mxu0
        %v895 = vadd.f32 %v325, %v894
        %v896 = vpop.f32.mrf.mxu0
        %v897 = vadd.f32 %v325, %v896
        %898 = vmatmul.bf16.gmra.mxu0 %v686
        %v899 = vpop.f32.mrf.mxu0
        %v900 = vadd.f32 %v325, %v899
        %v901 = vpop.f32.mrf.mxu0
        %v902 = vadd.f32 %v325, %v901
        %903 = vmatmul.bf16.gmra.mxu0 %v689
        %v904 = vpop.f32.mrf.mxu0
        %v905 = vadd.f32 %v325, %v904
        %v906 = vpop.f32.mrf.mxu0
        %v907 = vadd.f32 %v325, %v906
        %908 = vmatmul.bf16.gmra.mxu0 %v692
        %v909 = vpop.f32.mrf.mxu0
        %v910 = vadd.f32 %v325, %v909
        %v911 = vpop.f32.mrf.mxu0
        %v912 = vadd.f32 %v325, %v911
        %913 = vmatmul.bf16.gmra.mxu0 %v695
        %v914 = vpop.f32.mrf.mxu0
        %v915 = vadd.f32 %v325, %v914
        %v916 = vpop.f32.mrf.mxu0
        %v917 = vadd.f32 %v325, %v916
        %918 = vmatmul.bf16.gmra.mxu0 %v698
        %v919 = vpop.f32.mrf.mxu0
        %v920 = vadd.f32 %v325, %v919
        %v921 = vpop.f32.mrf.mxu0
        %v922 = vadd.f32 %v325, %v921
        %923 = vmatmul.bf16.gmra.mxu0 %v701
        %v924 = vpop.f32.mrf.mxu0
        %v925 = vadd.f32 %v325, %v924
        %v926 = vpop.f32.mrf.mxu0
        %v927 = vadd.f32 %v325, %v926
        %928 = vmatmul.bf16.gmra.mxu0 %v704
        %v929 = vpop.f32.mrf.mxu0
        %v930 = vadd.f32 %v325, %v929
        %v931 = vpop.f32.mrf.mxu0
        %v932 = vadd.f32 %v325, %v931
        %933 = vmatmul.bf16.gmra.mxu0 %v707
        %v934 = vpop.f32.mrf.mxu0
        %v935 = vadd.f32 %v325, %v934
        %v936 = vpop.f32.mrf.mxu0
        %v937 = vadd.f32 %v325, %v936
        %938 = vmatmul.bf16.gmra.mxu0 %v710
        %v939 = vpop.f32.mrf.mxu0
        %v940 = vadd.f32 %v325, %v939
        %v941 = vpop.f32.mrf.mxu0
        %v942 = vadd.f32 %v325, %v941
        %943 = vmatmul.bf16.gmra.mxu0 %v713
        %v944 = vpop.f32.mrf.mxu0
        %v945 = vadd.f32 %v325, %v944
        %v946 = vpop.f32.mrf.mxu0
        %v947 = vadd.f32 %v325, %v946
        %948 = vmatmul.bf16.gmra.mxu0 %v716
        %v949 = vpop.f32.mrf.mxu0
        %v950 = vadd.f32 %v325, %v949
        %v951 = vpop.f32.mrf.mxu0
        %v952 = vadd.f32 %v325, %v951
        %953 = vmatmul.bf16.gmra.mxu0 %v719
        %v954 = vpop.f32.mrf.mxu0
        %v955 = vadd.f32 %v325, %v954
        %v956 = vpop.f32.mrf.mxu0
        %v957 = vadd.f32 %v325, %v956
        %958 = vmatmul.bf16.gmra.mxu0 %v722
        %v959 = vpop.f32.mrf.mxu0
        %v960 = vadd.f32 %v325, %v959
        %v961 = vpop.f32.mrf.mxu0
        %v962 = vadd.f32 %v325, %v961
        %963 = vmatmul.bf16.gmra.mxu0 %v725
        %v964 = vpop.f32.mrf.mxu0
        %v965 = vadd.f32 %v325, %v964
        %v966 = vpop.f32.mrf.mxu0
        %v967 = vadd.f32 %v325, %v966
        %968 = vmatmul.bf16.gmra.mxu0 %v728
        %v969 = vpop.f32.mrf.mxu0
        %v970 = vadd.f32 %v325, %v969
        %v971 = vpop.f32.mrf.mxu0
        %v972 = vadd.f32 %v325, %v971
        %973 = vmatmul.bf16.gmra.mxu0 %v731
        %v974 = vpop.f32.mrf.mxu0
        %v975 = vadd.f32 %v325, %v974
        %v976 = vpop.f32.mrf.mxu0
        %v977 = vadd.f32 %v325, %v976
        %978 = vmatmul.bf16.gmra.mxu0 %v734
        %v979 = vpop.f32.mrf.mxu0
        %v980 = vadd.f32 %v325, %v979
        %v981 = vpop.f32.mrf.mxu0
        %v982 = vadd.f32 %v325, %v981
        %983 = vmatmul.bf16.gmra.mxu0 %v737
        %v984 = vpop.f32.mrf.mxu0
        %v985 = vadd.f32 %v325, %v984
        %v986 = vpop.f32.mrf.mxu0
        %v987 = vadd.f32 %v325, %v986
        %988 = vmatmul.bf16.gmra.mxu0 %v740
        %v989 = vpop.f32.mrf.mxu0
        %v990 = vadd.f32 %v325, %v989
        %v991 = vpop.f32.mrf.mxu0
        %v992 = vadd.f32 %v325, %v991
        %993 = vmatmul.bf16.gmra.mxu0 %v743
        %v994 = vpop.f32.mrf.mxu0
        %v995 = vadd.f32 %v325, %v994
        %v996 = vpop.f32.mrf.mxu0
        %v997 = vadd.f32 %v325, %v996
        %998 = vmatmul.bf16.gmra.mxu0 %v746
        %v999 = vpop.f32.mrf.mxu0
        %v1000 = vadd.f32 %v325, %v999
        %v1001 = vpop.f32.mrf.mxu0
        %v1002 = vadd.f32 %v325, %v1001
        %1003 = vmatmul.bf16.gmra.mxu0 %v749
        %v1004 = vpop.f32.mrf.mxu0
        %v1005 = vadd.f32 %v325, %v1004
        %v1006 = vpop.f32.mrf.mxu0
        %v1007 = vadd.f32 %v325, %v1006
        %1008 = vmatmul.bf16.gmra.mxu0 %v752
        %v1009 = vpop.f32.mrf.mxu0
        %v1010 = vadd.f32 %v325, %v1009
        %v1011 = vpop.f32.mrf.mxu0
        %v1012 = vadd.f32 %v325, %v1011
        %1013 = vmatmul.bf16.gmra.mxu0 %v755
        %v1014 = vpop.f32.mrf.mxu0
        %v1015 = vadd.f32 %v325, %v1014
        %v1016 = vpop.f32.mrf.mxu0
        %v1017 = vadd.f32 %v325, %v1016
        %1018 = vmatmul.bf16.gmra.mxu0 %v758
        %v1019 = vpop.f32.mrf.mxu0
        %v1020 = vadd.f32 %v325, %v1019
        %v1021 = vpop.f32.mrf.mxu0
        %v1022 = vadd.f32 %v325, %v1021
        %1023 = vmatmul.bf16.gmra.mxu0 %v761
        %v1024 = vpop.f32.mrf.mxu0
        %v1025 = vadd.f32 %v325, %v1024
        %v1026 = vpop.f32.mrf.mxu0
        %v1027 = vadd.f32 %v325, %v1026
        %1028 = vmatmul.bf16.gmra.mxu0 %v764
        %v1029 = vpop.f32.mrf.mxu0
        %v1030 = vadd.f32 %v325, %v1029
        %v1031 = vpop.f32.mrf.mxu0
        %v1032 = vadd.f32 %v325, %v1031
        %1033 = vmatmul.bf16.gmra.mxu0 %v767
        %v1034 = vpop.f32.mrf.mxu0
        %v1035 = vadd.f32 %v325, %v1034
        %v1036 = vpop.f32.mrf.mxu0
        %v1037 = vadd.f32 %v325, %v1036
        %1038 = vmatmul.bf16.gmra.mxu0 %v770
        %v1039 = vpop.f32.mrf.mxu0
        %v1040 = vadd.f32 %v325, %v1039
        %v1041 = vpop.f32.mrf.mxu0
        %v1042 = vadd.f32 %v325, %v1041
        %1043 = vmatmul.bf16.gmra.mxu0 %v773
        %v1044 = vpop.f32.mrf.mxu0
        %v1045 = vadd.f32 %v325, %v1044
        %v1046 = vpop.f32.mrf.mxu0
        %v1047 = vadd.f32 %v325, %v1046
        %1048 = vmatmul.bf16.gmra.mxu0 %v776
        %v1049 = vpop.f32.mrf.mxu0
        %v1050 = vadd.f32 %v325, %v1049
        %v1051 = vpop.f32.mrf.mxu0
        %v1052 = vadd.f32 %v325, %v1051
        %1053 = vmatmul.bf16.gmra.mxu0 %v779
        %v1054 = vpop.f32.mrf.mxu0
        %v1055 = vadd.f32 %v325, %v1054
        %v1056 = vpop.f32.mrf.mxu0
        %v1057 = vadd.f32 %v325, %v1056
        %1058 = vmatmul.bf16.gmra.mxu0 %v782
        %v1059 = vpop.f32.mrf.mxu0
        %v1060 = vadd.f32 %v325, %v1059
        %v1061 = vpop.f32.mrf.mxu0
        %v1062 = vadd.f32 %v325, %v1061
        %1063 = vmatmul.bf16.gmra.mxu0 %v785
        %v1064 = vpop.f32.mrf.mxu0
        %v1065 = vadd.f32 %v325, %v1064
        %v1066 = vpop.f32.mrf.mxu0
        %v1067 = vadd.f32 %v325, %v1066
        %1068 = vmatmul.bf16.gmra.mxu0 %v788
        %v1069 = vpop.f32.mrf.mxu0
        %v1070 = vadd.f32 %v325, %v1069
        %v1071 = vpop.f32.mrf.mxu0
        %v1072 = vadd.f32 %v325, %v1071
        %1073 = vmatmul.bf16.gmra.mxu0 %v791
        %v1074 = vpop.f32.mrf.mxu0
        %v1075 = vadd.f32 %v325, %v1074
        %v1076 = vpop.f32.mrf.mxu0
        %v1077 = vadd.f32 %v325, %v1076
        %1078 = vmatmul.bf16.gmra.mxu0 %v794
        %v1079 = vpop.f32.mrf.mxu0
        %v1080 = vadd.f32 %v325, %v1079
        %v1081 = vpop.f32.mrf.mxu0
        %v1082 = vadd.f32 %v325, %v1081
        %1083 = vmatmul.bf16.gmra.mxu0 %v797
        %v1084 = vpop.f32.mrf.mxu0
        %v1085 = vadd.f32 %v325, %v1084
        %v1086 = vpop.f32.mrf.mxu0
        %v1087 = vadd.f32 %v325, %v1086
        %1088 = vmatmul.bf16.gmra.mxu0 %v800
        %v1089 = vpop.f32.mrf.mxu0
        %v1090 = vadd.f32 %v325, %v1089
        %v1091 = vpop.f32.mrf.mxu0
        %v1092 = vadd.f32 %v325, %v1091
        %1093 = vmatmul.bf16.gmra.mxu0 %v803
        %v1094 = vpop.f32.mrf.mxu0
        %v1095 = vadd.f32 %v325, %v1094
        %v1096 = vpop.f32.mrf.mxu0
        %v1097 = vadd.f32 %v325, %v1096
        %1098 = vmatmul.bf16.gmra.mxu0 %v806
        %v1099 = vpop.f32.mrf.mxu0
        %v1100 = vadd.f32 %v325, %v1099
        %v1101 = vpop.f32.mrf.mxu0
        %v1102 = vadd.f32 %v325, %v1101
        %1103 = vmatmul.bf16.gmra.mxu0 %v809
        %v1104 = vpop.f32.mrf.mxu0
        %v1105 = vadd.f32 %v325, %v1104
        %v1106 = vpop.f32.mrf.mxu0
        %v1107 = vadd.f32 %v325, %v1106
        %1108 = vmatmul.bf16.gmra.mxu0 %v812
        %v1109 = vpop.f32.mrf.mxu0
        %v1110 = vadd.f32 %v325, %v1109
        %v1111 = vpop.f32.mrf.mxu0
        %v1112 = vadd.f32 %v325, %v1111
        %1113 = vmatmul.bf16.gmra.mxu0 %v815
        %v1114 = vpop.f32.mrf.mxu0
        %v1115 = vadd.f32 %v325, %v1114
        %v1116 = vpop.f32.mrf.mxu0
        %v1117 = vadd.f32 %v325, %v1116
        %1118 = vmatmul.bf16.gmra.mxu0 %v818
        %v1119 = vpop.f32.mrf.mxu0
        %v1120 = vadd.f32 %v325, %v1119
        %v1121 = vpop.f32.mrf.mxu0
        %v1122 = vadd.f32 %v325, %v1121
        %1123 = vmatmul.bf16.gmra.mxu0 %v821
        %v1124 = vpop.f32.mrf.mxu0
        %v1125 = vadd.f32 %v325, %v1124
        %v1126 = vpop.f32.mrf.mxu0
        %v1127 = vadd.f32 %v325, %v1126
        %1128 = vmatmul.bf16.gmra.mxu0 %v824
        %v1129 = vpop.f32.mrf.mxu0
        %v1130 = vadd.f32 %v325, %v1129
        %v1131 = vpop.f32.mrf.mxu0
        %v1132 = vadd.f32 %v325, %v1131
        %1133 = vmatmul.bf16.gmra.mxu0 %v827
        %v1134 = vpop.f32.mrf.mxu0
        %v1135 = vadd.f32 %v325, %v1134
        %v1136 = vpop.f32.mrf.mxu0
        %v1137 = vadd.f32 %v325, %v1136
        %1138 = vmatmul.bf16.gmra.mxu0 %v830
        %v1139 = vpop.f32.mrf.mxu0
        %v1140 = vadd.f32 %v325, %v1139
        %v1141 = vpop.f32.mrf.mxu0
        %v1142 = vadd.f32 %v325, %v1141
        %1143 = vmatmul.bf16.gmra.mxu0 %v833
        %v1144 = vpop.f32.mrf.mxu0
        %v1145 = vadd.f32 %v325, %v1144
        %v1146 = vpop.f32.mrf.mxu0
        %v1147 = vadd.f32 %v325, %v1146
        %1148 = vmatmul.bf16.gmra.mxu0 %v836
        %v1149 = vpop.f32.mrf.mxu0
        %v1150 = vadd.f32 %v325, %v1149
        %v1151 = vpop.f32.mrf.mxu0
        %v1152 = vadd.f32 %v325, %v1151
        %1153 = vmatmul.bf16.gmra.mxu0 %v839
        %v1154 = vpop.f32.mrf.mxu0
        %v1155 = vadd.f32 %v325, %v1154
        %v1156 = vpop.f32.mrf.mxu0
        %1157 = vdwg.mxu0
        %v1158 = vmax.f32 %v855, 0.0
        %v1159 = vmax.f32 %v857, 0.0
        %v1160 = vmax.f32 %v860, 0.0
        %v1161 = vmax.f32 %v862, 0.0
        %v1162 = vmax.f32 %v865, 0.0
        %v1163 = vmax.f32 %v867, 0.0
        %v1164 = vmax.f32 %v870, 0.0
        %v1165 = vmax.f32 %v872, 0.0
        %v1166 = vmax.f32 %v875, 0.0
        %v1167 = vmax.f32 %v877, 0.0
        %v1168 = vmax.f32 %v880, 0.0
        %v1169 = vmax.f32 %v882, 0.0
        %v1170 = vmax.f32 %v885, 0.0
        %v1171 = vmax.f32 %v887, 0.0
        %v1172 = vmax.f32 %v890, 0.0
        %v1173 = vmax.f32 %v892, 0.0
        %v1174 = vmax.f32 %v895, 0.0
        %v1175 = vmax.f32 %v897, 0.0
        %v1176 = vmax.f32 %v900, 0.0
        %v1177 = vmax.f32 %v902, 0.0
        %v1178 = vmax.f32 %v905, 0.0
        %v1179 = vmax.f32 %v907, 0.0
        %v1180 = vmax.f32 %v910, 0.0
        %v1181 = vmax.f32 %v912, 0.0
        %v1182 = vmax.f32 %v915, 0.0
        %v1183 = vmax.f32 %v917, 0.0
        %v1184 = vmax.f32 %v920, 0.0
        %v1185 = vmax.f32 %v922, 0.0
        %v1186 = vmax.f32 %v925, 0.0
        %v1187 = vmax.f32 %v927, 0.0
        %v1188 = vmax.f32 %v930, 0.0
        %v1189 = vmax.f32 %v932, 0.0
        %v1190 = vmax.f32 %v935, 0.0
        %v1191 = vmax.f32 %v937, 0.0
        %v1192 = vmax.f32 %v940, 0.0
        %v1193 = vmax.f32 %v942, 0.0
        %v1194 = vmax.f32 %v945, 0.0
        %v1195 = vmax.f32 %v947, 0.0
        %v1196 = vmax.f32 %v950, 0.0
        %v1197 = vmax.f32 %v952, 0.0
        %v1198 = vmax.f32 %v955, 0.0
        %v1199 = vmax.f32 %v957, 0.0
        %v1200 = vmax.f32 %v960, 0.0
        %v1201 = vmax.f32 %v962, 0.0
        %v1202 = vmax.f32 %v965, 0.0
        %v1203 = vmax.f32 %v967, 0.0
        %v1204 = vmax.f32 %v970, 0.0
        %v1205 = vmax.f32 %v972, 0.0
        %v1206 = vmax.f32 %v975, 0.0
        %v1207 = vmax.f32 %v977, 0.0
        %v1208 = vmax.f32 %v980, 0.0
        %v1209 = vmax.f32 %v982, 0.0
        %v1210 = vmax.f32 %v985, 0.0
        %v1211 = vmax.f32 %v987, 0.0
        %v1212 = vmax.f32 %v990, 0.0
        %v1213 = vmax.f32 %v992, 0.0
        %v1214 = vmax.f32 %v995, 0.0
        %v1215 = vmax.f32 %v997, 0.0
        %v1216 = vmax.f32 %v1000, 0.0
        %v1217 = vmax.f32 %v1002, 0.0
        %v1218 = vmax.f32 %v1005, 0.0
        %v1219 = vmax.f32 %v1007, 0.0
        %v1220 = vmax.f32 %v1010, 0.0
        %v1221 = vmax.f32 %v1012, 0.0
        %v1222 = vmax.f32 %v1015, 0.0
        %v1223 = vmax.f32 %v1017, 0.0
        %v1224 = vmax.f32 %v1020, 0.0
        %v1225 = vmax.f32 %v1022, 0.0
        %v1226 = vmax.f32 %v1025, 0.0
        %v1227 = vmax.f32 %v1027, 0.0
        %v1228 = vmax.f32 %v1030, 0.0
        %v1229 = vmax.f32 %v1032, 0.0
        %v1230 = vmax.f32 %v1035, 0.0
        %v1231 = vmax.f32 %v1037, 0.0
        %v1232 = vmax.f32 %v1040, 0.0
        %v1233 = vmax.f32 %v1042, 0.0
        %v1234 = vmax.f32 %v1045, 0.0
        %v1235 = vmax.f32 %v1047, 0.0
        %v1236 = vmax.f32 %v1050, 0.0
        %v1237 = vmax.f32 %v1052, 0.0
        %v1238 = vmax.f32 %v1055, 0.0
        %v1239 = vmax.f32 %v1057, 0.0
        %v1240 = vmax.f32 %v1060, 0.0
        %v1241 = vmax.f32 %v1062, 0.0
        %v1242 = vmax.f32 %v1065, 0.0
        %v1243 = vmax.f32 %v1067, 0.0
        %v1244 = vmax.f32 %v1070, 0.0
        %v1245 = vmax.f32 %v1072, 0.0
        %v1246 = vmax.f32 %v1075, 0.0
        %v1247 = vmax.f32 %v1077, 0.0
        %v1248 = vmax.f32 %v1080, 0.0
        %v1249 = vmax.f32 %v1082, 0.0
        %v1250 = vmax.f32 %v1085, 0.0
        %v1251 = vmax.f32 %v1087, 0.0
        %v1252 = vmax.f32 %v1090, 0.0
        %v1253 = vmax.f32 %v1092, 0.0
        %v1254 = vmax.f32 %v1095, 0.0
        %v1255 = vmax.f32 %v1097, 0.0
        %v1256 = vmax.f32 %v1100, 0.0
        %v1257 = vmax.f32 %v1102, 0.0
        %v1258 = vmax.f32 %v1105, 0.0
        %v1259 = vmax.f32 %v1107, 0.0
        %v1260 = vmax.f32 %v1110, 0.0
        %v1261 = vmax.f32 %v1112, 0.0
        %v1262 = vmax.f32 %v1115, 0.0
        %v1263 = vmax.f32 %v1117, 0.0
        %v1264 = vmax.f32 %v1120, 0.0
        %v1265 = vmax.f32 %v1122, 0.0
        %v1266 = vmax.f32 %v1125, 0.0
        %v1267 = vmax.f32 %v1127, 0.0
        %v1268 = vmax.f32 %v1130, 0.0
        %v1269 = vmax.f32 %v1132, 0.0
        %v1270 = vmax.f32 %v1135, 0.0
        %v1271 = vmax.f32 %v1137, 0.0
        %v1272 = vmax.f32 %v1140, 0.0
        %v1273 = vmax.f32 %v1142, 0.0
        %v1274 = vmax.f32 %v1145, 0.0
        %v1275 = vmax.f32 %v1147, 0.0
        %v1276 = vmax.f32 %v1150, 0.0
        %v1277 = vmax.f32 %v1152, 0.0
        %v1278 = vmax.f32 %v1155, 0.0
        %v1279 = vpack.c.bf16 %v1158, %v1158
        %v1280 = vpack.c.bf16 %v1159, %v1159
        %v1281 = vpack.c.bf16 %v1160, %v1160
        %v1282 = vpack.c.bf16 %v1161, %v1161
        %v1283 = vpack.c.bf16 %v1162, %v1162
        %v1284 = vpack.c.bf16 %v1163, %v1163
        %v1285 = vpack.c.bf16 %v1164, %v1164
        %v1286 = vpack.c.bf16 %v1165, %v1165
        %v1287 = vpack.c.bf16 %v1166, %v1166
        %v1288 = vpack.c.bf16 %v1167, %v1167
        %v1289 = vpack.c.bf16 %v1168, %v1168
        %v1290 = vpack.c.bf16 %v1169, %v1169
        %v1291 = vpack.c.bf16 %v1170, %v1170
        %v1292 = vpack.c.bf16 %v1171, %v1171
        %v1293 = vpack.c.bf16 %v1172, %v1172
        %v1294 = vpack.c.bf16 %v1173, %v1173
        %v1295 = vpack.c.bf16 %v1174, %v1174
        %v1296 = vpack.c.bf16 %v1175, %v1175
        %v1297 = vpack.c.bf16 %v1176, %v1176
        %v1298 = vpack.c.bf16 %v1177, %v1177
        %v1299 = vpack.c.bf16 %v1178, %v1178
        %v1300 = vpack.c.bf16 %v1179, %v1179
        %v1301 = vpack.c.bf16 %v1180, %v1180
        %v1302 = vpack.c.bf16 %v1181, %v1181
        %v1303 = vpack.c.bf16 %v1182, %v1182
        %v1304 = vpack.c.bf16 %v1183, %v1183
        %v1305 = vpack.c.bf16 %v1184, %v1184
        %v1306 = vpack.c.bf16 %v1185, %v1185
        %v1307 = vpack.c.bf16 %v1186, %v1186
        %v1308 = vpack.c.bf16 %v1187, %v1187
        %v1309 = vpack.c.bf16 %v1188, %v1188
        %v1310 = vpack.c.bf16 %v1189, %v1189
        %v1311 = vpack.c.bf16 %v1190, %v1190
        %v1312 = vpack.c.bf16 %v1191, %v1191
        %v1313 = vpack.c.bf16 %v1192, %v1192
        %v1314 = vpack.c.bf16 %v1193, %v1193
        %v1315 = vpack.c.bf16 %v1194, %v1194
        %v1316 = vpack.c.bf16 %v1195, %v1195
        %v1317 = vpack.c.bf16 %v1196, %v1196
        %v1318 = vpack.c.bf16 %v1197, %v1197
        %v1319 = vpack.c.bf16 %v1198, %v1198
        %v1320 = vpack.c.bf16 %v1199, %v1199
        %v1321 = vpack.c.bf16 %v1200, %v1200
        %v1322 = vpack.c.bf16 %v1201, %v1201
        %v1323 = vpack.c.bf16 %v1202, %v1202
        %v1324 = vpack.c.bf16 %v1203, %v1203
        %v1325 = vpack.c.bf16 %v1204, %v1204
        %v1326 = vpack.c.bf16 %v1205, %v1205
        %v1327 = vpack.c.bf16 %v1206, %v1206
        %v1328 = vpack.c.bf16 %v1207, %v1207
        %v1329 = vpack.c.bf16 %v1208, %v1208
        %v1330 = vpack.c.bf16 %v1209, %v1209
        %v1331 = vpack.c.bf16 %v1210, %v1210
        %v1332 = vpack.c.bf16 %v1211, %v1211
        %v1333 = vpack.c.bf16 %v1212, %v1212
        %v1334 = vpack.c.bf16 %v1213, %v1213
        %v1335 = vpack.c.bf16 %v1214, %v1214
        %v1336 = vpack.c.bf16 %v1215, %v1215
        %v1337 = vpack.c.bf16 %v1216, %v1216
        %v1338 = vpack.c.bf16 %v1217, %v1217
        %v1339 = vpack.c.bf16 %v1218, %v1218
        %v1340 = vpack.c.bf16 %v1219, %v1219
        %v1341 = vpack.c.bf16 %v1220, %v1220
        %v1342 = vpack.c.bf16 %v1221, %v1221
        %v1343 = vpack.c.bf16 %v1222, %v1222
        %v1344 = vpack.c.bf16 %v1223, %v1223
        %v1345 = vpack.c.bf16 %v1224, %v1224
        %v1346 = vpack.c.bf16 %v1225, %v1225
        %v1347 = vpack.c.bf16 %v1226, %v1226
        %v1348 = vpack.c.bf16 %v1227, %v1227
        %v1349 = vpack.c.bf16 %v1228, %v1228
        %v1350 = vpack.c.bf16 %v1229, %v1229
        %v1351 = vpack.c.bf16 %v1230, %v1230
        %v1352 = vpack.c.bf16 %v1231, %v1231
        %v1353 = vpack.c.bf16 %v1232, %v1232
        %v1354 = vpack.c.bf16 %v1233, %v1233
        %v1355 = vpack.c.bf16 %v1234, %v1234
        %v1356 = vpack.c.bf16 %v1235, %v1235
        %v1357 = vpack.c.bf16 %v1236, %v1236
        %v1358 = vpack.c.bf16 %v1237, %v1237
        %v1359 = vpack.c.bf16 %v1238, %v1238
        %v1360 = vpack.c.bf16 %v1239, %v1239
        %v1361 = vpack.c.bf16 %v1240, %v1240
        %v1362 = vpack.c.bf16 %v1241, %v1241
        %v1363 = vpack.c.bf16 %v1242, %v1242
        %v1364 = vpack.c.bf16 %v1243, %v1243
        %v1365 = vpack.c.bf16 %v1244, %v1244
        %v1366 = vpack.c.bf16 %v1245, %v1245
        %v1367 = vpack.c.bf16 %v1246, %v1246
        %v1368 = vpack.c.bf16 %v1247, %v1247
        %v1369 = vpack.c.bf16 %v1248, %v1248
        %v1370 = vpack.c.bf16 %v1249, %v1249
        %v1371 = vpack.c.bf16 %v1250, %v1250
        %v1372 = vpack.c.bf16 %v1251, %v1251
        %v1373 = vpack.c.bf16 %v1252, %v1252
        %v1374 = vpack.c.bf16 %v1253, %v1253
        %v1375 = vpack.c.bf16 %v1254, %v1254
        %v1376 = vpack.c.bf16 %v1255, %v1255
        %v1377 = vpack.c.bf16 %v1256, %v1256
        %v1378 = vpack.c.bf16 %v1257, %v1257
        %v1379 = vpack.c.bf16 %v1258, %v1258
        %v1380 = vpack.c.bf16 %v1259, %v1259
        %v1381 = vpack.c.bf16 %v1260, %v1260
        %v1382 = vpack.c.bf16 %v1261, %v1261
        %v1383 = vpack.c.bf16 %v1262, %v1262
        %v1384 = vpack.c.bf16 %v1263, %v1263
        %v1385 = vpack.c.bf16 %v1264, %v1264
        %v1386 = vpack.c.bf16 %v1265, %v1265
        %v1387 = vpack.c.bf16 %v1266, %v1266
        %v1388 = vpack.c.bf16 %v1267, %v1267
        %v1389 = vpack.c.bf16 %v1268, %v1268
        %v1390 = vpack.c.bf16 %v1269, %v1269
        %v1391 = vpack.c.bf16 %v1270, %v1270
        %v1392 = vpack.c.bf16 %v1271, %v1271
        %v1393 = vpack.c.bf16 %v1272, %v1272
        %v1394 = vpack.c.bf16 %v1273, %v1273
        %v1395 = vpack.c.bf16 %v1274, %v1274
        %v1396 = vpack.c.bf16 %v1275, %v1275
        %v1397 = vpack.c.bf16 %v1276, %v1276
        %v1398 = vpack.c.bf16 %v1277, %v1277
        %v1399 = vpack.c.bf16 %v1278, %v1278
        %vm1400 = vcmask 60416
        %1401 = vst.msk [vmem:[%s172] sm:$0xf] %vm1400, %v1279
        %1402 = vst.msk [vmem:[%s172 + $0x4] sm:$0xf] %vm1400, %v1280
        %1403 = vst.msk [vmem:[%s172 + $0x8] sm:$0xf] %vm1400, %v1281
        %1404 = vst.msk [vmem:[%s172 + $0xc] sm:$0xf] %vm1400, %v1282
        %1405 = vst.msk [vmem:[%s172 + $0x10] sm:$0xf] %vm1400, %v1283
        %1406 = vst.msk [vmem:[%s172 + $0x14] sm:$0xf] %vm1400, %v1284
        %1407 = vst.msk [vmem:[%s172 + $0x18] sm:$0xf] %vm1400, %v1285
        %1408 = vst.msk [vmem:[%s172 + $0x1c] sm:$0xf] %vm1400, %v1286
        %1409 = vst.msk [vmem:[%s172 + $0x20] sm:$0xf] %vm1400, %v1287
        %1410 = vst.msk [vmem:[%s172 + $0x24] sm:$0xf] %vm1400, %v1288
        %1411 = vst.msk [vmem:[%s172 + $0x28] sm:$0xf] %vm1400, %v1289
        %1412 = vst.msk [vmem:[%s172 + $0x2c] sm:$0xf] %vm1400, %v1290
        %1413 = vst.msk [vmem:[%s172 + $0x30] sm:$0xf] %vm1400, %v1291
        %1414 = vst.msk [vmem:[%s172 + $0x34] sm:$0xf] %vm1400, %v1292
        %1415 = vst.msk [vmem:[%s172 + $0x38] sm:$0xf] %vm1400, %v1293
        %1416 = vst.msk [vmem:[%s172 + $0x3c] sm:$0xf] %vm1400, %v1294
        %1417 = vst.msk [vmem:[%s172 + $0x40] sm:$0xf] %vm1400, %v1295
        %1418 = vst.msk [vmem:[%s172 + $0x44] sm:$0xf] %vm1400, %v1296
        %1419 = vst.msk [vmem:[%s172 + $0x48] sm:$0xf] %vm1400, %v1297
        %1420 = vst.msk [vmem:[%s172 + $0x4c] sm:$0xf] %vm1400, %v1298
        %1421 = vst.msk [vmem:[%s172 + $0x50] sm:$0xf] %vm1400, %v1299
        %1422 = vst.msk [vmem:[%s172 + $0x54] sm:$0xf] %vm1400, %v1300
        %1423 = vst.msk [vmem:[%s172 + $0x58] sm:$0xf] %vm1400, %v1301
        %1424 = vst.msk [vmem:[%s172 + $0x5c] sm:$0xf] %vm1400, %v1302
        %1425 = vst.msk [vmem:[%s172 + $0x60] sm:$0xf] %vm1400, %v1303
        %1426 = vst.msk [vmem:[%s172 + $0x64] sm:$0xf] %vm1400, %v1304
        %1427 = vst.msk [vmem:[%s172 + $0x68] sm:$0xf] %vm1400, %v1305
        %1428 = vst.msk [vmem:[%s172 + $0x6c] sm:$0xf] %vm1400, %v1306
        %1429 = vst.msk [vmem:[%s172 + $0x70] sm:$0xf] %vm1400, %v1307
        %1430 = vst.msk [vmem:[%s172 + $0x74] sm:$0xf] %vm1400, %v1308
        %1431 = vst.msk [vmem:[%s172 + $0x78] sm:$0xf] %vm1400, %v1309
        %1432 = vst.msk [vmem:[%s172 + $0x7c] sm:$0xf] %vm1400, %v1310
        %1433 = vst.msk [vmem:[%s172 + $0x80] sm:$0xf] %vm1400, %v1311
        %1434 = vst.msk [vmem:[%s172 + $0x84] sm:$0xf] %vm1400, %v1312
        %1435 = vst.msk [vmem:[%s172 + $0x88] sm:$0xf] %vm1400, %v1313
        %1436 = vst.msk [vmem:[%s172 + $0x8c] sm:$0xf] %vm1400, %v1314
        %1437 = vst.msk [vmem:[%s172 + $0x90] sm:$0xf] %vm1400, %v1315
        %1438 = vst.msk [vmem:[%s172 + $0x94] sm:$0xf] %vm1400, %v1316
        %1439 = vst.msk [vmem:[%s172 + $0x98] sm:$0xf] %vm1400, %v1317
        %1440 = vst.msk [vmem:[%s172 + $0x9c] sm:$0xf] %vm1400, %v1318
        %1441 = vst.msk [vmem:[%s172 + $0xa0] sm:$0xf] %vm1400, %v1319
        %1442 = vst.msk [vmem:[%s172 + $0xa4] sm:$0xf] %vm1400, %v1320
        %1443 = vst.msk [vmem:[%s172 + $0xa8] sm:$0xf] %vm1400, %v1321
        %1444 = vst.msk [vmem:[%s172 + $0xac] sm:$0xf] %vm1400, %v1322
        %1445 = vst.msk [vmem:[%s172 + $0xb0] sm:$0xf] %vm1400, %v1323
        %1446 = vst.msk [vmem:[%s172 + $0xb4] sm:$0xf] %vm1400, %v1324
        %1447 = vst.msk [vmem:[%s172 + $0xb8] sm:$0xf] %vm1400, %v1325
        %1448 = vst.msk [vmem:[%s172 + $0xbc] sm:$0xf] %vm1400, %v1326
        %1449 = vst.msk [vmem:[%s172 + $0xc0] sm:$0xf] %vm1400, %v1327
        %1450 = vst.msk [vmem:[%s172 + $0xc4] sm:$0xf] %vm1400, %v1328
        %1451 = vst.msk [vmem:[%s172 + $0xc8] sm:$0xf] %vm1400, %v1329
        %1452 = vst.msk [vmem:[%s172 + $0xcc] sm:$0xf] %vm1400, %v1330
        %1453 = vst.msk [vmem:[%s172 + $0xd0] sm:$0xf] %vm1400, %v1331
        %1454 = vst.msk [vmem:[%s172 + $0xd4] sm:$0xf] %vm1400, %v1332
        %1455 = vst.msk [vmem:[%s172 + $0xd8] sm:$0xf] %vm1400, %v1333
        %1456 = vst.msk [vmem:[%s172 + $0xdc] sm:$0xf] %vm1400, %v1334
        %1457 = vst.msk [vmem:[%s172 + $0xe0] sm:$0xf] %vm1400, %v1335
        %1458 = vst.msk [vmem:[%s172 + $0xe4] sm:$0xf] %vm1400, %v1336
        %1459 = vst.msk [vmem:[%s172 + $0xe8] sm:$0xf] %vm1400, %v1337
        %1460 = vst.msk [vmem:[%s172 + $0xec] sm:$0xf] %vm1400, %v1338
        %1461 = vst.msk [vmem:[%s172 + $0xf0] sm:$0xf] %vm1400, %v1339
        %1462 = vst.msk [vmem:[%s172 + $0xf4] sm:$0xf] %vm1400, %v1340
        %1463 = vst.msk [vmem:[%s172 + $0xf8] sm:$0xf] %vm1400, %v1341
        %1464 = vst.msk [vmem:[%s172 + $0xfc] sm:$0xf] %vm1400, %v1342
        %1465 = vst.msk [vmem:[%s172 + $0x100] sm:$0xf] %vm1400, %v1343
        %1466 = vst.msk [vmem:[%s172 + $0x104] sm:$0xf] %vm1400, %v1344
        %1467 = vst.msk [vmem:[%s172 + $0x108] sm:$0xf] %vm1400, %v1345
        %1468 = vst.msk [vmem:[%s172 + $0x10c] sm:$0xf] %vm1400, %v1346
        %1469 = vst.msk [vmem:[%s172 + $0x110] sm:$0xf] %vm1400, %v1347
        %1470 = vst.msk [vmem:[%s172 + $0x114] sm:$0xf] %vm1400, %v1348
        %1471 = vst.msk [vmem:[%s172 + $0x118] sm:$0xf] %vm1400, %v1349
        %1472 = vst.msk [vmem:[%s172 + $0x11c] sm:$0xf] %vm1400, %v1350
        %1473 = vst.msk [vmem:[%s172 + $0x120] sm:$0xf] %vm1400, %v1351
        %1474 = vst.msk [vmem:[%s172 + $0x124] sm:$0xf] %vm1400, %v1352
        %1475 = vst.msk [vmem:[%s172 + $0x128] sm:$0xf] %vm1400, %v1353
        %1476 = vst.msk [vmem:[%s172 + $0x12c] sm:$0xf] %vm1400, %v1354
        %1477 = vst.msk [vmem:[%s172 + $0x130] sm:$0xf] %vm1400, %v1355
        %1478 = vst.msk [vmem:[%s172 + $0x134] sm:$0xf] %vm1400, %v1356
        %1479 = vst.msk [vmem:[%s172 + $0x138] sm:$0xf] %vm1400, %v1357
        %1480 = vst.msk [vmem:[%s172 + $0x13c] sm:$0xf] %vm1400, %v1358
        %1481 = vst.msk [vmem:[%s172 + $0x140] sm:$0xf] %vm1400, %v1359
        %1482 = vst.msk [vmem:[%s172 + $0x144] sm:$0xf] %vm1400, %v1360
        %1483 = vst.msk [vmem:[%s172 + $0x148] sm:$0xf] %vm1400, %v1361
        %1484 = vst.msk [vmem:[%s172 + $0x14c] sm:$0xf] %vm1400, %v1362
        %1485 = vst.msk [vmem:[%s172 + $0x150] sm:$0xf] %vm1400, %v1363
        %1486 = vst.msk [vmem:[%s172 + $0x154] sm:$0xf] %vm1400, %v1364
        %1487 = vst.msk [vmem:[%s172 + $0x158] sm:$0xf] %vm1400, %v1365
        %1488 = vst.msk [vmem:[%s172 + $0x15c] sm:$0xf] %vm1400, %v1366
        %1489 = vst.msk [vmem:[%s172 + $0x160] sm:$0xf] %vm1400, %v1367
        %1490 = vst.msk [vmem:[%s172 + $0x164] sm:$0xf] %vm1400, %v1368
        %1491 = vst.msk [vmem:[%s172 + $0x168] sm:$0xf] %vm1400, %v1369
        %1492 = vst.msk [vmem:[%s172 + $0x16c] sm:$0xf] %vm1400, %v1370
        %1493 = vst.msk [vmem:[%s172 + $0x170] sm:$0xf] %vm1400, %v1371
        %1494 = vst.msk [vmem:[%s172 + $0x174] sm:$0xf] %vm1400, %v1372
        %1495 = vst.msk [vmem:[%s172 + $0x178] sm:$0xf] %vm1400, %v1373
        %1496 = vst.msk [vmem:[%s172 + $0x17c] sm:$0xf] %vm1400, %v1374
        %1497 = vst.msk [vmem:[%s172 + $0x180] sm:$0xf] %vm1400, %v1375
        %1498 = vst.msk [vmem:[%s172 + $0x184] sm:$0xf] %vm1400, %v1376
        %1499 = vst.msk [vmem:[%s172 + $0x188] sm:$0xf] %vm1400, %v1377
        %1500 = vst.msk [vmem:[%s172 + $0x18c] sm:$0xf] %vm1400, %v1378
        %1501 = vst.msk [vmem:[%s172 + $0x190] sm:$0xf] %vm1400, %v1379
        %1502 = vst.msk [vmem:[%s172 + $0x194] sm:$0xf] %vm1400, %v1380
        %1503 = vst.msk [vmem:[%s172 + $0x198] sm:$0xf] %vm1400, %v1381
        %1504 = vst.msk [vmem:[%s172 + $0x19c] sm:$0xf] %vm1400, %v1382
        %1505 = vst.msk [vmem:[%s172 + $0x1a0] sm:$0xf] %vm1400, %v1383
        %1506 = vst.msk [vmem:[%s172 + $0x1a4] sm:$0xf] %vm1400, %v1384
        %1507 = vst.msk [vmem:[%s172 + $0x1a8] sm:$0xf] %vm1400, %v1385
        %1508 = vst.msk [vmem:[%s172 + $0x1ac] sm:$0xf] %vm1400, %v1386
        %1509 = vst.msk [vmem:[%s172 + $0x1b0] sm:$0xf] %vm1400, %v1387
        %1510 = vst.msk [vmem:[%s172 + $0x1b4] sm:$0xf] %vm1400, %v1388
        %1511 = vst.msk [vmem:[%s172 + $0x1b8] sm:$0xf] %vm1400, %v1389
        %1512 = vst.msk [vmem:[%s172 + $0x1bc] sm:$0xf] %vm1400, %v1390
        %1513 = vst.msk [vmem:[%s172 + $0x1c0] sm:$0xf] %vm1400, %v1391
        %1514 = vst.msk [vmem:[%s172 + $0x1c4] sm:$0xf] %vm1400, %v1392
        %1515 = vst.msk [vmem:[%s172 + $0x1c8] sm:$0xf] %vm1400, %v1393
        %1516 = vst.msk [vmem:[%s172 + $0x1cc] sm:$0xf] %vm1400, %v1394
        %1517 = vst.msk [vmem:[%s172 + $0x1d0] sm:$0xf] %vm1400, %v1395
        %1518 = vst.msk [vmem:[%s172 + $0x1d4] sm:$0xf] %vm1400, %v1396
        %1519 = vst.msk [vmem:[%s172 + $0x1d8] sm:$0xf] %vm1400, %v1397
        %1520 = vst.msk [vmem:[%s172 + $0x1dc] sm:$0xf] %vm1400, %v1398
        %1521 = vst.msk [vmem:[%s172 + $0x1e0] sm:$0xf] %vm1400, %v1399
        %s1522 = sand.u32 %s90, 1
        %s1523 = sand.u32 %s90, 1
        %s1524 = smul.addr %s1523, 484
        %s1525 = scalar_lea.vmem [#allocation2], %s1524
        // Predicated region
        $region33: #{network_forward.14} parent=31 // pred_check
          %p1526 = pneg %p100
        $region34: #{network_forward.14} parent=31 // pred_check_branch
          %1528 = sbr.rel (%p1526) target = $region36
        $region35: #{network_forward.14} parent=31 // pred_region
          %s1529 = smul.u32 121, %s14
          %s1530 = ssub.s32 241, %s1529
          %p1531 = scmp.lt.s32.totalorder %s1530, 121
          %s1532 = scalar_select %p1531, %s1530, 121
          %s1533 = smul.u32 4, %s1532
          %p1534 = scmp.ne.s32.totalorder 0, %s1533
          %s1535 = smul.addr %s1529, 4
          %s1536 = scalar_lea.vmem %s3, %s1535
          // Predicated region
          $region37: #{network_forward.14} parent=35 // pred_check
            %p1537 = pneg %p1534
          $region38: #{network_forward.14} parent=35 // pred_check_branch
            %1539 = sbr.rel (%p1537) target = $region40
          $region39: #{network_forward.14} parent=35 // pred_region
            // Predicated region
            $region41: #{network_forward.14} parent=39 // pred_check
              _
            $region42: #{network_forward.14} parent=39 // pred_check_branch
              %1541 = sbr.rel target = $region44
            $region43: #{network_forward.14} parent=39 // pred_region
              // Predicated region
              $region63: #{network_forward.14} parent=43 // pred_check
                _
              $region64: #{network_forward.14} parent=43 // pred_check_branch
                %1653 = sbr.rel (0) target = $region66
              $region65: #{network_forward.14} parent=43 // pred_region
                %s1655 = ssub.s32 16, 1
                %s1656 = sshrl.u32 %s1532, 5
                // While loop
                $region67: #{network_forward.14} parent=65 // loop_pre_header
                  _
                $region68: #{network_forward.14} parent=65 // loop_header
                  %s1658 = sphi 0, %s1660
                  %p1659 = scmp.ge.s32.totalorder %s1658, %s1656
                  %s1663 = sphi 0, %s1732
                  %s1664 = sphi %s1525, %s1735
                  %s1665 = sphi %s1536, %s1736
                $region69: #{network_forward.14} parent=65 // loop_header_branch
                  %1662 = sbr.rel (%p1659) target = $region73
                $region70: #{network_forward.14} parent=65 // loop_body
                  %v1666 = vld [vmem:[%s1664] sm:%s1655]
                  %1667 = vst [vmem:[%s1665] sm:%s1655] %v1666
                  %v1668 = vld [vmem:[%s1664 + $0x4] sm:%s1655]
                  %1669 = vst [vmem:[%s1665 + $0x4] sm:%s1655] %v1668
                  %v1670 = vld [vmem:[%s1664 + $0x8] sm:%s1655]
                  %1671 = vst [vmem:[%s1665 + $0x8] sm:%s1655] %v1670
                  %v1672 = vld [vmem:[%s1664 + $0xc] sm:%s1655]
                  %1673 = vst [vmem:[%s1665 + $0xc] sm:%s1655] %v1672
                  %v1674 = vld [vmem:[%s1664 + $0x10] sm:%s1655]
                  %1675 = vst [vmem:[%s1665 + $0x10] sm:%s1655] %v1674
                  %v1676 = vld [vmem:[%s1664 + $0x14] sm:%s1655]
                  %1677 = vst [vmem:[%s1665 + $0x14] sm:%s1655] %v1676
                  %v1678 = vld [vmem:[%s1664 + $0x18] sm:%s1655]
                  %1679 = vst [vmem:[%s1665 + $0x18] sm:%s1655] %v1678
                  %v1680 = vld [vmem:[%s1664 + $0x1c] sm:%s1655]
                  %1681 = vst [vmem:[%s1665 + $0x1c] sm:%s1655] %v1680
                  %v1682 = vld [vmem:[%s1664 + $0x20] sm:%s1655]
                  %1683 = vst [vmem:[%s1665 + $0x20] sm:%s1655] %v1682
                  %v1684 = vld [vmem:[%s1664 + $0x24] sm:%s1655]
                  %1685 = vst [vmem:[%s1665 + $0x24] sm:%s1655] %v1684
                  %v1686 = vld [vmem:[%s1664 + $0x28] sm:%s1655]
                  %1687 = vst [vmem:[%s1665 + $0x28] sm:%s1655] %v1686
                  %v1688 = vld [vmem:[%s1664 + $0x2c] sm:%s1655]
                  %1689 = vst [vmem:[%s1665 + $0x2c] sm:%s1655] %v1688
                  %v1690 = vld [vmem:[%s1664 + $0x30] sm:%s1655]
                  %1691 = vst [vmem:[%s1665 + $0x30] sm:%s1655] %v1690
                  %v1692 = vld [vmem:[%s1664 + $0x34] sm:%s1655]
                  %1693 = vst [vmem:[%s1665 + $0x34] sm:%s1655] %v1692
                  %v1694 = vld [vmem:[%s1664 + $0x38] sm:%s1655]
                  %1695 = vst [vmem:[%s1665 + $0x38] sm:%s1655] %v1694
                  %v1696 = vld [vmem:[%s1664 + $0x3c] sm:%s1655]
                  %1697 = vst [vmem:[%s1665 + $0x3c] sm:%s1655] %v1696
                  %v1698 = vld [vmem:[%s1664 + $0x40] sm:%s1655]
                  %1699 = vst [vmem:[%s1665 + $0x40] sm:%s1655] %v1698
                  %v1700 = vld [vmem:[%s1664 + $0x44] sm:%s1655]
                  %1701 = vst [vmem:[%s1665 + $0x44] sm:%s1655] %v1700
                  %v1702 = vld [vmem:[%s1664 + $0x48] sm:%s1655]
                  %1703 = vst [vmem:[%s1665 + $0x48] sm:%s1655] %v1702
                  %v1704 = vld [vmem:[%s1664 + $0x4c] sm:%s1655]
                  %1705 = vst [vmem:[%s1665 + $0x4c] sm:%s1655] %v1704
                  %v1706 = vld [vmem:[%s1664 + $0x50] sm:%s1655]
                  %1707 = vst [vmem:[%s1665 + $0x50] sm:%s1655] %v1706
                  %v1708 = vld [vmem:[%s1664 + $0x54] sm:%s1655]
                  %1709 = vst [vmem:[%s1665 + $0x54] sm:%s1655] %v1708
                  %v1710 = vld [vmem:[%s1664 + $0x58] sm:%s1655]
                  %1711 = vst [vmem:[%s1665 + $0x58] sm:%s1655] %v1710
                  %v1712 = vld [vmem:[%s1664 + $0x5c] sm:%s1655]
                  %1713 = vst [vmem:[%s1665 + $0x5c] sm:%s1655] %v1712
                  %v1714 = vld [vmem:[%s1664 + $0x60] sm:%s1655]
                  %1715 = vst [vmem:[%s1665 + $0x60] sm:%s1655] %v1714
                  %v1716 = vld [vmem:[%s1664 + $0x64] sm:%s1655]
                  %1717 = vst [vmem:[%s1665 + $0x64] sm:%s1655] %v1716
                  %v1718 = vld [vmem:[%s1664 + $0x68] sm:%s1655]
                  %1719 = vst [vmem:[%s1665 + $0x68] sm:%s1655] %v1718
                  %v1720 = vld [vmem:[%s1664 + $0x6c] sm:%s1655]
                  %1721 = vst [vmem:[%s1665 + $0x6c] sm:%s1655] %v1720
                  %v1722 = vld [vmem:[%s1664 + $0x70] sm:%s1655]
                  %1723 = vst [vmem:[%s1665 + $0x70] sm:%s1655] %v1722
                  %v1724 = vld [vmem:[%s1664 + $0x74] sm:%s1655]
                  %1725 = vst [vmem:[%s1665 + $0x74] sm:%s1655] %v1724
                  %v1726 = vld [vmem:[%s1664 + $0x78] sm:%s1655]
                  %1727 = vst [vmem:[%s1665 + $0x78] sm:%s1655] %v1726
                  %v1728 = vld [vmem:[%s1664 + $0x7c] sm:%s1655]
                  %1729 = vst [vmem:[%s1665 + $0x7c] sm:%s1655] %v1728
                  %s1730 = sadd.s32 1, %s1663
                  %p1731 = scmp.ge.s32.totalorder %s1730, %s1656
                  %s1732 = scalar_select %p1731, 0, %s1730
                  %s1733 = smul.u32 %s1732, 128
                  %s1734 = smul.u32 %s1732, 128
                  %s1735 = scalar_lea.vmem %s1525, %s1733 [#allocation2]
                  %s1736 = scalar_lea.vmem %s1536, %s1734
                $region71: #{network_forward.14} parent=65 // loop_footer
                  %s1660 = sadd.s32 %s1658, 1
                $region72: #{network_forward.14} parent=65 // loop_footer_branch
                  %1657 = sbr.rel target = $region68
                $region73: #{network_forward.14} parent=65 // loop_exit
                  _
                %s1737 = sshrl.u32 %s1532, 5
                %s1738 = sand.u32 %s1532, 31
                %s1739 = smul.u32 %s1737, 32
                %s1740 = smul.u32 4, %s1739
                %s1741 = scalar_lea.vmem %s1525, %s1740 [#allocation2]
                %s1742 = smul.u32 4, %s1739
                %s1743 = scalar_lea.vmem %s1536, %s1742
                // While loop
                $region74: #{network_forward.14} parent=65 // loop_pre_header
                  _
                $region75: #{network_forward.14} parent=65 // loop_header
                  %s1745 = sphi 0, %s1747
                  %p1746 = scmp.ge.s32.totalorder %s1745, %s1738
                  %s1750 = sphi 0, %s1757
                  %s1751 = sphi %s1741, %s1760
                  %s1752 = sphi %s1743, %s1761
                $region76: #{network_forward.14} parent=65 // loop_header_branch
                  %1749 = sbr.rel (%p1746) target = $region80
                $region77: #{network_forward.14} parent=65 // loop_body
                  %v1753 = vld [vmem:[%s1751] sm:%s1655]
                  %1754 = vst [vmem:[%s1752] sm:%s1655] %v1753
                  %s1755 = sadd.s32 1, %s1750
                  %p1756 = scmp.ge.s32.totalorder %s1755, %s1738
                  %s1757 = scalar_select %p1756, 0, %s1755
                  %s1758 = smul.u32 %s1757, 4
                  %s1759 = smul.u32 %s1757, 4
                  %s1760 = scalar_lea.vmem %s1741, %s1758 [#allocation2]
                  %s1761 = scalar_lea.vmem %s1743, %s1759
                $region78: #{network_forward.14} parent=65 // loop_footer
                  %s1747 = sadd.s32 %s1745, 1
                $region79: #{network_forward.14} parent=65 // loop_footer_branch
                  %1744 = sbr.rel target = $region75
                $region80: #{network_forward.14} parent=65 // loop_exit
                  _
              $region66: #{network_forward.14} parent=43 // pred_fallthru
                _
            $region44: #{network_forward.14} parent=39 // pred_fallthru
              _
            // Predicated region
            $region45: #{network_forward.14} parent=39 // pred_check
              _
            $region46: #{network_forward.14} parent=39 // pred_check_branch
              %1543 = sbr.rel (0) target = $region48
            $region47: #{network_forward.14} parent=39 // pred_region
              %s1545 = ssub.s32 16, 1
              %s1546 = sshrl.u32 %s1532, 5
              // While loop
              $region49: #{network_forward.14} parent=47 // loop_pre_header
                _
              $region50: #{network_forward.14} parent=47 // loop_header
                %s1548 = sphi 0, %s1550
                %p1549 = scmp.ge.s32.totalorder %s1548, %s1546
                %s1553 = sphi 0, %s1622
                %s1554 = sphi %s1525, %s1625
                %s1555 = sphi %s1536, %s1626
              $region51: #{network_forward.14} parent=47 // loop_header_branch
                %1552 = sbr.rel (%p1549) target = $region55
              $region52: #{network_forward.14} parent=47 // loop_body
                %v1556 = vld [vmem:[%s1554] sm:%s1545]
                %1557 = vst [vmem:[%s1555] sm:%s1545] %v1556
                %v1558 = vld [vmem:[%s1554 + $0x4] sm:%s1545]
                %1559 = vst [vmem:[%s1555 + $0x4] sm:%s1545] %v1558
                %v1560 = vld [vmem:[%s1554 + $0x8] sm:%s1545]
                %1561 = vst [vmem:[%s1555 + $0x8] sm:%s1545] %v1560
                %v1562 = vld [vmem:[%s1554 + $0xc] sm:%s1545]
                %1563 = vst [vmem:[%s1555 + $0xc] sm:%s1545] %v1562
                %v1564 = vld [vmem:[%s1554 + $0x10] sm:%s1545]
                %1565 = vst [vmem:[%s1555 + $0x10] sm:%s1545] %v1564
                %v1566 = vld [vmem:[%s1554 + $0x14] sm:%s1545]
                %1567 = vst [vmem:[%s1555 + $0x14] sm:%s1545] %v1566
                %v1568 = vld [vmem:[%s1554 + $0x18] sm:%s1545]
                %1569 = vst [vmem:[%s1555 + $0x18] sm:%s1545] %v1568
                %v1570 = vld [vmem:[%s1554 + $0x1c] sm:%s1545]
                %1571 = vst [vmem:[%s1555 + $0x1c] sm:%s1545] %v1570
                %v1572 = vld [vmem:[%s1554 + $0x20] sm:%s1545]
                %1573 = vst [vmem:[%s1555 + $0x20] sm:%s1545] %v1572
                %v1574 = vld [vmem:[%s1554 + $0x24] sm:%s1545]
                %1575 = vst [vmem:[%s1555 + $0x24] sm:%s1545] %v1574
                %v1576 = vld [vmem:[%s1554 + $0x28] sm:%s1545]
                %1577 = vst [vmem:[%s1555 + $0x28] sm:%s1545] %v1576
                %v1578 = vld [vmem:[%s1554 + $0x2c] sm:%s1545]
                %1579 = vst [vmem:[%s1555 + $0x2c] sm:%s1545] %v1578
                %v1580 = vld [vmem:[%s1554 + $0x30] sm:%s1545]
                %1581 = vst [vmem:[%s1555 + $0x30] sm:%s1545] %v1580
                %v1582 = vld [vmem:[%s1554 + $0x34] sm:%s1545]
                %1583 = vst [vmem:[%s1555 + $0x34] sm:%s1545] %v1582
                %v1584 = vld [vmem:[%s1554 + $0x38] sm:%s1545]
                %1585 = vst [vmem:[%s1555 + $0x38] sm:%s1545] %v1584
                %v1586 = vld [vmem:[%s1554 + $0x3c] sm:%s1545]
                %1587 = vst [vmem:[%s1555 + $0x3c] sm:%s1545] %v1586
                %v1588 = vld [vmem:[%s1554 + $0x40] sm:%s1545]
                %1589 = vst [vmem:[%s1555 + $0x40] sm:%s1545] %v1588
                %v1590 = vld [vmem:[%s1554 + $0x44] sm:%s1545]
                %1591 = vst [vmem:[%s1555 + $0x44] sm:%s1545] %v1590
                %v1592 = vld [vmem:[%s1554 + $0x48] sm:%s1545]
                %1593 = vst [vmem:[%s1555 + $0x48] sm:%s1545] %v1592
                %v1594 = vld [vmem:[%s1554 + $0x4c] sm:%s1545]
                %1595 = vst [vmem:[%s1555 + $0x4c] sm:%s1545] %v1594
                %v1596 = vld [vmem:[%s1554 + $0x50] sm:%s1545]
                %1597 = vst [vmem:[%s1555 + $0x50] sm:%s1545] %v1596
                %v1598 = vld [vmem:[%s1554 + $0x54] sm:%s1545]
                %1599 = vst [vmem:[%s1555 + $0x54] sm:%s1545] %v1598
                %v1600 = vld [vmem:[%s1554 + $0x58] sm:%s1545]
                %1601 = vst [vmem:[%s1555 + $0x58] sm:%s1545] %v1600
                %v1602 = vld [vmem:[%s1554 + $0x5c] sm:%s1545]
                %1603 = vst [vmem:[%s1555 + $0x5c] sm:%s1545] %v1602
                %v1604 = vld [vmem:[%s1554 + $0x60] sm:%s1545]
                %1605 = vst [vmem:[%s1555 + $0x60] sm:%s1545] %v1604
                %v1606 = vld [vmem:[%s1554 + $0x64] sm:%s1545]
                %1607 = vst [vmem:[%s1555 + $0x64] sm:%s1545] %v1606
                %v1608 = vld [vmem:[%s1554 + $0x68] sm:%s1545]
                %1609 = vst [vmem:[%s1555 + $0x68] sm:%s1545] %v1608
                %v1610 = vld [vmem:[%s1554 + $0x6c] sm:%s1545]
                %1611 = vst [vmem:[%s1555 + $0x6c] sm:%s1545] %v1610
                %v1612 = vld [vmem:[%s1554 + $0x70] sm:%s1545]
                %1613 = vst [vmem:[%s1555 + $0x70] sm:%s1545] %v1612
                %v1614 = vld [vmem:[%s1554 + $0x74] sm:%s1545]
                %1615 = vst [vmem:[%s1555 + $0x74] sm:%s1545] %v1614
                %v1616 = vld [vmem:[%s1554 + $0x78] sm:%s1545]
                %1617 = vst [vmem:[%s1555 + $0x78] sm:%s1545] %v1616
                %v1618 = vld [vmem:[%s1554 + $0x7c] sm:%s1545]
                %1619 = vst [vmem:[%s1555 + $0x7c] sm:%s1545] %v1618
                %s1620 = sadd.s32 1, %s1553
                %p1621 = scmp.ge.s32.totalorder %s1620, %s1546
                %s1622 = scalar_select %p1621, 0, %s1620
                %s1623 = smul.u32 %s1622, 128
                %s1624 = smul.u32 %s1622, 128
                %s1625 = scalar_lea.vmem %s1525, %s1623 [#allocation2]
                %s1626 = scalar_lea.vmem %s1536, %s1624
              $region53: #{network_forward.14} parent=47 // loop_footer
                %s1550 = sadd.s32 %s1548, 1
              $region54: #{network_forward.14} parent=47 // loop_footer_branch
                %1547 = sbr.rel target = $region50
              $region55: #{network_forward.14} parent=47 // loop_exit
                _
              %s1627 = sshrl.u32 %s1532, 5
              %s1628 = sand.u32 %s1532, 31
              %s1629 = smul.u32 %s1627, 32
              %s1630 = smul.u32 4, %s1629
              %s1631 = scalar_lea.vmem %s1525, %s1630 [#allocation2]
              %s1632 = smul.u32 4, %s1629
              %s1633 = scalar_lea.vmem %s1536, %s1632
              // While loop
              $region56: #{network_forward.14} parent=47 // loop_pre_header
                _
              $region57: #{network_forward.14} parent=47 // loop_header
                %s1635 = sphi 0, %s1637
                %p1636 = scmp.ge.s32.totalorder %s1635, %s1628
                %s1640 = sphi 0, %s1647
                %s1641 = sphi %s1631, %s1650
                %s1642 = sphi %s1633, %s1651
              $region58: #{network_forward.14} parent=47 // loop_header_branch
                %1639 = sbr.rel (%p1636) target = $region62
              $region59: #{network_forward.14} parent=47 // loop_body
                %v1643 = vld [vmem:[%s1641] sm:%s1545]
                %1644 = vst [vmem:[%s1642] sm:%s1545] %v1643
                %s1645 = sadd.s32 1, %s1640
                %p1646 = scmp.ge.s32.totalorder %s1645, %s1628
                %s1647 = scalar_select %p1646, 0, %s1645
                %s1648 = smul.u32 %s1647, 4
                %s1649 = smul.u32 %s1647, 4
                %s1650 = scalar_lea.vmem %s1631, %s1648 [#allocation2]
                %s1651 = scalar_lea.vmem %s1633, %s1649
              $region60: #{network_forward.14} parent=47 // loop_footer
                %s1637 = sadd.s32 %s1635, 1
              $region61: #{network_forward.14} parent=47 // loop_footer_branch
                %1634 = sbr.rel target = $region57
              $region62: #{network_forward.14} parent=47 // loop_exit
                _
            $region48: #{network_forward.14} parent=39 // pred_fallthru
              _
          $region40: #{network_forward.14} parent=35 // pred_fallthru
            _
          %1762 = vnop
        $region36: #{network_forward.14} parent=31 // pred_fallthru
          _
      $region32: #{network_forward.14} parent=5 // pred_fallthru
        _
      %p1763 = scmp.le.s32.totalorder 2, %s9
      // Predicated region
      $region81: #{network_forward.14} parent=5 // pred_check
        %p1764 = pneg %p1763
      $region82: #{network_forward.14} parent=5 // pred_check_branch
        %1766 = sbr.rel (%p1764) target = $region84
      $region83: #{network_forward.14} parent=5 // pred_region
        %s1767 = ssub.s32 %s9, 2
        // Predicated region
        $region85: #{network_forward.14} parent=83 // pred_check
          %p1768 = pneg %p106
        $region86: #{network_forward.14} parent=83 // pred_check_branch
          %1770 = sbr.rel (%p1768) target = $region88
        $region87: #{network_forward.14} parent=83 // pred_region
          %s1771 = sand.u32 %s91, 1
          %s1772 = sand.u32 %s91, 1
          %s1773 = smul.addr %s1772, 484
          %s1774 = scalar_lea.vmem [#allocation2], %s1773
        $region88: #{network_forward.14} parent=83 // pred_fallthru
          _
      $region84: #{network_forward.14} parent=5 // pred_fallthru
        _
    $region6: #{network_forward.14} parent=1 // loop_footer
      %s13 = sadd.s32 1, %s9
    $region7: #{network_forward.14} parent=1 // loop_footer_branch
      %8 = sbr.rel target = $region3
    $region8: #{network_forward.14} parent=1 // loop_exit
      _

// kernel: network_forward.15
$region0: #{network_forward.15}
  #allocation0 [shape = 'u32[]', space=smem, size = 0x4, offset = 0x4, fixed_abs, tag = 'smem constant byte address 0x4 - core index']
  #allocation1 [shape = 'u32[72,128]{1,0:T(1,128)}', space=vmem, size = 0x9000, scoped, tag = 'internal scratch']
  %s0 = inlined_call_operand.vmem [shape: bf16[1922,8], index: 0, kind: input, shape index: {}]
  %s1 = inlined_call_operand.vmem [shape: bf16[8,8], index: 1, kind: input, shape index: {}]
  %s2 = inlined_call_operand.vmem [shape: f32[1,8], index: 2, kind: input, shape index: {}]
  %s3 = inlined_call_operand.vmem [shape: bf16[1922,8], index: 3, kind: input, shape index: {}]
  %s4 = inlined_call_operand.vmem [shape: bf16[1922,8], index: 4, kind: output, shape index: {}]
  %s5 = sld [smem:[#allocation0]]
  $region93: #{network_forward.15} parent=0
    _
  %s7 = ssub.s32 1, %s5
  %s8 = scalar_select 0, %s7, %s5
  $region1: #{network_forward.15} parent=0
    #allocation2 [shape = 'u8[495616]{0}', space=vmem, size = 0x79000, scoped, tag = 'output window, operand 0']
    loop: start=0, step=1, limit=4
    $region2: #{network_forward.15} parent=1 // loop_pre_header
      _
    $region3: #{network_forward.15} parent=1 // loop_header
      %s10 = sphi 0, %s14
      %p11 = scmp.ge.s32.totalorder %s10, 4
      %s20 = sphi 0, %s22
      %s23 = sphi 0, %s20
      %s24 = sphi 0, %s23
      %s40 = sphi 0, %s24
      %s44 = sphi 0, %s44
      %s46 = sphi 0, %s44
      %s47 = sphi 0, %s46
      %s61 = sphi 0, %s47
      %s65 = sphi 0, %s65
      %s67 = sphi 0, %s65
      %s68 = sphi 0, %s67
      %s82 = sphi 0, %s68
      %s88 = sphi 0, %s90
      %s91 = sphi 0, %s88
      %s92 = sphi 0, %s91
      %s108 = sphi 0, %s92
      %s114 = sphi 0, %s116
      %s117 = sphi 0, %s114
      %s118 = sphi 0, %s117
      %s134 = sphi 0, %s118
    $region4: #{network_forward.15} parent=1 // loop_header_branch
      %13 = sbr.rel (%p11) target = $region8
    $region5: #{network_forward.15} parent=1 // loop_body
      %s15 = ssub.s32 %s10, 1
      %s16 = ssub.s32 %s10, 2
      %s17 = sadd.s32 %s10, 1
      %s18 = ssub.s32 %s10, %s17
      %p19 = scmp.eq.s32.totalorder %s18, 0
      %s21 = sadd.s32 %s20, 1
      %s22 = scalar_select %p19, %s20, %s21
      %p25 = pneg %p19
      %p26 = scmp.eq.s32.totalorder %s10, 1
      %p27 = por %p25, %p26
      %p28 = scmp.ne.s32.totalorder %s20, %s23
      %p29 = scmp.eq.s32.totalorder %s10, 0
      %p30 = por %p28, %p29
      %p31 = scmp.ne.s32.totalorder %s20, %s23
      %p32 = scmp.eq.s32.totalorder %s15, 1
      %p33 = por %p31, %p32
      %p34 = scmp.ne.s32.totalorder %s23, %s24
      %p35 = scmp.eq.s32.totalorder %s15, 0
      %p36 = por %p34, %p35
      %p37 = scmp.ne.s32.totalorder %s23, %s24
      %p38 = scmp.eq.s32.totalorder %s16, 1
      %p39 = por %p37, %p38
      %p41 = scmp.ne.s32.totalorder %s24, %s40
      %p42 = scmp.eq.s32.totalorder %s16, 0
      %p43 = por %p41, %p42
      %s45 = sadd.s32 %s44, 1
      %p48 = scmp.eq.s32.totalorder %s10, 1
      %p49 = scmp.ne.s32.totalorder %s44, %s46
      %p50 = scmp.eq.s32.totalorder %s10, 0
      %p51 = por %p49, %p50
      %p52 = scmp.ne.s32.totalorder %s44, %s46
      %p53 = scmp.eq.s32.totalorder %s15, 1
      %p54 = por %p52, %p53
      %p55 = scmp.ne.s32.totalorder %s46, %s47
      %p56 = scmp.eq.s32.totalorder %s15, 0
      %p57 = por %p55, %p56
      %p58 = scmp.ne.s32.totalorder %s46, %s47
      %p59 = scmp.eq.s32.totalorder %s16, 1
      %p60 = por %p58, %p59
      %p62 = scmp.ne.s32.totalorder %s47, %s61
      %p63 = scmp.eq.s32.totalorder %s16, 0
      %p64 = por %p62, %p63
      %s66 = sadd.s32 %s65, 1
      %p69 = scmp.eq.s32.totalorder %s10, 1
      %p70 = scmp.ne.s32.totalorder %s65, %s67
      %p71 = scmp.eq.s32.totalorder %s10, 0
      %p72 = por %p70, %p71
      %p73 = scmp.ne.s32.totalorder %s65, %s67
      %p74 = scmp.eq.s32.totalorder %s15, 1
      %p75 = por %p73, %p74
      %p76 = scmp.ne.s32.totalorder %s67, %s68
      %p77 = scmp.eq.s32.totalorder %s15, 0
      %p78 = por %p76, %p77
      %p79 = scmp.ne.s32.totalorder %s67, %s68
      %p80 = scmp.eq.s32.totalorder %s16, 1
      %p81 = por %p79, %p80
      %p83 = scmp.ne.s32.totalorder %s68, %s82
      %p84 = scmp.eq.s32.totalorder %s16, 0
      %p85 = por %p83, %p84
      %s86 = ssub.s32 %s10, %s17
      %p87 = scmp.eq.s32.totalorder %s86, 0
      %s89 = sadd.s32 %s88, 1
      %s90 = scalar_select %p87, %s88, %s89
      %p93 = pneg %p87
      %p94 = scmp.eq.s32.totalorder %s10, 1
      %p95 = por %p93, %p94
      %p96 = scmp.ne.s32.totalorder %s88, %s91
      %p97 = scmp.eq.s32.totalorder %s10, 0
      %p98 = por %p96, %p97
      %p99 = scmp.ne.s32.totalorder %s88, %s91
      %p100 = scmp.eq.s32.totalorder %s15, 1
      %p101 = por %p99, %p100
      %p102 = scmp.ne.s32.totalorder %s91, %s92
      %p103 = scmp.eq.s32.totalorder %s15, 0
      %p104 = por %p102, %p103
      %p105 = scmp.ne.s32.totalorder %s91, %s92
      %p106 = scmp.eq.s32.totalorder %s16, 1
      %p107 = por %p105, %p106
      %p109 = scmp.ne.s32.totalorder %s92, %s108
      %p110 = scmp.eq.s32.totalorder %s16, 0
      %p111 = por %p109, %p110
      %s112 = ssub.s32 %s10, %s17
      %p113 = scmp.eq.s32.totalorder %s112, 0
      %s115 = sadd.s32 %s114, 1
      %s116 = scalar_select %p113, %s114, %s115
      %p119 = pneg %p113
      %p120 = scmp.eq.s32.totalorder %s10, 1
      %p121 = por %p119, %p120
      %p122 = scmp.ne.s32.totalorder %s114, %s117
      %p123 = scmp.eq.s32.totalorder %s10, 0
      %p124 = por %p122, %p123
      %p125 = scmp.ne.s32.totalorder %s114, %s117
      %p126 = scmp.eq.s32.totalorder %s15, 1
      %p127 = por %p125, %p126
      %p128 = scmp.ne.s32.totalorder %s117, %s118
      %p129 = scmp.eq.s32.totalorder %s15, 0
      %p130 = por %p128, %p129
      %p131 = scmp.ne.s32.totalorder %s117, %s118
      %p132 = scmp.eq.s32.totalorder %s16, 1
      %p133 = por %p131, %p132
      %p135 = scmp.ne.s32.totalorder %s118, %s134
      %p136 = scmp.eq.s32.totalorder %s16, 0
      %p137 = por %p135, %p136
      %p138 = scmp.le.s32.totalorder 1, %s10
      %p139 = scmp.lt.s32.totalorder %s10, 3
      %p140 = pnand %p138, %p139
      %p141 = pneg %p140
      // Predicated region
      $region9: #{network_forward.15} parent=5 // pred_check
        _
      $region10: #{network_forward.15} parent=5 // pred_check_branch
        %143 = sbr.rel (%p140) target = $region12
      $region11: #{network_forward.15} parent=5 // pred_region
        %s144 = ssub.s32 %s10, 1
        // Predicated region
        $region13: #{network_forward.15} parent=11 // pred_check
          %p145 = pneg %p57
        $region14: #{network_forward.15} parent=11 // pred_check_branch
          %147 = sbr.rel (%p145) target = $region16
        $region15: #{network_forward.15} parent=11 // pred_region
          _
        $region16: #{network_forward.15} parent=11 // pred_fallthru
          _
        // Predicated region
        $region17: #{network_forward.15} parent=11 // pred_check
          %p148 = pneg %p78
        $region18: #{network_forward.15} parent=11 // pred_check_branch
          %150 = sbr.rel (%p148) target = $region20
        $region19: #{network_forward.15} parent=11 // pred_region
          _
        $region20: #{network_forward.15} parent=11 // pred_fallthru
          _
      $region12: #{network_forward.15} parent=5 // pred_fallthru
        _
      %p151 = scmp.lt.s32.totalorder %s10, 2
      // Predicated region
      $region21: #{network_forward.15} parent=5 // pred_check
        %p152 = pneg %p151
      $region22: #{network_forward.15} parent=5 // pred_check_branch
        %154 = sbr.rel (%p152) target = $region24
      $region23: #{network_forward.15} parent=5 // pred_region
        // Predicated region
        $region25: #{network_forward.15} parent=23 // pred_check
          %p155 = pneg %p30
        $region26: #{network_forward.15} parent=23 // pred_check_branch
          %157 = sbr.rel (%p155) target = $region28
        $region27: #{network_forward.15} parent=23 // pred_region
          %s158 = smul.u32 121, %s10
          %s159 = ssub.s32 241, %s158
          %p160 = scmp.lt.s32.totalorder %s159, 121
          %s161 = scalar_select %p160, %s159, 121
          %s162 = smul.u32 4, %s161
          %p163 = scmp.lt.s32.totalorder %s158, 240
          %s164 = scalar_select %p163, %s158, 240
          %s165 = smul.addr %s164, 4
          %s166 = scalar_lea.vmem %s0, %s165
          %s167 = smul.u32 121, %s10
          %s168 = ssub.s32 241, %s167
          %p169 = scmp.lt.s32.totalorder %s168, 121
          %s170 = scalar_select %p169, %s168, 121
          %s171 = smul.u32 4, %s170
        $region28: #{network_forward.15} parent=23 // pred_fallthru
          _
        // Predicated region
        $region29: #{network_forward.15} parent=23 // pred_check
          %p172 = pneg %p98
        $region30: #{network_forward.15} parent=23 // pred_check_branch
          %174 = sbr.rel (%p172) target = $region32
        $region31: #{network_forward.15} parent=23 // pred_region
          %s175 = smul.u32 121, %s10
          %s176 = ssub.s32 241, %s175
          %p177 = scmp.lt.s32.totalorder %s176, 121
          %s178 = scalar_select %p177, %s176, 121
          %s179 = smul.u32 4, %s178
          %p180 = scmp.lt.s32.totalorder %s175, 240
          %s181 = scalar_select %p180, %s175, 240
          %s182 = smul.addr %s181, 4
          %s183 = scalar_lea.vmem %s3, %s182
          %s184 = smul.u32 121, %s10
          %s185 = ssub.s32 241, %s184
          %p186 = scmp.lt.s32.totalorder %s185, 121
          %s187 = scalar_select %p186, %s185, 121
          %s188 = smul.u32 4, %s187
        $region32: #{network_forward.15} parent=23 // pred_fallthru
          _
      $region24: #{network_forward.15} parent=5 // pred_fallthru
        _
      %p189 = scmp.le.s32.totalorder 1, %s10
      %p190 = scmp.lt.s32.totalorder %s10, 3
      %p191 = pnand %p189, %p190
      %p192 = pneg %p191
      // Predicated region
      $region33: #{network_forward.15} parent=5 // pred_check
        _
      $region34: #{network_forward.15} parent=5 // pred_check_branch
        %194 = sbr.rel (%p191) target = $region36
      $region35: #{network_forward.15} parent=5 // pred_region
        %s195 = ssub.s32 %s10, 1
        %s196 = smul.u32 121, %s15
        %s197 = ssub.s32 241, %s196
        %p198 = scmp.lt.s32.totalorder %s197, 121
        %s199 = scalar_select %p198, %s197, 121
        %s200 = smul.u32 4, %s199
        %p201 = scmp.lt.s32.totalorder %s196, 240
        %s202 = scalar_select %p201, %s196, 240
        %s203 = smul.addr %s202, 4
        %s204 = scalar_lea.vmem %s0, %s203
        %p205 = pneg %p36
        %p206 = pneg %p33
        %p207 = pneg %p57
        %p208 = pneg %p54
        %p209 = pneg %p78
        %p210 = pneg %p75
        %s211 = smul.u32 121, %s15
        %s212 = ssub.s32 241, %s211
        %p213 = scmp.lt.s32.totalorder %s212, 121
        %s214 = scalar_select %p213, %s212, 121
        %s215 = smul.u32 4, %s214
        %p216 = scmp.lt.s32.totalorder %s211, 240
        %s217 = scalar_select %p216, %s211, 240
        %s218 = smul.addr %s217, 4
        %s219 = scalar_lea.vmem %s3, %s218
        %p220 = pneg %p104
        %p221 = pneg %p101
        %p222 = pneg %p130
        %p223 = pneg %p127
        %s224 = sand.u32 %s117, 1
        %s225 = sand.u32 %s117, 1
        %s226 = smul.addr %s225, 484
        %s227 = scalar_lea.vmem [#allocation2], %s226
        %s228 = smul.u32 121, %s15
        %s229 = ssub.s32 241, %s228
        %p230 = scmp.lt.s32.totalorder %s229, 121
        %s231 = scalar_select %p230, %s229, 121
        %s232 = smul.u32 4, %s231
        %p233 = scmp.lt.s32.totalorder %s228, 240
        %s234 = scalar_select %p233, %s228, 240
        %s235 = smul.addr %s234, 4
        %s236 = scalar_lea.vmem %s0, %s235
        %s237 = smul.u32 121, %s15
        %s238 = ssub.s32 241, %s237
        %p239 = scmp.lt.s32.totalorder %s238, 121
        %s240 = scalar_select %p239, %s238, 121
        %s241 = smul.u32 4, %s240
        %s242 = smul.u32 121, %s15
        %s243 = ssub.s32 241, %s242
        %p244 = scmp.lt.s32.totalorder %s243, 121
        %s245 = scalar_select %p244, %s243, 121
        %s246 = smul.u32 4, %s245
        %p247 = scmp.lt.s32.totalorder %s242, 240
        %s248 = scalar_select %p247, %s242, 240
        %s249 = smul.addr %s248, 4
        %s250 = scalar_lea.vmem %s3, %s249
        %s251 = smul.u32 121, %s15
        %s252 = ssub.s32 241, %s251
        %p253 = scmp.lt.s32.totalorder %s252, 121
        %s254 = scalar_select %p253, %s252, 121
        %s255 = smul.u32 4, %s254
        %s256 = smul.u32 121, %s15
        %s257 = ssub.s32 241, %s256
        %p258 = scmp.lt.s32.totalorder %s257, 121
        %s259 = scalar_select %p258, %s257, 121
        %s260 = smul.u32 4, %s259
        %v262 = vld [vmem:[%s236] sm:$0xf]
        %v263 = vld [vmem:[%s236 + $0x4] sm:$0xf]
        %v264 = vld [vmem:[%s236 + $0x8] sm:$0xf]
        %v265 = vld [vmem:[%s236 + $0xc] sm:$0xf]
        %v266 = vld [vmem:[%s236 + $0x10] sm:$0xf]
        %v267 = vld [vmem:[%s236 + $0x14] sm:$0xf]
        %v268 = vld [vmem:[%s236 + $0x18] sm:$0xf]
        %v269 = vld [vmem:[%s236 + $0x1c] sm:$0xf]
        %v270 = vld [vmem:[%s236 + $0x20] sm:$0xf]
        %v271 = vld [vmem:[%s236 + $0x24] sm:$0xf]
        %v272 = vld [vmem:[%s236 + $0x28] sm:$0xf]
        %v273 = vld [vmem:[%s236 + $0x2c] sm:$0xf]
        %v274 = vld [vmem:[%s236 + $0x30] sm:$0xf]
        %v275 = vld [vmem:[%s236 + $0x34] sm:$0xf]
        %v276 = vld [vmem:[%s236 + $0x38] sm:$0xf]
        %v277 = vld [vmem:[%s236 + $0x3c] sm:$0xf]
        %v278 = vld [vmem:[%s236 + $0x40] sm:$0xf]
        %v279 = vld [vmem:[%s236 + $0x44] sm:$0xf]
        %v280 = vld [vmem:[%s236 + $0x48] sm:$0xf]
        %v281 = vld [vmem:[%s236 + $0x4c] sm:$0xf]
        %v282 = vld [vmem:[%s236 + $0x50] sm:$0xf]
        %v283 = vld [vmem:[%s236 + $0x54] sm:$0xf]
        %v284 = vld [vmem:[%s236 + $0x58] sm:$0xf]
        %v285 = vld [vmem:[%s236 + $0x5c] sm:$0xf]
        %v286 = vld [vmem:[%s236 + $0x60] sm:$0xf]
        %v287 = vld [vmem:[%s236 + $0x64] sm:$0xf]
        %v288 = vld [vmem:[%s236 + $0x68] sm:$0xf]
        %v289 = vld [vmem:[%s236 + $0x6c] sm:$0xf]
        %v290 = vld [vmem:[%s236 + $0x70] sm:$0xf]
        %v291 = vld [vmem:[%s236 + $0x74] sm:$0xf]
        %v292 = vld [vmem:[%s236 + $0x78] sm:$0xf]
        %v293 = vld [vmem:[%s236 + $0x7c] sm:$0xf]
        %v294 = vld [vmem:[%s236 + $0x80] sm:$0xf]
        %v295 = vld [vmem:[%s236 + $0x84] sm:$0xf]
        %v296 = vld [vmem:[%s236 + $0x88] sm:$0xf]
        %v297 = vld [vmem:[%s236 + $0x8c] sm:$0xf]
        %v298 = vld [vmem:[%s236 + $0x90] sm:$0xf]
        %v299 = vld [vmem:[%s236 + $0x94] sm:$0xf]
        %v300 = vld [vmem:[%s236 + $0x98] sm:$0xf]
        %v301 = vld [vmem:[%s236 + $0x9c] sm:$0xf]
        %v302 = vld [vmem:[%s236 + $0xa0] sm:$0xf]
        %v303 = vld [vmem:[%s236 + $0xa4] sm:$0xf]
        %v304 = vld [vmem:[%s236 + $0xa8] sm:$0xf]
        %v305 = vld [vmem:[%s236 + $0xac] sm:$0xf]
        %v306 = vld [vmem:[%s236 + $0xb0] sm:$0xf]
        %v307 = vld [vmem:[%s236 + $0xb4] sm:$0xf]
        %v308 = vld [vmem:[%s236 + $0xb8] sm:$0xf]
        %v309 = vld [vmem:[%s236 + $0xbc] sm:$0xf]
        %v310 = vld [vmem:[%s236 + $0xc0] sm:$0xf]
        %v311 = vld [vmem:[%s236 + $0xc4] sm:$0xf]
        %v312 = vld [vmem:[%s236 + $0xc8] sm:$0xf]
        %v313 = vld [vmem:[%s236 + $0xcc] sm:$0xf]
        %v314 = vld [vmem:[%s236 + $0xd0] sm:$0xf]
        %v315 = vld [vmem:[%s236 + $0xd4] sm:$0xf]
        %v316 = vld [vmem:[%s236 + $0xd8] sm:$0xf]
        %v317 = vld [vmem:[%s236 + $0xdc] sm:$0xf]
        %v318 = vld [vmem:[%s236 + $0xe0] sm:$0xf]
        %v319 = vld [vmem:[%s236 + $0xe4] sm:$0xf]
        %v320 = vld [vmem:[%s236 + $0xe8] sm:$0xf]
        %v321 = vld [vmem:[%s236 + $0xec] sm:$0xf]
        %v322 = vld [vmem:[%s236 + $0xf0] sm:$0xf]
        %v323 = vld [vmem:[%s236 + $0xf4] sm:$0xf]
        %v324 = vld [vmem:[%s236 + $0xf8] sm:$0xf]
        %v325 = vld [vmem:[%s236 + $0xfc] sm:$0xf]
        %v326 = vld [vmem:[%s236 + $0x100] sm:$0xf]
        %v327 = vld [vmem:[%s236 + $0x104] sm:$0xf]
        %v328 = vld [vmem:[%s236 + $0x108] sm:$0xf]
        %v329 = vld [vmem:[%s236 + $0x10c] sm:$0xf]
        %v330 = vld [vmem:[%s236 + $0x110] sm:$0xf]
        %v331 = vld [vmem:[%s236 + $0x114] sm:$0xf]
        %v332 = vld [vmem:[%s236 + $0x118] sm:$0xf]
        %v333 = vld [vmem:[%s236 + $0x11c] sm:$0xf]
        %v334 = vld [vmem:[%s236 + $0x120] sm:$0xf]
        %v335 = vld [vmem:[%s236 + $0x124] sm:$0xf]
        %v336 = vld [vmem:[%s236 + $0x128] sm:$0xf]
        %v337 = vld [vmem:[%s236 + $0x12c] sm:$0xf]
        %v338 = vld [vmem:[%s236 + $0x130] sm:$0xf]
        %v339 = vld [vmem:[%s236 + $0x134] sm:$0xf]
        %v340 = vld [vmem:[%s236 + $0x138] sm:$0xf]
        %v341 = vld [vmem:[%s236 + $0x13c] sm:$0xf]
        %v342 = vld [vmem:[%s236 + $0x140] sm:$0xf]
        %v343 = vld [vmem:[%s236 + $0x144] sm:$0xf]
        %v344 = vld [vmem:[%s236 + $0x148] sm:$0xf]
        %v345 = vld [vmem:[%s236 + $0x14c] sm:$0xf]
        %v346 = vld [vmem:[%s236 + $0x150] sm:$0xf]
        %v347 = vld [vmem:[%s236 + $0x154] sm:$0xf]
        %v348 = vld [vmem:[%s236 + $0x158] sm:$0xf]
        %v349 = vld [vmem:[%s236 + $0x15c] sm:$0xf]
        %v350 = vld [vmem:[%s236 + $0x160] sm:$0xf]
        %v351 = vld [vmem:[%s236 + $0x164] sm:$0xf]
        %v352 = vld [vmem:[%s236 + $0x168] sm:$0xf]
        %v353 = vld [vmem:[%s236 + $0x16c] sm:$0xf]
        %v354 = vld [vmem:[%s236 + $0x170] sm:$0xf]
        %v355 = vld [vmem:[%s236 + $0x174] sm:$0xf]
        %v356 = vld [vmem:[%s236 + $0x178] sm:$0xf]
        %v357 = vld [vmem:[%s236 + $0x17c] sm:$0xf]
        %v358 = vld [vmem:[%s236 + $0x180] sm:$0xf]
        %v359 = vld [vmem:[%s236 + $0x184] sm:$0xf]
        %v360 = vld [vmem:[%s236 + $0x188] sm:$0xf]
        %v361 = vld [vmem:[%s236 + $0x18c] sm:$0xf]
        %v362 = vld [vmem:[%s236 + $0x190] sm:$0xf]
        %v363 = vld [vmem:[%s236 + $0x194] sm:$0xf]
        %v364 = vld [vmem:[%s236 + $0x198] sm:$0xf]
        %v365 = vld [vmem:[%s236 + $0x19c] sm:$0xf]
        %v366 = vld [vmem:[%s236 + $0x1a0] sm:$0xf]
        %v367 = vld [vmem:[%s236 + $0x1a4] sm:$0xf]
        %v368 = vld [vmem:[%s236 + $0x1a8] sm:$0xf]
        %v369 = vld [vmem:[%s236 + $0x1ac] sm:$0xf]
        %v370 = vld [vmem:[%s236 + $0x1b0] sm:$0xf]
        %v371 = vld [vmem:[%s236 + $0x1b4] sm:$0xf]
        %v372 = vld [vmem:[%s236 + $0x1b8] sm:$0xf]
        %v373 = vld [vmem:[%s236 + $0x1bc] sm:$0xf]
        %v374 = vld [vmem:[%s236 + $0x1c0] sm:$0xf]
        %v375 = vld [vmem:[%s236 + $0x1c4] sm:$0xf]
        %v376 = vld [vmem:[%s236 + $0x1c8] sm:$0xf]
        %v377 = vld [vmem:[%s236 + $0x1cc] sm:$0xf]
        %v378 = vld [vmem:[%s236 + $0x1d0] sm:$0xf]
        %v379 = vld [vmem:[%s236 + $0x1d4] sm:$0xf]
        %v380 = vld [vmem:[%s236 + $0x1d8] sm:$0xf]
        %v381 = vld [vmem:[%s236 + $0x1dc] sm:$0xf]
        %v382 = vld [vmem:[%s236 + $0x1e0] sm:$0xf]
        %v383 = vld [vmem:[%s1] sm:$0xf]
        %v384 = vld [vmem:[%s2] sm:$0x1]
        %v386 = vperm.slane %v384, 0
        %v509 = vunpack.c.l.b16 %v262
        %v510 = vunpack.c.l.b16 %v263
        %v511 = vunpack.c.l.b16 %v264
        %v512 = vunpack.c.l.b16 %v265
        %v513 = vunpack.c.l.b16 %v266
        %v514 = vunpack.c.l.b16 %v267
        %v515 = vunpack.c.l.b16 %v268
        %v516 = vunpack.c.l.b16 %v269
        %v517 = vunpack.c.l.b16 %v270
        %v518 = vunpack.c.l.b16 %v271
        %v519 = vunpack.c.l.b16 %v272
        %v520 = vunpack.c.l.b16 %v273
        %v521 = vunpack.c.l.b16 %v274
        %v522 = vunpack.c.l.b16 %v275
        %v523 = vunpack.c.l.b16 %v276
        %v524 = vunpack.c.l.b16 %v277
        %v525 = vunpack.c.l.b16 %v278
        %v526 = vunpack.c.l.b16 %v279
        %v527 = vunpack.c.l.b16 %v280
        %v528 = vunpack.c.l.b16 %v281
        %v529 = vunpack.c.l.b16 %v282
        %v530 = vunpack.c.l.b16 %v283
        %v531 = vunpack.c.l.b16 %v284
        %v532 = vunpack.c.l.b16 %v285
        %v533 = vunpack.c.l.b16 %v286
        %v534 = vunpack.c.l.b16 %v287
        %v535 = vunpack.c.l.b16 %v288
        %v536 = vunpack.c.l.b16 %v289
        %v537 = vunpack.c.l.b16 %v290
        %v538 = vunpack.c.l.b16 %v291
        %v539 = vunpack.c.l.b16 %v292
        %v540 = vunpack.c.l.b16 %v293
        %v541 = vunpack.c.l.b16 %v294
        %v542 = vunpack.c.l.b16 %v295
        %v543 = vunpack.c.l.b16 %v296
        %v544 = vunpack.c.l.b16 %v297
        %v545 = vunpack.c.l.b16 %v298
        %v546 = vunpack.c.l.b16 %v299
        %v547 = vunpack.c.l.b16 %v300
        %v548 = vunpack.c.l.b16 %v301
        %v549 = vunpack.c.l.b16 %v302
        %v550 = vunpack.c.l.b16 %v303
        %v551 = vunpack.c.l.b16 %v304
        %v552 = vunpack.c.l.b16 %v305
        %v553 = vunpack.c.l.b16 %v306
        %v554 = vunpack.c.l.b16 %v307
        %v555 = vunpack.c.l.b16 %v308
        %v556 = vunpack.c.l.b16 %v309
        %v557 = vunpack.c.l.b16 %v310
        %v558 = vunpack.c.l.b16 %v311
        %v559 = vunpack.c.l.b16 %v312
        %v560 = vunpack.c.l.b16 %v313
        %v561 = vunpack.c.l.b16 %v314
        %v562 = vunpack.c.l.b16 %v315
        %v563 = vunpack.c.l.b16 %v316
        %v564 = vunpack.c.l.b16 %v317
        %v565 = vunpack.c.l.b16 %v318
        %v566 = vunpack.c.l.b16 %v319
        %v567 = vunpack.c.l.b16 %v320
        %v568 = vunpack.c.l.b16 %v321
        %v569 = vunpack.c.l.b16 %v322
        %v570 = vunpack.c.l.b16 %v323
        %v571 = vunpack.c.l.b16 %v324
        %v572 = vunpack.c.l.b16 %v325
        %v573 = vunpack.c.l.b16 %v326
        %v574 = vunpack.c.l.b16 %v327
        %v575 = vunpack.c.l.b16 %v328
        %v576 = vunpack.c.l.b16 %v329
        %v577 = vunpack.c.l.b16 %v330
        %v578 = vunpack.c.l.b16 %v331
        %v579 = vunpack.c.l.b16 %v332
        %v580 = vunpack.c.l.b16 %v333
        %v581 = vunpack.c.l.b16 %v334
        %v582 = vunpack.c.l.b16 %v335
        %v583 = vunpack.c.l.b16 %v336
        %v584 = vunpack.c.l.b16 %v337
        %v585 = vunpack.c.l.b16 %v338
        %v586 = vunpack.c.l.b16 %v339
        %v587 = vunpack.c.l.b16 %v340
        %v588 = vunpack.c.l.b16 %v341
        %v589 = vunpack.c.l.b16 %v342
        %v590 = vunpack.c.l.b16 %v343
        %v591 = vunpack.c.l.b16 %v344
        %v592 = vunpack.c.l.b16 %v345
        %v593 = vunpack.c.l.b16 %v346
        %v594 = vunpack.c.l.b16 %v347
        %v595 = vunpack.c.l.b16 %v348
        %v596 = vunpack.c.l.b16 %v349
        %v597 = vunpack.c.l.b16 %v350
        %v598 = vunpack.c.l.b16 %v351
        %v599 = vunpack.c.l.b16 %v352
        %v600 = vunpack.c.l.b16 %v353
        %v601 = vunpack.c.l.b16 %v354
        %v602 = vunpack.c.l.b16 %v355
        %v603 = vunpack.c.l.b16 %v356
        %v604 = vunpack.c.l.b16 %v357
        %v605 = vunpack.c.l.b16 %v358
        %v606 = vunpack.c.l.b16 %v359
        %v607 = vunpack.c.l.b16 %v360
        %v608 = vunpack.c.l.b16 %v361
        %v609 = vunpack.c.l.b16 %v362
        %v610 = vunpack.c.l.b16 %v363
        %v611 = vunpack.c.l.b16 %v364
        %v612 = vunpack.c.l.b16 %v365
        %v613 = vunpack.c.l.b16 %v366
        %v614 = vunpack.c.l.b16 %v367
        %v615 = vunpack.c.l.b16 %v368
        %v616 = vunpack.c.l.b16 %v369
        %v617 = vunpack.c.l.b16 %v370
        %v618 = vunpack.c.l.b16 %v371
        %v619 = vunpack.c.l.b16 %v372
        %v620 = vunpack.c.l.b16 %v373
        %v621 = vunpack.c.l.b16 %v374
        %v622 = vunpack.c.l.b16 %v375
        %v623 = vunpack.c.l.b16 %v376
        %v624 = vunpack.c.l.b16 %v377
        %v625 = vunpack.c.l.b16 %v378
        %v626 = vunpack.c.l.b16 %v379
        %v627 = vunpack.c.l.b16 %v380
        %v628 = vunpack.c.l.b16 %v381
        %v629 = vunpack.c.l.b16 %v382
        %v630 = vpack.c.b16 %v510, %v509
        %v631 = vpack.c.b16 %v512, %v511
        %v632 = vpack.c.b16 %v514, %v513
        %v633 = vpack.c.b16 %v516, %v515
        %v634 = vpack.c.b16 %v518, %v517
        %v635 = vpack.c.b16 %v520, %v519
        %v636 = vpack.c.b16 %v522, %v521
        %v637 = vpack.c.b16 %v524, %v523
        %v638 = vpack.c.b16 %v526, %v525
        %v639 = vpack.c.b16 %v528, %v527
        %v640 = vpack.c.b16 %v530, %v529
        %v641 = vpack.c.b16 %v532, %v531
        %v642 = vpack.c.b16 %v534, %v533
        %v643 = vpack.c.b16 %v536, %v535
        %v644 = vpack.c.b16 %v538, %v537
        %v645 = vpack.c.b16 %v540, %v539
        %v646 = vpack.c.b16 %v542, %v541
        %v647 = vpack.c.b16 %v544, %v543
        %v648 = vpack.c.b16 %v546, %v545
        %v649 = vpack.c.b16 %v548, %v547
        %v650 = vpack.c.b16 %v550, %v549
        %v651 = vpack.c.b16 %v552, %v551
        %v652 = vpack.c.b16 %v554, %v553
        %v653 = vpack.c.b16 %v556, %v555
        %v654 = vpack.c.b16 %v558, %v557
        %v655 = vpack.c.b16 %v560, %v559
        %v656 = vpack.c.b16 %v562, %v561
        %v657 = vpack.c.b16 %v564, %v563
        %v658 = vpack.c.b16 %v566, %v565
        %v659 = vpack.c.b16 %v568, %v567
        %v660 = vpack.c.b16 %v570, %v569
        %v661 = vpack.c.b16 %v572, %v571
        %v662 = vpack.c.b16 %v574, %v573
        %v663 = vpack.c.b16 %v576, %v575
        %v664 = vpack.c.b16 %v578, %v577
        %v665 = vpack.c.b16 %v580, %v579
        %v666 = vpack.c.b16 %v582, %v581
        %v667 = vpack.c.b16 %v584, %v583
        %v668 = vpack.c.b16 %v586, %v585
        %v669 = vpack.c.b16 %v588, %v587
        %v670 = vpack.c.b16 %v590, %v589
        %v671 = vpack.c.b16 %v592, %v591
        %v672 = vpack.c.b16 %v594, %v593
        %v673 = vpack.c.b16 %v596, %v595
        %v674 = vpack.c.b16 %v598, %v597
        %v675 = vpack.c.b16 %v600, %v599
        %v676 = vpack.c.b16 %v602, %v601
        %v677 = vpack.c.b16 %v604, %v603
        %v678 = vpack.c.b16 %v606, %v605
        %v679 = vpack.c.b16 %v608, %v607
        %v680 = vpack.c.b16 %v610, %v609
        %v681 = vpack.c.b16 %v612, %v611
        %v682 = vpack.c.b16 %v614, %v613
        %v683 = vpack.c.b16 %v616, %v615
        %v684 = vpack.c.b16 %v618, %v617
        %v685 = vpack.c.b16 %v620, %v619
        %v686 = vpack.c.b16 %v622, %v621
        %v687 = vpack.c.b16 %v624, %v623
        %v688 = vpack.c.b16 %v626, %v625
        %v689 = vpack.c.b16 %v628, %v627
        %v690 = vpack.c.b16 %v629, %v629
        %vm691 = vcmask 64512
        %v693 = vsel %vm691, %v630, 0
        %v696 = vsel %vm691, %v631, 0
        %v699 = vsel %vm691, %v632, 0
        %v702 = vsel %vm691, %v633, 0
        %v705 = vsel %vm691, %v634, 0
        %v708 = vsel %vm691, %v635, 0
        %v711 = vsel %vm691, %v636, 0
        %v714 = vsel %vm691, %v637, 0
        %v717 = vsel %vm691, %v638, 0
        %v720 = vsel %vm691, %v639, 0
        %v723 = vsel %vm691, %v640, 0
        %v726 = vsel %vm691, %v641, 0
        %v729 = vsel %vm691, %v642, 0
        %v732 = vsel %vm691, %v643, 0
        %v735 = vsel %vm691, %v644, 0
        %v738 = vsel %vm691, %v645, 0
        %v741 = vsel %vm691, %v646, 0
        %v744 = vsel %vm691, %v647, 0
        %v747 = vsel %vm691, %v648, 0
        %v750 = vsel %vm691, %v649, 0
        %v753 = vsel %vm691, %v650, 0
        %v756 = vsel %vm691, %v651, 0
        %v759 = vsel %vm691, %v652, 0
        %v762 = vsel %vm691, %v653, 0
        %v765 = vsel %vm691, %v654, 0
        %v768 = vsel %vm691, %v655, 0
        %v771 = vsel %vm691, %v656, 0
        %v774 = vsel %vm691, %v657, 0
        %v777 = vsel %vm691, %v658, 0
        %v780 = vsel %vm691, %v659, 0
        %v783 = vsel %vm691, %v660, 0
        %v786 = vsel %vm691, %v661, 0
        %v789 = vsel %vm691, %v662, 0
        %v792 = vsel %vm691, %v663, 0
        %v795 = vsel %vm691, %v664, 0
        %v798 = vsel %vm691, %v665, 0
        %v801 = vsel %vm691, %v666, 0
        %v804 = vsel %vm691, %v667, 0
        %v807 = vsel %vm691, %v668, 0
        %v810 = vsel %vm691, %v669, 0
        %v813 = vsel %vm691, %v670, 0
        %v816 = vsel %vm691, %v671, 0
        %v819 = vsel %vm691, %v672, 0
        %v822 = vsel %vm691, %v673, 0
        %v825 = vsel %vm691, %v674, 0
        %v828 = vsel %vm691, %v675, 0
        %v831 = vsel %vm691, %v676, 0
        %v834 = vsel %vm691, %v677, 0
        %v837 = vsel %vm691, %v678, 0
        %v840 = vsel %vm691, %v679, 0
        %v843 = vsel %vm691, %v680, 0
        %v846 = vsel %vm691, %v681, 0
        %v849 = vsel %vm691, %v682, 0
        %v852 = vsel %vm691, %v683, 0
        %v855 = vsel %vm691, %v684, 0
        %v858 = vsel %vm691, %v685, 0
        %v861 = vsel %vm691, %v686, 0
        %v864 = vsel %vm691, %v687, 0
        %v867 = vsel %vm691, %v688, 0
        %v870 = vsel %vm691, %v689, 0
        %v873 = vsel %vm691, %v690, 0
        %vm875 = vcmask 1043456
        %v877 = vsel %vm875, %v383, 0
        %879 = vmatpush.bf16.msra.mxu0 0
        %880 = vmatpush.bf16.msra.mxu0 0
        %881 = vmatpush.bf16.msra.mxu0 0
        %882 = vmatpush.bf16.msra.mxu0 0
        %883 = vmatpush.bf16.msra.mxu0 0
        %884 = vmatpush.bf16.msra.mxu0 0
        %885 = vmatpush.bf16.msra.mxu0 0
        %886 = vmatpush.bf16.msra.mxu0 %v877
        %887 = vmatmul.bf16.gmra.mxu0 %v693
        %v888 = vpop.f32.mrf.mxu0
        %v889 = vadd.f32 %v386, %v888
        %v890 = vpop.f32.mrf.mxu0
        %v891 = vadd.f32 %v386, %v890
        %892 = vmatmul.bf16.gmra.mxu0 %v696
        %v893 = vpop.f32.mrf.mxu0
        %v894 = vadd.f32 %v386, %v893
        %v895 = vpop.f32.mrf.mxu0
        %v896 = vadd.f32 %v386, %v895
        %897 = vmatmul.bf16.gmra.mxu0 %v699
        %v898 = vpop.f32.mrf.mxu0
        %v899 = vadd.f32 %v386, %v898
        %v900 = vpop.f32.mrf.mxu0
        %v901 = vadd.f32 %v386, %v900
        %902 = vmatmul.bf16.gmra.mxu0 %v702
        %v903 = vpop.f32.mrf.mxu0
        %v904 = vadd.f32 %v386, %v903
        %v905 = vpop.f32.mrf.mxu0
        %v906 = vadd.f32 %v386, %v905
        %907 = vmatmul.bf16.gmra.mxu0 %v705
        %v908 = vpop.f32.mrf.mxu0
        %v909 = vadd.f32 %v386, %v908
        %v910 = vpop.f32.mrf.mxu0
        %v911 = vadd.f32 %v386, %v910
        %912 = vmatmul.bf16.gmra.mxu0 %v708
        %v913 = vpop.f32.mrf.mxu0
        %v914 = vadd.f32 %v386, %v913
        %v915 = vpop.f32.mrf.mxu0
        %v916 = vadd.f32 %v386, %v915
        %917 = vmatmul.bf16.gmra.mxu0 %v711
        %v918 = vpop.f32.mrf.mxu0
        %v919 = vadd.f32 %v386, %v918
        %v920 = vpop.f32.mrf.mxu0
        %v921 = vadd.f32 %v386, %v920
        %922 = vmatmul.bf16.gmra.mxu0 %v714
        %v923 = vpop.f32.mrf.mxu0
        %v924 = vadd.f32 %v386, %v923
        %v925 = vpop.f32.mrf.mxu0
        %v926 = vadd.f32 %v386, %v925
        %927 = vmatmul.bf16.gmra.mxu0 %v717
        %v928 = vpop.f32.mrf.mxu0
        %v929 = vadd.f32 %v386, %v928
        %v930 = vpop.f32.mrf.mxu0
        %v931 = vadd.f32 %v386, %v930
        %932 = vmatmul.bf16.gmra.mxu0 %v720
        %v933 = vpop.f32.mrf.mxu0
        %v934 = vadd.f32 %v386, %v933
        %v935 = vpop.f32.mrf.mxu0
        %v936 = vadd.f32 %v386, %v935
        %937 = vmatmul.bf16.gmra.mxu0 %v723
        %v938 = vpop.f32.mrf.mxu0
        %v939 = vadd.f32 %v386, %v938
        %v940 = vpop.f32.mrf.mxu0
        %v941 = vadd.f32 %v386, %v940
        %942 = vmatmul.bf16.gmra.mxu0 %v726
        %v943 = vpop.f32.mrf.mxu0
        %v944 = vadd.f32 %v386, %v943
        %v945 = vpop.f32.mrf.mxu0
        %v946 = vadd.f32 %v386, %v945
        %947 = vmatmul.bf16.gmra.mxu0 %v729
        %v948 = vpop.f32.mrf.mxu0
        %v949 = vadd.f32 %v386, %v948
        %v950 = vpop.f32.mrf.mxu0
        %v951 = vadd.f32 %v386, %v950
        %952 = vmatmul.bf16.gmra.mxu0 %v732
        %v953 = vpop.f32.mrf.mxu0
        %v954 = vadd.f32 %v386, %v953
        %v955 = vpop.f32.mrf.mxu0
        %v956 = vadd.f32 %v386, %v955
        %957 = vmatmul.bf16.gmra.mxu0 %v735
        %v958 = vpop.f32.mrf.mxu0
        %v959 = vadd.f32 %v386, %v958
        %v960 = vpop.f32.mrf.mxu0
        %v961 = vadd.f32 %v386, %v960
        %962 = vmatmul.bf16.gmra.mxu0 %v738
        %v963 = vpop.f32.mrf.mxu0
        %v964 = vadd.f32 %v386, %v963
        %v965 = vpop.f32.mrf.mxu0
        %v966 = vadd.f32 %v386, %v965
        %967 = vmatmul.bf16.gmra.mxu0 %v741
        %v968 = vpop.f32.mrf.mxu0
        %v969 = vadd.f32 %v386, %v968
        %v970 = vpop.f32.mrf.mxu0
        %v971 = vadd.f32 %v386, %v970
        %972 = vmatmul.bf16.gmra.mxu0 %v744
        %v973 = vpop.f32.mrf.mxu0
        %v974 = vadd.f32 %v386, %v973
        %v975 = vpop.f32.mrf.mxu0
        %v976 = vadd.f32 %v386, %v975
        %977 = vmatmul.bf16.gmra.mxu0 %v747
        %v978 = vpop.f32.mrf.mxu0
        %v979 = vadd.f32 %v386, %v978
        %v980 = vpop.f32.mrf.mxu0
        %v981 = vadd.f32 %v386, %v980
        %982 = vmatmul.bf16.gmra.mxu0 %v750
        %v983 = vpop.f32.mrf.mxu0
        %v984 = vadd.f32 %v386, %v983
        %v985 = vpop.f32.mrf.mxu0
        %v986 = vadd.f32 %v386, %v985
        %987 = vmatmul.bf16.gmra.mxu0 %v753
        %v988 = vpop.f32.mrf.mxu0
        %v989 = vadd.f32 %v386, %v988
        %v990 = vpop.f32.mrf.mxu0
        %v991 = vadd.f32 %v386, %v990
        %992 = vmatmul.bf16.gmra.mxu0 %v756
        %v993 = vpop.f32.mrf.mxu0
        %v994 = vadd.f32 %v386, %v993
        %v995 = vpop.f32.mrf.mxu0
        %v996 = vadd.f32 %v386, %v995
        %997 = vmatmul.bf16.gmra.mxu0 %v759
        %v998 = vpop.f32.mrf.mxu0
        %v999 = vadd.f32 %v386, %v998
        %v1000 = vpop.f32.mrf.mxu0
        %v1001 = vadd.f32 %v386, %v1000
        %1002 = vmatmul.bf16.gmra.mxu0 %v762
        %v1003 = vpop.f32.mrf.mxu0
        %v1004 = vadd.f32 %v386, %v1003
        %v1005 = vpop.f32.mrf.mxu0
        %v1006 = vadd.f32 %v386, %v1005
        %1007 = vmatmul.bf16.gmra.mxu0 %v765
        %v1008 = vpop.f32.mrf.mxu0
        %v1009 = vadd.f32 %v386, %v1008
        %v1010 = vpop.f32.mrf.mxu0
        %v1011 = vadd.f32 %v386, %v1010
        %1012 = vmatmul.bf16.gmra.mxu0 %v768
        %v1013 = vpop.f32.mrf.mxu0
        %v1014 = vadd.f32 %v386, %v1013
        %v1015 = vpop.f32.mrf.mxu0
        %v1016 = vadd.f32 %v386, %v1015
        %1017 = vmatmul.bf16.gmra.mxu0 %v771
        %v1018 = vpop.f32.mrf.mxu0
        %v1019 = vadd.f32 %v386, %v1018
        %v1020 = vpop.f32.mrf.mxu0
        %v1021 = vadd.f32 %v386, %v1020
        %1022 = vmatmul.bf16.gmra.mxu0 %v774
        %v1023 = vpop.f32.mrf.mxu0
        %v1024 = vadd.f32 %v386, %v1023
        %v1025 = vpop.f32.mrf.mxu0
        %v1026 = vadd.f32 %v386, %v1025
        %1027 = vmatmul.bf16.gmra.mxu0 %v777
        %v1028 = vpop.f32.mrf.mxu0
        %v1029 = vadd.f32 %v386, %v1028
        %v1030 = vpop.f32.mrf.mxu0
        %v1031 = vadd.f32 %v386, %v1030
        %1032 = vmatmul.bf16.gmra.mxu0 %v780
        %v1033 = vpop.f32.mrf.mxu0
        %v1034 = vadd.f32 %v386, %v1033
        %v1035 = vpop.f32.mrf.mxu0
        %v1036 = vadd.f32 %v386, %v1035
        %1037 = vmatmul.bf16.gmra.mxu0 %v783
        %v1038 = vpop.f32.mrf.mxu0
        %v1039 = vadd.f32 %v386, %v1038
        %v1040 = vpop.f32.mrf.mxu0
        %v1041 = vadd.f32 %v386, %v1040
        %1042 = vmatmul.bf16.gmra.mxu0 %v786
        %v1043 = vpop.f32.mrf.mxu0
        %v1044 = vadd.f32 %v386, %v1043
        %v1045 = vpop.f32.mrf.mxu0
        %v1046 = vadd.f32 %v386, %v1045
        %1047 = vmatmul.bf16.gmra.mxu0 %v789
        %v1048 = vpop.f32.mrf.mxu0
        %v1049 = vadd.f32 %v386, %v1048
        %v1050 = vpop.f32.mrf.mxu0
        %v1051 = vadd.f32 %v386, %v1050
        %1052 = vmatmul.bf16.gmra.mxu0 %v792
        %v1053 = vpop.f32.mrf.mxu0
        %v1054 = vadd.f32 %v386, %v1053
        %v1055 = vpop.f32.mrf.mxu0
        %v1056 = vadd.f32 %v386, %v1055
        %1057 = vmatmul.bf16.gmra.mxu0 %v795
        %v1058 = vpop.f32.mrf.mxu0
        %v1059 = vadd.f32 %v386, %v1058
        %v1060 = vpop.f32.mrf.mxu0
        %v1061 = vadd.f32 %v386, %v1060
        %1062 = vmatmul.bf16.gmra.mxu0 %v798
        %v1063 = vpop.f32.mrf.mxu0
        %v1064 = vadd.f32 %v386, %v1063
        %v1065 = vpop.f32.mrf.mxu0
        %v1066 = vadd.f32 %v386, %v1065
        %1067 = vmatmul.bf16.gmra.mxu0 %v801
        %v1068 = vpop.f32.mrf.mxu0
        %v1069 = vadd.f32 %v386, %v1068
        %v1070 = vpop.f32.mrf.mxu0
        %v1071 = vadd.f32 %v386, %v1070
        %1072 = vmatmul.bf16.gmra.mxu0 %v804
        %v1073 = vpop.f32.mrf.mxu0
        %v1074 = vadd.f32 %v386, %v1073
        %v1075 = vpop.f32.mrf.mxu0
        %v1076 = vadd.f32 %v386, %v1075
        %1077 = vmatmul.bf16.gmra.mxu0 %v807
        %v1078 = vpop.f32.mrf.mxu0
        %v1079 = vadd.f32 %v386, %v1078
        %v1080 = vpop.f32.mrf.mxu0
        %v1081 = vadd.f32 %v386, %v1080
        %1082 = vmatmul.bf16.gmra.mxu0 %v810
        %v1083 = vpop.f32.mrf.mxu0
        %v1084 = vadd.f32 %v386, %v1083
        %v1085 = vpop.f32.mrf.mxu0
        %v1086 = vadd.f32 %v386, %v1085
        %1087 = vmatmul.bf16.gmra.mxu0 %v813
        %v1088 = vpop.f32.mrf.mxu0
        %v1089 = vadd.f32 %v386, %v1088
        %v1090 = vpop.f32.mrf.mxu0
        %v1091 = vadd.f32 %v386, %v1090
        %1092 = vmatmul.bf16.gmra.mxu0 %v816
        %v1093 = vpop.f32.mrf.mxu0
        %v1094 = vadd.f32 %v386, %v1093
        %v1095 = vpop.f32.mrf.mxu0
        %v1096 = vadd.f32 %v386, %v1095
        %1097 = vmatmul.bf16.gmra.mxu0 %v819
        %v1098 = vpop.f32.mrf.mxu0
        %v1099 = vadd.f32 %v386, %v1098
        %v1100 = vpop.f32.mrf.mxu0
        %v1101 = vadd.f32 %v386, %v1100
        %1102 = vmatmul.bf16.gmra.mxu0 %v822
        %v1103 = vpop.f32.mrf.mxu0
        %v1104 = vadd.f32 %v386, %v1103
        %v1105 = vpop.f32.mrf.mxu0
        %v1106 = vadd.f32 %v386, %v1105
        %1107 = vmatmul.bf16.gmra.mxu0 %v825
        %v1108 = vpop.f32.mrf.mxu0
        %v1109 = vadd.f32 %v386, %v1108
        %v1110 = vpop.f32.mrf.mxu0
        %v1111 = vadd.f32 %v386, %v1110
        %1112 = vmatmul.bf16.gmra.mxu0 %v828
        %v1113 = vpop.f32.mrf.mxu0
        %v1114 = vadd.f32 %v386, %v1113
        %v1115 = vpop.f32.mrf.mxu0
        %v1116 = vadd.f32 %v386, %v1115
        %1117 = vmatmul.bf16.gmra.mxu0 %v831
        %v1118 = vpop.f32.mrf.mxu0
        %v1119 = vadd.f32 %v386, %v1118
        %v1120 = vpop.f32.mrf.mxu0
        %v1121 = vadd.f32 %v386, %v1120
        %1122 = vmatmul.bf16.gmra.mxu0 %v834
        %v1123 = vpop.f32.mrf.mxu0
        %v1124 = vadd.f32 %v386, %v1123
        %v1125 = vpop.f32.mrf.mxu0
        %v1126 = vadd.f32 %v386, %v1125
        %1127 = vmatmul.bf16.gmra.mxu0 %v837
        %v1128 = vpop.f32.mrf.mxu0
        %v1129 = vadd.f32 %v386, %v1128
        %v1130 = vpop.f32.mrf.mxu0
        %v1131 = vadd.f32 %v386, %v1130
        %1132 = vmatmul.bf16.gmra.mxu0 %v840
        %v1133 = vpop.f32.mrf.mxu0
        %v1134 = vadd.f32 %v386, %v1133
        %v1135 = vpop.f32.mrf.mxu0
        %v1136 = vadd.f32 %v386, %v1135
        %1137 = vmatmul.bf16.gmra.mxu0 %v843
        %v1138 = vpop.f32.mrf.mxu0
        %v1139 = vadd.f32 %v386, %v1138
        %v1140 = vpop.f32.mrf.mxu0
        %v1141 = vadd.f32 %v386, %v1140
        %1142 = vmatmul.bf16.gmra.mxu0 %v846
        %v1143 = vpop.f32.mrf.mxu0
        %v1144 = vadd.f32 %v386, %v1143
        %v1145 = vpop.f32.mrf.mxu0
        %v1146 = vadd.f32 %v386, %v1145
        %1147 = vmatmul.bf16.gmra.mxu0 %v849
        %v1148 = vpop.f32.mrf.mxu0
        %v1149 = vadd.f32 %v386, %v1148
        %v1150 = vpop.f32.mrf.mxu0
        %v1151 = vadd.f32 %v386, %v1150
        %1152 = vmatmul.bf16.gmra.mxu0 %v852
        %v1153 = vpop.f32.mrf.mxu0
        %v1154 = vadd.f32 %v386, %v1153
        %v1155 = vpop.f32.mrf.mxu0
        %v1156 = vadd.f32 %v386, %v1155
        %1157 = vmatmul.bf16.gmra.mxu0 %v855
        %v1158 = vpop.f32.mrf.mxu0
        %v1159 = vadd.f32 %v386, %v1158
        %v1160 = vpop.f32.mrf.mxu0
        %v1161 = vadd.f32 %v386, %v1160
        %1162 = vmatmul.bf16.gmra.mxu0 %v858
        %v1163 = vpop.f32.mrf.mxu0
        %v1164 = vadd.f32 %v386, %v1163
        %v1165 = vpop.f32.mrf.mxu0
        %v1166 = vadd.f32 %v386, %v1165
        %1167 = vmatmul.bf16.gmra.mxu0 %v861
        %v1168 = vpop.f32.mrf.mxu0
        %v1169 = vadd.f32 %v386, %v1168
        %v1170 = vpop.f32.mrf.mxu0
        %v1171 = vadd.f32 %v386, %v1170
        %1172 = vmatmul.bf16.gmra.mxu0 %v864
        %v1173 = vpop.f32.mrf.mxu0
        %v1174 = vadd.f32 %v386, %v1173
        %v1175 = vpop.f32.mrf.mxu0
        %v1176 = vadd.f32 %v386, %v1175
        %1177 = vmatmul.bf16.gmra.mxu0 %v867
        %v1178 = vpop.f32.mrf.mxu0
        %v1179 = vadd.f32 %v386, %v1178
        %v1180 = vpop.f32.mrf.mxu0
        %v1181 = vadd.f32 %v386, %v1180
        %1182 = vmatmul.bf16.gmra.mxu0 %v870
        %v1183 = vpop.f32.mrf.mxu0
        %v1184 = vadd.f32 %v386, %v1183
        %v1185 = vpop.f32.mrf.mxu0
        %v1186 = vadd.f32 %v386, %v1185
        %1187 = vmatmul.bf16.gmra.mxu0 %v873
        %v1188 = vpop.f32.mrf.mxu0
        %v1189 = vadd.f32 %v386, %v1188
        %v1190 = vpop.f32.mrf.mxu0
        %1191 = vdwg.mxu0
        %v1192 = vld [vmem:[%s250] sm:$0xf]
        %v1193 = vld [vmem:[%s250 + $0x4] sm:$0xf]
        %v1194 = vld [vmem:[%s250 + $0x8] sm:$0xf]
        %v1195 = vld [vmem:[%s250 + $0xc] sm:$0xf]
        %v1196 = vld [vmem:[%s250 + $0x10] sm:$0xf]
        %v1197 = vld [vmem:[%s250 + $0x14] sm:$0xf]
        %v1198 = vld [vmem:[%s250 + $0x18] sm:$0xf]
        %v1199 = vld [vmem:[%s250 + $0x1c] sm:$0xf]
        %v1200 = vld [vmem:[%s250 + $0x20] sm:$0xf]
        %v1201 = vld [vmem:[%s250 + $0x24] sm:$0xf]
        %v1202 = vld [vmem:[%s250 + $0x28] sm:$0xf]
        %v1203 = vld [vmem:[%s250 + $0x2c] sm:$0xf]
        %v1204 = vld [vmem:[%s250 + $0x30] sm:$0xf]
        %v1205 = vld [vmem:[%s250 + $0x34] sm:$0xf]
        %v1206 = vld [vmem:[%s250 + $0x38] sm:$0xf]
        %v1207 = vld [vmem:[%s250 + $0x3c] sm:$0xf]
        %v1208 = vld [vmem:[%s250 + $0x40] sm:$0xf]
        %v1209 = vld [vmem:[%s250 + $0x44] sm:$0xf]
        %v1210 = vld [vmem:[%s250 + $0x48] sm:$0xf]
        %v1211 = vld [vmem:[%s250 + $0x4c] sm:$0xf]
        %v1212 = vld [vmem:[%s250 + $0x50] sm:$0xf]
        %v1213 = vld [vmem:[%s250 + $0x54] sm:$0xf]
        %v1214 = vld [vmem:[%s250 + $0x58] sm:$0xf]
        %v1215 = vld [vmem:[%s250 + $0x5c] sm:$0xf]
        %v1216 = vld [vmem:[%s250 + $0x60] sm:$0xf]
        %v1217 = vld [vmem:[%s250 + $0x64] sm:$0xf]
        %v1218 = vld [vmem:[%s250 + $0x68] sm:$0xf]
        %v1219 = vld [vmem:[%s250 + $0x6c] sm:$0xf]
        %v1220 = vld [vmem:[%s250 + $0x70] sm:$0xf]
        %v1221 = vld [vmem:[%s250 + $0x74] sm:$0xf]
        %v1222 = vld [vmem:[%s250 + $0x78] sm:$0xf]
        %v1223 = vld [vmem:[%s250 + $0x7c] sm:$0xf]
        %v1224 = vld [vmem:[%s250 + $0x80] sm:$0xf]
        %v1225 = vld [vmem:[%s250 + $0x84] sm:$0xf]
        %v1226 = vld [vmem:[%s250 + $0x88] sm:$0xf]
        %v1227 = vld [vmem:[%s250 + $0x8c] sm:$0xf]
        %v1228 = vld [vmem:[%s250 + $0x90] sm:$0xf]
        %v1229 = vld [vmem:[%s250 + $0x94] sm:$0xf]
        %v1230 = vld [vmem:[%s250 + $0x98] sm:$0xf]
        %v1231 = vld [vmem:[%s250 + $0x9c] sm:$0xf]
        %v1232 = vld [vmem:[%s250 + $0xa0] sm:$0xf]
        %v1233 = vld [vmem:[%s250 + $0xa4] sm:$0xf]
        %v1234 = vld [vmem:[%s250 + $0xa8] sm:$0xf]
        %v1235 = vld [vmem:[%s250 + $0xac] sm:$0xf]
        %v1236 = vld [vmem:[%s250 + $0xb0] sm:$0xf]
        %v1237 = vld [vmem:[%s250 + $0xb4] sm:$0xf]
        %v1238 = vld [vmem:[%s250 + $0xb8] sm:$0xf]
        %v1239 = vld [vmem:[%s250 + $0xbc] sm:$0xf]
        %v1240 = vld [vmem:[%s250 + $0xc0] sm:$0xf]
        %v1241 = vld [vmem:[%s250 + $0xc4] sm:$0xf]
        %v1242 = vld [vmem:[%s250 + $0xc8] sm:$0xf]
        %v1243 = vld [vmem:[%s250 + $0xcc] sm:$0xf]
        %v1244 = vld [vmem:[%s250 + $0xd0] sm:$0xf]
        %v1245 = vld [vmem:[%s250 + $0xd4] sm:$0xf]
        %v1246 = vld [vmem:[%s250 + $0xd8] sm:$0xf]
        %v1247 = vld [vmem:[%s250 + $0xdc] sm:$0xf]
        %v1248 = vld [vmem:[%s250 + $0xe0] sm:$0xf]
        %v1249 = vld [vmem:[%s250 + $0xe4] sm:$0xf]
        %v1250 = vld [vmem:[%s250 + $0xe8] sm:$0xf]
        %v1251 = vld [vmem:[%s250 + $0xec] sm:$0xf]
        %v1252 = vld [vmem:[%s250 + $0xf0] sm:$0xf]
        %v1253 = vld [vmem:[%s250 + $0xf4] sm:$0xf]
        %v1254 = vld [vmem:[%s250 + $0xf8] sm:$0xf]
        %v1255 = vld [vmem:[%s250 + $0xfc] sm:$0xf]
        %v1256 = vld [vmem:[%s250 + $0x100] sm:$0xf]
        %v1257 = vld [vmem:[%s250 + $0x104] sm:$0xf]
        %v1258 = vld [vmem:[%s250 + $0x108] sm:$0xf]
        %v1259 = vld [vmem:[%s250 + $0x10c] sm:$0xf]
        %v1260 = vld [vmem:[%s250 + $0x110] sm:$0xf]
        %v1261 = vld [vmem:[%s250 + $0x114] sm:$0xf]
        %v1262 = vld [vmem:[%s250 + $0x118] sm:$0xf]
        %v1263 = vld [vmem:[%s250 + $0x11c] sm:$0xf]
        %v1264 = vld [vmem:[%s250 + $0x120] sm:$0xf]
        %v1265 = vld [vmem:[%s250 + $0x124] sm:$0xf]
        %v1266 = vld [vmem:[%s250 + $0x128] sm:$0xf]
        %v1267 = vld [vmem:[%s250 + $0x12c] sm:$0xf]
        %v1268 = vld [vmem:[%s250 + $0x130] sm:$0xf]
        %v1269 = vld [vmem:[%s250 + $0x134] sm:$0xf]
        %v1270 = vld [vmem:[%s250 + $0x138] sm:$0xf]
        %v1271 = vld [vmem:[%s250 + $0x13c] sm:$0xf]
        %v1272 = vld [vmem:[%s250 + $0x140] sm:$0xf]
        %v1273 = vld [vmem:[%s250 + $0x144] sm:$0xf]
        %v1274 = vld [vmem:[%s250 + $0x148] sm:$0xf]
        %v1275 = vld [vmem:[%s250 + $0x14c] sm:$0xf]
        %v1276 = vld [vmem:[%s250 + $0x150] sm:$0xf]
        %v1277 = vld [vmem:[%s250 + $0x154] sm:$0xf]
        %v1278 = vld [vmem:[%s250 + $0x158] sm:$0xf]
        %v1279 = vld [vmem:[%s250 + $0x15c] sm:$0xf]
        %v1280 = vld [vmem:[%s250 + $0x160] sm:$0xf]
        %v1281 = vld [vmem:[%s250 + $0x164] sm:$0xf]
        %v1282 = vld [vmem:[%s250 + $0x168] sm:$0xf]
        %v1283 = vld [vmem:[%s250 + $0x16c] sm:$0xf]
        %v1284 = vld [vmem:[%s250 + $0x170] sm:$0xf]
        %v1285 = vld [vmem:[%s250 + $0x174] sm:$0xf]
        %v1286 = vld [vmem:[%s250 + $0x178] sm:$0xf]
        %v1287 = vld [vmem:[%s250 + $0x17c] sm:$0xf]
        %v1288 = vld [vmem:[%s250 + $0x180] sm:$0xf]
        %v1289 = vld [vmem:[%s250 + $0x184] sm:$0xf]
        %v1290 = vld [vmem:[%s250 + $0x188] sm:$0xf]
        %v1291 = vld [vmem:[%s250 + $0x18c] sm:$0xf]
        %v1292 = vld [vmem:[%s250 + $0x190] sm:$0xf]
        %v1293 = vld [vmem:[%s250 + $0x194] sm:$0xf]
        %v1294 = vld [vmem:[%s250 + $0x198] sm:$0xf]
        %v1295 = vld [vmem:[%s250 + $0x19c] sm:$0xf]
        %v1296 = vld [vmem:[%s250 + $0x1a0] sm:$0xf]
        %v1297 = vld [vmem:[%s250 + $0x1a4] sm:$0xf]
        %v1298 = vld [vmem:[%s250 + $0x1a8] sm:$0xf]
        %v1299 = vld [vmem:[%s250 + $0x1ac] sm:$0xf]
        %v1300 = vld [vmem:[%s250 + $0x1b0] sm:$0xf]
        %v1301 = vld [vmem:[%s250 + $0x1b4] sm:$0xf]
        %v1302 = vld [vmem:[%s250 + $0x1b8] sm:$0xf]
        %v1303 = vld [vmem:[%s250 + $0x1bc] sm:$0xf]
        %v1304 = vld [vmem:[%s250 + $0x1c0] sm:$0xf]
        %v1305 = vld [vmem:[%s250 + $0x1c4] sm:$0xf]
        %v1306 = vld [vmem:[%s250 + $0x1c8] sm:$0xf]
        %v1307 = vld [vmem:[%s250 + $0x1cc] sm:$0xf]
        %v1308 = vld [vmem:[%s250 + $0x1d0] sm:$0xf]
        %v1309 = vld [vmem:[%s250 + $0x1d4] sm:$0xf]
        %v1310 = vld [vmem:[%s250 + $0x1d8] sm:$0xf]
        %v1311 = vld [vmem:[%s250 + $0x1dc] sm:$0xf]
        %v1312 = vld [vmem:[%s250 + $0x1e0] sm:$0xf]
        %v1313 = vunpack.c.l.bf16 %v1192
        %v1314 = vunpack.c.l.bf16 %v1193
        %v1315 = vunpack.c.l.bf16 %v1194
        %v1316 = vunpack.c.l.bf16 %v1195
        %v1317 = vunpack.c.l.bf16 %v1196
        %v1318 = vunpack.c.l.bf16 %v1197
        %v1319 = vunpack.c.l.bf16 %v1198
        %v1320 = vunpack.c.l.bf16 %v1199
        %v1321 = vunpack.c.l.bf16 %v1200
        %v1322 = vunpack.c.l.bf16 %v1201
        %v1323 = vunpack.c.l.bf16 %v1202
        %v1324 = vunpack.c.l.bf16 %v1203
        %v1325 = vunpack.c.l.bf16 %v1204
        %v1326 = vunpack.c.l.bf16 %v1205
        %v1327 = vunpack.c.l.bf16 %v1206
        %v1328 = vunpack.c.l.bf16 %v1207
        %v1329 = vunpack.c.l.bf16 %v1208
        %v1330 = vunpack.c.l.bf16 %v1209
        %v1331 = vunpack.c.l.bf16 %v1210
        %v1332 = vunpack.c.l.bf16 %v1211
        %v1333 = vunpack.c.l.bf16 %v1212
        %v1334 = vunpack.c.l.bf16 %v1213
        %v1335 = vunpack.c.l.bf16 %v1214
        %v1336 = vunpack.c.l.bf16 %v1215
        %v1337 = vunpack.c.l.bf16 %v1216
        %v1338 = vunpack.c.l.bf16 %v1217
        %v1339 = vunpack.c.l.bf16 %v1218
        %v1340 = vunpack.c.l.bf16 %v1219
        %v1341 = vunpack.c.l.bf16 %v1220
        %v1342 = vunpack.c.l.bf16 %v1221
        %v1343 = vunpack.c.l.bf16 %v1222
        %v1344 = vunpack.c.l.bf16 %v1223
        %v1345 = vunpack.c.l.bf16 %v1224
        %v1346 = vunpack.c.l.bf16 %v1225
        %v1347 = vunpack.c.l.bf16 %v1226
        %v1348 = vunpack.c.l.bf16 %v1227
        %v1349 = vunpack.c.l.bf16 %v1228
        %v1350 = vunpack.c.l.bf16 %v1229
        %v1351 = vunpack.c.l.bf16 %v1230
        %v1352 = vunpack.c.l.bf16 %v1231
        %v1353 = vunpack.c.l.bf16 %v1232
        %v1354 = vunpack.c.l.bf16 %v1233
        %v1355 = vunpack.c.l.bf16 %v1234
        %v1356 = vunpack.c.l.bf16 %v1235
        %v1357 = vunpack.c.l.bf16 %v1236
        %v1358 = vunpack.c.l.bf16 %v1237
        %v1359 = vunpack.c.l.bf16 %v1238
        %v1360 = vunpack.c.l.bf16 %v1239
        %v1361 = vunpack.c.l.bf16 %v1240
        %v1362 = vunpack.c.l.bf16 %v1241
        %v1363 = vunpack.c.l.bf16 %v1242
        %v1364 = vunpack.c.l.bf16 %v1243
        %v1365 = vunpack.c.l.bf16 %v1244
        %v1366 = vunpack.c.l.bf16 %v1245
        %v1367 = vunpack.c.l.bf16 %v1246
        %v1368 = vunpack.c.l.bf16 %v1247
        %v1369 = vunpack.c.l.bf16 %v1248
        %v1370 = vunpack.c.l.bf16 %v1249
        %v1371 = vunpack.c.l.bf16 %v1250
        %v1372 = vunpack.c.l.bf16 %v1251
        %v1373 = vunpack.c.l.bf16 %v1252
        %v1374 = vunpack.c.l.bf16 %v1253
        %v1375 = vunpack.c.l.bf16 %v1254
        %v1376 = vunpack.c.l.bf16 %v1255
        %v1377 = vunpack.c.l.bf16 %v1256
        %v1378 = vunpack.c.l.bf16 %v1257
        %v1379 = vunpack.c.l.bf16 %v1258
        %v1380 = vunpack.c.l.bf16 %v1259
        %v1381 = vunpack.c.l.bf16 %v1260
        %v1382 = vunpack.c.l.bf16 %v1261
        %v1383 = vunpack.c.l.bf16 %v1262
        %v1384 = vunpack.c.l.bf16 %v1263
        %v1385 = vunpack.c.l.bf16 %v1264
        %v1386 = vunpack.c.l.bf16 %v1265
        %v1387 = vunpack.c.l.bf16 %v1266
        %v1388 = vunpack.c.l.bf16 %v1267
        %v1389 = vunpack.c.l.bf16 %v1268
        %v1390 = vunpack.c.l.bf16 %v1269
        %v1391 = vunpack.c.l.bf16 %v1270
        %v1392 = vunpack.c.l.bf16 %v1271
        %v1393 = vunpack.c.l.bf16 %v1272
        %v1394 = vunpack.c.l.bf16 %v1273
        %v1395 = vunpack.c.l.bf16 %v1274
        %v1396 = vunpack.c.l.bf16 %v1275
        %v1397 = vunpack.c.l.bf16 %v1276
        %v1398 = vunpack.c.l.bf16 %v1277
        %v1399 = vunpack.c.l.bf16 %v1278
        %v1400 = vunpack.c.l.bf16 %v1279
        %v1401 = vunpack.c.l.bf16 %v1280
        %v1402 = vunpack.c.l.bf16 %v1281
        %v1403 = vunpack.c.l.bf16 %v1282
        %v1404 = vunpack.c.l.bf16 %v1283
        %v1405 = vunpack.c.l.bf16 %v1284
        %v1406 = vunpack.c.l.bf16 %v1285
        %v1407 = vunpack.c.l.bf16 %v1286
        %v1408 = vunpack.c.l.bf16 %v1287
        %v1409 = vunpack.c.l.bf16 %v1288
        %v1410 = vunpack.c.l.bf16 %v1289
        %v1411 = vunpack.c.l.bf16 %v1290
        %v1412 = vunpack.c.l.bf16 %v1291
        %v1413 = vunpack.c.l.bf16 %v1292
        %v1414 = vunpack.c.l.bf16 %v1293
        %v1415 = vunpack.c.l.bf16 %v1294
        %v1416 = vunpack.c.l.bf16 %v1295
        %v1417 = vunpack.c.l.bf16 %v1296
        %v1418 = vunpack.c.l.bf16 %v1297
        %v1419 = vunpack.c.l.bf16 %v1298
        %v1420 = vunpack.c.l.bf16 %v1299
        %v1421 = vunpack.c.l.bf16 %v1300
        %v1422 = vunpack.c.l.bf16 %v1301
        %v1423 = vunpack.c.l.bf16 %v1302
        %v1424 = vunpack.c.l.bf16 %v1303
        %v1425 = vunpack.c.l.bf16 %v1304
        %v1426 = vunpack.c.l.bf16 %v1305
        %v1427 = vunpack.c.l.bf16 %v1306
        %v1428 = vunpack.c.l.bf16 %v1307
        %v1429 = vunpack.c.l.bf16 %v1308
        %v1430 = vunpack.c.l.bf16 %v1309
        %v1431 = vunpack.c.l.bf16 %v1310
        %v1432 = vunpack.c.l.bf16 %v1311
        %v1433 = vunpack.c.l.bf16 %v1312
        %v1434 = vadd.f32 %v889, %v1313
        %v1435 = vadd.f32 %v891, %v1314
        %v1436 = vadd.f32 %v894, %v1315
        %v1437 = vadd.f32 %v896, %v1316
        %v1438 = vadd.f32 %v899, %v1317
        %v1439 = vadd.f32 %v901, %v1318
        %v1440 = vadd.f32 %v904, %v1319
        %v1441 = vadd.f32 %v906, %v1320
        %v1442 = vadd.f32 %v909, %v1321
        %v1443 = vadd.f32 %v911, %v1322
        %v1444 = vadd.f32 %v914, %v1323
        %v1445 = vadd.f32 %v916, %v1324
        %v1446 = vadd.f32 %v919, %v1325
        %v1447 = vadd.f32 %v921, %v1326
        %v1448 = vadd.f32 %v924, %v1327
        %v1449 = vadd.f32 %v926, %v1328
        %v1450 = vadd.f32 %v929, %v1329
        %v1451 = vadd.f32 %v931, %v1330
        %v1452 = vadd.f32 %v934, %v1331
        %v1453 = vadd.f32 %v936, %v1332
        %v1454 = vadd.f32 %v939, %v1333
        %v1455 = vadd.f32 %v941, %v1334
        %v1456 = vadd.f32 %v944, %v1335
        %v1457 = vadd.f32 %v946, %v1336
        %v1458 = vadd.f32 %v949, %v1337
        %v1459 = vadd.f32 %v951, %v1338
        %v1460 = vadd.f32 %v954, %v1339
        %v1461 = vadd.f32 %v956, %v1340
        %v1462 = vadd.f32 %v959, %v1341
        %v1463 = vadd.f32 %v961, %v1342
        %v1464 = vadd.f32 %v964, %v1343
        %v1465 = vadd.f32 %v966, %v1344
        %v1466 = vadd.f32 %v969, %v1345
        %v1467 = vadd.f32 %v971, %v1346
        %v1468 = vadd.f32 %v974, %v1347
        %v1469 = vadd.f32 %v976, %v1348
        %v1470 = vadd.f32 %v979, %v1349
        %v1471 = vadd.f32 %v981, %v1350
        %v1472 = vadd.f32 %v984, %v1351
        %v1473 = vadd.f32 %v986, %v1352
        %v1474 = vadd.f32 %v989, %v1353
        %v1475 = vadd.f32 %v991, %v1354
        %v1476 = vadd.f32 %v994, %v1355
        %v1477 = vadd.f32 %v996, %v1356
        %v1478 = vadd.f32 %v999, %v1357
        %v1479 = vadd.f32 %v1001, %v1358
        %v1480 = vadd.f32 %v1004, %v1359
        %v1481 = vadd.f32 %v1006, %v1360
        %v1482 = vadd.f32 %v1009, %v1361
        %v1483 = vadd.f32 %v1011, %v1362
        %v1484 = vadd.f32 %v1014, %v1363
        %v1485 = vadd.f32 %v1016, %v1364
        %v1486 = vadd.f32 %v1019, %v1365
        %v1487 = vadd.f32 %v1021, %v1366
        %v1488 = vadd.f32 %v1024, %v1367
        %v1489 = vadd.f32 %v1026, %v1368
        %v1490 = vadd.f32 %v1029, %v1369
        %v1491 = vadd.f32 %v1031, %v1370
        %v1492 = vadd.f32 %v1034, %v1371
        %v1493 = vadd.f32 %v1036, %v1372
        %v1494 = vadd.f32 %v1039, %v1373
        %v1495 = vadd.f32 %v1041, %v1374
        %v1496 = vadd.f32 %v1044, %v1375
        %v1497 = vadd.f32 %v1046, %v1376
        %v1498 = vadd.f32 %v1049, %v1377
        %v1499 = vadd.f32 %v1051, %v1378
        %v1500 = vadd.f32 %v1054, %v1379
        %v1501 = vadd.f32 %v1056, %v1380
        %v1502 = vadd.f32 %v1059, %v1381
        %v1503 = vadd.f32 %v1061, %v1382
        %v1504 = vadd.f32 %v1064, %v1383
        %v1505 = vadd.f32 %v1066, %v1384
        %v1506 = vadd.f32 %v1069, %v1385
        %v1507 = vadd.f32 %v1071, %v1386
        %v1508 = vadd.f32 %v1074, %v1387
        %v1509 = vadd.f32 %v1076, %v1388
        %v1510 = vadd.f32 %v1079, %v1389
        %v1511 = vadd.f32 %v1081, %v1390
        %v1512 = vadd.f32 %v1084, %v1391
        %v1513 = vadd.f32 %v1086, %v1392
        %v1514 = vadd.f32 %v1089, %v1393
        %v1515 = vadd.f32 %v1091, %v1394
        %v1516 = vadd.f32 %v1094, %v1395
        %v1517 = vadd.f32 %v1096, %v1396
        %v1518 = vadd.f32 %v1099, %v1397
        %v1519 = vadd.f32 %v1101, %v1398
        %v1520 = vadd.f32 %v1104, %v1399
        %v1521 = vadd.f32 %v1106, %v1400
        %v1522 = vadd.f32 %v1109, %v1401
        %v1523 = vadd.f32 %v1111, %v1402
        %v1524 = vadd.f32 %v1114, %v1403
        %v1525 = vadd.f32 %v1116, %v1404
        %v1526 = vadd.f32 %v1119, %v1405
        %v1527 = vadd.f32 %v1121, %v1406
        %v1528 = vadd.f32 %v1124, %v1407
        %v1529 = vadd.f32 %v1126, %v1408
        %v1530 = vadd.f32 %v1129, %v1409
        %v1531 = vadd.f32 %v1131, %v1410
        %v1532 = vadd.f32 %v1134, %v1411
        %v1533 = vadd.f32 %v1136, %v1412
        %v1534 = vadd.f32 %v1139, %v1413
        %v1535 = vadd.f32 %v1141, %v1414
        %v1536 = vadd.f32 %v1144, %v1415
        %v1537 = vadd.f32 %v1146, %v1416
        %v1538 = vadd.f32 %v1149, %v1417
        %v1539 = vadd.f32 %v1151, %v1418
        %v1540 = vadd.f32 %v1154, %v1419
        %v1541 = vadd.f32 %v1156, %v1420
        %v1542 = vadd.f32 %v1159, %v1421
        %v1543 = vadd.f32 %v1161, %v1422
        %v1544 = vadd.f32 %v1164, %v1423
        %v1545 = vadd.f32 %v1166, %v1424
        %v1546 = vadd.f32 %v1169, %v1425
        %v1547 = vadd.f32 %v1171, %v1426
        %v1548 = vadd.f32 %v1174, %v1427
        %v1549 = vadd.f32 %v1176, %v1428
        %v1550 = vadd.f32 %v1179, %v1429
        %v1551 = vadd.f32 %v1181, %v1430
        %v1552 = vadd.f32 %v1184, %v1431
        %v1553 = vadd.f32 %v1186, %v1432
        %v1554 = vadd.f32 %v1189, %v1433
        %v1555 = vmax.f32 %v1434, 0.0
        %v1556 = vmax.f32 %v1435, 0.0
        %v1557 = vmax.f32 %v1436, 0.0
        %v1558 = vmax.f32 %v1437, 0.0
        %v1559 = vmax.f32 %v1438, 0.0
        %v1560 = vmax.f32 %v1439, 0.0
        %v1561 = vmax.f32 %v1440, 0.0
        %v1562 = vmax.f32 %v1441, 0.0
        %v1563 = vmax.f32 %v1442, 0.0
        %v1564 = vmax.f32 %v1443, 0.0
        %v1565 = vmax.f32 %v1444, 0.0
        %v1566 = vmax.f32 %v1445, 0.0
        %v1567 = vmax.f32 %v1446, 0.0
        %v1568 = vmax.f32 %v1447, 0.0
        %v1569 = vmax.f32 %v1448, 0.0
        %v1570 = vmax.f32 %v1449, 0.0
        %v1571 = vmax.f32 %v1450, 0.0
        %v1572 = vmax.f32 %v1451, 0.0
        %v1573 = vmax.f32 %v1452, 0.0
        %v1574 = vmax.f32 %v1453, 0.0
        %v1575 = vmax.f32 %v1454, 0.0
        %v1576 = vmax.f32 %v1455, 0.0
        %v1577 = vmax.f32 %v1456, 0.0
        %v1578 = vmax.f32 %v1457, 0.0
        %v1579 = vmax.f32 %v1458, 0.0
        %v1580 = vmax.f32 %v1459, 0.0
        %v1581 = vmax.f32 %v1460, 0.0
        %v1582 = vmax.f32 %v1461, 0.0
        %v1583 = vmax.f32 %v1462, 0.0
        %v1584 = vmax.f32 %v1463, 0.0
        %v1585 = vmax.f32 %v1464, 0.0
        %v1586 = vmax.f32 %v1465, 0.0
        %v1587 = vmax.f32 %v1466, 0.0
        %v1588 = vmax.f32 %v1467, 0.0
        %v1589 = vmax.f32 %v1468, 0.0
        %v1590 = vmax.f32 %v1469, 0.0
        %v1591 = vmax.f32 %v1470, 0.0
        %v1592 = vmax.f32 %v1471, 0.0
        %v1593 = vmax.f32 %v1472, 0.0
        %v1594 = vmax.f32 %v1473, 0.0
        %v1595 = vmax.f32 %v1474, 0.0
        %v1596 = vmax.f32 %v1475, 0.0
        %v1597 = vmax.f32 %v1476, 0.0
        %v1598 = vmax.f32 %v1477, 0.0
        %v1599 = vmax.f32 %v1478, 0.0
        %v1600 = vmax.f32 %v1479, 0.0
        %v1601 = vmax.f32 %v1480, 0.0
        %v1602 = vmax.f32 %v1481, 0.0
        %v1603 = vmax.f32 %v1482, 0.0
        %v1604 = vmax.f32 %v1483, 0.0
        %v1605 = vmax.f32 %v1484, 0.0
        %v1606 = vmax.f32 %v1485, 0.0
        %v1607 = vmax.f32 %v1486, 0.0
        %v1608 = vmax.f32 %v1487, 0.0
        %v1609 = vmax.f32 %v1488, 0.0
        %v1610 = vmax.f32 %v1489, 0.0
        %v1611 = vmax.f32 %v1490, 0.0
        %v1612 = vmax.f32 %v1491, 0.0
        %v1613 = vmax.f32 %v1492, 0.0
        %v1614 = vmax.f32 %v1493, 0.0
        %v1615 = vmax.f32 %v1494, 0.0
        %v1616 = vmax.f32 %v1495, 0.0
        %v1617 = vmax.f32 %v1496, 0.0
        %v1618 = vmax.f32 %v1497, 0.0
        %v1619 = vmax.f32 %v1498, 0.0
        %v1620 = vmax.f32 %v1499, 0.0
        %v1621 = vmax.f32 %v1500, 0.0
        %v1622 = vmax.f32 %v1501, 0.0
        %v1623 = vmax.f32 %v1502, 0.0
        %v1624 = vmax.f32 %v1503, 0.0
        %v1625 = vmax.f32 %v1504, 0.0
        %v1626 = vmax.f32 %v1505, 0.0
        %v1627 = vmax.f32 %v1506, 0.0
        %v1628 = vmax.f32 %v1507, 0.0
        %v1629 = vmax.f32 %v1508, 0.0
        %v1630 = vmax.f32 %v1509, 0.0
        %v1631 = vmax.f32 %v1510, 0.0
        %v1632 = vmax.f32 %v1511, 0.0
        %v1633 = vmax.f32 %v1512, 0.0
        %v1634 = vmax.f32 %v1513, 0.0
        %v1635 = vmax.f32 %v1514, 0.0
        %v1636 = vmax.f32 %v1515, 0.0
        %v1637 = vmax.f32 %v1516, 0.0
        %v1638 = vmax.f32 %v1517, 0.0
        %v1639 = vmax.f32 %v1518, 0.0
        %v1640 = vmax.f32 %v1519, 0.0
        %v1641 = vmax.f32 %v1520, 0.0
        %v1642 = vmax.f32 %v1521, 0.0
        %v1643 = vmax.f32 %v1522, 0.0
        %v1644 = vmax.f32 %v1523, 0.0
        %v1645 = vmax.f32 %v1524, 0.0
        %v1646 = vmax.f32 %v1525, 0.0
        %v1647 = vmax.f32 %v1526, 0.0
        %v1648 = vmax.f32 %v1527, 0.0
        %v1649 = vmax.f32 %v1528, 0.0
        %v1650 = vmax.f32 %v1529, 0.0
        %v1651 = vmax.f32 %v1530, 0.0
        %v1652 = vmax.f32 %v1531, 0.0
        %v1653 = vmax.f32 %v1532, 0.0
        %v1654 = vmax.f32 %v1533, 0.0
        %v1655 = vmax.f32 %v1534, 0.0
        %v1656 = vmax.f32 %v1535, 0.0
        %v1657 = vmax.f32 %v1536, 0.0
        %v1658 = vmax.f32 %v1537, 0.0
        %v1659 = vmax.f32 %v1538, 0.0
        %v1660 = vmax.f32 %v1539, 0.0
        %v1661 = vmax.f32 %v1540, 0.0
        %v1662 = vmax.f32 %v1541, 0.0
        %v1663 = vmax.f32 %v1542, 0.0
        %v1664 = vmax.f32 %v1543, 0.0
        %v1665 = vmax.f32 %v1544, 0.0
        %v1666 = vmax.f32 %v1545, 0.0
        %v1667 = vmax.f32 %v1546, 0.0
        %v1668 = vmax.f32 %v1547, 0.0
        %v1669 = vmax.f32 %v1548, 0.0
        %v1670 = vmax.f32 %v1549, 0.0
        %v1671 = vmax.f32 %v1550, 0.0
        %v1672 = vmax.f32 %v1551, 0.0
        %v1673 = vmax.f32 %v1552, 0.0
        %v1674 = vmax.f32 %v1553, 0.0
        %v1675 = vmax.f32 %v1554, 0.0
        %v1676 = vpack.c.bf16 %v1555, %v1555
        %v1677 = vpack.c.bf16 %v1556, %v1556
        %v1678 = vpack.c.bf16 %v1557, %v1557
        %v1679 = vpack.c.bf16 %v1558, %v1558
        %v1680 = vpack.c.bf16 %v1559, %v1559
        %v1681 = vpack.c.bf16 %v1560, %v1560
        %v1682 = vpack.c.bf16 %v1561, %v1561
        %v1683 = vpack.c.bf16 %v1562, %v1562
        %v1684 = vpack.c.bf16 %v1563, %v1563
        %v1685 = vpack.c.bf16 %v1564, %v1564
        %v1686 = vpack.c.bf16 %v1565, %v1565
        %v1687 = vpack.c.bf16 %v1566, %v1566
        %v1688 = vpack.c.bf16 %v1567, %v1567
        %v1689 = vpack.c.bf16 %v1568, %v1568
        %v1690 = vpack.c.bf16 %v1569, %v1569
        %v1691 = vpack.c.bf16 %v1570, %v1570
        %v1692 = vpack.c.bf16 %v1571, %v1571
        %v1693 = vpack.c.bf16 %v1572, %v1572
        %v1694 = vpack.c.bf16 %v1573, %v1573
        %v1695 = vpack.c.bf16 %v1574, %v1574
        %v1696 = vpack.c.bf16 %v1575, %v1575
        %v1697 = vpack.c.bf16 %v1576, %v1576
        %v1698 = vpack.c.bf16 %v1577, %v1577
        %v1699 = vpack.c.bf16 %v1578, %v1578
        %v1700 = vpack.c.bf16 %v1579, %v1579
        %v1701 = vpack.c.bf16 %v1580, %v1580
        %v1702 = vpack.c.bf16 %v1581, %v1581
        %v1703 = vpack.c.bf16 %v1582, %v1582
        %v1704 = vpack.c.bf16 %v1583, %v1583
        %v1705 = vpack.c.bf16 %v1584, %v1584
        %v1706 = vpack.c.bf16 %v1585, %v1585
        %v1707 = vpack.c.bf16 %v1586, %v1586
        %v1708 = vpack.c.bf16 %v1587, %v1587
        %v1709 = vpack.c.bf16 %v1588, %v1588
        %v1710 = vpack.c.bf16 %v1589, %v1589
        %v1711 = vpack.c.bf16 %v1590, %v1590
        %v1712 = vpack.c.bf16 %v1591, %v1591
        %v1713 = vpack.c.bf16 %v1592, %v1592
        %v1714 = vpack.c.bf16 %v1593, %v1593
        %v1715 = vpack.c.bf16 %v1594, %v1594
        %v1716 = vpack.c.bf16 %v1595, %v1595
        %v1717 = vpack.c.bf16 %v1596, %v1596
        %v1718 = vpack.c.bf16 %v1597, %v1597
        %v1719 = vpack.c.bf16 %v1598, %v1598
        %v1720 = vpack.c.bf16 %v1599, %v1599
        %v1721 = vpack.c.bf16 %v1600, %v1600
        %v1722 = vpack.c.bf16 %v1601, %v1601
        %v1723 = vpack.c.bf16 %v1602, %v1602
        %v1724 = vpack.c.bf16 %v1603, %v1603
        %v1725 = vpack.c.bf16 %v1604, %v1604
        %v1726 = vpack.c.bf16 %v1605, %v1605
        %v1727 = vpack.c.bf16 %v1606, %v1606
        %v1728 = vpack.c.bf16 %v1607, %v1607
        %v1729 = vpack.c.bf16 %v1608, %v1608
        %v1730 = vpack.c.bf16 %v1609, %v1609
        %v1731 = vpack.c.bf16 %v1610, %v1610
        %v1732 = vpack.c.bf16 %v1611, %v1611
        %v1733 = vpack.c.bf16 %v1612, %v1612
        %v1734 = vpack.c.bf16 %v1613, %v1613
        %v1735 = vpack.c.bf16 %v1614, %v1614
        %v1736 = vpack.c.bf16 %v1615, %v1615
        %v1737 = vpack.c.bf16 %v1616, %v1616
        %v1738 = vpack.c.bf16 %v1617, %v1617
        %v1739 = vpack.c.bf16 %v1618, %v1618
        %v1740 = vpack.c.bf16 %v1619, %v1619
        %v1741 = vpack.c.bf16 %v1620, %v1620
        %v1742 = vpack.c.bf16 %v1621, %v1621
        %v1743 = vpack.c.bf16 %v1622, %v1622
        %v1744 = vpack.c.bf16 %v1623, %v1623
        %v1745 = vpack.c.bf16 %v1624, %v1624
        %v1746 = vpack.c.bf16 %v1625, %v1625
        %v1747 = vpack.c.bf16 %v1626, %v1626
        %v1748 = vpack.c.bf16 %v1627, %v1627
        %v1749 = vpack.c.bf16 %v1628, %v1628
        %v1750 = vpack.c.bf16 %v1629, %v1629
        %v1751 = vpack.c.bf16 %v1630, %v1630
        %v1752 = vpack.c.bf16 %v1631, %v1631
        %v1753 = vpack.c.bf16 %v1632, %v1632
        %v1754 = vpack.c.bf16 %v1633, %v1633
        %v1755 = vpack.c.bf16 %v1634, %v1634
        %v1756 = vpack.c.bf16 %v1635, %v1635
        %v1757 = vpack.c.bf16 %v1636, %v1636
        %v1758 = vpack.c.bf16 %v1637, %v1637
        %v1759 = vpack.c.bf16 %v1638, %v1638
        %v1760 = vpack.c.bf16 %v1639, %v1639
        %v1761 = vpack.c.bf16 %v1640, %v1640
        %v1762 = vpack.c.bf16 %v1641, %v1641
        %v1763 = vpack.c.bf16 %v1642, %v1642
        %v1764 = vpack.c.bf16 %v1643, %v1643
        %v1765 = vpack.c.bf16 %v1644, %v1644
        %v1766 = vpack.c.bf16 %v1645, %v1645
        %v1767 = vpack.c.bf16 %v1646, %v1646
        %v1768 = vpack.c.bf16 %v1647, %v1647
        %v1769 = vpack.c.bf16 %v1648, %v1648
        %v1770 = vpack.c.bf16 %v1649, %v1649
        %v1771 = vpack.c.bf16 %v1650, %v1650
        %v1772 = vpack.c.bf16 %v1651, %v1651
        %v1773 = vpack.c.bf16 %v1652, %v1652
        %v1774 = vpack.c.bf16 %v1653, %v1653
        %v1775 = vpack.c.bf16 %v1654, %v1654
        %v1776 = vpack.c.bf16 %v1655, %v1655
        %v1777 = vpack.c.bf16 %v1656, %v1656
        %v1778 = vpack.c.bf16 %v1657, %v1657
        %v1779 = vpack.c.bf16 %v1658, %v1658
        %v1780 = vpack.c.bf16 %v1659, %v1659
        %v1781 = vpack.c.bf16 %v1660, %v1660
        %v1782 = vpack.c.bf16 %v1661, %v1661
        %v1783 = vpack.c.bf16 %v1662, %v1662
        %v1784 = vpack.c.bf16 %v1663, %v1663
        %v1785 = vpack.c.bf16 %v1664, %v1664
        %v1786 = vpack.c.bf16 %v1665, %v1665
        %v1787 = vpack.c.bf16 %v1666, %v1666
        %v1788 = vpack.c.bf16 %v1667, %v1667
        %v1789 = vpack.c.bf16 %v1668, %v1668
        %v1790 = vpack.c.bf16 %v1669, %v1669
        %v1791 = vpack.c.bf16 %v1670, %v1670
        %v1792 = vpack.c.bf16 %v1671, %v1671
        %v1793 = vpack.c.bf16 %v1672, %v1672
        %v1794 = vpack.c.bf16 %v1673, %v1673
        %v1795 = vpack.c.bf16 %v1674, %v1674
        %v1796 = vpack.c.bf16 %v1675, %v1675
        %vm1797 = vcmask 60416
        %1798 = vst.msk [vmem:[%s227] sm:$0xf] %vm1797, %v1676
        %1799 = vst.msk [vmem:[%s227 + $0x4] sm:$0xf] %vm1797, %v1677
        %1800 = vst.msk [vmem:[%s227 + $0x8] sm:$0xf] %vm1797, %v1678
        %1801 = vst.msk [vmem:[%s227 + $0xc] sm:$0xf] %vm1797, %v1679
        %1802 = vst.msk [vmem:[%s227 + $0x10] sm:$0xf] %vm1797, %v1680
        %1803 = vst.msk [vmem:[%s227 + $0x14] sm:$0xf] %vm1797, %v1681
        %1804 = vst.msk [vmem:[%s227 + $0x18] sm:$0xf] %vm1797, %v1682
        %1805 = vst.msk [vmem:[%s227 + $0x1c] sm:$0xf] %vm1797, %v1683
        %1806 = vst.msk [vmem:[%s227 + $0x20] sm:$0xf] %vm1797, %v1684
        %1807 = vst.msk [vmem:[%s227 + $0x24] sm:$0xf] %vm1797, %v1685
        %1808 = vst.msk [vmem:[%s227 + $0x28] sm:$0xf] %vm1797, %v1686
        %1809 = vst.msk [vmem:[%s227 + $0x2c] sm:$0xf] %vm1797, %v1687
        %1810 = vst.msk [vmem:[%s227 + $0x30] sm:$0xf] %vm1797, %v1688
        %1811 = vst.msk [vmem:[%s227 + $0x34] sm:$0xf] %vm1797, %v1689
        %1812 = vst.msk [vmem:[%s227 + $0x38] sm:$0xf] %vm1797, %v1690
        %1813 = vst.msk [vmem:[%s227 + $0x3c] sm:$0xf] %vm1797, %v1691
        %1814 = vst.msk [vmem:[%s227 + $0x40] sm:$0xf] %vm1797, %v1692
        %1815 = vst.msk [vmem:[%s227 + $0x44] sm:$0xf] %vm1797, %v1693
        %1816 = vst.msk [vmem:[%s227 + $0x48] sm:$0xf] %vm1797, %v1694
        %1817 = vst.msk [vmem:[%s227 + $0x4c] sm:$0xf] %vm1797, %v1695
        %1818 = vst.msk [vmem:[%s227 + $0x50] sm:$0xf] %vm1797, %v1696
        %1819 = vst.msk [vmem:[%s227 + $0x54] sm:$0xf] %vm1797, %v1697
        %1820 = vst.msk [vmem:[%s227 + $0x58] sm:$0xf] %vm1797, %v1698
        %1821 = vst.msk [vmem:[%s227 + $0x5c] sm:$0xf] %vm1797, %v1699
        %1822 = vst.msk [vmem:[%s227 + $0x60] sm:$0xf] %vm1797, %v1700
        %1823 = vst.msk [vmem:[%s227 + $0x64] sm:$0xf] %vm1797, %v1701
        %1824 = vst.msk [vmem:[%s227 + $0x68] sm:$0xf] %vm1797, %v1702
        %1825 = vst.msk [vmem:[%s227 + $0x6c] sm:$0xf] %vm1797, %v1703
        %1826 = vst.msk [vmem:[%s227 + $0x70] sm:$0xf] %vm1797, %v1704
        %1827 = vst.msk [vmem:[%s227 + $0x74] sm:$0xf] %vm1797, %v1705
        %1828 = vst.msk [vmem:[%s227 + $0x78] sm:$0xf] %vm1797, %v1706
        %1829 = vst.msk [vmem:[%s227 + $0x7c] sm:$0xf] %vm1797, %v1707
        %1830 = vst.msk [vmem:[%s227 + $0x80] sm:$0xf] %vm1797, %v1708
        %1831 = vst.msk [vmem:[%s227 + $0x84] sm:$0xf] %vm1797, %v1709
        %1832 = vst.msk [vmem:[%s227 + $0x88] sm:$0xf] %vm1797, %v1710
        %1833 = vst.msk [vmem:[%s227 + $0x8c] sm:$0xf] %vm1797, %v1711
        %1834 = vst.msk [vmem:[%s227 + $0x90] sm:$0xf] %vm1797, %v1712
        %1835 = vst.msk [vmem:[%s227 + $0x94] sm:$0xf] %vm1797, %v1713
        %1836 = vst.msk [vmem:[%s227 + $0x98] sm:$0xf] %vm1797, %v1714
        %1837 = vst.msk [vmem:[%s227 + $0x9c] sm:$0xf] %vm1797, %v1715
        %1838 = vst.msk [vmem:[%s227 + $0xa0] sm:$0xf] %vm1797, %v1716
        %1839 = vst.msk [vmem:[%s227 + $0xa4] sm:$0xf] %vm1797, %v1717
        %1840 = vst.msk [vmem:[%s227 + $0xa8] sm:$0xf] %vm1797, %v1718
        %1841 = vst.msk [vmem:[%s227 + $0xac] sm:$0xf] %vm1797, %v1719
        %1842 = vst.msk [vmem:[%s227 + $0xb0] sm:$0xf] %vm1797, %v1720
        %1843 = vst.msk [vmem:[%s227 + $0xb4] sm:$0xf] %vm1797, %v1721
        %1844 = vst.msk [vmem:[%s227 + $0xb8] sm:$0xf] %vm1797, %v1722
        %1845 = vst.msk [vmem:[%s227 + $0xbc] sm:$0xf] %vm1797, %v1723
        %1846 = vst.msk [vmem:[%s227 + $0xc0] sm:$0xf] %vm1797, %v1724
        %1847 = vst.msk [vmem:[%s227 + $0xc4] sm:$0xf] %vm1797, %v1725
        %1848 = vst.msk [vmem:[%s227 + $0xc8] sm:$0xf] %vm1797, %v1726
        %1849 = vst.msk [vmem:[%s227 + $0xcc] sm:$0xf] %vm1797, %v1727
        %1850 = vst.msk [vmem:[%s227 + $0xd0] sm:$0xf] %vm1797, %v1728
        %1851 = vst.msk [vmem:[%s227 + $0xd4] sm:$0xf] %vm1797, %v1729
        %1852 = vst.msk [vmem:[%s227 + $0xd8] sm:$0xf] %vm1797, %v1730
        %1853 = vst.msk [vmem:[%s227 + $0xdc] sm:$0xf] %vm1797, %v1731
        %1854 = vst.msk [vmem:[%s227 + $0xe0] sm:$0xf] %vm1797, %v1732
        %1855 = vst.msk [vmem:[%s227 + $0xe4] sm:$0xf] %vm1797, %v1733
        %1856 = vst.msk [vmem:[%s227 + $0xe8] sm:$0xf] %vm1797, %v1734
        %1857 = vst.msk [vmem:[%s227 + $0xec] sm:$0xf] %vm1797, %v1735
        %1858 = vst.msk [vmem:[%s227 + $0xf0] sm:$0xf] %vm1797, %v1736
        %1859 = vst.msk [vmem:[%s227 + $0xf4] sm:$0xf] %vm1797, %v1737
        %1860 = vst.msk [vmem:[%s227 + $0xf8] sm:$0xf] %vm1797, %v1738
        %1861 = vst.msk [vmem:[%s227 + $0xfc] sm:$0xf] %vm1797, %v1739
        %1862 = vst.msk [vmem:[%s227 + $0x100] sm:$0xf] %vm1797, %v1740
        %1863 = vst.msk [vmem:[%s227 + $0x104] sm:$0xf] %vm1797, %v1741
        %1864 = vst.msk [vmem:[%s227 + $0x108] sm:$0xf] %vm1797, %v1742
        %1865 = vst.msk [vmem:[%s227 + $0x10c] sm:$0xf] %vm1797, %v1743
        %1866 = vst.msk [vmem:[%s227 + $0x110] sm:$0xf] %vm1797, %v1744
        %1867 = vst.msk [vmem:[%s227 + $0x114] sm:$0xf] %vm1797, %v1745
        %1868 = vst.msk [vmem:[%s227 + $0x118] sm:$0xf] %vm1797, %v1746
        %1869 = vst.msk [vmem:[%s227 + $0x11c] sm:$0xf] %vm1797, %v1747
        %1870 = vst.msk [vmem:[%s227 + $0x120] sm:$0xf] %vm1797, %v1748
        %1871 = vst.msk [vmem:[%s227 + $0x124] sm:$0xf] %vm1797, %v1749
        %1872 = vst.msk [vmem:[%s227 + $0x128] sm:$0xf] %vm1797, %v1750
        %1873 = vst.msk [vmem:[%s227 + $0x12c] sm:$0xf] %vm1797, %v1751
        %1874 = vst.msk [vmem:[%s227 + $0x130] sm:$0xf] %vm1797, %v1752
        %1875 = vst.msk [vmem:[%s227 + $0x134] sm:$0xf] %vm1797, %v1753
        %1876 = vst.msk [vmem:[%s227 + $0x138] sm:$0xf] %vm1797, %v1754
        %1877 = vst.msk [vmem:[%s227 + $0x13c] sm:$0xf] %vm1797, %v1755
        %1878 = vst.msk [vmem:[%s227 + $0x140] sm:$0xf] %vm1797, %v1756
        %1879 = vst.msk [vmem:[%s227 + $0x144] sm:$0xf] %vm1797, %v1757
        %1880 = vst.msk [vmem:[%s227 + $0x148] sm:$0xf] %vm1797, %v1758
        %1881 = vst.msk [vmem:[%s227 + $0x14c] sm:$0xf] %vm1797, %v1759
        %1882 = vst.msk [vmem:[%s227 + $0x150] sm:$0xf] %vm1797, %v1760
        %1883 = vst.msk [vmem:[%s227 + $0x154] sm:$0xf] %vm1797, %v1761
        %1884 = vst.msk [vmem:[%s227 + $0x158] sm:$0xf] %vm1797, %v1762
        %1885 = vst.msk [vmem:[%s227 + $0x15c] sm:$0xf] %vm1797, %v1763
        %1886 = vst.msk [vmem:[%s227 + $0x160] sm:$0xf] %vm1797, %v1764
        %1887 = vst.msk [vmem:[%s227 + $0x164] sm:$0xf] %vm1797, %v1765
        %1888 = vst.msk [vmem:[%s227 + $0x168] sm:$0xf] %vm1797, %v1766
        %1889 = vst.msk [vmem:[%s227 + $0x16c] sm:$0xf] %vm1797, %v1767
        %1890 = vst.msk [vmem:[%s227 + $0x170] sm:$0xf] %vm1797, %v1768
        %1891 = vst.msk [vmem:[%s227 + $0x174] sm:$0xf] %vm1797, %v1769
        %1892 = vst.msk [vmem:[%s227 + $0x178] sm:$0xf] %vm1797, %v1770
        %1893 = vst.msk [vmem:[%s227 + $0x17c] sm:$0xf] %vm1797, %v1771
        %1894 = vst.msk [vmem:[%s227 + $0x180] sm:$0xf] %vm1797, %v1772
        %1895 = vst.msk [vmem:[%s227 + $0x184] sm:$0xf] %vm1797, %v1773
        %1896 = vst.msk [vmem:[%s227 + $0x188] sm:$0xf] %vm1797, %v1774
        %1897 = vst.msk [vmem:[%s227 + $0x18c] sm:$0xf] %vm1797, %v1775
        %1898 = vst.msk [vmem:[%s227 + $0x190] sm:$0xf] %vm1797, %v1776
        %1899 = vst.msk [vmem:[%s227 + $0x194] sm:$0xf] %vm1797, %v1777
        %1900 = vst.msk [vmem:[%s227 + $0x198] sm:$0xf] %vm1797, %v1778
        %1901 = vst.msk [vmem:[%s227 + $0x19c] sm:$0xf] %vm1797, %v1779
        %1902 = vst.msk [vmem:[%s227 + $0x1a0] sm:$0xf] %vm1797, %v1780
        %1903 = vst.msk [vmem:[%s227 + $0x1a4] sm:$0xf] %vm1797, %v1781
        %1904 = vst.msk [vmem:[%s227 + $0x1a8] sm:$0xf] %vm1797, %v1782
        %1905 = vst.msk [vmem:[%s227 + $0x1ac] sm:$0xf] %vm1797, %v1783
        %1906 = vst.msk [vmem:[%s227 + $0x1b0] sm:$0xf] %vm1797, %v1784
        %1907 = vst.msk [vmem:[%s227 + $0x1b4] sm:$0xf] %vm1797, %v1785
        %1908 = vst.msk [vmem:[%s227 + $0x1b8] sm:$0xf] %vm1797, %v1786
        %1909 = vst.msk [vmem:[%s227 + $0x1bc] sm:$0xf] %vm1797, %v1787
        %1910 = vst.msk [vmem:[%s227 + $0x1c0] sm:$0xf] %vm1797, %v1788
        %1911 = vst.msk [vmem:[%s227 + $0x1c4] sm:$0xf] %vm1797, %v1789
        %1912 = vst.msk [vmem:[%s227 + $0x1c8] sm:$0xf] %vm1797, %v1790
        %1913 = vst.msk [vmem:[%s227 + $0x1cc] sm:$0xf] %vm1797, %v1791
        %1914 = vst.msk [vmem:[%s227 + $0x1d0] sm:$0xf] %vm1797, %v1792
        %1915 = vst.msk [vmem:[%s227 + $0x1d4] sm:$0xf] %vm1797, %v1793
        %1916 = vst.msk [vmem:[%s227 + $0x1d8] sm:$0xf] %vm1797, %v1794
        %1917 = vst.msk [vmem:[%s227 + $0x1dc] sm:$0xf] %vm1797, %v1795
        %1918 = vst.msk [vmem:[%s227 + $0x1e0] sm:$0xf] %vm1797, %v1796
        %s1919 = sand.u32 %s117, 1
        %s1920 = sand.u32 %s117, 1
        %s1921 = smul.addr %s1920, 484
        %s1922 = scalar_lea.vmem [#allocation2], %s1921
        // Predicated region
        $region37: #{network_forward.15} parent=35 // pred_check
          %p1923 = pneg %p127
        $region38: #{network_forward.15} parent=35 // pred_check_branch
          %1925 = sbr.rel (%p1923) target = $region40
        $region39: #{network_forward.15} parent=35 // pred_region
          %s1926 = smul.u32 121, %s15
          %s1927 = ssub.s32 241, %s1926
          %p1928 = scmp.lt.s32.totalorder %s1927, 121
          %s1929 = scalar_select %p1928, %s1927, 121
          %s1930 = smul.u32 4, %s1929
          %p1931 = scmp.ne.s32.totalorder 0, %s1930
          %s1932 = smul.addr %s1926, 4
          %s1933 = scalar_lea.vmem %s4, %s1932
          // Predicated region
          $region41: #{network_forward.15} parent=39 // pred_check
            %p1934 = pneg %p1931
          $region42: #{network_forward.15} parent=39 // pred_check_branch
            %1936 = sbr.rel (%p1934) target = $region44
          $region43: #{network_forward.15} parent=39 // pred_region
            // Predicated region
            $region45: #{network_forward.15} parent=43 // pred_check
              _
            $region46: #{network_forward.15} parent=43 // pred_check_branch
              %1938 = sbr.rel target = $region48
            $region47: #{network_forward.15} parent=43 // pred_region
              // Predicated region
              $region67: #{network_forward.15} parent=47 // pred_check
                _
              $region68: #{network_forward.15} parent=47 // pred_check_branch
                %2050 = sbr.rel (0) target = $region70
              $region69: #{network_forward.15} parent=47 // pred_region
                %s2052 = ssub.s32 16, 1
                %s2053 = sshrl.u32 %s1929, 5
                // While loop
                $region71: #{network_forward.15} parent=69 // loop_pre_header
                  _
                $region72: #{network_forward.15} parent=69 // loop_header
                  %s2055 = sphi 0, %s2057
                  %p2056 = scmp.ge.s32.totalorder %s2055, %s2053
                  %s2060 = sphi 0, %s2129
                  %s2061 = sphi %s1922, %s2132
                  %s2062 = sphi %s1933, %s2133
                $region73: #{network_forward.15} parent=69 // loop_header_branch
                  %2059 = sbr.rel (%p2056) target = $region77
                $region74: #{network_forward.15} parent=69 // loop_body
                  %v2063 = vld [vmem:[%s2061] sm:%s2052]
                  %2064 = vst [vmem:[%s2062] sm:%s2052] %v2063
                  %v2065 = vld [vmem:[%s2061 + $0x4] sm:%s2052]
                  %2066 = vst [vmem:[%s2062 + $0x4] sm:%s2052] %v2065
                  %v2067 = vld [vmem:[%s2061 + $0x8] sm:%s2052]
                  %2068 = vst [vmem:[%s2062 + $0x8] sm:%s2052] %v2067
                  %v2069 = vld [vmem:[%s2061 + $0xc] sm:%s2052]
                  %2070 = vst [vmem:[%s2062 + $0xc] sm:%s2052] %v2069
                  %v2071 = vld [vmem:[%s2061 + $0x10] sm:%s2052]
                  %2072 = vst [vmem:[%s2062 + $0x10] sm:%s2052] %v2071
                  %v2073 = vld [vmem:[%s2061 + $0x14] sm:%s2052]
                  %2074 = vst [vmem:[%s2062 + $0x14] sm:%s2052] %v2073
                  %v2075 = vld [vmem:[%s2061 + $0x18] sm:%s2052]
                  %2076 = vst [vmem:[%s2062 + $0x18] sm:%s2052] %v2075
                  %v2077 = vld [vmem:[%s2061 + $0x1c] sm:%s2052]
                  %2078 = vst [vmem:[%s2062 + $0x1c] sm:%s2052] %v2077
                  %v2079 = vld [vmem:[%s2061 + $0x20] sm:%s2052]
                  %2080 = vst [vmem:[%s2062 + $0x20] sm:%s2052] %v2079
                  %v2081 = vld [vmem:[%s2061 + $0x24] sm:%s2052]
                  %2082 = vst [vmem:[%s2062 + $0x24] sm:%s2052] %v2081
                  %v2083 = vld [vmem:[%s2061 + $0x28] sm:%s2052]
                  %2084 = vst [vmem:[%s2062 + $0x28] sm:%s2052] %v2083
                  %v2085 = vld [vmem:[%s2061 + $0x2c] sm:%s2052]
                  %2086 = vst [vmem:[%s2062 + $0x2c] sm:%s2052] %v2085
                  %v2087 = vld [vmem:[%s2061 + $0x30] sm:%s2052]
                  %2088 = vst [vmem:[%s2062 + $0x30] sm:%s2052] %v2087
                  %v2089 = vld [vmem:[%s2061 + $0x34] sm:%s2052]
                  %2090 = vst [vmem:[%s2062 + $0x34] sm:%s2052] %v2089
                  %v2091 = vld [vmem:[%s2061 + $0x38] sm:%s2052]
                  %2092 = vst [vmem:[%s2062 + $0x38] sm:%s2052] %v2091
                  %v2093 = vld [vmem:[%s2061 + $0x3c] sm:%s2052]
                  %2094 = vst [vmem:[%s2062 + $0x3c] sm:%s2052] %v2093
                  %v2095 = vld [vmem:[%s2061 + $0x40] sm:%s2052]
                  %2096 = vst [vmem:[%s2062 + $0x40] sm:%s2052] %v2095
                  %v2097 = vld [vmem:[%s2061 + $0x44] sm:%s2052]
                  %2098 = vst [vmem:[%s2062 + $0x44] sm:%s2052] %v2097
                  %v2099 = vld [vmem:[%s2061 + $0x48] sm:%s2052]
                  %2100 = vst [vmem:[%s2062 + $0x48] sm:%s2052] %v2099
                  %v2101 = vld [vmem:[%s2061 + $0x4c] sm:%s2052]
                  %2102 = vst [vmem:[%s2062 + $0x4c] sm:%s2052] %v2101
                  %v2103 = vld [vmem:[%s2061 + $0x50] sm:%s2052]
                  %2104 = vst [vmem:[%s2062 + $0x50] sm:%s2052] %v2103
                  %v2105 = vld [vmem:[%s2061 + $0x54] sm:%s2052]
                  %2106 = vst [vmem:[%s2062 + $0x54] sm:%s2052] %v2105
                  %v2107 = vld [vmem:[%s2061 + $0x58] sm:%s2052]
                  %2108 = vst [vmem:[%s2062 + $0x58] sm:%s2052] %v2107
                  %v2109 = vld [vmem:[%s2061 + $0x5c] sm:%s2052]
                  %2110 = vst [vmem:[%s2062 + $0x5c] sm:%s2052] %v2109
                  %v2111 = vld [vmem:[%s2061 + $0x60] sm:%s2052]
                  %2112 = vst [vmem:[%s2062 + $0x60] sm:%s2052] %v2111
                  %v2113 = vld [vmem:[%s2061 + $0x64] sm:%s2052]
                  %2114 = vst [vmem:[%s2062 + $0x64] sm:%s2052] %v2113
                  %v2115 = vld [vmem:[%s2061 + $0x68] sm:%s2052]
                  %2116 = vst [vmem:[%s2062 + $0x68] sm:%s2052] %v2115
                  %v2117 = vld [vmem:[%s2061 + $0x6c] sm:%s2052]
                  %2118 = vst [vmem:[%s2062 + $0x6c] sm:%s2052] %v2117
                  %v2119 = vld [vmem:[%s2061 + $0x70] sm:%s2052]
                  %2120 = vst [vmem:[%s2062 + $0x70] sm:%s2052] %v2119
                  %v2121 = vld [vmem:[%s2061 + $0x74] sm:%s2052]
                  %2122 = vst [vmem:[%s2062 + $0x74] sm:%s2052] %v2121
                  %v2123 = vld [vmem:[%s2061 + $0x78] sm:%s2052]
                  %2124 = vst [vmem:[%s2062 + $0x78] sm:%s2052] %v2123
                  %v2125 = vld [vmem:[%s2061 + $0x7c] sm:%s2052]
                  %2126 = vst [vmem:[%s2062 + $0x7c] sm:%s2052] %v2125
                  %s2127 = sadd.s32 1, %s2060
                  %p2128 = scmp.ge.s32.totalorder %s2127, %s2053
                  %s2129 = scalar_select %p2128, 0, %s2127
                  %s2130 = smul.u32 %s2129, 128
                  %s2131 = smul.u32 %s2129, 128
                  %s2132 = scalar_lea.vmem %s1922, %s2130 [#allocation2]
                  %s2133 = scalar_lea.vmem %s1933, %s2131
                $region75: #{network_forward.15} parent=69 // loop_footer
                  %s2057 = sadd.s32 %s2055, 1
                $region76: #{network_forward.15} parent=69 // loop_footer_branch
                  %2054 = sbr.rel target = $region72
                $region77: #{network_forward.15} parent=69 // loop_exit
                  _
                %s2134 = sshrl.u32 %s1929, 5
                %s2135 = sand.u32 %s1929, 31
                %s2136 = smul.u32 %s2134, 32
                %s2137 = smul.u32 4, %s2136
                %s2138 = scalar_lea.vmem %s1922, %s2137 [#allocation2]
                %s2139 = smul.u32 4, %s2136
                %s2140 = scalar_lea.vmem %s1933, %s2139
                // While loop
                $region78: #{network_forward.15} parent=69 // loop_pre_header
                  _
                $region79: #{network_forward.15} parent=69 // loop_header
                  %s2142 = sphi 0, %s2144
                  %p2143 = scmp.ge.s32.totalorder %s2142, %s2135
                  %s2147 = sphi 0, %s2154
                  %s2148 = sphi %s2138, %s2157
                  %s2149 = sphi %s2140, %s2158
                $region80: #{network_forward.15} parent=69 // loop_header_branch
                  %2146 = sbr.rel (%p2143) target = $region84
                $region81: #{network_forward.15} parent=69 // loop_body
                  %v2150 = vld [vmem:[%s2148] sm:%s2052]
                  %2151 = vst [vmem:[%s2149] sm:%s2052] %v2150
                  %s2152 = sadd.s32 1, %s2147
                  %p2153 = scmp.ge.s32.totalorder %s2152, %s2135
                  %s2154 = scalar_select %p2153, 0, %s2152
                  %s2155 = smul.u32 %s2154, 4
                  %s2156 = smul.u32 %s2154, 4
                  %s2157 = scalar_lea.vmem %s2138, %s2155 [#allocation2]
                  %s2158 = scalar_lea.vmem %s2140, %s2156
                $region82: #{network_forward.15} parent=69 // loop_footer
                  %s2144 = sadd.s32 %s2142, 1
                $region83: #{network_forward.15} parent=69 // loop_footer_branch
                  %2141 = sbr.rel target = $region79
                $region84: #{network_forward.15} parent=69 // loop_exit
                  _
              $region70: #{network_forward.15} parent=47 // pred_fallthru
                _
            $region48: #{network_forward.15} parent=43 // pred_fallthru
              _
            // Predicated region
            $region49: #{network_forward.15} parent=43 // pred_check
              _
            $region50: #{network_forward.15} parent=43 // pred_check_branch
              %1940 = sbr.rel (0) target = $region52
            $region51: #{network_forward.15} parent=43 // pred_region
              %s1942 = ssub.s32 16, 1
              %s1943 = sshrl.u32 %s1929, 5
              // While loop
              $region53: #{network_forward.15} parent=51 // loop_pre_header
                _
              $region54: #{network_forward.15} parent=51 // loop_header
                %s1945 = sphi 0, %s1947
                %p1946 = scmp.ge.s32.totalorder %s1945, %s1943
                %s1950 = sphi 0, %s2019
                %s1951 = sphi %s1922, %s2022
                %s1952 = sphi %s1933, %s2023
              $region55: #{network_forward.15} parent=51 // loop_header_branch
                %1949 = sbr.rel (%p1946) target = $region59
              $region56: #{network_forward.15} parent=51 // loop_body
                %v1953 = vld [vmem:[%s1951] sm:%s1942]
                %1954 = vst [vmem:[%s1952] sm:%s1942] %v1953
                %v1955 = vld [vmem:[%s1951 + $0x4] sm:%s1942]
                %1956 = vst [vmem:[%s1952 + $0x4] sm:%s1942] %v1955
                %v1957 = vld [vmem:[%s1951 + $0x8] sm:%s1942]
                %1958 = vst [vmem:[%s1952 + $0x8] sm:%s1942] %v1957
                %v1959 = vld [vmem:[%s1951 + $0xc] sm:%s1942]
                %1960 = vst [vmem:[%s1952 + $0xc] sm:%s1942] %v1959
                %v1961 = vld [vmem:[%s1951 + $0x10] sm:%s1942]
                %1962 = vst [vmem:[%s1952 + $0x10] sm:%s1942] %v1961
                %v1963 = vld [vmem:[%s1951 + $0x14] sm:%s1942]
                %1964 = vst [vmem:[%s1952 + $0x14] sm:%s1942] %v1963
                %v1965 = vld [vmem:[%s1951 + $0x18] sm:%s1942]
                %1966 = vst [vmem:[%s1952 + $0x18] sm:%s1942] %v1965
                %v1967 = vld [vmem:[%s1951 + $0x1c] sm:%s1942]
                %1968 = vst [vmem:[%s1952 + $0x1c] sm:%s1942] %v1967
                %v1969 = vld [vmem:[%s1951 + $0x20] sm:%s1942]
                %1970 = vst [vmem:[%s1952 + $0x20] sm:%s1942] %v1969
                %v1971 = vld [vmem:[%s1951 + $0x24] sm:%s1942]
                %1972 = vst [vmem:[%s1952 + $0x24] sm:%s1942] %v1971
                %v1973 = vld [vmem:[%s1951 + $0x28] sm:%s1942]
                %1974 = vst [vmem:[%s1952 + $0x28] sm:%s1942] %v1973
                %v1975 = vld [vmem:[%s1951 + $0x2c] sm:%s1942]
                %1976 = vst [vmem:[%s1952 + $0x2c] sm:%s1942] %v1975
                %v1977 = vld [vmem:[%s1951 + $0x30] sm:%s1942]
                %1978 = vst [vmem:[%s1952 + $0x30] sm:%s1942] %v1977
                %v1979 = vld [vmem:[%s1951 + $0x34] sm:%s1942]
                %1980 = vst [vmem:[%s1952 + $0x34] sm:%s1942] %v1979
                %v1981 = vld [vmem:[%s1951 + $0x38] sm:%s1942]
                %1982 = vst [vmem:[%s1952 + $0x38] sm:%s1942] %v1981
                %v1983 = vld [vmem:[%s1951 + $0x3c] sm:%s1942]
                %1984 = vst [vmem:[%s1952 + $0x3c] sm:%s1942] %v1983
                %v1985 = vld [vmem:[%s1951 + $0x40] sm:%s1942]
                %1986 = vst [vmem:[%s1952 + $0x40] sm:%s1942] %v1985
                %v1987 = vld [vmem:[%s1951 + $0x44] sm:%s1942]
                %1988 = vst [vmem:[%s1952 + $0x44] sm:%s1942] %v1987
                %v1989 = vld [vmem:[%s1951 + $0x48] sm:%s1942]
                %1990 = vst [vmem:[%s1952 + $0x48] sm:%s1942] %v1989
                %v1991 = vld [vmem:[%s1951 + $0x4c] sm:%s1942]
                %1992 = vst [vmem:[%s1952 + $0x4c] sm:%s1942] %v1991
                %v1993 = vld [vmem:[%s1951 + $0x50] sm:%s1942]
                %1994 = vst [vmem:[%s1952 + $0x50] sm:%s1942] %v1993
                %v1995 = vld [vmem:[%s1951 + $0x54] sm:%s1942]
                %1996 = vst [vmem:[%s1952 + $0x54] sm:%s1942] %v1995
                %v1997 = vld [vmem:[%s1951 + $0x58] sm:%s1942]
                %1998 = vst [vmem:[%s1952 + $0x58] sm:%s1942] %v1997
                %v1999 = vld [vmem:[%s1951 + $0x5c] sm:%s1942]
                %2000 = vst [vmem:[%s1952 + $0x5c] sm:%s1942] %v1999
                %v2001 = vld [vmem:[%s1951 + $0x60] sm:%s1942]
                %2002 = vst [vmem:[%s1952 + $0x60] sm:%s1942] %v2001
                %v2003 = vld [vmem:[%s1951 + $0x64] sm:%s1942]
                %2004 = vst [vmem:[%s1952 + $0x64] sm:%s1942] %v2003
                %v2005 = vld [vmem:[%s1951 + $0x68] sm:%s1942]
                %2006 = vst [vmem:[%s1952 + $0x68] sm:%s1942] %v2005
                %v2007 = vld [vmem:[%s1951 + $0x6c] sm:%s1942]
                %2008 = vst [vmem:[%s1952 + $0x6c] sm:%s1942] %v2007
                %v2009 = vld [vmem:[%s1951 + $0x70] sm:%s1942]
                %2010 = vst [vmem:[%s1952 + $0x70] sm:%s1942] %v2009
                %v2011 = vld [vmem:[%s1951 + $0x74] sm:%s1942]
                %2012 = vst [vmem:[%s1952 + $0x74] sm:%s1942] %v2011
                %v2013 = vld [vmem:[%s1951 + $0x78] sm:%s1942]
                %2014 = vst [vmem:[%s1952 + $0x78] sm:%s1942] %v2013
                %v2015 = vld [vmem:[%s1951 + $0x7c] sm:%s1942]
                %2016 = vst [vmem:[%s1952 + $0x7c] sm:%s1942] %v2015
                %s2017 = sadd.s32 1, %s1950
                %p2018 = scmp.ge.s32.totalorder %s2017, %s1943
                %s2019 = scalar_select %p2018, 0, %s2017
                %s2020 = smul.u32 %s2019, 128
                %s2021 = smul.u32 %s2019, 128
                %s2022 = scalar_lea.vmem %s1922, %s2020 [#allocation2]
                %s2023 = scalar_lea.vmem %s1933, %s2021
              $region57: #{network_forward.15} parent=51 // loop_footer
                %s1947 = sadd.s32 %s1945, 1
              $region58: #{network_forward.15} parent=51 // loop_footer_branch
                %1944 = sbr.rel target = $region54
              $region59: #{network_forward.15} parent=51 // loop_exit
                _
              %s2024 = sshrl.u32 %s1929, 5
              %s2025 = sand.u32 %s1929, 31
              %s2026 = smul.u32 %s2024, 32
              %s2027 = smul.u32 4, %s2026
              %s2028 = scalar_lea.vmem %s1922, %s2027 [#allocation2]
              %s2029 = smul.u32 4, %s2026
              %s2030 = scalar_lea.vmem %s1933, %s2029
              // While loop
              $region60: #{network_forward.15} parent=51 // loop_pre_header
                _
              $region61: #{network_forward.15} parent=51 // loop_header
                %s2032 = sphi 0, %s2034
                %p2033 = scmp.ge.s32.totalorder %s2032, %s2025
                %s2037 = sphi 0, %s2044
                %s2038 = sphi %s2028, %s2047
                %s2039 = sphi %s2030, %s2048
              $region62: #{network_forward.15} parent=51 // loop_header_branch
                %2036 = sbr.rel (%p2033) target = $region66
              $region63: #{network_forward.15} parent=51 // loop_body
                %v2040 = vld [vmem:[%s2038] sm:%s1942]
                %2041 = vst [vmem:[%s2039] sm:%s1942] %v2040
                %s2042 = sadd.s32 1, %s2037
                %p2043 = scmp.ge.s32.totalorder %s2042, %s2025
                %s2044 = scalar_select %p2043, 0, %s2042
                %s2045 = smul.u32 %s2044, 4
                %s2046 = smul.u32 %s2044, 4
                %s2047 = scalar_lea.vmem %s2028, %s2045 [#allocation2]
                %s2048 = scalar_lea.vmem %s2030, %s2046
              $region64: #{network_forward.15} parent=51 // loop_footer
                %s2034 = sadd.s32 %s2032, 1
              $region65: #{network_forward.15} parent=51 // loop_footer_branch
                %2031 = sbr.rel target = $region61
              $region66: #{network_forward.15} parent=51 // loop_exit
                _
            $region52: #{network_forward.15} parent=43 // pred_fallthru
              _
          $region44: #{network_forward.15} parent=39 // pred_fallthru
            _
          %2159 = vnop
        $region40: #{network_forward.15} parent=35 // pred_fallthru
          _
      $region36: #{network_forward.15} parent=5 // pred_fallthru
        _
      %p2160 = scmp.le.s32.totalorder 2, %s10
      // Predicated region
      $region85: #{network_forward.15} parent=5 // pred_check
        %p2161 = pneg %p2160
      $region86: #{network_forward.15} parent=5 // pred_check_branch
        %2163 = sbr.rel (%p2161) target = $region88
      $region87: #{network_forward.15} parent=5 // pred_region
        %s2164 = ssub.s32 %s10, 2
        // Predicated region
        $region89: #{network_forward.15} parent=87 // pred_check
          %p2165 = pneg %p133
        $region90: #{network_forward.15} parent=87 // pred_check_branch
          %2167 = sbr.rel (%p2165) target = $region92
        $region91: #{network_forward.15} parent=87 // pred_region
          %s2168 = sand.u32 %s118, 1
          %s2169 = sand.u32 %s118, 1
          %s2170 = smul.addr %s2169, 484
          %s2171 = scalar_lea.vmem [#allocation2], %s2170
        $region92: #{network_forward.15} parent=87 // pred_fallthru
          _
      $region88: #{network_forward.15} parent=5 // pred_fallthru
        _
    $region6: #{network_forward.15} parent=1 // loop_footer
      %s14 = sadd.s32 1, %s10
    $region7: #{network_forward.15} parent=1 // loop_footer_branch
      %9 = sbr.rel target = $region3
    $region8: #{network_forward.15} parent=1 // loop_exit
      _

// kernel: network_forward.16
$region0: #{network_forward.16}
  #allocation0 [shape = 'u32[]', space=smem, size = 0x4, offset = 0x4, fixed_abs, tag = 'smem constant byte address 0x4 - core index']
  #allocation1 [shape = 'u32[72,128]{1,0:T(1,128)}', space=vmem, size = 0x9000, scoped, tag = 'internal scratch']
  %s0 = inlined_call_operand.vmem [shape: bf16[450,72], index: 0, kind: input, shape index: {}]
  %s1 = inlined_call_operand.vmem [shape: bf16[72,8], index: 1, kind: input, shape index: {}]
  %s2 = inlined_call_operand.vmem [shape: f32[1,8], index: 2, kind: input, shape index: {}]
  %s3 = inlined_call_operand.vmem [shape: bf16[450,8], index: 3, kind: output, shape index: {}]
  %s4 = sld [smem:[#allocation0]]
  $region89: #{network_forward.16} parent=0
    _
  %s6 = ssub.s32 1, %s4
  %s7 = scalar_select 0, %s6, %s4
  $region1: #{network_forward.16} parent=0
    #allocation2 [shape = 'u8[118784]{0}', space=vmem, size = 0x1d000, scoped, tag = 'output window, operand 0']
    loop: start=0, step=1, limit=4
    $region2: #{network_forward.16} parent=1 // loop_pre_header
      _
    $region3: #{network_forward.16} parent=1 // loop_header
      %s9 = sphi 0, %s13
      %p10 = scmp.ge.s32.totalorder %s9, 4
      %s19 = sphi 0, %s21
      %s22 = sphi 0, %s19
      %s23 = sphi 0, %s22
      %s39 = sphi 0, %s23
      %s43 = sphi 0, %s43
      %s45 = sphi 0, %s43
      %s46 = sphi 0, %s45
      %s60 = sphi 0, %s46
      %s64 = sphi 0, %s64
      %s66 = sphi 0, %s64
      %s67 = sphi 0, %s66
      %s81 = sphi 0, %s67
      %s87 = sphi 0, %s89
      %s90 = sphi 0, %s87
      %s91 = sphi 0, %s90
      %s107 = sphi 0, %s91
    $region4: #{network_forward.16} parent=1 // loop_header_branch
      %12 = sbr.rel (%p10) target = $region8
    $region5: #{network_forward.16} parent=1 // loop_body
      %s14 = ssub.s32 %s9, 1
      %s15 = ssub.s32 %s9, 2
      %s16 = sadd.s32 %s9, 1
      %s17 = ssub.s32 %s9, %s16
      %p18 = scmp.eq.s32.totalorder %s17, 0
      %s20 = sadd.s32 %s19, 1
      %s21 = scalar_select %p18, %s19, %s20
      %p24 = pneg %p18
      %p25 = scmp.eq.s32.totalorder %s9, 1
      %p26 = por %p24, %p25
      %p27 = scmp.ne.s32.totalorder %s19, %s22
      %p28 = scmp.eq.s32.totalorder %s9, 0
      %p29 = por %p27, %p28
      %p30 = scmp.ne.s32.totalorder %s19, %s22
      %p31 = scmp.eq.s32.totalorder %s14, 1
      %p32 = por %p30, %p31
      %p33 = scmp.ne.s32.totalorder %s22, %s23
      %p34 = scmp.eq.s32.totalorder %s14, 0
      %p35 = por %p33, %p34
      %p36 = scmp.ne.s32.totalorder %s22, %s23
      %p37 = scmp.eq.s32.totalorder %s15, 1
      %p38 = por %p36, %p37
      %p40 = scmp.ne.s32.totalorder %s23, %s39
      %p41 = scmp.eq.s32.totalorder %s15, 0
      %p42 = por %p40, %p41
      %s44 = sadd.s32 %s43, 1
      %p47 = scmp.eq.s32.totalorder %s9, 1
      %p48 = scmp.ne.s32.totalorder %s43, %s45
      %p49 = scmp.eq.s32.totalorder %s9, 0
      %p50 = por %p48, %p49
      %p51 = scmp.ne.s32.totalorder %s43, %s45
      %p52 = scmp.eq.s32.totalorder %s14, 1
      %p53 = por %p51, %p52
      %p54 = scmp.ne.s32.totalorder %s45, %s46
      %p55 = scmp.eq.s32.totalorder %s14, 0
      %p56 = por %p54, %p55
      %p57 = scmp.ne.s32.totalorder %s45, %s46
      %p58 = scmp.eq.s32.totalorder %s15, 1
      %p59 = por %p57, %p58
      %p61 = scmp.ne.s32.totalorder %s46, %s60
      %p62 = scmp.eq.s32.totalorder %s15, 0
      %p63 = por %p61, %p62
      %s65 = sadd.s32 %s64, 1
      %p68 = scmp.eq.s32.totalorder %s9, 1
      %p69 = scmp.ne.s32.totalorder %s64, %s66
      %p70 = scmp.eq.s32.totalorder %s9, 0
      %p71 = por %p69, %p70
      %p72 = scmp.ne.s32.totalorder %s64, %s66
      %p73 = scmp.eq.s32.totalorder %s14, 1
      %p74 = por %p72, %p73
      %p75 = scmp.ne.s32.totalorder %s66, %s67
      %p76 = scmp.eq.s32.totalorder %s14, 0
      %p77 = por %p75, %p76
      %p78 = scmp.ne.s32.totalorder %s66, %s67
      %p79 = scmp.eq.s32.totalorder %s15, 1
      %p80 = por %p78, %p79
      %p82 = scmp.ne.s32.totalorder %s67, %s81
      %p83 = scmp.eq.s32.totalorder %s15, 0
      %p84 = por %p82, %p83
      %s85 = ssub.s32 %s9, %s16
      %p86 = scmp.eq.s32.totalorder %s85, 0
      %s88 = sadd.s32 %s87, 1
      %s89 = scalar_select %p86, %s87, %s88
      %p92 = pneg %p86
      %p93 = scmp.eq.s32.totalorder %s9, 1
      %p94 = por %p92, %p93
      %p95 = scmp.ne.s32.totalorder %s87, %s90
      %p96 = scmp.eq.s32.totalorder %s9, 0
      %p97 = por %p95, %p96
      %p98 = scmp.ne.s32.totalorder %s87, %s90
      %p99 = scmp.eq.s32.totalorder %s14, 1
      %p100 = por %p98, %p99
      %p101 = scmp.ne.s32.totalorder %s90, %s91
      %p102 = scmp.eq.s32.totalorder %s14, 0
      %p103 = por %p101, %p102
      %p104 = scmp.ne.s32.totalorder %s90, %s91
      %p105 = scmp.eq.s32.totalorder %s15, 1
      %p106 = por %p104, %p105
      %p108 = scmp.ne.s32.totalorder %s91, %s107
      %p109 = scmp.eq.s32.totalorder %s15, 0
      %p110 = por %p108, %p109
      %p111 = scmp.le.s32.totalorder 1, %s9
      %p112 = scmp.lt.s32.totalorder %s9, 3
      %p113 = pnand %p111, %p112
      %p114 = pneg %p113
      // Predicated region
      $region9: #{network_forward.16} parent=5 // pred_check
        _
      $region10: #{network_forward.16} parent=5 // pred_check_branch
        %116 = sbr.rel (%p113) target = $region12
      $region11: #{network_forward.16} parent=5 // pred_region
        %s117 = ssub.s32 %s9, 1
        // Predicated region
        $region13: #{network_forward.16} parent=11 // pred_check
          %p118 = pneg %p56
        $region14: #{network_forward.16} parent=11 // pred_check_branch
          %120 = sbr.rel (%p118) target = $region16
        $region15: #{network_forward.16} parent=11 // pred_region
          _
        $region16: #{network_forward.16} parent=11 // pred_fallthru
          _
        // Predicated region
        $region17: #{network_forward.16} parent=11 // pred_check
          %p121 = pneg %p77
        $region18: #{network_forward.16} parent=11 // pred_check_branch
          %123 = sbr.rel (%p121) target = $region20
        $region19: #{network_forward.16} parent=11 // pred_region
          _
        $region20: #{network_forward.16} parent=11 // pred_fallthru
          _
      $region12: #{network_forward.16} parent=5 // pred_fallthru
        _
      %p124 = scmp.lt.s32.totalorder %s9, 2
      // Predicated region
      $region21: #{network_forward.16} parent=5 // pred_check
        %p125 = pneg %p124
      $region22: #{network_forward.16} parent=5 // pred_check_branch
        %127 = sbr.rel (%p125) target = $region24
      $region23: #{network_forward.16} parent=5 // pred_region
        // Predicated region
        $region25: #{network_forward.16} parent=23 // pred_check
          %p128 = pneg %p29
        $region26: #{network_forward.16} parent=23 // pred_check_branch
          %130 = sbr.rel (%p128) target = $region28
        $region27: #{network_forward.16} parent=23 // pred_region
          %s131 = smul.u32 29, %s9
          %s132 = ssub.s32 57, %s131
          %p133 = scmp.lt.s32.totalorder %s132, 29
          %s134 = scalar_select %p133, %s132, 29
          %s135 = smul.u32 4, %s134
          %p136 = scmp.lt.s32.totalorder %s131, 56
          %s137 = scalar_select %p136, %s131, 56
          %s138 = smul.addr %s137, 4
          %s139 = scalar_lea.vmem %s0, %s138
          %s140 = smul.u32 29, %s9
          %s141 = ssub.s32 57, %s140
          %p142 = scmp.lt.s32.totalorder %s141, 29
          %s143 = scalar_select %p142, %s141, 29
          %s144 = smul.u32 4, %s143
        $region28: #{network_forward.16} parent=23 // pred_fallthru
          _
      $region24: #{network_forward.16} parent=5 // pred_fallthru
        _
      %p145 = scmp.le.s32.totalorder 1, %s9
      %p146 = scmp.lt.s32.totalorder %s9, 3
      %p147 = pnand %p145, %p146
      %p148 = pneg %p147
      // Predicated region
      $region29: #{network_forward.16} parent=5 // pred_check
        _
      $region30: #{network_forward.16} parent=5 // pred_check_branch
        %150 = sbr.rel (%p147) target = $region32
      $region31: #{network_forward.16} parent=5 // pred_region
        %s151 = ssub.s32 %s9, 1
        %s152 = smul.u32 29, %s14
        %s153 = ssub.s32 57, %s152
        %p154 = scmp.lt.s32.totalorder %s153, 29
        %s155 = scalar_select %p154, %s153, 29
        %s156 = smul.u32 4, %s155
        %p157 = scmp.lt.s32.totalorder %s152, 56
        %s158 = scalar_select %p157, %s152, 56
        %s159 = smul.addr %s158, 4
        %s160 = scalar_lea.vmem %s0, %s159
        %p161 = pneg %p35
        %p162 = pneg %p32
        %p163 = pneg %p56
        %p164 = pneg %p53
        %p165 = pneg %p77
        %p166 = pneg %p74
        %p167 = pneg %p103
        %p168 = pneg %p100
        %s169 = sand.u32 %s90, 1
        %s170 = sand.u32 %s90, 1
        %s171 = smul.addr %s170, 116
        %s172 = scalar_lea.vmem [#allocation2], %s171
        %s173 = smul.u32 29, %s14
        %s174 = ssub.s32 57, %s173
        %p175 = scmp.lt.s32.totalorder %s174, 29
        %s176 = scalar_select %p175, %s174, 29
        %s177 = smul.u32 4, %s176
        %p178 = scmp.lt.s32.totalorder %s173, 56
        %s179 = scalar_select %p178, %s173, 56
        %s180 = smul.addr %s179, 4
        %s181 = scalar_lea.vmem %s0, %s180
        %s182 = smul.u32 29, %s14
        %s183 = ssub.s32 57, %s182
        %p184 = scmp.lt.s32.totalorder %s183, 29
        %s185 = scalar_select %p184, %s183, 29
        %s186 = smul.u32 4, %s185
        %s187 = smul.u32 29, %s14
        %s188 = ssub.s32 57, %s187
        %p189 = scmp.lt.s32.totalorder %s188, 29
        %s190 = scalar_select %p189, %s188, 29
        %s191 = smul.u32 4, %s190
        %v193 = vld [vmem:[%s181] sm:$0xf]
        %v194 = vld [vmem:[%s181 + $0x4] sm:$0xf]
        %v195 = vld [vmem:[%s181 + $0x8] sm:$0xf]
        %v196 = vld [vmem:[%s181 + $0xc] sm:$0xf]
        %v197 = vld [vmem:[%s181 + $0x10] sm:$0xf]
        %v198 = vld [vmem:[%s181 + $0x14] sm:$0xf]
        %v199 = vld [vmem:[%s181 + $0x18] sm:$0xf]
        %v200 = vld [vmem:[%s181 + $0x1c] sm:$0xf]
        %v201 = vld [vmem:[%s181 + $0x20] sm:$0xf]
        %v202 = vld [vmem:[%s181 + $0x24] sm:$0xf]
        %v203 = vld [vmem:[%s181 + $0x28] sm:$0xf]
        %v204 = vld [vmem:[%s181 + $0x2c] sm:$0xf]
        %v205 = vld [vmem:[%s181 + $0x30] sm:$0xf]
        %v206 = vld [vmem:[%s181 + $0x34] sm:$0xf]
        %v207 = vld [vmem:[%s181 + $0x38] sm:$0xf]
        %v208 = vld [vmem:[%s181 + $0x3c] sm:$0xf]
        %v209 = vld [vmem:[%s181 + $0x40] sm:$0xf]
        %v210 = vld [vmem:[%s181 + $0x44] sm:$0xf]
        %v211 = vld [vmem:[%s181 + $0x48] sm:$0xf]
        %v212 = vld [vmem:[%s181 + $0x4c] sm:$0xf]
        %v213 = vld [vmem:[%s181 + $0x50] sm:$0xf]
        %v214 = vld [vmem:[%s181 + $0x54] sm:$0xf]
        %v215 = vld [vmem:[%s181 + $0x58] sm:$0xf]
        %v216 = vld [vmem:[%s181 + $0x5c] sm:$0xf]
        %v217 = vld [vmem:[%s181 + $0x60] sm:$0xf]
        %v218 = vld [vmem:[%s181 + $0x64] sm:$0xf]
        %v219 = vld [vmem:[%s181 + $0x68] sm:$0xf]
        %v220 = vld [vmem:[%s181 + $0x6c] sm:$0xf]
        %v221 = vld [vmem:[%s181 + $0x70] sm:$0xf]
        %v222 = vld [vmem:[%s1] sm:$0xf]
        %v223 = vld [vmem:[%s1 + $0x4] sm:$0xf]
        %v224 = vld [vmem:[%s1 + $0x8] sm:$0xf]
        %v225 = vld [vmem:[%s1 + $0xc] sm:$0xf]
        %v226 = vld [vmem:[%s1 + $0x10] sm:$0xf]
        %v227 = vld [vmem:[%s1 + $0x14] sm:$0xf]
        %v228 = vld [vmem:[%s1 + $0x18] sm:$0xf]
        %v229 = vld [vmem:[%s1 + $0x1c] sm:$0xf]
        %v230 = vld [vmem:[%s1 + $0x20] sm:$0xf]
        %v231 = vld [vmem:[%s2] sm:$0x1]
        %v233 = vperm.slane %v231, 0
        %v264 = vunpack.c.l.b16 %v193
        %v265 = vunpack.c.l.b16 %v194
        %v266 = vunpack.c.l.b16 %v195
        %v267 = vunpack.c.l.b16 %v196
        %v268 = vunpack.c.l.b16 %v197
        %v269 = vunpack.c.l.b16 %v198
        %v270 = vunpack.c.l.b16 %v199
        %v271 = vunpack.c.l.b16 %v200
        %v272 = vunpack.c.l.b16 %v201
        %v273 = vunpack.c.l.b16 %v202
        %v274 = vunpack.c.l.b16 %v203
        %v275 = vunpack.c.l.b16 %v204
        %v276 = vunpack.c.l.b16 %v205
        %v277 = vunpack.c.l.b16 %v206
        %v278 = vunpack.c.l.b16 %v207
        %v279 = vunpack.c.l.b16 %v208
        %v280 = vunpack.c.l.b16 %v209
        %v281 = vunpack.c.l.b16 %v210
        %v282 = vunpack.c.l.b16 %v211
        %v283 = vunpack.c.l.b16 %v212
        %v284 = vunpack.c.l.b16 %v213
        %v285 = vunpack.c.l.b16 %v214
        %v286 = vunpack.c.l.b16 %v215
        %v287 = vunpack.c.l.b16 %v216
        %v288 = vunpack.c.l.b16 %v217
        %v289 = vunpack.c.l.b16 %v218
        %v290 = vunpack.c.l.b16 %v219
        %v291 = vunpack.c.l.b16 %v220
        %v292 = vunpack.c.l.b16 %v221
        %v293 = vpack.c.b16 %v265, %v264
        %v294 = vpack.c.b16 %v267, %v266
        %v295 = vpack.c.b16 %v269, %v268
        %v296 = vpack.c.b16 %v271, %v270
        %v297 = vpack.c.b16 %v273, %v272
        %v298 = vpack.c.b16 %v275, %v274
        %v299 = vpack.c.b16 %v277, %v276
        %v300 = vpack.c.b16 %v279, %v278
        %v301 = vpack.c.b16 %v281, %v280
        %v302 = vpack.c.b16 %v283, %v282
        %v303 = vpack.c.b16 %v285, %v284
        %v304 = vpack.c.b16 %v287, %v286
        %v305 = vpack.c.b16 %v289, %v288
        %v306 = vpack.c.b16 %v291, %v290
        %v307 = vpack.c.b16 %v292, %v292
        %v317 = vunpack.c.l.b16 %v222
        %v318 = vunpack.c.l.b16 %v223
        %v319 = vunpack.c.l.b16 %v224
        %v320 = vunpack.c.l.b16 %v225
        %v321 = vunpack.c.l.b16 %v226
        %v322 = vunpack.c.l.b16 %v227
        %v323 = vunpack.c.l.b16 %v228
        %v324 = vunpack.c.l.b16 %v229
        %v325 = vunpack.c.l.b16 %v230
        %v326 = vpack.c.b16 %v318, %v317
        %v327 = vpack.c.b16 %v320, %v319
        %v328 = vpack.c.b16 %v322, %v321
        %v329 = vpack.c.b16 %v324, %v323
        %v330 = vpack.c.b16 %v325, %v325
        %vm335 = vcmask 588800
        %v337 = vsel %vm335, %v293, 0
        %v340 = vsel %vm335, %v294, 0
        %v343 = vsel %vm335, %v295, 0
        %v346 = vsel %vm335, %v296, 0
        %v349 = vsel %vm335, %v297, 0
        %v352 = vsel %vm335, %v298, 0
        %v355 = vsel %vm335, %v299, 0
        %v358 = vsel %vm335, %v300, 0
        %v361 = vsel %vm335, %v301, 0
        %v364 = vsel %vm335, %v302, 0
        %v367 = vsel %vm335, %v303, 0
        %v370 = vsel %vm335, %v304, 0
        %v373 = vsel %vm335, %v305, 0
        %v376 = vsel %vm335, %v306, 0
        %v379 = vsel %vm335, %v307, 0
        %vm381 = vcmask 1043456
        %v383 = vsel %vm381, %v330, 0
        %385 = vmatpush.bf16.msra.mxu0 0
        %386 = vmatpush.bf16.msra.mxu0 0
        %387 = vmatpush.bf16.msra.mxu0 0
        %388 = vmatpush.bf16.msra.mxu0 %v383
        %389 = vmatpush.bf16.msra.mxu0 %v329
        %390 = vmatpush.bf16.msra.mxu0 %v328
        %391 = vmatpush.bf16.msra.mxu0 %v327
        %392 = vmatpush.bf16.msra.mxu0 %v326
        %393 = vmatmul.bf16.gmra.mxu0 %v337
        %v394 = vpop.f32.mrf.mxu0
        %v395 = vadd.f32 %v233, %v394
        %v396 = vpop.f32.mrf.mxu0
        %v397 = vadd.f32 %v233, %v396
        %398 = vmatmul.bf16.gmra.mxu0 %v340
        %v399 = vpop.f32.mrf.mxu0
        %v400 = vadd.f32 %v233, %v399
        %v401 = vpop.f32.mrf.mxu0
        %v402 = vadd.f32 %v233, %v401
        %403 = vmatmul.bf16.gmra.mxu0 %v343
        %v404 = vpop.f32.mrf.mxu0
        %v405 = vadd.f32 %v233, %v404
        %v406 = vpop.f32.mrf.mxu0
        %v407 = vadd.f32 %v233, %v406
        %408 = vmatmul.bf16.gmra.mxu0 %v346
        %v409 = vpop.f32.mrf.mxu0
        %v410 = vadd.f32 %v233, %v409
        %v411 = vpop.f32.mrf.mxu0
        %v412 = vadd.f32 %v233, %v411
        %413 = vmatmul.bf16.gmra.mxu0 %v349
        %v414 = vpop.f32.mrf.mxu0
        %v415 = vadd.f32 %v233, %v414
        %v416 = vpop.f32.mrf.mxu0
        %v417 = vadd.f32 %v233, %v416
        %418 = vmatmul.bf16.gmra.mxu0 %v352
        %v419 = vpop.f32.mrf.mxu0
        %v420 = vadd.f32 %v233, %v419
        %v421 = vpop.f32.mrf.mxu0
        %v422 = vadd.f32 %v233, %v421
        %423 = vmatmul.bf16.gmra.mxu0 %v355
        %v424 = vpop.f32.mrf.mxu0
        %v425 = vadd.f32 %v233, %v424
        %v426 = vpop.f32.mrf.mxu0
        %v427 = vadd.f32 %v233, %v426
        %428 = vmatmul.bf16.gmra.mxu0 %v358
        %v429 = vpop.f32.mrf.mxu0
        %v430 = vadd.f32 %v233, %v429
        %v431 = vpop.f32.mrf.mxu0
        %v432 = vadd.f32 %v233, %v431
        %433 = vmatmul.bf16.gmra.mxu0 %v361
        %v434 = vpop.f32.mrf.mxu0
        %v435 = vadd.f32 %v233, %v434
        %v436 = vpop.f32.mrf.mxu0
        %v437 = vadd.f32 %v233, %v436
        %438 = vmatmul.bf16.gmra.mxu0 %v364
        %v439 = vpop.f32.mrf.mxu0
        %v440 = vadd.f32 %v233, %v439
        %v441 = vpop.f32.mrf.mxu0
        %v442 = vadd.f32 %v233, %v441
        %443 = vmatmul.bf16.gmra.mxu0 %v367
        %v444 = vpop.f32.mrf.mxu0
        %v445 = vadd.f32 %v233, %v444
        %v446 = vpop.f32.mrf.mxu0
        %v447 = vadd.f32 %v233, %v446
        %448 = vmatmul.bf16.gmra.mxu0 %v370
        %v449 = vpop.f32.mrf.mxu0
        %v450 = vadd.f32 %v233, %v449
        %v451 = vpop.f32.mrf.mxu0
        %v452 = vadd.f32 %v233, %v451
        %453 = vmatmul.bf16.gmra.mxu0 %v373
        %v454 = vpop.f32.mrf.mxu0
        %v455 = vadd.f32 %v233, %v454
        %v456 = vpop.f32.mrf.mxu0
        %v457 = vadd.f32 %v233, %v456
        %458 = vmatmul.bf16.gmra.mxu0 %v376
        %v459 = vpop.f32.mrf.mxu0
        %v460 = vadd.f32 %v233, %v459
        %v461 = vpop.f32.mrf.mxu0
        %v462 = vadd.f32 %v233, %v461
        %463 = vmatmul.bf16.gmra.mxu0 %v379
        %v464 = vpop.f32.mrf.mxu0
        %v465 = vadd.f32 %v233, %v464
        %v466 = vpop.f32.mrf.mxu0
        %467 = vdwg.mxu0
        %v468 = vmax.f32 %v395, 0.0
        %v469 = vmax.f32 %v397, 0.0
        %v470 = vmax.f32 %v400, 0.0
        %v471 = vmax.f32 %v402, 0.0
        %v472 = vmax.f32 %v405, 0.0
        %v473 = vmax.f32 %v407, 0.0
        %v474 = vmax.f32 %v410, 0.0
        %v475 = vmax.f32 %v412, 0.0
        %v476 = vmax.f32 %v415, 0.0
        %v477 = vmax.f32 %v417, 0.0
        %v478 = vmax.f32 %v420, 0.0
        %v479 = vmax.f32 %v422, 0.0
        %v480 = vmax.f32 %v425, 0.0
        %v481 = vmax.f32 %v427, 0.0
        %v482 = vmax.f32 %v430, 0.0
        %v483 = vmax.f32 %v432, 0.0
        %v484 = vmax.f32 %v435, 0.0
        %v485 = vmax.f32 %v437, 0.0
        %v486 = vmax.f32 %v440, 0.0
        %v487 = vmax.f32 %v442, 0.0
        %v488 = vmax.f32 %v445, 0.0
        %v489 = vmax.f32 %v447, 0.0
        %v490 = vmax.f32 %v450, 0.0
        %v491 = vmax.f32 %v452, 0.0
        %v492 = vmax.f32 %v455, 0.0
        %v493 = vmax.f32 %v457, 0.0
        %v494 = vmax.f32 %v460, 0.0
        %v495 = vmax.f32 %v462, 0.0
        %v496 = vmax.f32 %v465, 0.0
        %v497 = vpack.c.bf16 %v468, %v468
        %v498 = vpack.c.bf16 %v469, %v469
        %v499 = vpack.c.bf16 %v470, %v470
        %v500 = vpack.c.bf16 %v471, %v471
        %v501 = vpack.c.bf16 %v472, %v472
        %v502 = vpack.c.bf16 %v473, %v473
        %v503 = vpack.c.bf16 %v474, %v474
        %v504 = vpack.c.bf16 %v475, %v475
        %v505 = vpack.c.bf16 %v476, %v476
        %v506 = vpack.c.bf16 %v477, %v477
        %v507 = vpack.c.bf16 %v478, %v478
        %v508 = vpack.c.bf16 %v479, %v479
        %v509 = vpack.c.bf16 %v480, %v480
        %v510 = vpack.c.bf16 %v481, %v481
        %v511 = vpack.c.bf16 %v482, %v482
        %v512 = vpack.c.bf16 %v483, %v483
        %v513 = vpack.c.bf16 %v484, %v484
        %v514 = vpack.c.bf16 %v485, %v485
        %v515 = vpack.c.bf16 %v486, %v486
        %v516 = vpack.c.bf16 %v487, %v487
        %v517 = vpack.c.bf16 %v488, %v488
        %v518 = vpack.c.bf16 %v489, %v489
        %v519 = vpack.c.bf16 %v490, %v490
        %v520 = vpack.c.bf16 %v491, %v491
        %v521 = vpack.c.bf16 %v492, %v492
        %v522 = vpack.c.bf16 %v493, %v493
        %v523 = vpack.c.bf16 %v494, %v494
        %v524 = vpack.c.bf16 %v495, %v495
        %v525 = vpack.c.bf16 %v496, %v496
        %vm526 = vcmask 60416
        %527 = vst.msk [vmem:[%s172] sm:$0xf] %vm526, %v497
        %528 = vst.msk [vmem:[%s172 + $0x4] sm:$0xf] %vm526, %v498
        %529 = vst.msk [vmem:[%s172 + $0x8] sm:$0xf] %vm526, %v499
        %530 = vst.msk [vmem:[%s172 + $0xc] sm:$0xf] %vm526, %v500
        %531 = vst.msk [vmem:[%s172 + $0x10] sm:$0xf] %vm526, %v501
        %532 = vst.msk [vmem:[%s172 + $0x14] sm:$0xf] %vm526, %v502
        %533 = vst.msk [vmem:[%s172 + $0x18] sm:$0xf] %vm526, %v503
        %534 = vst.msk [vmem:[%s172 + $0x1c] sm:$0xf] %vm526, %v504
        %535 = vst.msk [vmem:[%s172 + $0x20] sm:$0xf] %vm526, %v505
        %536 = vst.msk [vmem:[%s172 + $0x24] sm:$0xf] %vm526, %v506
        %537 = vst.msk [vmem:[%s172 + $0x28] sm:$0xf] %vm526, %v507
        %538 = vst.msk [vmem:[%s172 + $0x2c] sm:$0xf] %vm526, %v508
        %539 = vst.msk [vmem:[%s172 + $0x30] sm:$0xf] %vm526, %v509
        %540 = vst.msk [vmem:[%s172 + $0x34] sm:$0xf] %vm526, %v510
        %541 = vst.msk [vmem:[%s172 + $0x38] sm:$0xf] %vm526, %v511
        %542 = vst.msk [vmem:[%s172 + $0x3c] sm:$0xf] %vm526, %v512
        %543 = vst.msk [vmem:[%s172 + $0x40] sm:$0xf] %vm526, %v513
        %544 = vst.msk [vmem:[%s172 + $0x44] sm:$0xf] %vm526, %v514
        %545 = vst.msk [vmem:[%s172 + $0x48] sm:$0xf] %vm526, %v515
        %546 = vst.msk [vmem:[%s172 + $0x4c] sm:$0xf] %vm526, %v516
        %547 = vst.msk [vmem:[%s172 + $0x50] sm:$0xf] %vm526, %v517
        %548 = vst.msk [vmem:[%s172 + $0x54] sm:$0xf] %vm526, %v518
        %549 = vst.msk [vmem:[%s172 + $0x58] sm:$0xf] %vm526, %v519
        %550 = vst.msk [vmem:[%s172 + $0x5c] sm:$0xf] %vm526, %v520
        %551 = vst.msk [vmem:[%s172 + $0x60] sm:$0xf] %vm526, %v521
        %552 = vst.msk [vmem:[%s172 + $0x64] sm:$0xf] %vm526, %v522
        %553 = vst.msk [vmem:[%s172 + $0x68] sm:$0xf] %vm526, %v523
        %554 = vst.msk [vmem:[%s172 + $0x6c] sm:$0xf] %vm526, %v524
        %555 = vst.msk [vmem:[%s172 + $0x70] sm:$0xf] %vm526, %v525
        %s556 = sand.u32 %s90, 1
        %s557 = sand.u32 %s90, 1
        %s558 = smul.addr %s557, 116
        %s559 = scalar_lea.vmem [#allocation2], %s558
        // Predicated region
        $region33: #{network_forward.16} parent=31 // pred_check
          %p560 = pneg %p100
        $region34: #{network_forward.16} parent=31 // pred_check_branch
          %562 = sbr.rel (%p560) target = $region36
        $region35: #{network_forward.16} parent=31 // pred_region
          %s563 = smul.u32 29, %s14
          %s564 = ssub.s32 57, %s563
          %p565 = scmp.lt.s32.totalorder %s564, 29
          %s566 = scalar_select %p565, %s564, 29
          %s567 = smul.u32 4, %s566
          %p568 = scmp.ne.s32.totalorder 0, %s567
          %s569 = smul.addr %s563, 4
          %s570 = scalar_lea.vmem %s3, %s569
          // Predicated region
          $region37: #{network_forward.16} parent=35 // pred_check
            %p571 = pneg %p568
          $region38: #{network_forward.16} parent=35 // pred_check_branch
            %573 = sbr.rel (%p571) target = $region40
          $region39: #{network_forward.16} parent=35 // pred_region
            // Predicated region
            $region41: #{network_forward.16} parent=39 // pred_check
              _
            $region42: #{network_forward.16} parent=39 // pred_check_branch
              %575 = sbr.rel target = $region44
            $region43: #{network_forward.16} parent=39 // pred_region
              // Predicated region
              $region63: #{network_forward.16} parent=43 // pred_check
                _
              $region64: #{network_forward.16} parent=43 // pred_check_branch
                %682 = sbr.rel (0) target = $region66
              $region65: #{network_forward.16} parent=43 // pred_region
                %s684 = ssub.s32 16, 1
                %s685 = sdiv.u32.pop %s566, 29
                %s686 = srem.u32.pop %s566, 29
                // While loop
                $region67: #{network_forward.16} parent=65 // loop_pre_header
                  _
                $region68: #{network_forward.16} parent=65 // loop_header
                  %s688 = sphi 0, %s690
                  %p689 = scmp.ge.s32.totalorder %s688, %s685
                  %s693 = sphi 0, %s756
                  %s694 = sphi %s559, %s759
                  %s695 = sphi %s570, %s760
                $region69: #{network_forward.16} parent=65 // loop_header_branch
                  %692 = sbr.rel (%p689) target = $region73
                $region70: #{network_forward.16} parent=65 // loop_body
                  %v696 = vld [vmem:[%s694] sm:%s684]
                  %697 = vst [vmem:[%s695] sm:%s684] %v696
                  %v698 = vld [vmem:[%s694 + $0x4] sm:%s684]
                  %699 = vst [vmem:[%s695 + $0x4] sm:%s684] %v698
                  %v700 = vld [vmem:[%s694 + $0x8] sm:%s684]
                  %701 = vst [vmem:[%s695 + $0x8] sm:%s684] %v700
                  %v702 = vld [vmem:[%s694 + $0xc] sm:%s684]
                  %703 = vst [vmem:[%s695 + $0xc] sm:%s684] %v702
                  %v704 = vld [vmem:[%s694 + $0x10] sm:%s684]
                  %705 = vst [vmem:[%s695 + $0x10] sm:%s684] %v704
                  %v706 = vld [vmem:[%s694 + $0x14] sm:%s684]
                  %707 = vst [vmem:[%s695 + $0x14] sm:%s684] %v706
                  %v708 = vld [vmem:[%s694 + $0x18] sm:%s684]
                  %709 = vst [vmem:[%s695 + $0x18] sm:%s684] %v708
                  %v710 = vld [vmem:[%s694 + $0x1c] sm:%s684]
                  %711 = vst [vmem:[%s695 + $0x1c] sm:%s684] %v710
                  %v712 = vld [vmem:[%s694 + $0x20] sm:%s684]
                  %713 = vst [vmem:[%s695 + $0x20] sm:%s684] %v712
                  %v714 = vld [vmem:[%s694 + $0x24] sm:%s684]
                  %715 = vst [vmem:[%s695 + $0x24] sm:%s684] %v714
                  %v716 = vld [vmem:[%s694 + $0x28] sm:%s684]
                  %717 = vst [vmem:[%s695 + $0x28] sm:%s684] %v716
                  %v718 = vld [vmem:[%s694 + $0x2c] sm:%s684]
                  %719 = vst [vmem:[%s695 + $0x2c] sm:%s684] %v718
                  %v720 = vld [vmem:[%s694 + $0x30] sm:%s684]
                  %721 = vst [vmem:[%s695 + $0x30] sm:%s684] %v720
                  %v722 = vld [vmem:[%s694 + $0x34] sm:%s684]
                  %723 = vst [vmem:[%s695 + $0x34] sm:%s684] %v722
                  %v724 = vld [vmem:[%s694 + $0x38] sm:%s684]
                  %725 = vst [vmem:[%s695 + $0x38] sm:%s684] %v724
                  %v726 = vld [vmem:[%s694 + $0x3c] sm:%s684]
                  %727 = vst [vmem:[%s695 + $0x3c] sm:%s684] %v726
                  %v728 = vld [vmem:[%s694 + $0x40] sm:%s684]
                  %729 = vst [vmem:[%s695 + $0x40] sm:%s684] %v728
                  %v730 = vld [vmem:[%s694 + $0x44] sm:%s684]
                  %731 = vst [vmem:[%s695 + $0x44] sm:%s684] %v730
                  %v732 = vld [vmem:[%s694 + $0x48] sm:%s684]
                  %733 = vst [vmem:[%s695 + $0x48] sm:%s684] %v732
                  %v734 = vld [vmem:[%s694 + $0x4c] sm:%s684]
                  %735 = vst [vmem:[%s695 + $0x4c] sm:%s684] %v734
                  %v736 = vld [vmem:[%s694 + $0x50] sm:%s684]
                  %737 = vst [vmem:[%s695 + $0x50] sm:%s684] %v736
                  %v738 = vld [vmem:[%s694 + $0x54] sm:%s684]
                  %739 = vst [vmem:[%s695 + $0x54] sm:%s684] %v738
                  %v740 = vld [vmem:[%s694 + $0x58] sm:%s684]
                  %741 = vst [vmem:[%s695 + $0x58] sm:%s684] %v740
                  %v742 = vld [vmem:[%s694 + $0x5c] sm:%s684]
                  %743 = vst [vmem:[%s695 + $0x5c] sm:%s684] %v742
                  %v744 = vld [vmem:[%s694 + $0x60] sm:%s684]
                  %745 = vst [vmem:[%s695 + $0x60] sm:%s684] %v744
                  %v746 = vld [vmem:[%s694 + $0x64] sm:%s684]
                  %747 = vst [vmem:[%s695 + $0x64] sm:%s684] %v746
                  %v748 = vld [vmem:[%s694 + $0x68] sm:%s684]
                  %749 = vst [vmem:[%s695 + $0x68] sm:%s684] %v748
                  %v750 = vld [vmem:[%s694 + $0x6c] sm:%s684]
                  %751 = vst [vmem:[%s695 + $0x6c] sm:%s684] %v750
                  %v752 = vld [vmem:[%s694 + $0x70] sm:%s684]
                  %753 = vst [vmem:[%s695 + $0x70] sm:%s684] %v752
                  %s754 = sadd.s32 1, %s693
                  %p755 = scmp.ge.s32.totalorder %s754, %s685
                  %s756 = scalar_select %p755, 0, %s754
                  %s757 = smul.u32 %s756, 116
                  %s758 = smul.u32 %s756, 116
                  %s759 = scalar_lea.vmem %s559, %s757 [#allocation2]
                  %s760 = scalar_lea.vmem %s570, %s758
                $region71: #{network_forward.16} parent=65 // loop_footer
                  %s690 = sadd.s32 %s688, 1
                $region72: #{network_forward.16} parent=65 // loop_footer_branch
                  %687 = sbr.rel target = $region68
                $region73: #{network_forward.16} parent=65 // loop_exit
                  _
                %s761 = sdiv.u32.pop %s566, 29
                %s762 = srem.u32.pop %s566, 29
                %s763 = smul.u32 %s761, 29
                %s764 = smul.u32 4, %s763
                %s765 = scalar_lea.vmem %s559, %s764 [#allocation2]
                %s766 = smul.u32 4, %s763
                %s767 = scalar_lea.vmem %s570, %s766
                // While loop
                $region74: #{network_forward.16} parent=65 // loop_pre_header
                  _
                $region75: #{network_forward.16} parent=65 // loop_header
                  %s769 = sphi 0, %s771
                  %p770 = scmp.ge.s32.totalorder %s769, %s762
                  %s774 = sphi 0, %s781
                  %s775 = sphi %s765, %s784
                  %s776 = sphi %s767, %s785
                $region76: #{network_forward.16} parent=65 // loop_header_branch
                  %773 = sbr.rel (%p770) target = $region80
                $region77: #{network_forward.16} parent=65 // loop_body
                  %v777 = vld [vmem:[%s775] sm:%s684]
                  %778 = vst [vmem:[%s776] sm:%s684] %v777
                  %s779 = sadd.s32 1, %s774
                  %p780 = scmp.ge.s32.totalorder %s779, %s762
                  %s781 = scalar_select %p780, 0, %s779
                  %s782 = smul.u32 %s781, 4
                  %s783 = smul.u32 %s781, 4
                  %s784 = scalar_lea.vmem %s765, %s782 [#allocation2]
                  %s785 = scalar_lea.vmem %s767, %s783
                $region78: #{network_forward.16} parent=65 // loop_footer
                  %s771 = sadd.s32 %s769, 1
                $region79: #{network_forward.16} parent=65 // loop_footer_branch
                  %768 = sbr.rel target = $region75
                $region80: #{network_forward.16} parent=65 // loop_exit
                  _
              $region66: #{network_forward.16} parent=43 // pred_fallthru
                _
            $region44: #{network_forward.16} parent=39 // pred_fallthru
              _
            // Predicated region
            $region45: #{network_forward.16} parent=39 // pred_check
              _
            $region46: #{network_forward.16} parent=39 // pred_check_branch
              %577 = sbr.rel (0) target = $region48
            $region47: #{network_forward.16} parent=39 // pred_region
              %s579 = ssub.s32 16, 1
              %s580 = sdiv.u32.pop %s566, 29
              %s581 = srem.u32.pop %s566, 29
              // While loop
              $region49: #{network_forward.16} parent=47 // loop_pre_header
                _
              $region50: #{network_forward.16} parent=47 // loop_header
                %s583 = sphi 0, %s585
                %p584 = scmp.ge.s32.totalorder %s583, %s580
                %s588 = sphi 0, %s651
                %s589 = sphi %s559, %s654
                %s590 = sphi %s570, %s655
              $region51: #{network_forward.16} parent=47 // loop_header_branch
                %587 = sbr.rel (%p584) target = $region55
              $region52: #{network_forward.16} parent=47 // loop_body
                %v591 = vld [vmem:[%s589] sm:%s579]
                %592 = vst [vmem:[%s590] sm:%s579] %v591
                %v593 = vld [vmem:[%s589 + $0x4] sm:%s579]
                %594 = vst [vmem:[%s590 + $0x4] sm:%s579] %v593
                %v595 = vld [vmem:[%s589 + $0x8] sm:%s579]
                %596 = vst [vmem:[%s590 + $0x8] sm:%s579] %v595
                %v597 = vld [vmem:[%s589 + $0xc] sm:%s579]
                %598 = vst [vmem:[%s590 + $0xc] sm:%s579] %v597
                %v599 = vld [vmem:[%s589 + $0x10] sm:%s579]
                %600 = vst [vmem:[%s590 + $0x10] sm:%s579] %v599
                %v601 = vld [vmem:[%s589 + $0x14] sm:%s579]
                %602 = vst [vmem:[%s590 + $0x14] sm:%s579] %v601
                %v603 = vld [vmem:[%s589 + $0x18] sm:%s579]
                %604 = vst [vmem:[%s590 + $0x18] sm:%s579] %v603
                %v605 = vld [vmem:[%s589 + $0x1c] sm:%s579]
                %606 = vst [vmem:[%s590 + $0x1c] sm:%s579] %v605
                %v607 = vld [vmem:[%s589 + $0x20] sm:%s579]
                %608 = vst [vmem:[%s590 + $0x20] sm:%s579] %v607
                %v609 = vld [vmem:[%s589 + $0x24] sm:%s579]
                %610 = vst [vmem:[%s590 + $0x24] sm:%s579] %v609
                %v611 = vld [vmem:[%s589 + $0x28] sm:%s579]
                %612 = vst [vmem:[%s590 + $0x28] sm:%s579] %v611
                %v613 = vld [vmem:[%s589 + $0x2c] sm:%s579]
                %614 = vst [vmem:[%s590 + $0x2c] sm:%s579] %v613
                %v615 = vld [vmem:[%s589 + $0x30] sm:%s579]
                %616 = vst [vmem:[%s590 + $0x30] sm:%s579] %v615
                %v617 = vld [vmem:[%s589 + $0x34] sm:%s579]
                %618 = vst [vmem:[%s590 + $0x34] sm:%s579] %v617
                %v619 = vld [vmem:[%s589 + $0x38] sm:%s579]
                %620 = vst [vmem:[%s590 + $0x38] sm:%s579] %v619
                %v621 = vld [vmem:[%s589 + $0x3c] sm:%s579]
                %622 = vst [vmem:[%s590 + $0x3c] sm:%s579] %v621
                %v623 = vld [vmem:[%s589 + $0x40] sm:%s579]
                %624 = vst [vmem:[%s590 + $0x40] sm:%s579] %v623
                %v625 = vld [vmem:[%s589 + $0x44] sm:%s579]
                %626 = vst [vmem:[%s590 + $0x44] sm:%s579] %v625
                %v627 = vld [vmem:[%s589 + $0x48] sm:%s579]
                %628 = vst [vmem:[%s590 + $0x48] sm:%s579] %v627
                %v629 = vld [vmem:[%s589 + $0x4c] sm:%s579]
                %630 = vst [vmem:[%s590 + $0x4c] sm:%s579] %v629
                %v631 = vld [vmem:[%s589 + $0x50] sm:%s579]
                %632 = vst [vmem:[%s590 + $0x50] sm:%s579] %v631
                %v633 = vld [vmem:[%s589 + $0x54] sm:%s579]
                %634 = vst [vmem:[%s590 + $0x54] sm:%s579] %v633
                %v635 = vld [vmem:[%s589 + $0x58] sm:%s579]
                %636 = vst [vmem:[%s590 + $0x58] sm:%s579] %v635
                %v637 = vld [vmem:[%s589 + $0x5c] sm:%s579]
                %638 = vst [vmem:[%s590 + $0x5c] sm:%s579] %v637
                %v639 = vld [vmem:[%s589 + $0x60] sm:%s579]
                %640 = vst [vmem:[%s590 + $0x60] sm:%s579] %v639
                %v641 = vld [vmem:[%s589 + $0x64] sm:%s579]
                %642 = vst [vmem:[%s590 + $0x64] sm:%s579] %v641
                %v643 = vld [vmem:[%s589 + $0x68] sm:%s579]
                %644 = vst [vmem:[%s590 + $0x68] sm:%s579] %v643
                %v645 = vld [vmem:[%s589 + $0x6c] sm:%s579]
                %646 = vst [vmem:[%s590 + $0x6c] sm:%s579] %v645
                %v647 = vld [vmem:[%s589 + $0x70] sm:%s579]
                %648 = vst [vmem:[%s590 + $0x70] sm:%s579] %v647
                %s649 = sadd.s32 1, %s588
                %p650 = scmp.ge.s32.totalorder %s649, %s580
                %s651 = scalar_select %p650, 0, %s649
                %s652 = smul.u32 %s651, 116
                %s653 = smul.u32 %s651, 116
                %s654 = scalar_lea.vmem %s559, %s652 [#allocation2]
                %s655 = scalar_lea.vmem %s570, %s653
              $region53: #{network_forward.16} parent=47 // loop_footer
                %s585 = sadd.s32 %s583, 1
              $region54: #{network_forward.16} parent=47 // loop_footer_branch
                %582 = sbr.rel target = $region50
              $region55: #{network_forward.16} parent=47 // loop_exit
                _
              %s656 = sdiv.u32.pop %s566, 29
              %s657 = srem.u32.pop %s566, 29
              %s658 = smul.u32 %s656, 29
              %s659 = smul.u32 4, %s658
              %s660 = scalar_lea.vmem %s559, %s659 [#allocation2]
              %s661 = smul.u32 4, %s658
              %s662 = scalar_lea.vmem %s570, %s661
              // While loop
              $region56: #{network_forward.16} parent=47 // loop_pre_header
                _
              $region57: #{network_forward.16} parent=47 // loop_header
                %s664 = sphi 0, %s666
                %p665 = scmp.ge.s32.totalorder %s664, %s657
                %s669 = sphi 0, %s676
                %s670 = sphi %s660, %s679
                %s671 = sphi %s662, %s680
              $region58: #{network_forward.16} parent=47 // loop_header_branch
                %668 = sbr.rel (%p665) target = $region62
              $region59: #{network_forward.16} parent=47 // loop_body
                %v672 = vld [vmem:[%s670] sm:%s579]
                %673 = vst [vmem:[%s671] sm:%s579] %v672
                %s674 = sadd.s32 1, %s669
                %p675 = scmp.ge.s32.totalorder %s674, %s657
                %s676 = scalar_select %p675, 0, %s674
                %s677 = smul.u32 %s676, 4
                %s678 = smul.u32 %s676, 4
                %s679 = scalar_lea.vmem %s660, %s677 [#allocation2]
                %s680 = scalar_lea.vmem %s662, %s678
              $region60: #{network_forward.16} parent=47 // loop_footer
                %s666 = sadd.s32 %s664, 1
              $region61: #{network_forward.16} parent=47 // loop_footer_branch
                %663 = sbr.rel target = $region57
              $region62: #{network_forward.16} parent=47 // loop_exit
                _
            $region48: #{network_forward.16} parent=39 // pred_fallthru
              _
          $region40: #{network_forward.16} parent=35 // pred_fallthru
            _
          %786 = vnop
        $region36: #{network_forward.16} parent=31 // pred_fallthru
          _
      $region32: #{network_forward.16} parent=5 // pred_fallthru
        _
      %p787 = scmp.le.s32.totalorder 2, %s9
      // Predicated region
      $region81: #{network_forward.16} parent=5 // pred_check
        %p788 = pneg %p787
      $region82: #{network_forward.16} parent=5 // pred_check_branch
        %790 = sbr.rel (%p788) target = $region84
      $region83: #{network_forward.16} parent=5 // pred_region
        %s791 = ssub.s32 %s9, 2
        // Predicated region
        $region85: #{network_forward.16} parent=83 // pred_check
          %p792 = pneg %p106
        $region86: #{network_forward.16} parent=83 // pred_check_branch
          %794 = sbr.rel (%p792) target = $region88
        $region87: #{network_forward.16} parent=83 // pred_region
          %s795 = sand.u32 %s91, 1
          %s796 = sand.u32 %s91, 1
          %s797 = smul.addr %s796, 116
          %s798 = scalar_lea.vmem [#allocation2], %s797
        $region88: #{network_forward.16} parent=83 // pred_fallthru
          _
      $region84: #{network_forward.16} parent=5 // pred_fallthru
        _
    $region6: #{network_forward.16} parent=1 // loop_footer
      %s13 = sadd.s32 1, %s9
    $region7: #{network_forward.16} parent=1 // loop_footer_branch
      %8 = sbr.rel target = $region3
    $region8: #{network_forward.16} parent=1 // loop_exit
      _

// kernel: network_forward.17
$region0: #{network_forward.17}
  #allocation0 [shape = 'u32[]', space=smem, size = 0x4, offset = 0x4, fixed_abs, tag = 'smem constant byte address 0x4 - core index']
  #allocation1 [shape = 'u32[72,128]{1,0:T(1,128)}', space=vmem, size = 0x9000, scoped, tag = 'internal scratch']
  %s0 = inlined_call_operand.vmem [shape: bf16[450,72], index: 0, kind: input, shape index: {}]
  %s1 = inlined_call_operand.vmem [shape: bf16[72,8], index: 1, kind: input, shape index: {}]
  %s2 = inlined_call_operand.vmem [shape: f32[1,8], index: 2, kind: input, shape index: {}]
  %s3 = inlined_call_operand.vmem [shape: bf16[450,8], index: 3, kind: input, shape index: {}]
  %s4 = inlined_call_operand.vmem [shape: bf16[450,8], index: 4, kind: output, shape index: {}]
  %s5 = sld [smem:[#allocation0]]
  $region93: #{network_forward.17} parent=0
    _
  %s7 = ssub.s32 1, %s5
  %s8 = scalar_select 0, %s7, %s5
  $region1: #{network_forward.17} parent=0
    #allocation2 [shape = 'u8[118784]{0}', space=vmem, size = 0x1d000, scoped, tag = 'output window, operand 0']
    loop: start=0, step=1, limit=4
    $region2: #{network_forward.17} parent=1 // loop_pre_header
      _
    $region3: #{network_forward.17} parent=1 // loop_header
      %s10 = sphi 0, %s14
      %p11 = scmp.ge.s32.totalorder %s10, 4
      %s20 = sphi 0, %s22
      %s23 = sphi 0, %s20
      %s24 = sphi 0, %s23
      %s40 = sphi 0, %s24
      %s44 = sphi 0, %s44
      %s46 = sphi 0, %s44
      %s47 = sphi 0, %s46
      %s61 = sphi 0, %s47
      %s65 = sphi 0, %s65
      %s67 = sphi 0, %s65
      %s68 = sphi 0, %s67
      %s82 = sphi 0, %s68
      %s88 = sphi 0, %s90
      %s91 = sphi 0, %s88
      %s92 = sphi 0, %s91
      %s108 = sphi 0, %s92
      %s114 = sphi 0, %s116
      %s117 = sphi 0, %s114
      %s118 = sphi 0, %s117
      %s134 = sphi 0, %s118
    $region4: #{network_forward.17} parent=1 // loop_header_branch
      %13 = sbr.rel (%p11) target = $region8
    $region5: #{network_forward.17} parent=1 // loop_body
      %s15 = ssub.s32 %s10, 1
      %s16 = ssub.s32 %s10, 2
      %s17 = sadd.s32 %s10, 1
      %s18 = ssub.s32 %s10, %s17
      %p19 = scmp.eq.s32.totalorder %s18, 0
      %s21 = sadd.s32 %s20, 1
      %s22 = scalar_select %p19, %s20, %s21
      %p25 = pneg %p19
      %p26 = scmp.eq.s32.totalorder %s10, 1
      %p27 = por %p25, %p26
      %p28 = scmp.ne.s32.totalorder %s20, %s23
      %p29 = scmp.eq.s32.totalorder %s10, 0
      %p30 = por %p28, %p29
      %p31 = scmp.ne.s32.totalorder %s20, %s23
      %p32 = scmp.eq.s32.totalorder %s15, 1
      %p33 = por %p31, %p32
      %p34 = scmp.ne.s32.totalorder %s23, %s24
      %p35 = scmp.eq.s32.totalorder %s15, 0
      %p36 = por %p34, %p35
      %p37 = scmp.ne.s32.totalorder %s23, %s24
      %p38 = scmp.eq.s32.totalorder %s16, 1
      %p39 = por %p37, %p38
      %p41 = scmp.ne.s32.totalorder %s24, %s40
      %p42 = scmp.eq.s32.totalorder %s16, 0
      %p43 = por %p41, %p42
      %s45 = sadd.s32 %s44, 1
      %p48 = scmp.eq.s32.totalorder %s10, 1
      %p49 = scmp.ne.s32.totalorder %s44, %s46
      %p50 = scmp.eq.s32.totalorder %s10, 0
      %p51 = por %p49, %p50
      %p52 = scmp.ne.s32.totalorder %s44, %s46
      %p53 = scmp.eq.s32.totalorder %s15, 1
      %p54 = por %p52, %p53
      %p55 = scmp.ne.s32.totalorder %s46, %s47
      %p56 = scmp.eq.s32.totalorder %s15, 0
      %p57 = por %p55, %p56
      %p58 = scmp.ne.s32.totalorder %s46, %s47
      %p59 = scmp.eq.s32.totalorder %s16, 1
      %p60 = por %p58, %p59
      %p62 = scmp.ne.s32.totalorder %s47, %s61
      %p63 = scmp.eq.s32.totalorder %s16, 0
      %p64 = por %p62, %p63
      %s66 = sadd.s32 %s65, 1
      %p69 = scmp.eq.s32.totalorder %s10, 1
      %p70 = scmp.ne.s32.totalorder %s65, %s67
      %p71 = scmp.eq.s32.totalorder %s10, 0
      %p72 = por %p70, %p71
      %p73 = scmp.ne.s32.totalorder %s65, %s67
      %p74 = scmp.eq.s32.totalorder %s15, 1
      %p75 = por %p73, %p74
      %p76 = scmp.ne.s32.totalorder %s67, %s68
      %p77 = scmp.eq.s32.totalorder %s15, 0
      %p78 = por %p76, %p77
      %p79 = scmp.ne.s32.totalorder %s67, %s68
      %p80 = scmp.eq.s32.totalorder %s16, 1
      %p81 = por %p79, %p80
      %p83 = scmp.ne.s32.totalorder %s68, %s82
      %p84 = scmp.eq.s32.totalorder %s16, 0
      %p85 = por %p83, %p84
      %s86 = ssub.s32 %s10, %s17
      %p87 = scmp.eq.s32.totalorder %s86, 0
      %s89 = sadd.s32 %s88, 1
      %s90 = scalar_select %p87, %s88, %s89
      %p93 = pneg %p87
      %p94 = scmp.eq.s32.totalorder %s10, 1
      %p95 = por %p93, %p94
      %p96 = scmp.ne.s32.totalorder %s88, %s91
      %p97 = scmp.eq.s32.totalorder %s10, 0
      %p98 = por %p96, %p97
      %p99 = scmp.ne.s32.totalorder %s88, %s91
      %p100 = scmp.eq.s32.totalorder %s15, 1
      %p101 = por %p99, %p100
      %p102 = scmp.ne.s32.totalorder %s91, %s92
      %p103 = scmp.eq.s32.totalorder %s15, 0
      %p104 = por %p102, %p103
      %p105 = scmp.ne.s32.totalorder %s91, %s92
      %p106 = scmp.eq.s32.totalorder %s16, 1
      %p107 = por %p105, %p106
      %p109 = scmp.ne.s32.totalorder %s92, %s108
      %p110 = scmp.eq.s32.totalorder %s16, 0
      %p111 = por %p109, %p110
      %s112 = ssub.s32 %s10, %s17
      %p113 = scmp.eq.s32.totalorder %s112, 0
      %s115 = sadd.s32 %s114, 1
      %s116 = scalar_select %p113, %s114, %s115
      %p119 = pneg %p113
      %p120 = scmp.eq.s32.totalorder %s10, 1
      %p121 = por %p119, %p120
      %p122 = scmp.ne.s32.totalorder %s114, %s117
      %p123 = scmp.eq.s32.totalorder %s10, 0
      %p124 = por %p122, %p123
      %p125 = scmp.ne.s32.totalorder %s114, %s117
      %p126 = scmp.eq.s32.totalorder %s15, 1
      %p127 = por %p125, %p126
      %p128 = scmp.ne.s32.totalorder %s117, %s118
      %p129 = scmp.eq.s32.totalorder %s15, 0
      %p130 = por %p128, %p129
      %p131 = scmp.ne.s32.totalorder %s117, %s118
      %p132 = scmp.eq.s32.totalorder %s16, 1
      %p133 = por %p131, %p132
      %p135 = scmp.ne.s32.totalorder %s118, %s134
      %p136 = scmp.eq.s32.totalorder %s16, 0
      %p137 = por %p135, %p136
      %p138 = scmp.le.s32.totalorder 1, %s10
      %p139 = scmp.lt.s32.totalorder %s10, 3
      %p140 = pnand %p138, %p139
      %p141 = pneg %p140
      // Predicated region
      $region9: #{network_forward.17} parent=5 // pred_check
        _
      $region10: #{network_forward.17} parent=5 // pred_check_branch
        %143 = sbr.rel (%p140) target = $region12
      $region11: #{network_forward.17} parent=5 // pred_region
        %s144 = ssub.s32 %s10, 1
        // Predicated region
        $region13: #{network_forward.17} parent=11 // pred_check
          %p145 = pneg %p57
        $region14: #{network_forward.17} parent=11 // pred_check_branch
          %147 = sbr.rel (%p145) target = $region16
        $region15: #{network_forward.17} parent=11 // pred_region
          _
        $region16: #{network_forward.17} parent=11 // pred_fallthru
          _
        // Predicated region
        $region17: #{network_forward.17} parent=11 // pred_check
          %p148 = pneg %p78
        $region18: #{network_forward.17} parent=11 // pred_check_branch
          %150 = sbr.rel (%p148) target = $region20
        $region19: #{network_forward.17} parent=11 // pred_region
          _
        $region20: #{network_forward.17} parent=11 // pred_fallthru
          _
      $region12: #{network_forward.17} parent=5 // pred_fallthru
        _
      %p151 = scmp.lt.s32.totalorder %s10, 2
      // Predicated region
      $region21: #{network_forward.17} parent=5 // pred_check
        %p152 = pneg %p151
      $region22: #{network_forward.17} parent=5 // pred_check_branch
        %154 = sbr.rel (%p152) target = $region24
      $region23: #{network_forward.17} parent=5 // pred_region
        // Predicated region
        $region25: #{network_forward.17} parent=23 // pred_check
          %p155 = pneg %p30
        $region26: #{network_forward.17} parent=23 // pred_check_branch
          %157 = sbr.rel (%p155) target = $region28
        $region27: #{network_forward.17} parent=23 // pred_region
          %s158 = smul.u32 29, %s10
          %s159 = ssub.s32 57, %s158
          %p160 = scmp.lt.s32.totalorder %s159, 29
          %s161 = scalar_select %p160, %s159, 29
          %s162 = smul.u32 4, %s161
          %p163 = scmp.lt.s32.totalorder %s158, 56
          %s164 = scalar_select %p163, %s158, 56
          %s165 = smul.addr %s164, 4
          %s166 = scalar_lea.vmem %s0, %s165
          %s167 = smul.u32 29, %s10
          %s168 = ssub.s32 57, %s167
          %p169 = scmp.lt.s32.totalorder %s168, 29
          %s170 = scalar_select %p169, %s168, 29
          %s171 = smul.u32 4, %s170
        $region28: #{network_forward.17} parent=23 // pred_fallthru
          _
        // Predicated region
        $region29: #{network_forward.17} parent=23 // pred_check
          %p172 = pneg %p98
        $region30: #{network_forward.17} parent=23 // pred_check_branch
          %174 = sbr.rel (%p172) target = $region32
        $region31: #{network_forward.17} parent=23 // pred_region
          %s175 = smul.u32 29, %s10
          %s176 = ssub.s32 57, %s175
          %p177 = scmp.lt.s32.totalorder %s176, 29
          %s178 = scalar_select %p177, %s176, 29
          %s179 = smul.u32 4, %s178
          %p180 = scmp.lt.s32.totalorder %s175, 56
          %s181 = scalar_select %p180, %s175, 56
          %s182 = smul.addr %s181, 4
          %s183 = scalar_lea.vmem %s3, %s182
          %s184 = smul.u32 29, %s10
          %s185 = ssub.s32 57, %s184
          %p186 = scmp.lt.s32.totalorder %s185, 29
          %s187 = scalar_select %p186, %s185, 29
          %s188 = smul.u32 4, %s187
        $region32: #{network_forward.17} parent=23 // pred_fallthru
          _
      $region24: #{network_forward.17} parent=5 // pred_fallthru
        _
      %p189 = scmp.le.s32.totalorder 1, %s10
      %p190 = scmp.lt.s32.totalorder %s10, 3
      %p191 = pnand %p189, %p190
      %p192 = pneg %p191
      // Predicated region
      $region33: #{network_forward.17} parent=5 // pred_check
        _
      $region34: #{network_forward.17} parent=5 // pred_check_branch
        %194 = sbr.rel (%p191) target = $region36
      $region35: #{network_forward.17} parent=5 // pred_region
        %s195 = ssub.s32 %s10, 1
        %s196 = smul.u32 29, %s15
        %s197 = ssub.s32 57, %s196
        %p198 = scmp.lt.s32.totalorder %s197, 29
        %s199 = scalar_select %p198, %s197, 29
        %s200 = smul.u32 4, %s199
        %p201 = scmp.lt.s32.totalorder %s196, 56
        %s202 = scalar_select %p201, %s196, 56
        %s203 = smul.addr %s202, 4
        %s204 = scalar_lea.vmem %s0, %s203
        %p205 = pneg %p36
        %p206 = pneg %p33
        %p207 = pneg %p57
        %p208 = pneg %p54
        %p209 = pneg %p78
        %p210 = pneg %p75
        %s211 = smul.u32 29, %s15
        %s212 = ssub.s32 57, %s211
        %p213 = scmp.lt.s32.totalorder %s212, 29
        %s214 = scalar_select %p213, %s212, 29
        %s215 = smul.u32 4, %s214
        %p216 = scmp.lt.s32.totalorder %s211, 56
        %s217 = scalar_select %p216, %s211, 56
        %s218 = smul.addr %s217, 4
        %s219 = scalar_lea.vmem %s3, %s218
        %p220 = pneg %p104
        %p221 = pneg %p101
        %p222 = pneg %p130
        %p223 = pneg %p127
        %s224 = sand.u32 %s117, 1
        %s225 = sand.u32 %s117, 1
        %s226 = smul.addr %s225, 116
        %s227 = scalar_lea.vmem [#allocation2], %s226
        %s228 = smul.u32 29, %s15
        %s229 = ssub.s32 57, %s228
        %p230 = scmp.lt.s32.totalorder %s229, 29
        %s231 = scalar_select %p230, %s229, 29
        %s232 = smul.u32 4, %s231
        %p233 = scmp.lt.s32.totalorder %s228, 56
        %s234 = scalar_select %p233, %s228, 56
        %s235 = smul.addr %s234, 4
        %s236 = scalar_lea.vmem %s0, %s235
        %s237 = smul.u32 29, %s15
        %s238 = ssub.s32 57, %s237
        %p239 = scmp.lt.s32.totalorder %s238, 29
        %s240 = scalar_select %p239, %s238, 29
        %s241 = smul.u32 4, %s240
        %s242 = smul.u32 29, %s15
        %s243 = ssub.s32 57, %s242
        %p244 = scmp.lt.s32.totalorder %s243, 29
        %s245 = scalar_select %p244, %s243, 29
        %s246 = smul.u32 4, %s245
        %p247 = scmp.lt.s32.totalorder %s242, 56
        %s248 = scalar_select %p247, %s242, 56
        %s249 = smul.addr %s248, 4
        %s250 = scalar_lea.vmem %s3, %s249
        %s251 = smul.u32 29, %s15
        %s252 = ssub.s32 57, %s251
        %p253 = scmp.lt.s32.totalorder %s252, 29
        %s254 = scalar_select %p253, %s252, 29
        %s255 = smul.u32 4, %s254
        %s256 = smul.u32 29, %s15
        %s257 = ssub.s32 57, %s256
        %p258 = scmp.lt.s32.totalorder %s257, 29
        %s259 = scalar_select %p258, %s257, 29
        %s260 = smul.u32 4, %s259
        %v262 = vld [vmem:[%s236] sm:$0xf]
        %v263 = vld [vmem:[%s236 + $0x4] sm:$0xf]
        %v264 = vld [vmem:[%s236 + $0x8] sm:$0xf]
        %v265 = vld [vmem:[%s236 + $0xc] sm:$0xf]
        %v266 = vld [vmem:[%s236 + $0x10] sm:$0xf]
        %v267 = vld [vmem:[%s236 + $0x14] sm:$0xf]
        %v268 = vld [vmem:[%s236 + $0x18] sm:$0xf]
        %v269 = vld [vmem:[%s236 + $0x1c] sm:$0xf]
        %v270 = vld [vmem:[%s236 + $0x20] sm:$0xf]
        %v271 = vld [vmem:[%s236 + $0x24] sm:$0xf]
        %v272 = vld [vmem:[%s236 + $0x28] sm:$0xf]
        %v273 = vld [vmem:[%s236 + $0x2c] sm:$0xf]
        %v274 = vld [vmem:[%s236 + $0x30] sm:$0xf]
        %v275 = vld [vmem:[%s236 + $0x34] sm:$0xf]
        %v276 = vld [vmem:[%s236 + $0x38] sm:$0xf]
        %v277 = vld [vmem:[%s236 + $0x3c] sm:$0xf]
        %v278 = vld [vmem:[%s236 + $0x40] sm:$0xf]
        %v279 = vld [vmem:[%s236 + $0x44] sm:$0xf]
        %v280 = vld [vmem:[%s236 + $0x48] sm:$0xf]
        %v281 = vld [vmem:[%s236 + $0x4c] sm:$0xf]
        %v282 = vld [vmem:[%s236 + $0x50] sm:$0xf]
        %v283 = vld [vmem:[%s236 + $0x54] sm:$0xf]
        %v284 = vld [vmem:[%s236 + $0x58] sm:$0xf]
        %v285 = vld [vmem:[%s236 + $0x5c] sm:$0xf]
        %v286 = vld [vmem:[%s236 + $0x60] sm:$0xf]
        %v287 = vld [vmem:[%s236 + $0x64] sm:$0xf]
        %v288 = vld [vmem:[%s236 + $0x68] sm:$0xf]
        %v289 = vld [vmem:[%s236 + $0x6c] sm:$0xf]
        %v290 = vld [vmem:[%s236 + $0x70] sm:$0xf]
        %v291 = vld [vmem:[%s1] sm:$0xf]
        %v292 = vld [vmem:[%s1 + $0x4] sm:$0xf]
        %v293 = vld [vmem:[%s1 + $0x8] sm:$0xf]
        %v294 = vld [vmem:[%s1 + $0xc] sm:$0xf]
        %v295 = vld [vmem:[%s1 + $0x10] sm:$0xf]
        %v296 = vld [vmem:[%s1 + $0x14] sm:$0xf]
        %v297 = vld [vmem:[%s1 + $0x18] sm:$0xf]
        %v298 = vld [vmem:[%s1 + $0x1c] sm:$0xf]
        %v299 = vld [vmem:[%s1 + $0x20] sm:$0xf]
        %v300 = vld [vmem:[%s2] sm:$0x1]
        %v302 = vperm.slane %v300, 0
        %v333 = vunpack.c.l.b16 %v262
        %v334 = vunpack.c.l.b16 %v263
        %v335 = vunpack.c.l.b16 %v264
        %v336 = vunpack.c.l.b16 %v265
        %v337 = vunpack.c.l.b16 %v266
        %v338 = vunpack.c.l.b16 %v267
        %v339 = vunpack.c.l.b16 %v268
        %v340 = vunpack.c.l.b16 %v269
        %v341 = vunpack.c.l.b16 %v270
        %v342 = vunpack.c.l.b16 %v271
        %v343 = vunpack.c.l.b16 %v272
        %v344 = vunpack.c.l.b16 %v273
        %v345 = vunpack.c.l.b16 %v274
        %v346 = vunpack.c.l.b16 %v275
        %v347 = vunpack.c.l.b16 %v276
        %v348 = vunpack.c.l.b16 %v277
        %v349 = vunpack.c.l.b16 %v278
        %v350 = vunpack.c.l.b16 %v279
        %v351 = vunpack.c.l.b16 %v280
        %v352 = vunpack.c.l.b16 %v281
        %v353 = vunpack.c.l.b16 %v282
        %v354 = vunpack.c.l.b16 %v283
        %v355 = vunpack.c.l.b16 %v284
        %v356 = vunpack.c.l.b16 %v285
        %v357 = vunpack.c.l.b16 %v286
        %v358 = vunpack.c.l.b16 %v287
        %v359 = vunpack.c.l.b16 %v288
        %v360 = vunpack.c.l.b16 %v289
        %v361 = vunpack.c.l.b16 %v290
        %v362 = vpack.c.b16 %v334, %v333
        %v363 = vpack.c.b16 %v336, %v335
        %v364 = vpack.c.b16 %v338, %v337
        %v365 = vpack.c.b16 %v340, %v339
        %v366 = vpack.c.b16 %v342, %v341
        %v367 = vpack.c.b16 %v344, %v343
        %v368 = vpack.c.b16 %v346, %v345
        %v369 = vpack.c.b16 %v348, %v347
        %v370 = vpack.c.b16 %v350, %v349
        %v371 = vpack.c.b16 %v352, %v351
        %v372 = vpack.c.b16 %v354, %v353
        %v373 = vpack.c.b16 %v356, %v355
        %v374 = vpack.c.b16 %v358, %v357
        %v375 = vpack.c.b16 %v360, %v359
        %v376 = vpack.c.b16 %v361, %v361
        %v386 = vunpack.c.l.b16 %v291
        %v387 = vunpack.c.l.b16 %v292
        %v388 = vunpack.c.l.b16 %v293
        %v389 = vunpack.c.l.b16 %v294
        %v390 = vunpack.c.l.b16 %v295
        %v391 = vunpack.c.l.b16 %v296
        %v392 = vunpack.c.l.b16 %v297
        %v393 = vunpack.c.l.b16 %v298
        %v394 = vunpack.c.l.b16 %v299
        %v395 = vpack.c.b16 %v387, %v386
        %v396 = vpack.c.b16 %v389, %v388
        %v397 = vpack.c.b16 %v391, %v390
        %v398 = vpack.c.b16 %v393, %v392
        %v399 = vpack.c.b16 %v394, %v394
        %vm404 = vcmask 588800
        %v406 = vsel %vm404, %v362, 0
        %v409 = vsel %vm404, %v363, 0
        %v412 = vsel %vm404, %v364, 0
        %v415 = vsel %vm404, %v365, 0
        %v418 = vsel %vm404, %v366, 0
        %v421 = vsel %vm404, %v367, 0
        %v424 = vsel %vm404, %v368, 0
        %v427 = vsel %vm404, %v369, 0
        %v430 = vsel %vm404, %v370, 0
        %v433 = vsel %vm404, %v371, 0
        %v436 = vsel %vm404, %v372, 0
        %v439 = vsel %vm404, %v373, 0
        %v442 = vsel %vm404, %v374, 0
        %v445 = vsel %vm404, %v375, 0
        %v448 = vsel %vm404, %v376, 0
        %vm450 = vcmask 1043456
        %v452 = vsel %vm450, %v399, 0
        %454 = vmatpush.bf16.msra.mxu0 0
        %455 = vmatpush.bf16.msra.mxu0 0
        %456 = vmatpush.bf16.msra.mxu0 0
        %457 = vmatpush.bf16.msra.mxu0 %v452
        %458 = vmatpush.bf16.msra.mxu0 %v398
        %459 = vmatpush.bf16.msra.mxu0 %v397
        %460 = vmatpush.bf16.msra.mxu0 %v396
        %461 = vmatpush.bf16.msra.mxu0 %v395
        %462 = vmatmul.bf16.gmra.mxu0 %v406
        %v463 = vpop.f32.mrf.mxu0
        %v464 = vadd.f32 %v302, %v463
        %v465 = vpop.f32.mrf.mxu0
        %v466 = vadd.f32 %v302, %v465
        %467 = vmatmul.bf16.gmra.mxu0 %v409
        %v468 = vpop.f32.mrf.mxu0
        %v469 = vadd.f32 %v302, %v468
        %v470 = vpop.f32.mrf.mxu0
        %v471 = vadd.f32 %v302, %v470
        %472 = vmatmul.bf16.gmra.mxu0 %v412
        %v473 = vpop.f32.mrf.mxu0
        %v474 = vadd.f32 %v302, %v473
        %v475 = vpop.f32.mrf.mxu0
        %v476 = vadd.f32 %v302, %v475
        %477 = vmatmul.bf16.gmra.mxu0 %v415
        %v478 = vpop.f32.mrf.mxu0
        %v479 = vadd.f32 %v302, %v478
        %v480 = vpop.f32.mrf.mxu0
        %v481 = vadd.f32 %v302, %v480
        %482 = vmatmul.bf16.gmra.mxu0 %v418
        %v483 = vpop.f32.mrf.mxu0
        %v484 = vadd.f32 %v302, %v483
        %v485 = vpop.f32.mrf.mxu0
        %v486 = vadd.f32 %v302, %v485
        %487 = vmatmul.bf16.gmra.mxu0 %v421
        %v488 = vpop.f32.mrf.mxu0
        %v489 = vadd.f32 %v302, %v488
        %v490 = vpop.f32.mrf.mxu0
        %v491 = vadd.f32 %v302, %v490
        %492 = vmatmul.bf16.gmra.mxu0 %v424
        %v493 = vpop.f32.mrf.mxu0
        %v494 = vadd.f32 %v302, %v493
        %v495 = vpop.f32.mrf.mxu0
        %v496 = vadd.f32 %v302, %v495
        %497 = vmatmul.bf16.gmra.mxu0 %v427
        %v498 = vpop.f32.mrf.mxu0
        %v499 = vadd.f32 %v302, %v498
        %v500 = vpop.f32.mrf.mxu0
        %v501 = vadd.f32 %v302, %v500
        %502 = vmatmul.bf16.gmra.mxu0 %v430
        %v503 = vpop.f32.mrf.mxu0
        %v504 = vadd.f32 %v302, %v503
        %v505 = vpop.f32.mrf.mxu0
        %v506 = vadd.f32 %v302, %v505
        %507 = vmatmul.bf16.gmra.mxu0 %v433
        %v508 = vpop.f32.mrf.mxu0
        %v509 = vadd.f32 %v302, %v508
        %v510 = vpop.f32.mrf.mxu0
        %v511 = vadd.f32 %v302, %v510
        %512 = vmatmul.bf16.gmra.mxu0 %v436
        %v513 = vpop.f32.mrf.mxu0
        %v514 = vadd.f32 %v302, %v513
        %v515 = vpop.f32.mrf.mxu0
        %v516 = vadd.f32 %v302, %v515
        %517 = vmatmul.bf16.gmra.mxu0 %v439
        %v518 = vpop.f32.mrf.mxu0
        %v519 = vadd.f32 %v302, %v518
        %v520 = vpop.f32.mrf.mxu0
        %v521 = vadd.f32 %v302, %v520
        %522 = vmatmul.bf16.gmra.mxu0 %v442
        %v523 = vpop.f32.mrf.mxu0
        %v524 = vadd.f32 %v302, %v523
        %v525 = vpop.f32.mrf.mxu0
        %v526 = vadd.f32 %v302, %v525
        %527 = vmatmul.bf16.gmra.mxu0 %v445
        %v528 = vpop.f32.mrf.mxu0
        %v529 = vadd.f32 %v302, %v528
        %v530 = vpop.f32.mrf.mxu0
        %v531 = vadd.f32 %v302, %v530
        %532 = vmatmul.bf16.gmra.mxu0 %v448
        %v533 = vpop.f32.mrf.mxu0
        %v534 = vadd.f32 %v302, %v533
        %v535 = vpop.f32.mrf.mxu0
        %536 = vdwg.mxu0
        %v537 = vld [vmem:[%s250] sm:$0xf]
        %v538 = vld [vmem:[%s250 + $0x4] sm:$0xf]
        %v539 = vld [vmem:[%s250 + $0x8] sm:$0xf]
        %v540 = vld [vmem:[%s250 + $0xc] sm:$0xf]
        %v541 = vld [vmem:[%s250 + $0x10] sm:$0xf]
        %v542 = vld [vmem:[%s250 + $0x14] sm:$0xf]
        %v543 = vld [vmem:[%s250 + $0x18] sm:$0xf]
        %v544 = vld [vmem:[%s250 + $0x1c] sm:$0xf]
        %v545 = vld [vmem:[%s250 + $0x20] sm:$0xf]
        %v546 = vld [vmem:[%s250 + $0x24] sm:$0xf]
        %v547 = vld [vmem:[%s250 + $0x28] sm:$0xf]
        %v548 = vld [vmem:[%s250 + $0x2c] sm:$0xf]
        %v549 = vld [vmem:[%s250 + $0x30] sm:$0xf]
        %v550 = vld [vmem:[%s250 + $0x34] sm:$0xf]
        %v551 = vld [vmem:[%s250 + $0x38] sm:$0xf]
        %v552 = vld [vmem:[%s250 + $0x3c] sm:$0xf]
        %v553 = vld [vmem:[%s250 + $0x40] sm:$0xf]
        %v554 = vld [vmem:[%s250 + $0x44] sm:$0xf]
        %v555 = vld [vmem:[%s250 + $0x48] sm:$0xf]
        %v556 = vld [vmem:[%s250 + $0x4c] sm:$0xf]
        %v557 = vld [vmem:[%s250 + $0x50] sm:$0xf]
        %v558 = vld [vmem:[%s250 + $0x54] sm:$0xf]
        %v559 = vld [vmem:[%s250 + $0x58] sm:$0xf]
        %v560 = vld [vmem:[%s250 + $0x5c] sm:$0xf]
        %v561 = vld [vmem:[%s250 + $0x60] sm:$0xf]
        %v562 = vld [vmem:[%s250 + $0x64] sm:$0xf]
        %v563 = vld [vmem:[%s250 + $0x68] sm:$0xf]
        %v564 = vld [vmem:[%s250 + $0x6c] sm:$0xf]
        %v565 = vld [vmem:[%s250 + $0x70] sm:$0xf]
        %v566 = vunpack.c.l.bf16 %v537
        %v567 = vunpack.c.l.bf16 %v538
        %v568 = vunpack.c.l.bf16 %v539
        %v569 = vunpack.c.l.bf16 %v540
        %v570 = vunpack.c.l.bf16 %v541
        %v571 = vunpack.c.l.bf16 %v542
        %v572 = vunpack.c.l.bf16 %v543
        %v573 = vunpack.c.l.bf16 %v544
        %v574 = vunpack.c.l.bf16 %v545
        %v575 = vunpack.c.l.bf16 %v546
        %v576 = vunpack.c.l.bf16 %v547
        %v577 = vunpack.c.l.bf16 %v548
        %v578 = vunpack.c.l.bf16 %v549
        %v579 = vunpack.c.l.bf16 %v550
        %v580 = vunpack.c.l.bf16 %v551
        %v581 = vunpack.c.l.bf16 %v552
        %v582 = vunpack.c.l.bf16 %v553
        %v583 = vunpack.c.l.bf16 %v554
        %v584 = vunpack.c.l.bf16 %v555
        %v585 = vunpack.c.l.bf16 %v556
        %v586 = vunpack.c.l.bf16 %v557
        %v587 = vunpack.c.l.bf16 %v558
        %v588 = vunpack.c.l.bf16 %v559
        %v589 = vunpack.c.l.bf16 %v560
        %v590 = vunpack.c.l.bf16 %v561
        %v591 = vunpack.c.l.bf16 %v562
        %v592 = vunpack.c.l.bf16 %v563
        %v593 = vunpack.c.l.bf16 %v564
        %v594 = vunpack.c.l.bf16 %v565
        %v595 = vadd.f32 %v464, %v566
        %v596 = vadd.f32 %v466, %v567
        %v597 = vadd.f32 %v469, %v568
        %v598 = vadd.f32 %v471, %v569
        %v599 = vadd.f32 %v474, %v570
        %v600 = vadd.f32 %v476, %v571
        %v601 = vadd.f32 %v479, %v572
        %v602 = vadd.f32 %v481, %v573
        %v603 = vadd.f32 %v484, %v574
        %v604 = vadd.f32 %v486, %v575
        %v605 = vadd.f32 %v489, %v576
        %v606 = vadd.f32 %v491, %v577
        %v607 = vadd.f32 %v494, %v578
        %v608 = vadd.f32 %v496, %v579
        %v609 = vadd.f32 %v499, %v580
        %v610 = vadd.f32 %v501, %v581
        %v611 = vadd.f32 %v504, %v582
        %v612 = vadd.f32 %v506, %v583
        %v613 = vadd.f32 %v509, %v584
        %v614 = vadd.f32 %v511, %v585
        %v615 = vadd.f32 %v514, %v586
        %v616 = vadd.f32 %v516, %v587
        %v617 = vadd.f32 %v519, %v588
        %v618 = vadd.f32 %v521, %v589
        %v619 = vadd.f32 %v524, %v590
        %v620 = vadd.f32 %v526, %v591
        %v621 = vadd.f32 %v529, %v592
        %v622 = vadd.f32 %v531, %v593
        %v623 = vadd.f32 %v534, %v594
        %v624 = vmax.f32 %v595, 0.0
        %v625 = vmax.f32 %v596, 0.0
        %v626 = vmax.f32 %v597, 0.0
        %v627 = vmax.f32 %v598, 0.0
        %v628 = vmax.f32 %v599, 0.0
        %v629 = vmax.f32 %v600, 0.0
        %v630 = vmax.f32 %v601, 0.0
        %v631 = vmax.f32 %v602, 0.0
        %v632 = vmax.f32 %v603, 0.0
        %v633 = vmax.f32 %v604, 0.0
        %v634 = vmax.f32 %v605, 0.0
        %v635 = vmax.f32 %v606, 0.0
        %v636 = vmax.f32 %v607, 0.0
        %v637 = vmax.f32 %v608, 0.0
        %v638 = vmax.f32 %v609, 0.0
        %v639 = vmax.f32 %v610, 0.0
        %v640 = vmax.f32 %v611, 0.0
        %v641 = vmax.f32 %v612, 0.0
        %v642 = vmax.f32 %v613, 0.0
        %v643 = vmax.f32 %v614, 0.0
        %v644 = vmax.f32 %v615, 0.0
        %v645 = vmax.f32 %v616, 0.0
        %v646 = vmax.f32 %v617, 0.0
        %v647 = vmax.f32 %v618, 0.0
        %v648 = vmax.f32 %v619, 0.0
        %v649 = vmax.f32 %v620, 0.0
        %v650 = vmax.f32 %v621, 0.0
        %v651 = vmax.f32 %v622, 0.0
        %v652 = vmax.f32 %v623, 0.0
        %v653 = vpack.c.bf16 %v624, %v624
        %v654 = vpack.c.bf16 %v625, %v625
        %v655 = vpack.c.bf16 %v626, %v626
        %v656 = vpack.c.bf16 %v627, %v627
        %v657 = vpack.c.bf16 %v628, %v628
        %v658 = vpack.c.bf16 %v629, %v629
        %v659 = vpack.c.bf16 %v630, %v630
        %v660 = vpack.c.bf16 %v631, %v631
        %v661 = vpack.c.bf16 %v632, %v632
        %v662 = vpack.c.bf16 %v633, %v633
        %v663 = vpack.c.bf16 %v634, %v634
        %v664 = vpack.c.bf16 %v635, %v635
        %v665 = vpack.c.bf16 %v636, %v636
        %v666 = vpack.c.bf16 %v637, %v637
        %v667 = vpack.c.bf16 %v638, %v638
        %v668 = vpack.c.bf16 %v639, %v639
        %v669 = vpack.c.bf16 %v640, %v640
        %v670 = vpack.c.bf16 %v641, %v641
        %v671 = vpack.c.bf16 %v642, %v642
        %v672 = vpack.c.bf16 %v643, %v643
        %v673 = vpack.c.bf16 %v644, %v644
        %v674 = vpack.c.bf16 %v645, %v645
        %v675 = vpack.c.bf16 %v646, %v646
        %v676 = vpack.c.bf16 %v647, %v647
        %v677 = vpack.c.bf16 %v648, %v648
        %v678 = vpack.c.bf16 %v649, %v649
        %v679 = vpack.c.bf16 %v650, %v650
        %v680 = vpack.c.bf16 %v651, %v651
        %v681 = vpack.c.bf16 %v652, %v652
        %vm682 = vcmask 60416
        %683 = vst.msk [vmem:[%s227] sm:$0xf] %vm682, %v653
        %684 = vst.msk [vmem:[%s227 + $0x4] sm:$0xf] %vm682, %v654
        %685 = vst.msk [vmem:[%s227 + $0x8] sm:$0xf] %vm682, %v655
        %686 = vst.msk [vmem:[%s227 + $0xc] sm:$0xf] %vm682, %v656
        %687 = vst.msk [vmem:[%s227 + $0x10] sm:$0xf] %vm682, %v657
        %688 = vst.msk [vmem:[%s227 + $0x14] sm:$0xf] %vm682, %v658
        %689 = vst.msk [vmem:[%s227 + $0x18] sm:$0xf] %vm682, %v659
        %690 = vst.msk [vmem:[%s227 + $0x1c] sm:$0xf] %vm682, %v660
        %691 = vst.msk [vmem:[%s227 + $0x20] sm:$0xf] %vm682, %v661
        %692 = vst.msk [vmem:[%s227 + $0x24] sm:$0xf] %vm682, %v662
        %693 = vst.msk [vmem:[%s227 + $0x28] sm:$0xf] %vm682, %v663
        %694 = vst.msk [vmem:[%s227 + $0x2c] sm:$0xf] %vm682, %v664
        %695 = vst.msk [vmem:[%s227 + $0x30] sm:$0xf] %vm682, %v665
        %696 = vst.msk [vmem:[%s227 + $0x34] sm:$0xf] %vm682, %v666
        %697 = vst.msk [vmem:[%s227 + $0x38] sm:$0xf] %vm682, %v667
        %698 = vst.msk [vmem:[%s227 + $0x3c] sm:$0xf] %vm682, %v668
        %699 = vst.msk [vmem:[%s227 + $0x40] sm:$0xf] %vm682, %v669
        %700 = vst.msk [vmem:[%s227 + $0x44] sm:$0xf] %vm682, %v670
        %701 = vst.msk [vmem:[%s227 + $0x48] sm:$0xf] %vm682, %v671
        %702 = vst.msk [vmem:[%s227 + $0x4c] sm:$0xf] %vm682, %v672
        %703 = vst.msk [vmem:[%s227 + $0x50] sm:$0xf] %vm682, %v673
        %704 = vst.msk [vmem:[%s227 + $0x54] sm:$0xf] %vm682, %v674
        %705 = vst.msk [vmem:[%s227 + $0x58] sm:$0xf] %vm682, %v675
        %706 = vst.msk [vmem:[%s227 + $0x5c] sm:$0xf] %vm682, %v676
        %707 = vst.msk [vmem:[%s227 + $0x60] sm:$0xf] %vm682, %v677
        %708 = vst.msk [vmem:[%s227 + $0x64] sm:$0xf] %vm682, %v678
        %709 = vst.msk [vmem:[%s227 + $0x68] sm:$0xf] %vm682, %v679
        %710 = vst.msk [vmem:[%s227 + $0x6c] sm:$0xf] %vm682, %v680
        %711 = vst.msk [vmem:[%s227 + $0x70] sm:$0xf] %vm682, %v681
        %s712 = sand.u32 %s117, 1
        %s713 = sand.u32 %s117, 1
        %s714 = smul.addr %s713, 116
        %s715 = scalar_lea.vmem [#allocation2], %s714
        // Predicated region
        $region37: #{network_forward.17} parent=35 // pred_check
          %p716 = pneg %p127
        $region38: #{network_forward.17} parent=35 // pred_check_branch
          %718 = sbr.rel (%p716) target = $region40
        $region39: #{network_forward.17} parent=35 // pred_region
          %s719 = smul.u32 29, %s15
          %s720 = ssub.s32 57, %s719
          %p721 = scmp.lt.s32.totalorder %s720, 29
          %s722 = scalar_select %p721, %s720, 29
          %s723 = smul.u32 4, %s722
          %p724 = scmp.ne.s32.totalorder 0, %s723
          %s725 = smul.addr %s719, 4
          %s726 = scalar_lea.vmem %s4, %s725
          // Predicated region
          $region41: #{network_forward.17} parent=39 // pred_check
            %p727 = pneg %p724
          $region42: #{network_forward.17} parent=39 // pred_check_branch
            %729 = sbr.rel (%p727) target = $region44
          $region43: #{network_forward.17} parent=39 // pred_region
            // Predicated region
            $region45: #{network_forward.17} parent=43 // pred_check
              _
            $region46: #{network_forward.17} parent=43 // pred_check_branch
              %731 = sbr.rel target = $region48
            $region47: #{network_forward.17} parent=43 // pred_region
              // Predicated region
              $region67: #{network_forward.17} parent=47 // pred_check
                _
              $region68: #{network_forward.17} parent=47 // pred_check_branch
                %838 = sbr.rel (0) target = $region70
              $region69: #{network_forward.17} parent=47 // pred_region
                %s840 = ssub.s32 16, 1
                %s841 = sdiv.u32.pop %s722, 29
                %s842 = srem.u32.pop %s722, 29
                // While loop
                $region71: #{network_forward.17} parent=69 // loop_pre_header
                  _
                $region72: #{network_forward.17} parent=69 // loop_header
                  %s844 = sphi 0, %s846
                  %p845 = scmp.ge.s32.totalorder %s844, %s841
                  %s849 = sphi 0, %s912
                  %s850 = sphi %s715, %s915
                  %s851 = sphi %s726, %s916
                $region73: #{network_forward.17} parent=69 // loop_header_branch
                  %848 = sbr.rel (%p845) target = $region77
                $region74: #{network_forward.17} parent=69 // loop_body
                  %v852 = vld [vmem:[%s850] sm:%s840]
                  %853 = vst [vmem:[%s851] sm:%s840] %v852
                  %v854 = vld [vmem:[%s850 + $0x4] sm:%s840]
                  %855 = vst [vmem:[%s851 + $0x4] sm:%s840] %v854
                  %v856 = vld [vmem:[%s850 + $0x8] sm:%s840]
                  %857 = vst [vmem:[%s851 + $0x8] sm:%s840] %v856
                  %v858 = vld [vmem:[%s850 + $0xc] sm:%s840]
                  %859 = vst [vmem:[%s851 + $0xc] sm:%s840] %v858
                  %v860 = vld [vmem:[%s850 + $0x10] sm:%s840]
                  %861 = vst [vmem:[%s851 + $0x10] sm:%s840] %v860
                  %v862 = vld [vmem:[%s850 + $0x14] sm:%s840]
                  %863 = vst [vmem:[%s851 + $0x14] sm:%s840] %v862
                  %v864 = vld [vmem:[%s850 + $0x18] sm:%s840]
                  %865 = vst [vmem:[%s851 + $0x18] sm:%s840] %v864
                  %v866 = vld [vmem:[%s850 + $0x1c] sm:%s840]
                  %867 = vst [vmem:[%s851 + $0x1c] sm:%s840] %v866
                  %v868 = vld [vmem:[%s850 + $0x20] sm:%s840]
                  %869 = vst [vmem:[%s851 + $0x20] sm:%s840] %v868
                  %v870 = vld [vmem:[%s850 + $0x24] sm:%s840]
                  %871 = vst [vmem:[%s851 + $0x24] sm:%s840] %v870
                  %v872 = vld [vmem:[%s850 + $0x28] sm:%s840]
                  %873 = vst [vmem:[%s851 + $0x28] sm:%s840] %v872
                  %v874 = vld [vmem:[%s850 + $0x2c] sm:%s840]
                  %875 = vst [vmem:[%s851 + $0x2c] sm:%s840] %v874
                  %v876 = vld [vmem:[%s850 + $0x30] sm:%s840]
                  %877 = vst [vmem:[%s851 + $0x30] sm:%s840] %v876
                  %v878 = vld [vmem:[%s850 + $0x34] sm:%s840]
                  %879 = vst [vmem:[%s851 + $0x34] sm:%s840] %v878
                  %v880 = vld [vmem:[%s850 + $0x38] sm:%s840]
                  %881 = vst [vmem:[%s851 + $0x38] sm:%s840] %v880
                  %v882 = vld [vmem:[%s850 + $0x3c] sm:%s840]
                  %883 = vst [vmem:[%s851 + $0x3c] sm:%s840] %v882
                  %v884 = vld [vmem:[%s850 + $0x40] sm:%s840]
                  %885 = vst [vmem:[%s851 + $0x40] sm:%s840] %v884
                  %v886 = vld [vmem:[%s850 + $0x44] sm:%s840]
                  %887 = vst [vmem:[%s851 + $0x44] sm:%s840] %v886
                  %v888 = vld [vmem:[%s850 + $0x48] sm:%s840]
                  %889 = vst [vmem:[%s851 + $0x48] sm:%s840] %v888
                  %v890 = vld [vmem:[%s850 + $0x4c] sm:%s840]
                  %891 = vst [vmem:[%s851 + $0x4c] sm:%s840] %v890
                  %v892 = vld [vmem:[%s850 + $0x50] sm:%s840]
                  %893 = vst [vmem:[%s851 + $0x50] sm:%s840] %v892
                  %v894 = vld [vmem:[%s850 + $0x54] sm:%s840]
                  %895 = vst [vmem:[%s851 + $0x54] sm:%s840] %v894
                  %v896 = vld [vmem:[%s850 + $0x58] sm:%s840]
                  %897 = vst [vmem:[%s851 + $0x58] sm:%s840] %v896
                  %v898 = vld [vmem:[%s850 + $0x5c] sm:%s840]
                  %899 = vst [vmem:[%s851 + $0x5c] sm:%s840] %v898
                  %v900 = vld [vmem:[%s850 + $0x60] sm:%s840]
                  %901 = vst [vmem:[%s851 + $0x60] sm:%s840] %v900
                  %v902 = vld [vmem:[%s850 + $0x64] sm:%s840]
                  %903 = vst [vmem:[%s851 + $0x64] sm:%s840] %v902
                  %v904 = vld [vmem:[%s850 + $0x68] sm:%s840]
                  %905 = vst [vmem:[%s851 + $0x68] sm:%s840] %v904
                  %v906 = vld [vmem:[%s850 + $0x6c] sm:%s840]
                  %907 = vst [vmem:[%s851 + $0x6c] sm:%s840] %v906
                  %v908 = vld [vmem:[%s850 + $0x70] sm:%s840]
                  %909 = vst [vmem:[%s851 + $0x70] sm:%s840] %v908
                  %s910 = sadd.s32 1, %s849
                  %p911 = scmp.ge.s32.totalorder %s910, %s841
                  %s912 = scalar_select %p911, 0, %s910
                  %s913 = smul.u32 %s912, 116
                  %s914 = smul.u32 %s912, 116
                  %s915 = scalar_lea.vmem %s715, %s913 [#allocation2]
                  %s916 = scalar_lea.vmem %s726, %s914
                $region75: #{network_forward.17} parent=69 // loop_footer
                  %s846 = sadd.s32 %s844, 1
                $region76: #{network_forward.17} parent=69 // loop_footer_branch
                  %843 = sbr.rel target = $region72
                $region77: #{network_forward.17} parent=69 // loop_exit
                  _
                %s917 = sdiv.u32.pop %s722, 29
                %s918 = srem.u32.pop %s722, 29
                %s919 = smul.u32 %s917, 29
                %s920 = smul.u32 4, %s919
                %s921 = scalar_lea.vmem %s715, %s920 [#allocation2]
                %s922 = smul.u32 4, %s919
                %s923 = scalar_lea.vmem %s726, %s922
                // While loop
                $region78: #{network_forward.17} parent=69 // loop_pre_header
                  _
                $region79: #{network_forward.17} parent=69 // loop_header
                  %s925 = sphi 0, %s927
                  %p926 = scmp.ge.s32.totalorder %s925, %s918
                  %s930 = sphi 0, %s937
                  %s931 = sphi %s921, %s940
                  %s932 = sphi %s923, %s941
                $region80: #{network_forward.17} parent=69 // loop_header_branch
                  %929 = sbr.rel (%p926) target = $region84
                $region81: #{network_forward.17} parent=69 // loop_body
                  %v933 = vld [vmem:[%s931] sm:%s840]
                  %934 = vst [vmem:[%s932] sm:%s840] %v933
                  %s935 = sadd.s32 1, %s930
                  %p936 = scmp.ge.s32.totalorder %s935, %s918
                  %s937 = scalar_select %p936, 0, %s935
                  %s938 = smul.u32 %s937, 4
                  %s939 = smul.u32 %s937, 4
                  %s940 = scalar_lea.vmem %s921, %s938 [#allocation2]
                  %s941 = scalar_lea.vmem %s923, %s939
                $region82: #{network_forward.17} parent=69 // loop_footer
                  %s927 = sadd.s32 %s925, 1
                $region83: #{network_forward.17} parent=69 // loop_footer_branch
                  %924 = sbr.rel target = $region79
                $region84: #{network_forward.17} parent=69 // loop_exit
                  _
              $region70: #{network_forward.17} parent=47 // pred_fallthru
                _
            $region48: #{network_forward.17} parent=43 // pred_fallthru
              _
            // Predicated region
            $region49: #{network_forward.17} parent=43 // pred_check
              _
            $region50: #{network_forward.17} parent=43 // pred_check_branch
              %733 = sbr.rel (0) target = $region52
            $region51: #{network_forward.17} parent=43 // pred_region
              %s735 = ssub.s32 16, 1
              %s736 = sdiv.u32.pop %s722, 29
              %s737 = srem.u32.pop %s722, 29
              // While loop
              $region53: #{network_forward.17} parent=51 // loop_pre_header
                _
              $region54: #{network_forward.17} parent=51 // loop_header
                %s739 = sphi 0, %s741
                %p740 = scmp.ge.s32.totalorder %s739, %s736
                %s744 = sphi 0, %s807
                %s745 = sphi %s715, %s810
                %s746 = sphi %s726, %s811
              $region55: #{network_forward.17} parent=51 // loop_header_branch
                %743 = sbr.rel (%p740) target = $region59
              $region56: #{network_forward.17} parent=51 // loop_body
                %v747 = vld [vmem:[%s745] sm:%s735]
                %748 = vst [vmem:[%s746] sm:%s735] %v747
                %v749 = vld [vmem:[%s745 + $0x4] sm:%s735]
                %750 = vst [vmem:[%s746 + $0x4] sm:%s735] %v749
                %v751 = vld [vmem:[%s745 + $0x8] sm:%s735]
                %752 = vst [vmem:[%s746 + $0x8] sm:%s735] %v751
                %v753 = vld [vmem:[%s745 + $0xc] sm:%s735]
                %754 = vst [vmem:[%s746 + $0xc] sm:%s735] %v753
                %v755 = vld [vmem:[%s745 + $0x10] sm:%s735]
                %756 = vst [vmem:[%s746 + $0x10] sm:%s735] %v755
                %v757 = vld [vmem:[%s745 + $0x14] sm:%s735]
                %758 = vst [vmem:[%s746 + $0x14] sm:%s735] %v757
                %v759 = vld [vmem:[%s745 + $0x18] sm:%s735]
                %760 = vst [vmem:[%s746 + $0x18] sm:%s735] %v759
                %v761 = vld [vmem:[%s745 + $0x1c] sm:%s735]
                %762 = vst [vmem:[%s746 + $0x1c] sm:%s735] %v761
                %v763 = vld [vmem:[%s745 + $0x20] sm:%s735]
                %764 = vst [vmem:[%s746 + $0x20] sm:%s735] %v763
                %v765 = vld [vmem:[%s745 + $0x24] sm:%s735]
                %766 = vst [vmem:[%s746 + $0x24] sm:%s735] %v765
                %v767 = vld [vmem:[%s745 + $0x28] sm:%s735]
                %768 = vst [vmem:[%s746 + $0x28] sm:%s735] %v767
                %v769 = vld [vmem:[%s745 + $0x2c] sm:%s735]
                %770 = vst [vmem:[%s746 + $0x2c] sm:%s735] %v769
                %v771 = vld [vmem:[%s745 + $0x30] sm:%s735]
                %772 = vst [vmem:[%s746 + $0x30] sm:%s735] %v771
                %v773 = vld [vmem:[%s745 + $0x34] sm:%s735]
                %774 = vst [vmem:[%s746 + $0x34] sm:%s735] %v773
                %v775 = vld [vmem:[%s745 + $0x38] sm:%s735]
                %776 = vst [vmem:[%s746 + $0x38] sm:%s735] %v775
                %v777 = vld [vmem:[%s745 + $0x3c] sm:%s735]
                %778 = vst [vmem:[%s746 + $0x3c] sm:%s735] %v777
                %v779 = vld [vmem:[%s745 + $0x40] sm:%s735]
                %780 = vst [vmem:[%s746 + $0x40] sm:%s735] %v779
                %v781 = vld [vmem:[%s745 + $0x44] sm:%s735]
                %782 = vst [vmem:[%s746 + $0x44] sm:%s735] %v781
                %v783 = vld [vmem:[%s745 + $0x48] sm:%s735]
                %784 = vst [vmem:[%s746 + $0x48] sm:%s735] %v783
                %v785 = vld [vmem:[%s745 + $0x4c] sm:%s735]
                %786 = vst [vmem:[%s746 + $0x4c] sm:%s735] %v785
                %v787 = vld [vmem:[%s745 + $0x50] sm:%s735]
                %788 = vst [vmem:[%s746 + $0x50] sm:%s735] %v787
                %v789 = vld [vmem:[%s745 + $0x54] sm:%s735]
                %790 = vst [vmem:[%s746 + $0x54] sm:%s735] %v789
                %v791 = vld [vmem:[%s745 + $0x58] sm:%s735]
                %792 = vst [vmem:[%s746 + $0x58] sm:%s735] %v791
                %v793 = vld [vmem:[%s745 + $0x5c] sm:%s735]
                %794 = vst [vmem:[%s746 + $0x5c] sm:%s735] %v793
                %v795 = vld [vmem:[%s745 + $0x60] sm:%s735]
                %796 = vst [vmem:[%s746 + $0x60] sm:%s735] %v795
                %v797 = vld [vmem:[%s745 + $0x64] sm:%s735]
                %798 = vst [vmem:[%s746 + $0x64] sm:%s735] %v797
                %v799 = vld [vmem:[%s745 + $0x68] sm:%s735]
                %800 = vst [vmem:[%s746 + $0x68] sm:%s735] %v799
                %v801 = vld [vmem:[%s745 + $0x6c] sm:%s735]
                %802 = vst [vmem:[%s746 + $0x6c] sm:%s735] %v801
                %v803 = vld [vmem:[%s745 + $0x70] sm:%s735]
                %804 = vst [vmem:[%s746 + $0x70] sm:%s735] %v803
                %s805 = sadd.s32 1, %s744
                %p806 = scmp.ge.s32.totalorder %s805, %s736
                %s807 = scalar_select %p806, 0, %s805
                %s808 = smul.u32 %s807, 116
                %s809 = smul.u32 %s807, 116
                %s810 = scalar_lea.vmem %s715, %s808 [#allocation2]
                %s811 = scalar_lea.vmem %s726, %s809
              $region57: #{network_forward.17} parent=51 // loop_footer
                %s741 = sadd.s32 %s739, 1
              $region58: #{network_forward.17} parent=51 // loop_footer_branch
                %738 = sbr.rel target = $region54
              $region59: #{network_forward.17} parent=51 // loop_exit
                _
              %s812 = sdiv.u32.pop %s722, 29
              %s813 = srem.u32.pop %s722, 29
              %s814 = smul.u32 %s812, 29
              %s815 = smul.u32 4, %s814
              %s816 = scalar_lea.vmem %s715, %s815 [#allocation2]
              %s817 = smul.u32 4, %s814
              %s818 = scalar_lea.vmem %s726, %s817
              // While loop
              $region60: #{network_forward.17} parent=51 // loop_pre_header
                _
              $region61: #{network_forward.17} parent=51 // loop_header
                %s820 = sphi 0, %s822
                %p821 = scmp.ge.s32.totalorder %s820, %s813
                %s825 = sphi 0, %s832
                %s826 = sphi %s816, %s835
                %s827 = sphi %s818, %s836
              $region62: #{network_forward.17} parent=51 // loop_header_branch
                %824 = sbr.rel (%p821) target = $region66
              $region63: #{network_forward.17} parent=51 // loop_body
                %v828 = vld [vmem:[%s826] sm:%s735]
                %829 = vst [vmem:[%s827] sm:%s735] %v828
                %s830 = sadd.s32 1, %s825
                %p831 = scmp.ge.s32.totalorder %s830, %s813
                %s832 = scalar_select %p831, 0, %s830
                %s833 = smul.u32 %s832, 4
                %s834 = smul.u32 %s832, 4
                %s835 = scalar_lea.vmem %s816, %s833 [#allocation2]
                %s836 = scalar_lea.vmem %s818, %s834
              $region64: #{network_forward.17} parent=51 // loop_footer
                %s822 = sadd.s32 %s820, 1
              $region65: #{network_forward.17} parent=51 // loop_footer_branch
                %819 = sbr.rel target = $region61
              $region66: #{network_forward.17} parent=51 // loop_exit
                _
            $region52: #{network_forward.17} parent=43 // pred_fallthru
              _
          $region44: #{network_forward.17} parent=39 // pred_fallthru
            _
          %942 = vnop
        $region40: #{network_forward.17} parent=35 // pred_fallthru
          _
      $region36: #{network_forward.17} parent=5 // pred_fallthru
        _
      %p943 = scmp.le.s32.totalorder 2, %s10
      // Predicated region
      $region85: #{network_forward.17} parent=5 // pred_check
        %p944 = pneg %p943
      $region86: #{network_forward.17} parent=5 // pred_check_branch
        %946 = sbr.rel (%p944) target = $region88
      $region87: #{network_forward.17} parent=5 // pred_region
        %s947 = ssub.s32 %s10, 2
        // Predicated region
        $region89: #{network_forward.17} parent=87 // pred_check
          %p948 = pneg %p133
        $region90: #{network_forward.17} parent=87 // pred_check_branch
          %950 = sbr.rel (%p948) target = $region92
        $region91: #{network_forward.17} parent=87 // pred_region
          %s951 = sand.u32 %s118, 1
          %s952 = sand.u32 %s118, 1
          %s953 = smul.addr %s952, 116
          %s954 = scalar_lea.vmem [#allocation2], %s953
        $region92: #{network_forward.17} parent=87 // pred_fallthru
          _
      $region88: #{network_forward.17} parent=5 // pred_fallthru
        _
    $region6: #{network_forward.17} parent=1 // loop_footer
      %s14 = sadd.s32 1, %s10
    $region7: #{network_forward.17} parent=1 // loop_footer_branch
      %9 = sbr.rel target = $region3
    $region8: #{network_forward.17} parent=1 // loop_exit
      _

// kernel: network_forward.18
$region0: #{network_forward.18}
  #allocation0 [shape = 'u32[]', space=smem, size = 0x4, offset = 0x4, fixed_abs, tag = 'smem constant byte address 0x4 - core index']
  #allocation1 [shape = 'u32[72,128]{1,0:T(1,128)}', space=vmem, size = 0x9000, scoped, tag = 'internal scratch']
  %s0 = inlined_call_operand.vmem [shape: bf16[98,72], index: 0, kind: input, shape index: {}]
  %s1 = inlined_call_operand.vmem [shape: bf16[72,8], index: 1, kind: input, shape index: {}]
  %s2 = inlined_call_operand.vmem [shape: f32[1,8], index: 2, kind: input, shape index: {}]
  %s3 = inlined_call_operand.vmem [shape: bf16[98,8], index: 3, kind: output, shape index: {}]
  %s4 = sld [smem:[#allocation0]]
  $region22: #{network_forward.18} parent=0
    _
  %s6 = ssub.s32 1, %s4
  %s7 = scalar_select 0, %s6, %s4
  // Predicated region
  $region2: #{network_forward.18} parent=0 // pred_check
    _
  $region3: #{network_forward.18} parent=0 // pred_check_branch
    %9 = sbr.rel (0) target = $region5
  $region4: #{network_forward.18} parent=0 // pred_region
    _
  $region5: #{network_forward.18} parent=0 // pred_fallthru
    _
  // Predicated region
  $region6: #{network_forward.18} parent=0 // pred_check
    _
  $region7: #{network_forward.18} parent=0 // pred_check_branch
    %11 = sbr.rel (0) target = $region9
  $region8: #{network_forward.18} parent=0 // pred_region
    _
  $region9: #{network_forward.18} parent=0 // pred_fallthru
    _
  // Predicated region
  $region10: #{network_forward.18} parent=0 // pred_check
    _
  $region11: #{network_forward.18} parent=0 // pred_check_branch
    %13 = sbr.rel (0) target = $region13
  $region12: #{network_forward.18} parent=0 // pred_region
    _
  $region13: #{network_forward.18} parent=0 // pred_fallthru
    _
  %v15 = vld [vmem:[%s0] sm:$0xf]
  %v16 = vld [vmem:[%s0 + $0x4] sm:$0xf]
  %v17 = vld [vmem:[%s0 + $0x8] sm:$0xf]
  %v18 = vld [vmem:[%s0 + $0xc] sm:$0xf]
  %v19 = vld [vmem:[%s0 + $0x10] sm:$0xf]
  %v20 = vld [vmem:[%s0 + $0x14] sm:$0xf]
  %v21 = vld [vmem:[%s0 + $0x18] sm:$0xf]
  %v22 = vld [vmem:[%s0 + $0x1c] sm:$0xf]
  %v23 = vld [vmem:[%s0 + $0x20] sm:$0xf]
  %v24 = vld [vmem:[%s0 + $0x24] sm:$0xf]
  %v25 = vld [vmem:[%s0 + $0x28] sm:$0xf]
  %v26 = vld [vmem:[%s0 + $0x2c] sm:$0xf]
  %v27 = vld [vmem:[%s0 + $0x30] sm:$0xf]
  %v28 = vld [vmem:[%s1] sm:$0xf]
  %v29 = vld [vmem:[%s1 + $0x4] sm:$0xf]
  %v30 = vld [vmem:[%s1 + $0x8] sm:$0xf]
  %v31 = vld [vmem:[%s1 + $0xc] sm:$0xf]
  %v32 = vld [vmem:[%s1 + $0x10] sm:$0xf]
  %v33 = vld [vmem:[%s1 + $0x14] sm:$0xf]
  %v34 = vld [vmem:[%s1 + $0x18] sm:$0xf]
  %v35 = vld [vmem:[%s1 + $0x1c] sm:$0xf]
  %v36 = vld [vmem:[%s1 + $0x20] sm:$0xf]
  %v37 = vld [vmem:[%s2] sm:$0x1]
  %v39 = vperm.slane %v37, 0
  %v54 = vunpack.c.l.b16 %v15
  %v55 = vunpack.c.l.b16 %v16
  %v56 = vunpack.c.l.b16 %v17
  %v57 = vunpack.c.l.b16 %v18
  %v58 = vunpack.c.l.b16 %v19
  %v59 = vunpack.c.l.b16 %v20
  %v60 = vunpack.c.l.b16 %v21
  %v61 = vunpack.c.l.b16 %v22
  %v62 = vunpack.c.l.b16 %v23
  %v63 = vunpack.c.l.b16 %v24
  %v64 = vunpack.c.l.b16 %v25
  %v65 = vunpack.c.l.b16 %v26
  %v66 = vunpack.c.l.b16 %v27
  %v67 = vpack.c.b16 %v55, %v54
  %v68 = vpack.c.b16 %v57, %v56
  %v69 = vpack.c.b16 %v59, %v58
  %v70 = vpack.c.b16 %v61, %v60
  %v71 = vpack.c.b16 %v63, %v62
  %v72 = vpack.c.b16 %v65, %v64
  %v73 = vpack.c.b16 %v66, %v66
  %v83 = vunpack.c.l.b16 %v28
  %v84 = vunpack.c.l.b16 %v29
  %v85 = vunpack.c.l.b16 %v30
  %v86 = vunpack.c.l.b16 %v31
  %v87 = vunpack.c.l.b16 %v32
  %v88 = vunpack.c.l.b16 %v33
  %v89 = vunpack.c.l.b16 %v34
  %v90 = vunpack.c.l.b16 %v35
  %v91 = vunpack.c.l.b16 %v36
  %v92 = vpack.c.b16 %v84, %v83
  %v93 = vpack.c.b16 %v86, %v85
  %v94 = vpack.c.b16 %v88, %v87
  %v95 = vpack.c.b16 %v90, %v89
  %v96 = vpack.c.b16 %v91, %v91
  %vm101 = vcmask 588800
  %v103 = vsel %vm101, %v67, 0
  %v106 = vsel %vm101, %v68, 0
  %v109 = vsel %vm101, %v69, 0
  %v112 = vsel %vm101, %v70, 0
  %v115 = vsel %vm101, %v71, 0
  %v118 = vsel %vm101, %v72, 0
  %v121 = vsel %vm101, %v73, 0
  %vm123 = vcmask 1043456
  %v125 = vsel %vm123, %v96, 0
  %127 = vmatpush.bf16.msra.mxu0 0
  %128 = vmatpush.bf16.msra.mxu0 0
  %129 = vmatpush.bf16.msra.mxu0 0
  %130 = vmatpush.bf16.msra.mxu0 %v125
  %131 = vmatpush.bf16.msra.mxu0 %v95
  %132 = vmatpush.bf16.msra.mxu0 %v94
  %133 = vmatpush.bf16.msra.mxu0 %v93
  %134 = vmatpush.bf16.msra.mxu0 %v92
  %135 = vmatmul.bf16.gmra.mxu0 %v103
  %v136 = vpop.f32.mrf.mxu0
  %v137 = vadd.f32 %v39, %v136
  %v138 = vpop.f32.mrf.mxu0
  %v139 = vadd.f32 %v39, %v138
  %140 = vmatmul.bf16.gmra.mxu0 %v106
  %v141 = vpop.f32.mrf.mxu0
  %v142 = vadd.f32 %v39, %v141
  %v143 = vpop.f32.mrf.mxu0
  %v144 = vadd.f32 %v39, %v143
  %145 = vmatmul.bf16.gmra.mxu0 %v109
  %v146 = vpop.f32.mrf.mxu0
  %v147 = vadd.f32 %v39, %v146
  %v148 = vpop.f32.mrf.mxu0
  %v149 = vadd.f32 %v39, %v148
  %150 = vmatmul.bf16.gmra.mxu0 %v112
  %v151 = vpop.f32.mrf.mxu0
  %v152 = vadd.f32 %v39, %v151
  %v153 = vpop.f32.mrf.mxu0
  %v154 = vadd.f32 %v39, %v153
  %155 = vmatmul.bf16.gmra.mxu0 %v115
  %v156 = vpop.f32.mrf.mxu0
  %v157 = vadd.f32 %v39, %v156
  %v158 = vpop.f32.mrf.mxu0
  %v159 = vadd.f32 %v39, %v158
  %160 = vmatmul.bf16.gmra.mxu0 %v118
  %v161 = vpop.f32.mrf.mxu0
  %v162 = vadd.f32 %v39, %v161
  %v163 = vpop.f32.mrf.mxu0
  %v164 = vadd.f32 %v39, %v163
  %165 = vmatmul.bf16.gmra.mxu0 %v121
  %v166 = vpop.f32.mrf.mxu0
  %v167 = vadd.f32 %v39, %v166
  %v168 = vpop.f32.mrf.mxu0
  %169 = vdwg.mxu0
  %v170 = vmax.f32 %v137, 0.0
  %v171 = vmax.f32 %v139, 0.0
  %v172 = vmax.f32 %v142, 0.0
  %v173 = vmax.f32 %v144, 0.0
  %v174 = vmax.f32 %v147, 0.0
  %v175 = vmax.f32 %v149, 0.0
  %v176 = vmax.f32 %v152, 0.0
  %v177 = vmax.f32 %v154, 0.0
  %v178 = vmax.f32 %v157, 0.0
  %v179 = vmax.f32 %v159, 0.0
  %v180 = vmax.f32 %v162, 0.0
  %v181 = vmax.f32 %v164, 0.0
  %v182 = vmax.f32 %v167, 0.0
  %v183 = vpack.c.bf16 %v170, %v170
  %v184 = vpack.c.bf16 %v171, %v171
  %v185 = vpack.c.bf16 %v172, %v172
  %v186 = vpack.c.bf16 %v173, %v173
  %v187 = vpack.c.bf16 %v174, %v174
  %v188 = vpack.c.bf16 %v175, %v175
  %v189 = vpack.c.bf16 %v176, %v176
  %v190 = vpack.c.bf16 %v177, %v177
  %v191 = vpack.c.bf16 %v178, %v178
  %v192 = vpack.c.bf16 %v179, %v179
  %v193 = vpack.c.bf16 %v180, %v180
  %v194 = vpack.c.bf16 %v181, %v181
  %v195 = vpack.c.bf16 %v182, %v182
  %vm196 = vcmask 60416
  %197 = vst.msk [vmem:[%s3] sm:$0xf] %vm196, %v183
  %198 = vst.msk [vmem:[%s3 + $0x4] sm:$0xf] %vm196, %v184
  %199 = vst.msk [vmem:[%s3 + $0x8] sm:$0xf] %vm196, %v185
  %200 = vst.msk [vmem:[%s3 + $0xc] sm:$0xf] %vm196, %v186
  %201 = vst.msk [vmem:[%s3 + $0x10] sm:$0xf] %vm196, %v187
  %202 = vst.msk [vmem:[%s3 + $0x14] sm:$0xf] %vm196, %v188
  %203 = vst.msk [vmem:[%s3 + $0x18] sm:$0xf] %vm196, %v189
  %204 = vst.msk [vmem:[%s3 + $0x1c] sm:$0xf] %vm196, %v190
  %205 = vst.msk [vmem:[%s3 + $0x20] sm:$0xf] %vm196, %v191
  %206 = vst.msk [vmem:[%s3 + $0x24] sm:$0xf] %vm196, %v192
  %207 = vst.msk [vmem:[%s3 + $0x28] sm:$0xf] %vm196, %v193
  %208 = vst.msk [vmem:[%s3 + $0x2c] sm:$0xf] %vm196, %v194
  %209 = vst.msk [vmem:[%s3 + $0x30] sm:$0xf] %vm196, %v195
  // Predicated region
  $region14: #{network_forward.18} parent=0 // pred_check
    _
  $region15: #{network_forward.18} parent=0 // pred_check_branch
    %211 = sbr.rel (0) target = $region17
  $region16: #{network_forward.18} parent=0 // pred_region
    _
  $region17: #{network_forward.18} parent=0 // pred_fallthru
    _
  // Predicated region
  $region18: #{network_forward.18} parent=0 // pred_check
    _
  $region19: #{network_forward.18} parent=0 // pred_check_branch
    %213 = sbr.rel (0) target = $region21
  $region20: #{network_forward.18} parent=0 // pred_region
    _
  $region21: #{network_forward.18} parent=0 // pred_fallthru
    _

// kernel: network_forward.19
$region0: #{network_forward.19}
  #allocation0 [shape = 'u32[]', space=smem, size = 0x4, offset = 0x4, fixed_abs, tag = 'smem constant byte address 0x4 - core index']
  #allocation1 [shape = 'u32[72,128]{1,0:T(1,128)}', space=vmem, size = 0x9000, scoped, tag = 'internal scratch']
  %s0 = inlined_call_operand.vmem [shape: bf16[98,72], index: 0, kind: input, shape index: {}]
  %s1 = inlined_call_operand.vmem [shape: bf16[72,8], index: 1, kind: input, shape index: {}]
  %s2 = inlined_call_operand.vmem [shape: f32[1,8], index: 2, kind: input, shape index: {}]
  %s3 = inlined_call_operand.vmem [shape: bf16[98,8], index: 3, kind: input, shape index: {}]
  %s4 = inlined_call_operand.vmem [shape: bf16[98,8], index: 4, kind: output, shape index: {}]
  %s5 = sld [smem:[#allocation0]]
  $region26: #{network_forward.19} parent=0
    _
  %s7 = ssub.s32 1, %s5
  %s8 = scalar_select 0, %s7, %s5
  // Predicated region
  $region2: #{network_forward.19} parent=0 // pred_check
    _
  $region3: #{network_forward.19} parent=0 // pred_check_branch
    %10 = sbr.rel (0) target = $region5
  $region4: #{network_forward.19} parent=0 // pred_region
    _
  $region5: #{network_forward.19} parent=0 // pred_fallthru
    _
  // Predicated region
  $region6: #{network_forward.19} parent=0 // pred_check
    _
  $region7: #{network_forward.19} parent=0 // pred_check_branch
    %12 = sbr.rel (0) target = $region9
  $region8: #{network_forward.19} parent=0 // pred_region
    _
  $region9: #{network_forward.19} parent=0 // pred_fallthru
    _
  // Predicated region
  $region10: #{network_forward.19} parent=0 // pred_check
    _
  $region11: #{network_forward.19} parent=0 // pred_check_branch
    %14 = sbr.rel (0) target = $region13
  $region12: #{network_forward.19} parent=0 // pred_region
    _
  $region13: #{network_forward.19} parent=0 // pred_fallthru
    _
  // Predicated region
  $region14: #{network_forward.19} parent=0 // pred_check
    _
  $region15: #{network_forward.19} parent=0 // pred_check_branch
    %16 = sbr.rel (0) target = $region17
  $region16: #{network_forward.19} parent=0 // pred_region
    _
  $region17: #{network_forward.19} parent=0 // pred_fallthru
    _
  %v18 = vld [vmem:[%s0] sm:$0xf]
  %v19 = vld [vmem:[%s0 + $0x4] sm:$0xf]
  %v20 = vld [vmem:[%s0 + $0x8] sm:$0xf]
  %v21 = vld [vmem:[%s0 + $0xc] sm:$0xf]
  %v22 = vld [vmem:[%s0 + $0x10] sm:$0xf]
  %v23 = vld [vmem:[%s0 + $0x14] sm:$0xf]
  %v24 = vld [vmem:[%s0 + $0x18] sm:$0xf]
  %v25 = vld [vmem:[%s0 + $0x1c] sm:$0xf]
  %v26 = vld [vmem:[%s0 + $0x20] sm:$0xf]
  %v27 = vld [vmem:[%s0 + $0x24] sm:$0xf]
  %v28 = vld [vmem:[%s0 + $0x28] sm:$0xf]
  %v29 = vld [vmem:[%s0 + $0x2c] sm:$0xf]
  %v30 = vld [vmem:[%s0 + $0x30] sm:$0xf]
  %v31 = vld [vmem:[%s1] sm:$0xf]
  %v32 = vld [vmem:[%s1 + $0x4] sm:$0xf]
  %v33 = vld [vmem:[%s1 + $0x8] sm:$0xf]
  %v34 = vld [vmem:[%s1 + $0xc] sm:$0xf]
  %v35 = vld [vmem:[%s1 + $0x10] sm:$0xf]
  %v36 = vld [vmem:[%s1 + $0x14] sm:$0xf]
  %v37 = vld [vmem:[%s1 + $0x18] sm:$0xf]
  %v38 = vld [vmem:[%s1 + $0x1c] sm:$0xf]
  %v39 = vld [vmem:[%s1 + $0x20] sm:$0xf]
  %v40 = vld [vmem:[%s2] sm:$0x1]
  %v42 = vperm.slane %v40, 0
  %v57 = vunpack.c.l.b16 %v18
  %v58 = vunpack.c.l.b16 %v19
  %v59 = vunpack.c.l.b16 %v20
  %v60 = vunpack.c.l.b16 %v21
  %v61 = vunpack.c.l.b16 %v22
  %v62 = vunpack.c.l.b16 %v23
  %v63 = vunpack.c.l.b16 %v24
  %v64 = vunpack.c.l.b16 %v25
  %v65 = vunpack.c.l.b16 %v26
  %v66 = vunpack.c.l.b16 %v27
  %v67 = vunpack.c.l.b16 %v28
  %v68 = vunpack.c.l.b16 %v29
  %v69 = vunpack.c.l.b16 %v30
  %v70 = vpack.c.b16 %v58, %v57
  %v71 = vpack.c.b16 %v60, %v59
  %v72 = vpack.c.b16 %v62, %v61
  %v73 = vpack.c.b16 %v64, %v63
  %v74 = vpack.c.b16 %v66, %v65
  %v75 = vpack.c.b16 %v68, %v67
  %v76 = vpack.c.b16 %v69, %v69
  %v86 = vunpack.c.l.b16 %v31
  %v87 = vunpack.c.l.b16 %v32
  %v88 = vunpack.c.l.b16 %v33
  %v89 = vunpack.c.l.b16 %v34
  %v90 = vunpack.c.l.b16 %v35
  %v91 = vunpack.c.l.b16 %v36
  %v92 = vunpack.c.l.b16 %v37
  %v93 = vunpack.c.l.b16 %v38
  %v94 = vunpack.c.l.b16 %v39
  %v95 = vpack.c.b16 %v87, %v86
  %v96 = vpack.c.b16 %v89, %v88
  %v97 = vpack.c.b16 %v91, %v90
  %v98 = vpack.c.b16 %v93, %v92
  %v99 = vpack.c.b16 %v94, %v94
  %vm104 = vcmask 588800
  %v106 = vsel %vm104, %v70, 0
  %v109 = vsel %vm104, %v71, 0
  %v112 = vsel %vm104, %v72, 0
  %v115 = vsel %vm104, %v73, 0
  %v118 = vsel %vm104, %v74, 0
  %v121 = vsel %vm104, %v75, 0
  %v124 = vsel %vm104, %v76, 0
  %vm126 = vcmask 1043456
  %v128 = vsel %vm126, %v99, 0
  %130 = vmatpush.bf16.msra.mxu0 0
  %131 = vmatpush.bf16.msra.mxu0 0
  %132 = vmatpush.bf16.msra.mxu0 0
  %133 = vmatpush.bf16.msra.mxu0 %v128
  %134 = vmatpush.bf16.msra.mxu0 %v98
  %135 = vmatpush.bf16.msra.mxu0 %v97
  %136 = vmatpush.bf16.msra.mxu0 %v96
  %137 = vmatpush.bf16.msra.mxu0 %v95
  %138 = vmatmul.bf16.gmra.mxu0 %v106
  %v139 = vpop.f32.mrf.mxu0
  %v140 = vadd.f32 %v42, %v139
  %v141 = vpop.f32.mrf.mxu0
  %v142 = vadd.f32 %v42, %v141
  %143 = vmatmul.bf16.gmra.mxu0 %v109
  %v144 = vpop.f32.mrf.mxu0
  %v145 = vadd.f32 %v42, %v144
  %v146 = vpop.f32.mrf.mxu0
  %v147 = vadd.f32 %v42, %v146
  %148 = vmatmul.bf16.gmra.mxu0 %v112
  %v149 = vpop.f32.mrf.mxu0
  %v150 = vadd.f32 %v42, %v149
  %v151 = vpop.f32.mrf.mxu0
  %v152 = vadd.f32 %v42, %v151
  %153 = vmatmul.bf16.gmra.mxu0 %v115
  %v154 = vpop.f32.mrf.mxu0
  %v155 = vadd.f32 %v42, %v154
  %v156 = vpop.f32.mrf.mxu0
  %v157 = vadd.f32 %v42, %v156
  %158 = vmatmul.bf16.gmra.mxu0 %v118
  %v159 = vpop.f32.mrf.mxu0
  %v160 = vadd.f32 %v42, %v159
  %v161 = vpop.f32.mrf.mxu0
  %v162 = vadd.f32 %v42, %v161
  %163 = vmatmul.bf16.gmra.mxu0 %v121
  %v164 = vpop.f32.mrf.mxu0
  %v165 = vadd.f32 %v42, %v164
  %v166 = vpop.f32.mrf.mxu0
  %v167 = vadd.f32 %v42, %v166
  %168 = vmatmul.bf16.gmra.mxu0 %v124
  %v169 = vpop.f32.mrf.mxu0
  %v170 = vadd.f32 %v42, %v169
  %v171 = vpop.f32.mrf.mxu0
  %172 = vdwg.mxu0
  %v173 = vld [vmem:[%s3] sm:$0xf]
  %v174 = vld [vmem:[%s3 + $0x4] sm:$0xf]
  %v175 = vld [vmem:[%s3 + $0x8] sm:$0xf]
  %v176 = vld [vmem:[%s3 + $0xc] sm:$0xf]
  %v177 = vld [vmem:[%s3 + $0x10] sm:$0xf]
  %v178 = vld [vmem:[%s3 + $0x14] sm:$0xf]
  %v179 = vld [vmem:[%s3 + $0x18] sm:$0xf]
  %v180 = vld [vmem:[%s3 + $0x1c] sm:$0xf]
  %v181 = vld [vmem:[%s3 + $0x20] sm:$0xf]
  %v182 = vld [vmem:[%s3 + $0x24] sm:$0xf]
  %v183 = vld [vmem:[%s3 + $0x28] sm:$0xf]
  %v184 = vld [vmem:[%s3 + $0x2c] sm:$0xf]
  %v185 = vld [vmem:[%s3 + $0x30] sm:$0xf]
  %v186 = vunpack.c.l.bf16 %v173
  %v187 = vunpack.c.l.bf16 %v174
  %v188 = vunpack.c.l.bf16 %v175
  %v189 = vunpack.c.l.bf16 %v176
  %v190 = vunpack.c.l.bf16 %v177
  %v191 = vunpack.c.l.bf16 %v178
  %v192 = vunpack.c.l.bf16 %v179
  %v193 = vunpack.c.l.bf16 %v180
  %v194 = vunpack.c.l.bf16 %v181
  %v195 = vunpack.c.l.bf16 %v182
  %v196 = vunpack.c.l.bf16 %v183
  %v197 = vunpack.c.l.bf16 %v184
  %v198 = vunpack.c.l.bf16 %v185
  %v199 = vadd.f32 %v140, %v186
  %v200 = vadd.f32 %v142, %v187
  %v201 = vadd.f32 %v145, %v188
  %v202 = vadd.f32 %v147, %v189
  %v203 = vadd.f32 %v150, %v190
  %v204 = vadd.f32 %v152, %v191
  %v205 = vadd.f32 %v155, %v192
  %v206 = vadd.f32 %v157, %v193
  %v207 = vadd.f32 %v160, %v194
  %v208 = vadd.f32 %v162, %v195
  %v209 = vadd.f32 %v165, %v196
  %v210 = vadd.f32 %v167, %v197
  %v211 = vadd.f32 %v170, %v198
  %v212 = vmax.f32 %v199, 0.0
  %v213 = vmax.f32 %v200, 0.0
  %v214 = vmax.f32 %v201, 0.0
  %v215 = vmax.f32 %v202, 0.0
  %v216 = vmax.f32 %v203, 0.0
  %v217 = vmax.f32 %v204, 0.0
  %v218 = vmax.f32 %v205, 0.0
  %v219 = vmax.f32 %v206, 0.0
  %v220 = vmax.f32 %v207, 0.0
  %v221 = vmax.f32 %v208, 0.0
  %v222 = vmax.f32 %v209, 0.0
  %v223 = vmax.f32 %v210, 0.0
  %v224 = vmax.f32 %v211, 0.0
  %v225 = vpack.c.bf16 %v212, %v212
  %v226 = vpack.c.bf16 %v213, %v213
  %v227 = vpack.c.bf16 %v214, %v214
  %v228 = vpack.c.bf16 %v215, %v215
  %v229 = vpack.c.bf16 %v216, %v216
  %v230 = vpack.c.bf16 %v217, %v217
  %v231 = vpack.c.bf16 %v218, %v218
  %v232 = vpack.c.bf16 %v219, %v219
  %v233 = vpack.c.bf16 %v220, %v220
  %v234 = vpack.c.bf16 %v221, %v221
  %v235 = vpack.c.bf16 %v222, %v222
  %v236 = vpack.c.bf16 %v223, %v223
  %v237 = vpack.c.bf16 %v224, %v224
  %vm238 = vcmask 60416
  %239 = vst.msk [vmem:[%s4] sm:$0xf] %vm238, %v225
  %240 = vst.msk [vmem:[%s4 + $0x4] sm:$0xf] %vm238, %v226
  %241 = vst.msk [vmem:[%s4 + $0x8] sm:$0xf] %vm238, %v227
  %242 = vst.msk [vmem:[%s4 + $0xc] sm:$0xf] %vm238, %v228
  %243 = vst.msk [vmem:[%s4 + $0x10] sm:$0xf] %vm238, %v229
  %244 = vst.msk [vmem:[%s4 + $0x14] sm:$0xf] %vm238, %v230
  %245 = vst.msk [vmem:[%s4 + $0x18] sm:$0xf] %vm238, %v231
  %246 = vst.msk [vmem:[%s4 + $0x1c] sm:$0xf] %vm238, %v232
  %247 = vst.msk [vmem:[%s4 + $0x20] sm:$0xf] %vm238, %v233
  %248 = vst.msk [vmem:[%s4 + $0x24] sm:$0xf] %vm238, %v234
  %249 = vst.msk [vmem:[%s4 + $0x28] sm:$0xf] %vm238, %v235
  %250 = vst.msk [vmem:[%s4 + $0x2c] sm:$0xf] %vm238, %v236
  %251 = vst.msk [vmem:[%s4 + $0x30] sm:$0xf] %vm238, %v237
  // Predicated region
  $region18: #{network_forward.19} parent=0 // pred_check
    _
  $region19: #{network_forward.19} parent=0 // pred_check_branch
    %253 = sbr.rel (0) target = $region21
  $region20: #{network_forward.19} parent=0 // pred_region
    _
  $region21: #{network_forward.19} parent=0 // pred_fallthru
    _
  // Predicated region
  $region22: #{network_forward.19} parent=0 // pred_check
    _
  $region23: #{network_forward.19} parent=0 // pred_check_branch
    %255 = sbr.rel (0) target = $region25
  $region24: #{network_forward.19} parent=0 // pred_region
    _
  $region25: #{network_forward.19} parent=0 // pred_fallthru
    _

// kernel: network_forward.21
$region0: #{network_forward.21}
  #allocation0 [shape = 'u32[]', space=smem, size = 0x4, offset = 0x4, fixed_abs, tag = 'smem constant byte address 0x4 - core index']
  #allocation1 [shape = 'u32[72,128]{1,0:T(1,128)}', space=vmem, size = 0x9000, scoped, tag = 'internal scratch']
  %s0 = inlined_call_operand.vmem [shape: bf16[98,8], index: 0, kind: input, shape index: {}]
  %s1 = inlined_call_operand.vmem [shape: bf16[8,8], index: 1, kind: input, shape index: {}]
  %s2 = inlined_call_operand.vmem [shape: f32[1,8], index: 2, kind: input, shape index: {}]
  %s3 = inlined_call_operand.vmem [shape: bf16[98,8], index: 3, kind: input, shape index: {}]
  %s4 = inlined_call_operand.vmem [shape: bf16[98,8], index: 4, kind: output, shape index: {}]
  %s5 = sld [smem:[#allocation0]]
  $region26: #{network_forward.21} parent=0
    _
  %s7 = ssub.s32 1, %s5
  %s8 = scalar_select 0, %s7, %s5
  // Predicated region
  $region2: #{network_forward.21} parent=0 // pred_check
    _
  $region3: #{network_forward.21} parent=0 // pred_check_branch
    %10 = sbr.rel (0) target = $region5
  $region4: #{network_forward.21} parent=0 // pred_region
    _
  $region5: #{network_forward.21} parent=0 // pred_fallthru
    _
  // Predicated region
  $region6: #{network_forward.21} parent=0 // pred_check
    _
  $region7: #{network_forward.21} parent=0 // pred_check_branch
    %12 = sbr.rel (0) target = $region9
  $region8: #{network_forward.21} parent=0 // pred_region
    _
  $region9: #{network_forward.21} parent=0 // pred_fallthru
    _
  // Predicated region
  $region10: #{network_forward.21} parent=0 // pred_check
    _
  $region11: #{network_forward.21} parent=0 // pred_check_branch
    %14 = sbr.rel (0) target = $region13
  $region12: #{network_forward.21} parent=0 // pred_region
    _
  $region13: #{network_forward.21} parent=0 // pred_fallthru
    _
  // Predicated region
  $region14: #{network_forward.21} parent=0 // pred_check
    _
  $region15: #{network_forward.21} parent=0 // pred_check_branch
    %16 = sbr.rel (0) target = $region17
  $region16: #{network_forward.21} parent=0 // pred_region
    _
  $region17: #{network_forward.21} parent=0 // pred_fallthru
    _
  %v18 = vld [vmem:[%s0] sm:$0xf]
  %v19 = vld [vmem:[%s0 + $0x4] sm:$0xf]
  %v20 = vld [vmem:[%s0 + $0x8] sm:$0xf]
  %v21 = vld [vmem:[%s0 + $0xc] sm:$0xf]
  %v22 = vld [vmem:[%s0 + $0x10] sm:$0xf]
  %v23 = vld [vmem:[%s0 + $0x14] sm:$0xf]
  %v24 = vld [vmem:[%s0 + $0x18] sm:$0xf]
  %v25 = vld [vmem:[%s0 + $0x1c] sm:$0xf]
  %v26 = vld [vmem:[%s0 + $0x20] sm:$0xf]
  %v27 = vld [vmem:[%s0 + $0x24] sm:$0xf]
  %v28 = vld [vmem:[%s0 + $0x28] sm:$0xf]
  %v29 = vld [vmem:[%s0 + $0x2c] sm:$0xf]
  %v30 = vld [vmem:[%s0 + $0x30] sm:$0xf]
  %v31 = vld [vmem:[%s1] sm:$0xf]
  %v32 = vld [vmem:[%s2] sm:$0x1]
  %v34 = vperm.slane %v32, 0
  %v49 = vunpack.c.l.b16 %v18
  %v50 = vunpack.c.l.b16 %v19
  %v51 = vunpack.c.l.b16 %v20
  %v52 = vunpack.c.l.b16 %v21
  %v53 = vunpack.c.l.b16 %v22
  %v54 = vunpack.c.l.b16 %v23
  %v55 = vunpack.c.l.b16 %v24
  %v56 = vunpack.c.l.b16 %v25
  %v57 = vunpack.c.l.b16 %v26
  %v58 = vunpack.c.l.b16 %v27
  %v59 = vunpack.c.l.b16 %v28
  %v60 = vunpack.c.l.b16 %v29
  %v61 = vunpack.c.l.b16 %v30
  %v62 = vpack.c.b16 %v50, %v49
  %v63 = vpack.c.b16 %v52, %v51
  %v64 = vpack.c.b16 %v54, %v53
  %v65 = vpack.c.b16 %v56, %v55
  %v66 = vpack.c.b16 %v58, %v57
  %v67 = vpack.c.b16 %v60, %v59
  %v68 = vpack.c.b16 %v61, %v61
  %vm69 = vcmask 64512
  %v71 = vsel %vm69, %v62, 0
  %v74 = vsel %vm69, %v63, 0
  %v77 = vsel %vm69, %v64, 0
  %v80 = vsel %vm69, %v65, 0
  %v83 = vsel %vm69, %v66, 0
  %v86 = vsel %vm69, %v67, 0
  %v89 = vsel %vm69, %v68, 0
  %vm91 = vcmask 1043456
  %v93 = vsel %vm91, %v31, 0
  %95 = vmatpush.bf16.msra.mxu0 0
  %96 = vmatpush.bf16.msra.mxu0 0
  %97 = vmatpush.bf16.msra.mxu0 0
  %98 = vmatpush.bf16.msra.mxu0 0
  %99 = vmatpush.bf16.msra.mxu0 0
  %100 = vmatpush.bf16.msra.mxu0 0
  %101 = vmatpush.bf16.msra.mxu0 0
  %102 = vmatpush.bf16.msra.mxu0 %v93
  %103 = vmatmul.bf16.gmra.mxu0 %v71
  %v104 = vpop.f32.mrf.mxu0
  %v105 = vadd.f32 %v34, %v104
  %v106 = vpop.f32.mrf.mxu0
  %v107 = vadd.f32 %v34, %v106
  %108 = vmatmul.bf16.gmra.mxu0 %v74
  %v109 = vpop.f32.mrf.mxu0
  %v110 = vadd.f32 %v34, %v109
  %v111 = vpop.f32.mrf.mxu0
  %v112 = vadd.f32 %v34, %v111
  %113 = vmatmul.bf16.gmra.mxu0 %v77
  %v114 = vpop.f32.mrf.mxu0
  %v115 = vadd.f32 %v34, %v114
  %v116 = vpop.f32.mrf.mxu0
  %v117 = vadd.f32 %v34, %v116
  %118 = vmatmul.bf16.gmra.mxu0 %v80
  %v119 = vpop.f32.mrf.mxu0
  %v120 = vadd.f32 %v34, %v119
  %v121 = vpop.f32.mrf.mxu0
  %v122 = vadd.f32 %v34, %v121
  %123 = vmatmul.bf16.gmra.mxu0 %v83
  %v124 = vpop.f32.mrf.mxu0
  %v125 = vadd.f32 %v34, %v124
  %v126 = vpop.f32.mrf.mxu0
  %v127 = vadd.f32 %v34, %v126
  %128 = vmatmul.bf16.gmra.mxu0 %v86
  %v129 = vpop.f32.mrf.mxu0
  %v130 = vadd.f32 %v34, %v129
  %v131 = vpop.f32.mrf.mxu0
  %v132 = vadd.f32 %v34, %v131
  %133 = vmatmul.bf16.gmra.mxu0 %v89
  %v134 = vpop.f32.mrf.mxu0
  %v135 = vadd.f32 %v34, %v134
  %v136 = vpop.f32.mrf.mxu0
  %137 = vdwg.mxu0
  %v138 = vld [vmem:[%s3] sm:$0xf]
  %v139 = vld [vmem:[%s3 + $0x4] sm:$0xf]
  %v140 = vld [vmem:[%s3 + $0x8] sm:$0xf]
  %v141 = vld [vmem:[%s3 + $0xc] sm:$0xf]
  %v142 = vld [vmem:[%s3 + $0x10] sm:$0xf]
  %v143 = vld [vmem:[%s3 + $0x14] sm:$0xf]
  %v144 = vld [vmem:[%s3 + $0x18] sm:$0xf]
  %v145 = vld [vmem:[%s3 + $0x1c] sm:$0xf]
  %v146 = vld [vmem:[%s3 + $0x20] sm:$0xf]
  %v147 = vld [vmem:[%s3 + $0x24] sm:$0xf]
  %v148 = vld [vmem:[%s3 + $0x28] sm:$0xf]
  %v149 = vld [vmem:[%s3 + $0x2c] sm:$0xf]
  %v150 = vld [vmem:[%s3 + $0x30] sm:$0xf]
  %v151 = vunpack.c.l.bf16 %v138
  %v152 = vunpack.c.l.bf16 %v139
  %v153 = vunpack.c.l.bf16 %v140
  %v154 = vunpack.c.l.bf16 %v141
  %v155 = vunpack.c.l.bf16 %v142
  %v156 = vunpack.c.l.bf16 %v143
  %v157 = vunpack.c.l.bf16 %v144
  %v158 = vunpack.c.l.bf16 %v145
  %v159 = vunpack.c.l.bf16 %v146
  %v160 = vunpack.c.l.bf16 %v147
  %v161 = vunpack.c.l.bf16 %v148
  %v162 = vunpack.c.l.bf16 %v149
  %v163 = vunpack.c.l.bf16 %v150
  %v164 = vadd.f32 %v105, %v151
  %v165 = vadd.f32 %v107, %v152
  %v166 = vadd.f32 %v110, %v153
  %v167 = vadd.f32 %v112, %v154
  %v168 = vadd.f32 %v115, %v155
  %v169 = vadd.f32 %v117, %v156
  %v170 = vadd.f32 %v120, %v157
  %v171 = vadd.f32 %v122, %v158
  %v172 = vadd.f32 %v125, %v159
  %v173 = vadd.f32 %v127, %v160
  %v174 = vadd.f32 %v130, %v161
  %v175 = vadd.f32 %v132, %v162
  %v176 = vadd.f32 %v135, %v163
  %v177 = vmax.f32 %v164, 0.0
  %v178 = vmax.f32 %v165, 0.0
  %v179 = vmax.f32 %v166, 0.0
  %v180 = vmax.f32 %v167, 0.0
  %v181 = vmax.f32 %v168, 0.0
  %v182 = vmax.f32 %v169, 0.0
  %v183 = vmax.f32 %v170, 0.0
  %v184 = vmax.f32 %v171, 0.0
  %v185 = vmax.f32 %v172, 0.0
  %v186 = vmax.f32 %v173, 0.0
  %v187 = vmax.f32 %v174, 0.0
  %v188 = vmax.f32 %v175, 0.0
  %v189 = vmax.f32 %v176, 0.0
  %v190 = vpack.c.bf16 %v177, %v177
  %v191 = vpack.c.bf16 %v178, %v178
  %v192 = vpack.c.bf16 %v179, %v179
  %v193 = vpack.c.bf16 %v180, %v180
  %v194 = vpack.c.bf16 %v181, %v181
  %v195 = vpack.c.bf16 %v182, %v182
  %v196 = vpack.c.bf16 %v183, %v183
  %v197 = vpack.c.bf16 %v184, %v184
  %v198 = vpack.c.bf16 %v185, %v185
  %v199 = vpack.c.bf16 %v186, %v186
  %v200 = vpack.c.bf16 %v187, %v187
  %v201 = vpack.c.bf16 %v188, %v188
  %v202 = vpack.c.bf16 %v189, %v189
  %vm203 = vcmask 60416
  %204 = vst.msk [vmem:[%s4] sm:$0xf] %vm203, %v190
  %205 = vst.msk [vmem:[%s4 + $0x4] sm:$0xf] %vm203, %v191
  %206 = vst.msk [vmem:[%s4 + $0x8] sm:$0xf] %vm203, %v192
  %207 = vst.msk [vmem:[%s4 + $0xc] sm:$0xf] %vm203, %v193
  %208 = vst.msk [vmem:[%s4 + $0x10] sm:$0xf] %vm203, %v194
  %209 = vst.msk [vmem:[%s4 + $0x14] sm:$0xf] %vm203, %v195
  %210 = vst.msk [vmem:[%s4 + $0x18] sm:$0xf] %vm203, %v196
  %211 = vst.msk [vmem:[%s4 + $0x1c] sm:$0xf] %vm203, %v197
  %212 = vst.msk [vmem:[%s4 + $0x20] sm:$0xf] %vm203, %v198
  %213 = vst.msk [vmem:[%s4 + $0x24] sm:$0xf] %vm203, %v199
  %214 = vst.msk [vmem:[%s4 + $0x28] sm:$0xf] %vm203, %v200
  %215 = vst.msk [vmem:[%s4 + $0x2c] sm:$0xf] %vm203, %v201
  %216 = vst.msk [vmem:[%s4 + $0x30] sm:$0xf] %vm203, %v202
  // Predicated region
  $region18: #{network_forward.21} parent=0 // pred_check
    _
  $region19: #{network_forward.21} parent=0 // pred_check_branch
    %218 = sbr.rel (0) target = $region21
  $region20: #{network_forward.21} parent=0 // pred_region
    _
  $region21: #{network_forward.21} parent=0 // pred_fallthru
    _
  // Predicated region
  $region22: #{network_forward.21} parent=0 // pred_check
    _
  $region23: #{network_forward.21} parent=0 // pred_check_branch
    %220 = sbr.rel (0) target = $region25
  $region24: #{network_forward.21} parent=0 // pred_region
    _
  $region25: #{network_forward.21} parent=0 // pred_fallthru
    _

// kernel: network_forward.22
$region0: #{network_forward.22}
  #allocation0 [shape = 'u32[]', space=smem, size = 0x4, offset = 0x4, fixed_abs, tag = 'smem constant byte address 0x4 - core index']
  #allocation1 [shape = 'u32[72,128]{1,0:T(1,128)}', space=vmem, size = 0x9000, scoped, tag = 'internal scratch']
  %s0 = inlined_call_operand.vmem [shape: bf16[18,8], index: 0, kind: input, shape index: {}]
  %s1 = inlined_call_operand.vmem [shape: bf16[8,16], index: 1, kind: input, shape index: {}]
  %s2 = inlined_call_operand.vmem [shape: f32[1,16], index: 2, kind: input, shape index: {}]
  %s3 = inlined_call_operand.vmem [shape: bf16[16,16], index: 3, kind: input, shape index: {}]
  %s4 = inlined_call_operand.vmem [shape: f32[1,16], index: 4, kind: input, shape index: {}]
  %s5 = inlined_call_operand.vmem [shape: bf16[8,16], index: 5, kind: input, shape index: {}]
  %s6 = inlined_call_operand.vmem [shape: f32[1,16], index: 6, kind: input, shape index: {}]
  %s7 = inlined_call_operand.vmem [shape: bf16[18,16], index: 7, kind: output, shape index: {}]
  %s8 = sld [smem:[#allocation0]]
  $region38: #{network_forward.22} parent=0
    _
  %s10 = ssub.s32 1, %s8
  %s11 = scalar_select 0, %s10, %s8
  // Predicated region
  $region2: #{network_forward.22} parent=0 // pred_check
    _
  $region3: #{network_forward.22} parent=0 // pred_check_branch
    %13 = sbr.rel (0) target = $region5
  $region4: #{network_forward.22} parent=0 // pred_region
    _
  $region5: #{network_forward.22} parent=0 // pred_fallthru
    _
  // Predicated region
  $region6: #{network_forward.22} parent=0 // pred_check
    _
  $region7: #{network_forward.22} parent=0 // pred_check_branch
    %15 = sbr.rel (0) target = $region9
  $region8: #{network_forward.22} parent=0 // pred_region
    _
  $region9: #{network_forward.22} parent=0 // pred_fallthru
    _
  // Predicated region
  $region10: #{network_forward.22} parent=0 // pred_check
    _
  $region11: #{network_forward.22} parent=0 // pred_check_branch
    %17 = sbr.rel (0) target = $region13
  $region12: #{network_forward.22} parent=0 // pred_region
    _
  $region13: #{network_forward.22} parent=0 // pred_fallthru
    _
  // Predicated region
  $region14: #{network_forward.22} parent=0 // pred_check
    _
  $region15: #{network_forward.22} parent=0 // pred_check_branch
    %19 = sbr.rel (0) target = $region17
  $region16: #{network_forward.22} parent=0 // pred_region
    _
  $region17: #{network_forward.22} parent=0 // pred_fallthru
    _
  // Predicated region
  $region18: #{network_forward.22} parent=0 // pred_check
    _
  $region19: #{network_forward.22} parent=0 // pred_check_branch
    %21 = sbr.rel (0) target = $region21
  $region20: #{network_forward.22} parent=0 // pred_region
    _
  $region21: #{network_forward.22} parent=0 // pred_fallthru
    _
  // Predicated region
  $region22: #{network_forward.22} parent=0 // pred_check
    _
  $region23: #{network_forward.22} parent=0 // pred_check_branch
    %23 = sbr.rel (0) target = $region25
  $region24: #{network_forward.22} parent=0 // pred_region
    _
  $region25: #{network_forward.22} parent=0 // pred_fallthru
    _
  // Predicated region
  $region26: #{network_forward.22} parent=0 // pred_check
    _
  $region27: #{network_forward.22} parent=0 // pred_check_branch
    %25 = sbr.rel (0) target = $region29
  $region28: #{network_forward.22} parent=0 // pred_region
    _
  $region29: #{network_forward.22} parent=0 // pred_fallthru
    _
  %v27 = vld [vmem:[%s0] sm:$0xf]
  %v28 = vld [vmem:[%s0 + $0x4] sm:$0xf]
  %v29 = vld [vmem:[%s0 + $0x8] sm:$0xf]
  %v30 = vld [vmem:[%s1] sm:$0xf]
  %v31 = vld [vmem:[%s2] sm:$0x1]
  %v33 = vperm.slane %v31, 0
  %v38 = vunpack.c.l.b16 %v27
  %v39 = vunpack.c.l.b16 %v28
  %v40 = vunpack.c.l.b16 %v29
  %v41 = vpack.c.b16 %v39, %v38
  %v42 = vpack.c.b16 %v40, %v40
  %vm43 = vcmask 64512
  %v45 = vsel %vm43, %v41, 0
  %v48 = vsel %vm43, %v42, 0
  %vm50 = vcmask 1043456
  %v52 = vsel %vm50, %v30, 0
  %54 = vmatpush.bf16.msra.mxu0 0
  %55 = vmatpush.bf16.msra.mxu0 0
  %56 = vmatpush.bf16.msra.mxu0 0
  %57 = vmatpush.bf16.msra.mxu0 0
  %58 = vmatpush.bf16.msra.mxu0 0
  %59 = vmatpush.bf16.msra.mxu0 0
  %60 = vmatpush.bf16.msra.mxu0 0
  %61 = vmatpush.bf16.msra.mxu0 %v52
  %62 = vmatmul.bf16.gmra.mxu0 %v45
  %v63 = vpop.f32.mrf.mxu0
  %v64 = vadd.f32 %v33, %v63
  %v65 = vpop.f32.mrf.mxu0
  %v66 = vadd.f32 %v33, %v65
  %67 = vmatmul.bf16.gmra.mxu0 %v48
  %v68 = vpop.f32.mrf.mxu0
  %v69 = vadd.f32 %v33, %v68
  %v70 = vpop.f32.mrf.mxu0
  %71 = vdwg.mxu0
  %v72 = vmax.f32 %v64, 0.0
  %v73 = vmax.f32 %v66, 0.0
  %v74 = vmax.f32 %v69, 0.0
  %v75 = vpack.c.bf16 %v73, %v72
  %v76 = vpack.c.bf16 %v74, %v74
  %v77 = vld [vmem:[%s5] sm:$0xf]
  %v78 = vld [vmem:[%s6] sm:$0x1]
  %v80 = vperm.slane %v78, 0
  %v83 = vsel %vm50, %v77, 0
  %85 = vmatpush.bf16.msra.mxu0 0
  %86 = vmatpush.bf16.msra.mxu0 0
  %87 = vmatpush.bf16.msra.mxu0 0
  %88 = vmatpush.bf16.msra.mxu0 0
  %89 = vmatpush.bf16.msra.mxu0 0
  %90 = vmatpush.bf16.msra.mxu0 0
  %91 = vmatpush.bf16.msra.mxu0 0
  %92 = vmatpush.bf16.msra.mxu0 %v83
  %93 = vmatmul.bf16.gmra.mxu0 %v45
  %v94 = vpop.f32.mrf.mxu0
  %v95 = vadd.f32 %v80, %v94
  %v96 = vpop.f32.mrf.mxu0
  %v97 = vadd.f32 %v80, %v96
  %98 = vmatmul.bf16.gmra.mxu0 %v48
  %v99 = vpop.f32.mrf.mxu0
  %v100 = vadd.f32 %v80, %v99
  %v101 = vpop.f32.mrf.mxu0
  %102 = vdwg.mxu0
  %v103 = vld [vmem:[%s3] sm:$0xf]
  %v104 = vld [vmem:[%s3 + $0x4] sm:$0xf]
  %v105 = vld [vmem:[%s4] sm:$0x1]
  %v107 = vperm.slane %v105, 0
  %v111 = vunpack.c.l.b16 %v103
  %v112 = vunpack.c.l.b16 %v104
  %v113 = vpack.c.b16 %v112, %v111
  %vm115 = vcmask 130048
  %v117 = vsel %vm115, %v75, 0
  %v120 = vsel %vm115, %v76, 0
  %122 = vmatpush.bf16.msra.mxu0 0
  %123 = vmatpush.bf16.msra.mxu0 0
  %124 = vmatpush.bf16.msra.mxu0 0
  %125 = vmatpush.bf16.msra.mxu0 0
  %126 = vmatpush.bf16.msra.mxu0 0
  %127 = vmatpush.bf16.msra.mxu0 0
  %128 = vmatpush.bf16.msra.mxu0 0
  %129 = vmatpush.bf16.msra.mxu0 %v113
  %130 = vmatmul.bf16.gmra.mxu0 %v117
  %v131 = vpop.f32.mrf.mxu0
  %v132 = vadd.f32 %v107, %v131
  %v133 = vpop.f32.mrf.mxu0
  %v134 = vadd.f32 %v107, %v133
  %135 = vmatmul.bf16.gmra.mxu0 %v120
  %v136 = vpop.f32.mrf.mxu0
  %v137 = vadd.f32 %v107, %v136
  %v138 = vpop.f32.mrf.mxu0
  %139 = vdwg.mxu0
  %v140 = vadd.f32 %v132, %v95
  %v141 = vadd.f32 %v134, %v97
  %v142 = vadd.f32 %v137, %v100
  %v143 = vmax.f32 %v140, 0.0
  %v144 = vmax.f32 %v141, 0.0
  %v145 = vmax.f32 %v142, 0.0
  %v146 = vpack.c.bf16 %v143, %v143
  %v147 = vpack.c.bf16 %v144, %v144
  %v148 = vpack.c.bf16 %v145, %v145
  %vm149 = vcmask 125952
  %150 = vst.msk [vmem:[%s7] sm:$0xf] %vm149, %v146
  %151 = vst.msk [vmem:[%s7 + $0x4] sm:$0xf] %vm149, %v147
  %152 = vst.msk [vmem:[%s7 + $0x8] sm:$0xf] %vm149, %v148
  // Predicated region
  $region30: #{network_forward.22} parent=0 // pred_check
    _
  $region31: #{network_forward.22} parent=0 // pred_check_branch
    %154 = sbr.rel (0) target = $region33
  $region32: #{network_forward.22} parent=0 // pred_region
    _
  $region33: #{network_forward.22} parent=0 // pred_fallthru
    _
  // Predicated region
  $region34: #{network_forward.22} parent=0 // pred_check
    _
  $region35: #{network_forward.22} parent=0 // pred_check_branch
    %156 = sbr.rel (0) target = $region37
  $region36: #{network_forward.22} parent=0 // pred_region
    _
  $region37: #{network_forward.22} parent=0 // pred_fallthru
    _

// kernel: network_forward.24
$region0: #{network_forward.24}
  #allocation0 [shape = 'u32[]', space=smem, size = 0x4, offset = 0x4, fixed_abs, tag = 'smem constant byte address 0x4 - core index']
  #allocation1 [shape = 'u32[72,128]{1,0:T(1,128)}', space=vmem, size = 0x9000, scoped, tag = 'internal scratch']
  %s0 = inlined_call_operand.vmem [shape: bf16[18,32], index: 0, kind: input, shape index: {}]
  %s1 = inlined_call_operand.vmem [shape: bf16[32,32], index: 1, kind: input, shape index: {}]
  %s2 = inlined_call_operand.vmem [shape: f32[1,32], index: 2, kind: input, shape index: {}]
  %s3 = inlined_call_operand.vmem [shape: bf16[32,32], index: 3, kind: input, shape index: {}]
  %s4 = inlined_call_operand.vmem [shape: f32[1,32], index: 4, kind: input, shape index: {}]
  %s5 = inlined_call_operand.vmem [shape: bf16[18,32], index: 5, kind: output, shape index: {}]
  %s6 = sld [smem:[#allocation0]]
  $region30: #{network_forward.24} parent=0
    _
  %s8 = ssub.s32 1, %s6
  %s9 = scalar_select 0, %s8, %s6
  // Predicated region
  $region2: #{network_forward.24} parent=0 // pred_check
    _
  $region3: #{network_forward.24} parent=0 // pred_check_branch
    %11 = sbr.rel (0) target = $region5
  $region4: #{network_forward.24} parent=0 // pred_region
    _
  $region5: #{network_forward.24} parent=0 // pred_fallthru
    _
  // Predicated region
  $region6: #{network_forward.24} parent=0 // pred_check
    _
  $region7: #{network_forward.24} parent=0 // pred_check_branch
    %13 = sbr.rel (0) target = $region9
  $region8: #{network_forward.24} parent=0 // pred_region
    _
  $region9: #{network_forward.24} parent=0 // pred_fallthru
    _
  // Predicated region
  $region10: #{network_forward.24} parent=0 // pred_check
    _
  $region11: #{network_forward.24} parent=0 // pred_check_branch
    %15 = sbr.rel (0) target = $region13
  $region12: #{network_forward.24} parent=0 // pred_region
    _
  $region13: #{network_forward.24} parent=0 // pred_fallthru
    _
  // Predicated region
  $region14: #{network_forward.24} parent=0 // pred_check
    _
  $region15: #{network_forward.24} parent=0 // pred_check_branch
    %17 = sbr.rel (0) target = $region17
  $region16: #{network_forward.24} parent=0 // pred_region
    _
  $region17: #{network_forward.24} parent=0 // pred_fallthru
    _
  // Predicated region
  $region18: #{network_forward.24} parent=0 // pred_check
    _
  $region19: #{network_forward.24} parent=0 // pred_check_branch
    %19 = sbr.rel (0) target = $region21
  $region20: #{network_forward.24} parent=0 // pred_region
    _
  $region21: #{network_forward.24} parent=0 // pred_fallthru
    _
  %v21 = vld [vmem:[%s0] sm:$0xf]
  %v22 = vld [vmem:[%s0 + $0x4] sm:$0xf]
  %v23 = vld [vmem:[%s0 + $0x8] sm:$0xf]
  %v24 = vld [vmem:[%s1] sm:$0xf]
  %v25 = vld [vmem:[%s1 + $0x4] sm:$0xf]
  %v26 = vld [vmem:[%s1 + $0x8] sm:$0xf]
  %v27 = vld [vmem:[%s1 + $0xc] sm:$0xf]
  %v28 = vld [vmem:[%s2] sm:$0x1]
  %v30 = vperm.slane %v28, 0
  %v35 = vunpack.c.l.b16 %v21
  %v36 = vunpack.c.l.b16 %v22
  %v37 = vunpack.c.l.b16 %v23
  %v38 = vpack.c.b16 %v36, %v35
  %v39 = vpack.c.b16 %v37, %v37
  %v44 = vunpack.c.l.b16 %v24
  %v45 = vunpack.c.l.b16 %v25
  %v46 = vunpack.c.l.b16 %v26
  %v47 = vunpack.c.l.b16 %v27
  %v48 = vpack.c.b16 %v45, %v44
  %v49 = vpack.c.b16 %v47, %v46
  %vm52 = vcmask 261120
  %v54 = vsel %vm52, %v38, 0
  %v57 = vsel %vm52, %v39, 0
  %59 = vmatpush.bf16.msra.mxu0 0
  %60 = vmatpush.bf16.msra.mxu0 0
  %61 = vmatpush.bf16.msra.mxu0 0
  %62 = vmatpush.bf16.msra.mxu0 0
  %63 = vmatpush.bf16.msra.mxu0 0
  %64 = vmatpush.bf16.msra.mxu0 0
  %65 = vmatpush.bf16.msra.mxu0 %v49
  %66 = vmatpush.bf16.msra.mxu0 %v48
  %67 = vmatmul.bf16.gmra.mxu0 %v54
  %v68 = vpop.f32.mrf.mxu0
  %v69 = vadd.f32 %v30, %v68
  %v70 = vpop.f32.mrf.mxu0
  %v71 = vadd.f32 %v30, %v70
  %72 = vmatmul.bf16.gmra.mxu0 %v57
  %v73 = vpop.f32.mrf.mxu0
  %v74 = vadd.f32 %v30, %v73
  %v75 = vpop.f32.mrf.mxu0
  %76 = vdwg.mxu0
  %v77 = vmax.f32 %v69, 0.0
  %v78 = vmax.f32 %v71, 0.0
  %v79 = vmax.f32 %v74, 0.0
  %v80 = vpack.c.bf16 %v78, %v77
  %v81 = vpack.c.bf16 %v79, %v79
  %v82 = vld [vmem:[%s3] sm:$0xf]
  %v83 = vld [vmem:[%s3 + $0x4] sm:$0xf]
  %v84 = vld [vmem:[%s3 + $0x8] sm:$0xf]
  %v85 = vld [vmem:[%s3 + $0xc] sm:$0xf]
  %v86 = vld [vmem:[%s4] sm:$0x1]
  %v88 = vperm.slane %v86, 0
  %v94 = vunpack.c.l.b16 %v82
  %v95 = vunpack.c.l.b16 %v83
  %v96 = vunpack.c.l.b16 %v84
  %v97 = vunpack.c.l.b16 %v85
  %v98 = vpack.c.b16 %v95, %v94
  %v99 = vpack.c.b16 %v97, %v96
  %v103 = vsel %vm52, %v80, 0
  %v106 = vsel %vm52, %v81, 0
  %108 = vmatpush.bf16.msra.mxu0 0
  %109 = vmatpush.bf16.msra.mxu0 0
  %110 = vmatpush.bf16.msra.mxu0 0
  %111 = vmatpush.bf16.msra.mxu0 0
  %112 = vmatpush.bf16.msra.mxu0 0
  %113 = vmatpush.bf16.msra.mxu0 0
  %114 = vmatpush.bf16.msra.mxu0 %v99
  %115 = vmatpush.bf16.msra.mxu0 %v98
  %116 = vmatmul.bf16.gmra.mxu0 %v103
  %v117 = vpop.f32.mrf.mxu0
  %v118 = vadd.f32 %v88, %v117
  %v119 = vpop.f32.mrf.mxu0
  %v120 = vadd.f32 %v88, %v119
  %121 = vmatmul.bf16.gmra.mxu0 %v106
  %v122 = vpop.f32.mrf.mxu0
  %v123 = vadd.f32 %v88, %v122
  %v124 = vpop.f32.mrf.mxu0
  %125 = vdwg.mxu0
  %v126 = vunpack.c.l.bf16 %v21
  %v127 = vunpack.c.l.bf16 %v22
  %v128 = vunpack.c.l.bf16 %v23
  %v129 = vadd.f32 %v118, %v126
  %v130 = vadd.f32 %v120, %v127
  %v131 = vadd.f32 %v123, %v128
  %v132 = vmax.f32 %v129, 0.0
  %v133 = vmax.f32 %v130, 0.0
  %v134 = vmax.f32 %v131, 0.0
  %v135 = vpack.c.bf16 %v132, %v132
  %v136 = vpack.c.bf16 %v133, %v133
  %v137 = vpack.c.bf16 %v134, %v134
  %vm138 = vcmask 257024
  %139 = vst.msk [vmem:[%s5] sm:$0xf] %vm138, %v135
  %140 = vst.msk [vmem:[%s5 + $0x4] sm:$0xf] %vm138, %v136
  %141 = vst.msk [vmem:[%s5 + $0x8] sm:$0xf] %vm138, %v137
  // Predicated region
  $region22: #{network_forward.24} parent=0 // pred_check
    _
  $region23: #{network_forward.24} parent=0 // pred_check_branch
    %143 = sbr.rel (0) target = $region25
  $region24: #{network_forward.24} parent=0 // pred_region
    _
  $region25: #{network_forward.24} parent=0 // pred_fallthru
    _
  // Predicated region
  $region26: #{network_forward.24} parent=0 // pred_check
    _
  $region27: #{network_forward.24} parent=0 // pred_check_branch
    %145 = sbr.rel (0) target = $region29
  $region28: #{network_forward.24} parent=0 // pred_region
    _
  $region29: #{network_forward.24} parent=0 // pred_fallthru
    _

// kernel: network_forward.23
$region0: #{network_forward.23}
  #allocation0 [shape = 'u32[]', space=smem, size = 0x4, offset = 0x4, fixed_abs, tag = 'smem constant byte address 0x4 - core index']
  #allocation1 [shape = 'u32[72,128]{1,0:T(1,128)}', space=vmem, size = 0x9000, scoped, tag = 'internal scratch']
  %s0 = inlined_call_operand.vmem [shape: bf16[18,16], index: 0, kind: input, shape index: {}]
  %s1 = inlined_call_operand.vmem [shape: bf16[16,32], index: 1, kind: input, shape index: {}]
  %s2 = inlined_call_operand.vmem [shape: f32[1,32], index: 2, kind: input, shape index: {}]
  %s3 = inlined_call_operand.vmem [shape: bf16[32,32], index: 3, kind: input, shape index: {}]
  %s4 = inlined_call_operand.vmem [shape: f32[1,32], index: 4, kind: input, shape index: {}]
  %s5 = inlined_call_operand.vmem [shape: bf16[16,32], index: 5, kind: input, shape index: {}]
  %s6 = inlined_call_operand.vmem [shape: f32[1,32], index: 6, kind: input, shape index: {}]
  %s7 = inlined_call_operand.vmem [shape: bf16[18,32], index: 7, kind: output, shape index: {}]
  %s8 = sld [smem:[#allocation0]]
  $region38: #{network_forward.23} parent=0
    _
  %s10 = ssub.s32 1, %s8
  %s11 = scalar_select 0, %s10, %s8
  // Predicated region
  $region2: #{network_forward.23} parent=0 // pred_check
    _
  $region3: #{network_forward.23} parent=0 // pred_check_branch
    %13 = sbr.rel (0) target = $region5
  $region4: #{network_forward.23} parent=0 // pred_region
    _
  $region5: #{network_forward.23} parent=0 // pred_fallthru
    _
  // Predicated region
  $region6: #{network_forward.23} parent=0 // pred_check
    _
  $region7: #{network_forward.23} parent=0 // pred_check_branch
    %15 = sbr.rel (0) target = $region9
  $region8: #{network_forward.23} parent=0 // pred_region
    _
  $region9: #{network_forward.23} parent=0 // pred_fallthru
    _
  // Predicated region
  $region10: #{network_forward.23} parent=0 // pred_check
    _
  $region11: #{network_forward.23} parent=0 // pred_check_branch
    %17 = sbr.rel (0) target = $region13
  $region12: #{network_forward.23} parent=0 // pred_region
    _
  $region13: #{network_forward.23} parent=0 // pred_fallthru
    _
  // Predicated region
  $region14: #{network_forward.23} parent=0 // pred_check
    _
  $region15: #{network_forward.23} parent=0 // pred_check_branch
    %19 = sbr.rel (0) target = $region17
  $region16: #{network_forward.23} parent=0 // pred_region
    _
  $region17: #{network_forward.23} parent=0 // pred_fallthru
    _
  // Predicated region
  $region18: #{network_forward.23} parent=0 // pred_check
    _
  $region19: #{network_forward.23} parent=0 // pred_check_branch
    %21 = sbr.rel (0) target = $region21
  $region20: #{network_forward.23} parent=0 // pred_region
    _
  $region21: #{network_forward.23} parent=0 // pred_fallthru
    _
  // Predicated region
  $region22: #{network_forward.23} parent=0 // pred_check
    _
  $region23: #{network_forward.23} parent=0 // pred_check_branch
    %23 = sbr.rel (0) target = $region25
  $region24: #{network_forward.23} parent=0 // pred_region
    _
  $region25: #{network_forward.23} parent=0 // pred_fallthru
    _
  // Predicated region
  $region26: #{network_forward.23} parent=0 // pred_check
    _
  $region27: #{network_forward.23} parent=0 // pred_check_branch
    %25 = sbr.rel (0) target = $region29
  $region28: #{network_forward.23} parent=0 // pred_region
    _
  $region29: #{network_forward.23} parent=0 // pred_fallthru
    _
  %v27 = vld [vmem:[%s0] sm:$0xf]
  %v28 = vld [vmem:[%s0 + $0x4] sm:$0xf]
  %v29 = vld [vmem:[%s0 + $0x8] sm:$0xf]
  %v30 = vld [vmem:[%s1] sm:$0xf]
  %v31 = vld [vmem:[%s1 + $0x4] sm:$0xf]
  %v32 = vld [vmem:[%s2] sm:$0x1]
  %v34 = vperm.slane %v32, 0
  %v39 = vunpack.c.l.b16 %v27
  %v40 = vunpack.c.l.b16 %v28
  %v41 = vunpack.c.l.b16 %v29
  %v42 = vpack.c.b16 %v40, %v39
  %v43 = vpack.c.b16 %v41, %v41
  %v46 = vunpack.c.l.b16 %v30
  %v47 = vunpack.c.l.b16 %v31
  %v48 = vpack.c.b16 %v47, %v46
  %vm50 = vcmask 130048
  %v52 = vsel %vm50, %v42, 0
  %v55 = vsel %vm50, %v43, 0
  %57 = vmatpush.bf16.msra.mxu0 0
  %58 = vmatpush.bf16.msra.mxu0 0
  %59 = vmatpush.bf16.msra.mxu0 0
  %60 = vmatpush.bf16.msra.mxu0 0
  %61 = vmatpush.bf16.msra.mxu0 0
  %62 = vmatpush.bf16.msra.mxu0 0
  %63 = vmatpush.bf16.msra.mxu0 0
  %64 = vmatpush.bf16.msra.mxu0 %v48
  %65 = vmatmul.bf16.gmra.mxu0 %v52
  %v66 = vpop.f32.mrf.mxu0
  %v67 = vadd.f32 %v34, %v66
  %v68 = vpop.f32.mrf.mxu0
  %v69 = vadd.f32 %v34, %v68
  %70 = vmatmul.bf16.gmra.mxu0 %v55
  %v71 = vpop.f32.mrf.mxu0
  %v72 = vadd.f32 %v34, %v71
  %v73 = vpop.f32.mrf.mxu0
  %74 = vdwg.mxu0
  %v75 = vmax.f32 %v67, 0.0
  %v76 = vmax.f32 %v69, 0.0
  %v77 = vmax.f32 %v72, 0.0
  %v78 = vpack.c.bf16 %v76, %v75
  %v79 = vpack.c.bf16 %v77, %v77
  %v80 = vld [vmem:[%s5] sm:$0xf]
  %v81 = vld [vmem:[%s5 + $0x4] sm:$0xf]
  %v82 = vld [vmem:[%s6] sm:$0x1]
  %v84 = vperm.slane %v82, 0
  %v88 = vunpack.c.l.b16 %v80
  %v89 = vunpack.c.l.b16 %v81
  %v90 = vpack.c.b16 %v89, %v88
  %92 = vmatpush.bf16.msra.mxu0 0
  %93 = vmatpush.bf16.msra.mxu0 0
  %94 = vmatpush.bf16.msra.mxu0 0
  %95 = vmatpush.bf16.msra.mxu0 0
  %96 = vmatpush.bf16.msra.mxu0 0
  %97 = vmatpush.bf16.msra.mxu0 0
  %98 = vmatpush.bf16.msra.mxu0 0
  %99 = vmatpush.bf16.msra.mxu0 %v90
  %100 = vmatmul.bf16.gmra.mxu0 %v52
  %v101 = vpop.f32.mrf.mxu0
  %v102 = vadd.f32 %v84, %v101
  %v103 = vpop.f32.mrf.mxu0
  %v104 = vadd.f32 %v84, %v103
  %105 = vmatmul.bf16.gmra.mxu0 %v55
  %v106 = vpop.f32.mrf.mxu0
  %v107 = vadd.f32 %v84, %v106
  %v108 = vpop.f32.mrf.mxu0
  %109 = vdwg.mxu0
  %v110 = vld [vmem:[%s3] sm:$0xf]
  %v111 = vld [vmem:[%s3 + $0x4] sm:$0xf]
  %v112 = vld [vmem:[%s3 + $0x8] sm:$0xf]
  %v113 = vld [vmem:[%s3 + $0xc] sm:$0xf]
  %v114 = vld [vmem:[%s4] sm:$0x1]
  %v116 = vperm.slane %v114, 0
  %v122 = vunpack.c.l.b16 %v110
  %v123 = vunpack.c.l.b16 %v111
  %v124 = vunpack.c.l.b16 %v112
  %v125 = vunpack.c.l.b16 %v113
  %v126 = vpack.c.b16 %v123, %v122
  %v127 = vpack.c.b16 %v125, %v124
  %vm130 = vcmask 261120
  %v132 = vsel %vm130, %v78, 0
  %v135 = vsel %vm130, %v79, 0
  %137 = vmatpush.bf16.msra.mxu0 0
  %138 = vmatpush.bf16.msra.mxu0 0
  %139 = vmatpush.bf16.msra.mxu0 0
  %140 = vmatpush.bf16.msra.mxu0 0
  %141 = vmatpush.bf16.msra.mxu0 0
  %142 = vmatpush.bf16.msra.mxu0 0
  %143 = vmatpush.bf16.msra.mxu0 %v127
  %144 = vmatpush.bf16.msra.mxu0 %v126
  %145 = vmatmul.bf16.gmra.mxu0 %v132
  %v146 = vpop.f32.mrf.mxu0
  %v147 = vadd.f32 %v116, %v146
  %v148 = vpop.f32.mrf.mxu0
  %v149 = vadd.f32 %v116, %v148
  %150 = vmatmul.bf16.gmra.mxu0 %v135
  %v151 = vpop.f32.mrf.mxu0
  %v152 = vadd.f32 %v116, %v151
  %v153 = vpop.f32.mrf.mxu0
  %154 = vdwg.mxu0
  %v155 = vadd.f32 %v147, %v102
  %v156 = vadd.f32 %v149, %v104
  %v157 = vadd.f32 %v152, %v107
  %v158 = vmax.f32 %v155, 0.0
  %v159 = vmax.f32 %v156, 0.0
  %v160 = vmax.f32 %v157, 0.0
  %v161 = vpack.c.bf16 %v158, %v158
  %v162 = vpack.c.bf16 %v159, %v159
  %v163 = vpack.c.bf16 %v160, %v160
  %vm164 = vcmask 257024
  %165 = vst.msk [vmem:[%s7] sm:$0xf] %vm164, %v161
  %166 = vst.msk [vmem:[%s7 + $0x4] sm:$0xf] %vm164, %v162
  %167 = vst.msk [vmem:[%s7 + $0x8] sm:$0xf] %vm164, %v163
  // Predicated region
  $region30: #{network_forward.23} parent=0 // pred_check
    _
  $region31: #{network_forward.23} parent=0 // pred_check_branch
    %169 = sbr.rel (0) target = $region33
  $region32: #{network_forward.23} parent=0 // pred_region
    _
  $region33: #{network_forward.23} parent=0 // pred_fallthru
    _
  // Predicated region
  $region34: #{network_forward.23} parent=0 // pred_check
    _
  $region35: #{network_forward.23} parent=0 // pred_check_branch
    %171 = sbr.rel (0) target = $region37
  $region36: #{network_forward.23} parent=0 // pred_region
    _
  $region37: #{network_forward.23} parent=0 // pred_fallthru
    _

// kernel: network_forward.25
$region0: #{network_forward.25}
  #allocation0 [shape = 'u32[]', space=smem, size = 0x4, offset = 0x4, fixed_abs, tag = 'smem constant byte address 0x4 - core index']
  #allocation1 [shape = 'u32[72,128]{1,0:T(1,128)}', space=vmem, size = 0x9000, scoped, tag = 'internal scratch']
  #allocation2 [shape = 'f32[1,1]{1,0:T(1,128)S(1)}', space=vmem, size = 0x200, scoped, tag = 'scoped memory for network_forward.25']
  %s0 = inlined_call_operand.vmem [shape: bf16[18,32], index: 0, kind: input, shape index: {}]
  %s1 = inlined_call_operand.vmem [shape: bf16[32,1], index: 1, kind: input, shape index: {}]
  %s2 = inlined_call_operand.<no memory space> [shape: f32[1,1], index: 2, kind: input, shape index: {}]
  %s3 = inlined_call_operand.vmem [shape: bf16[18,1], index: 3, kind: output, shape index: {}]
  %s4 = sld [smem:[#allocation0]]
  $region22: #{network_forward.25} parent=0
    _
  %s6 = ssub.s32 1, %s4
  %s7 = scalar_select 0, %s6, %s4
  %v8 = vstv %s2
  %9 = vst [vmem:[#allocation2] sm:$0x1] %v8
  // Predicated region
  $region2: #{network_forward.25} parent=0 // pred_check
    _
  $region3: #{network_forward.25} parent=0 // pred_check_branch
    %11 = sbr.rel (0) target = $region5
  $region4: #{network_forward.25} parent=0 // pred_region
    _
  $region5: #{network_forward.25} parent=0 // pred_fallthru
    _
  // Predicated region
  $region6: #{network_forward.25} parent=0 // pred_check
    _
  $region7: #{network_forward.25} parent=0 // pred_check_branch
    %13 = sbr.rel (0) target = $region9
  $region8: #{network_forward.25} parent=0 // pred_region
    _
  $region9: #{network_forward.25} parent=0 // pred_fallthru
    _
  // Predicated region
  $region10: #{network_forward.25} parent=0 // pred_check
    _
  $region11: #{network_forward.25} parent=0 // pred_check_branch
    %15 = sbr.rel (0) target = $region13
  $region12: #{network_forward.25} parent=0 // pred_region
    _
  $region13: #{network_forward.25} parent=0 // pred_fallthru
    _
  %v17 = vld [vmem:[%s0] sm:$0xf]
  %v18 = vld [vmem:[%s0 + $0x4] sm:$0xf]
  %v19 = vld [vmem:[%s0 + $0x8] sm:$0xf]
  %v20 = vld [vmem:[%s1] sm:$0xf]
  %v21 = vld [vmem:[%s1 + $0x4] sm:$0xf]
  %v22 = vld [vmem:[%s1 + $0x8] sm:$0xf]
  %v23 = vld [vmem:[%s1 + $0xc] sm:$0xf]
  %v24 = vld [vmem:[#allocation2] sm:$0x1]
  %v26 = vperm.slane %v24, 0
  %v31 = vunpack.c.l.b16 %v17
  %v32 = vunpack.c.l.b16 %v18
  %v33 = vunpack.c.l.b16 %v19
  %v34 = vpack.c.b16 %v32, %v31
  %v35 = vpack.c.b16 %v33, %v33
  %v40 = vunpack.c.l.b16 %v20
  %v41 = vunpack.c.l.b16 %v21
  %v42 = vunpack.c.l.b16 %v22
  %v43 = vunpack.c.l.b16 %v23
  %v44 = vpack.c.b16 %v41, %v40
  %v45 = vpack.c.b16 %v43, %v42
  %vm48 = vcmask 261120
  %v50 = vsel %vm48, %v34, 0
  %v53 = vsel %vm48, %v35, 0
  %55 = vmatpush.bf16.msra.mxu0 0
  %56 = vmatpush.bf16.msra.mxu0 0
  %57 = vmatpush.bf16.msra.mxu0 0
  %58 = vmatpush.bf16.msra.mxu0 0
  %59 = vmatpush.bf16.msra.mxu0 0
  %60 = vmatpush.bf16.msra.mxu0 0
  %61 = vmatpush.bf16.msra.mxu0 %v45
  %62 = vmatpush.bf16.msra.mxu0 %v44
  %63 = vmatmul.bf16.gmra.mxu0 %v50
  %v64 = vpop.f32.mrf.mxu0
  %v65 = vadd.f32 %v26, %v64
  %v66 = vpop.f32.mrf.mxu0
  %v67 = vadd.f32 %v26, %v66
  %68 = vmatmul.bf16.gmra.mxu0 %v53
  %v69 = vpop.f32.mrf.mxu0
  %v70 = vadd.f32 %v26, %v69
  %v71 = vpop.f32.mrf.mxu0
  %72 = vdwg.mxu0
  %v73 = vpack.c.bf16 %v65, %v65
  %v74 = vpack.c.bf16 %v67, %v67
  %v75 = vpack.c.bf16 %v70, %v70
  %vm76 = vcmask 3072
  %77 = vst.msk [vmem:[%s3] sm:$0xf] %vm76, %v73
  %78 = vst.msk [vmem:[%s3 + $0x4] sm:$0xf] %vm76, %v74
  %79 = vst.msk [vmem:[%s3 + $0x8] sm:$0xf] %vm76, %v75
  // Predicated region
  $region14: #{network_forward.25} parent=0 // pred_check
    _
  $region15: #{network_forward.25} parent=0 // pred_check_branch
    %81 = sbr.rel (0) target = $region17
  $region16: #{network_forward.25} parent=0 // pred_region
    _
  $region17: #{network_forward.25} parent=0 // pred_fallthru
    _
  // Predicated region
  $region18: #{network_forward.25} parent=0 // pred_check
    _
  $region19: #{network_forward.25} parent=0 // pred_check_branch
    %83 = sbr.rel (0) target = $region21
  $region20: #{network_forward.25} parent=0 // pred_region
    _
  $region21: #{network_forward.25} parent=0 // pred_fallthru
    _

</llo_original>
